<compile_context>
chip_gen: v5e
topology: v5e:2x2
jax: 0.10.0
libtpu: 0.0.40
codegen_flags: <defaults>
</compile_context>

<pallas_src>
import functools

import jax
import jax.numpy as jnp
from jax.experimental import pallas as pl
from jax.experimental.pallas import tpu as pltpu

EPS = 1e-5
_PER_TAP_MIN_CIN = 128      # Cin >= this -> accumulated per-tap matmuls (no im2col)


# ---------------------------------------------------------------------------
# Hardware-aware sizing
# ---------------------------------------------------------------------------
def _vmem_capacity_bytes():
    try:
        return int(pltpu.get_tpu_info().vmem_capacity_bytes)
    except Exception:
        return 64 << 20      # conservative fallback: v7x per-core VMEM


def _compiler_params(plan_bytes):
    cap = _vmem_capacity_bytes()
    # plan_bytes already counts double-buffering of the pipelined tiles; add
    # headroom for compiler temporaries / relayouts, stay well under physical.
    limit = int(min(max(plan_bytes + (4 << 20), 16 << 20), cap - (8 << 20)))
    return pltpu.CompilerParams(dimension_semantics=("parallel",),
                                vmem_limit_bytes=limit)


def _pick_block_n(N, per_image_bytes, budget_bytes):
    """Largest divisor-of-N batch tile that fits the VMEM budget, keeping at
    least 2 grid steps (both v7x TensorCores fed) whenever N allows it."""
    best = 1
    for bn in range(1, N + 1):
        if N % bn:
            continue
        if N >= 2 and N // bn < 2:
            continue
        if bn * per_image_bytes <= budget_bytes:
            best = bn
    return best


def _conv_pass_bytes_per_image(H, W, Cin, Cout, fused):
    m = H * W
    b = (2 * m * Cin * 2            # double-buffered input tile (bf16)
         + 2 * m * Cout * 2         # double-buffered output tile (bf16)
         + (H + 2) * (W + 2) * Cin * 2)   # halo scratch
    if fused:
        b += m * 9 * Cin * 2        # im2col scratch (tiny-Cin path only)
    return b


def _elem_pass_bytes_per_image(H, W, C, Cout):
    m = H * W
    return 2 * m * Cout * 2 + 2 * m * C * 2 + 2 * m * Cout * 4


# ---------------------------------------------------------------------------
# In-kernel helpers
# ---------------------------------------------------------------------------
def _conv3x3_acc(xpad_scr, w_ref, patch_ref, bn, H, W, Cin, Cout):
    """3x3 conv of the zero-haloed VMEM scratch with a (9*Cin, Cout) weight.

    patch_ref is not None -> fused-K im2col: one K=9*Cin matmul (tiny Cin).
    patch_ref is None     -> 9 accumulated K=Cin matmuls (production Cin).
    """
    Mt = bn * H * W
    if patch_ref is not None:
        for dy in range(3):
            for dx in range(3):
                j = dy * 3 + dx
                patch_ref[:, j * Cin:(j + 1) * Cin] = (
                    xpad_scr[:, dy:dy + H, dx:dx + W, :].reshape(Mt, Cin))
        return jnp.dot(patch_ref[...], w_ref[...],
                       preferred_element_type=jnp.float32)
    acc = jnp.zeros((Mt, Cout), jnp.float32)
    for dy in range(3):
        for dx in range(3):
            j = dy * 3 + dx
            tap = xpad_scr[:, dy:dy + H, dx:dx + W, :].reshape(Mt, Cin)
            acc = acc + jnp.dot(tap, w_ref[j * Cin:(j + 1) * Cin, :],
                                preferred_element_type=jnp.float32)
    return acc


# ---------------------------------------------------------------------------
# Kernels
# ---------------------------------------------------------------------------
def conv_bn_stats_kernel(x_ref, s_ref, t_ref, w_ref, y_ref, stats_ref,
                         xpad_scr, *patch, apply_affine_relu):
    """[optional BN affine + ReLU] -> 3x3 conv (bf16 MXU, f32 accumulation)
    -> bf16 activation + per-tile per-channel [sum, sum_sq] partial stats."""
    bn, H, W, Cin = x_ref.shape
    Cout = y_ref.shape[-1]
    patch_ref = patch[0] if patch else None

    if apply_affine_relu:
        z = x_ref[...].astype(jnp.float32)
        z = z * s_ref[...].reshape(1, 1, 1, Cin) + t_ref[...].reshape(1, 1, 1, Cin)
        z = jnp.maximum(z, 0.0).astype(xpad_scr.dtype)
    else:
        z = x_ref[...]                       # already bf16

    # Build the 1-pixel zero halo in VMEM (VMEM-local stores, no HBM traffic);
    # full zero-fill keeps the kernel stateless across grid steps, so the
    # "parallel" axis is safe to shard over v7x's two TensorCores.
    xpad_scr[...] = jnp.zeros_like(xpad_scr)
    xpad_scr[:, 1:H + 1, 1:W + 1, :] = z

    acc = _conv3x3_acc(xpad_scr, w_ref, patch_ref, bn, H, W, Cin, Cout)

    # Round to the storage dtype FIRST so the BN statistics describe exactly
    # the values the next pass will normalize.
    y_rounded = acc.astype(y_ref.dtype)
    y_ref[...] = y_rounded.reshape(bn, H, W, Cout)
    yf = y_rounded.astype(jnp.float32)
    stats_ref[0, 0:1, :] = jnp.sum(yf, axis=0, keepdims=True)
    stats_ref[0, 1:2, :] = jnp.sum(yf * yf, axis=0, keepdims=True)


def bn_add_relu_kernel(y_ref, s_ref, t_ref, res_ref, o_ref):
    """BN2 affine + residual add + ReLU (pure HBM-streaming pass)."""
    C = y_ref.shape[-1]
    out = (y_ref[...].astype(jnp.float32) * s_ref[...].reshape(1, 1, 1, C)
           + t_ref[...].reshape(1, 1, 1, C)
           + res_ref[...].astype(jnp.float32))
    o_ref[...] = jnp.maximum(out, 0.0)


# ---------------------------------------------------------------------------
# pallas_call wrappers
# ---------------------------------------------------------------------------
def _conv_pass(x, scale, shift, w_flat, *, block_n, apply_affine_relu):
    """One conv3x3 pass over NHWC bf16 input; returns (y bf16, partial stats)."""
    N, H, W, Cin = x.shape
    Cout = w_flat.shape[1]
    gn = N // block_n
    Hp, Wp = H + 2, W + 2
    Mt = block_n * H * W
    M = N * H * W
    fused = Cin < _PER_TAP_MIN_CIN

    scratch = [pltpu.VMEM((block_n, Hp, Wp, Cin), jnp.bfloat16)]
    if fused:
        scratch.append(pltpu.VMEM((Mt, 9 * Cin), jnp.bfloat16))

    plan = (2 * Mt * Cin * 2 + 2 * Mt * Cout * 2
            + 2 * 9 * Cin * Cout * 2 + 2 * 2 * Cout * 4
            + block_n * Hp * Wp * Cin * 2
            + (Mt * 9 * Cin * 2 if fused else 0))

    cost = pl.CostEstimate(
        flops=2 * M * 9 * Cin * Cout + (6 * M * Cin if apply_affine_relu else 0),
        transcendentals=0,
        bytes_accessed=(M * Cin * 2 + 9 * Cin * Cout * 2
                        + M * Cout * 2 + gn * 2 * Cout * 4))

    kernel = functools.partial(conv_bn_stats_kernel,
                               apply_affine_relu=apply_affine_relu)
    return pl.pallas_call(
        kernel,
        out_shape=(jax.ShapeDtypeStruct((N, H, W, Cout), jnp.bfloat16),
                   jax.ShapeDtypeStruct((gn, 2, Cout), jnp.float32)),
        grid=(gn,),
        in_specs=[
            pl.BlockSpec((block_n, H, W, Cin), lambda i: (i, 0, 0, 0)),
            pl.BlockSpec((1, Cin), lambda i: (0, 0)),
            pl.BlockSpec((1, Cin), lambda i: (0, 0)),
            pl.BlockSpec((9 * Cin, Cout), lambda i: (0, 0)),
        ],
        out_specs=(
            pl.BlockSpec((block_n, H, W, Cout), lambda i: (i, 0, 0, 0)),
            pl.BlockSpec((1, 2, Cout), lambda i: (i, 0, 0)),
        ),
        scratch_shapes=scratch,
        compiler_params=_compiler_params(plan),
        cost_estimate=cost,
    )(x, scale, shift, w_flat)


def _scale_shift(partial_stats, gamma, beta, count):
    """Reduce per-tile [sum, sum_sq] partials into a fused BN scale/shift."""
    tot = jnp.sum(partial_stats, axis=0)          # (2, C)
    mean = tot[0] / count
    var = tot[1] / count - mean * mean            # biased variance (train mode)
    scale = gamma * jax.lax.rsqrt(var + EPS)
    shift = beta - mean * scale
    return (scale.reshape(1, -1).astype(jnp.float32),
            shift.reshape(1, -1).astype(jnp.float32))


@jax.jit
def residual_block(x_nchw, w1_oihw, w2_oihw, g1, b1, g2, b2):
    """x_nchw: (N, C, H, W) float32; conv weights in PyTorch OIHW layout."""
    N, C, H, W = x_nchw.shape
    Cout = w1_oihw.shape[0]
    assert Cout == C, "stride=1 / downsample=None requires in_ch == out_ch"
    M = N * H * W

    # NCHW -> NHWC fused with the bf16 cast (one XLA op); reused as residual.
    x_bf16 = jnp.transpose(x_nchw, (0, 2, 3, 1)).astype(jnp.bfloat16)
    # OIHW -> HWIO -> (9*Cin, Cout); row (dy*3+dx)*Cin + ci matches both conv paths.
    w1f = jnp.transpose(w1_oihw, (2, 3, 1, 0)).reshape(9 * C, Cout).astype(jnp.bfloat16)
    w2f = jnp.transpose(w2_oihw, (2, 3, 1, 0)).reshape(9 * Cout, Cout).astype(jnp.bfloat16)

    cap = _vmem_capacity_bytes()
    fused = C < _PER_TAP_MIN_CIN
    conv_budget = int(0.4 * cap) - 2 * 9 * C * Cout * 2
    block_n = _pick_block_n(N, _conv_pass_bytes_per_image(H, W, C, Cout, fused),
                            conv_budget)
    block_n3 = _pick_block_n(N, _elem_pass_bytes_per_image(H, W, C, Cout),
                             int(0.4 * cap))

    ones = jnp.ones((1, C), jnp.float32)        # dummy affine for pass 1
    zeros = jnp.zeros((1, C), jnp.float32)

    # ---- pass 1: conv1 + BN1 partial stats ----------------------------------
    y1, stats1 = _conv_pass(x_bf16, ones, zeros, w1f,
                            block_n=block_n, apply_affine_relu=False)
    scale1, shift1 = _scale_shift(stats1, g1, b1, M)

    # ---- pass 2: BN1 affine + ReLU + conv2 + BN2 partial stats --------------
    y2, stats2 = _conv_pass(y1, scale1, shift1, w2f,
                            block_n=block_n, apply_affine_relu=True)
    scale2, shift2 = _scale_shift(stats2, g2, b2, M)

    # ---- pass 3: BN2 affine + residual add + ReLU (streaming) ---------------
    gn3 = N // block_n3
    m3 = block_n3 * H * W
    plan3 = (2 * m3 * Cout * 2 + 2 * m3 * C * 2 + 2 * m3 * Cout * 4
             + 2 * 2 * Cout * 4)
    out_nhwc = pl.pallas_call(
        bn_add_relu_kernel,
        out_shape=jax.ShapeDtypeStruct((N, H, W, Cout), jnp.float32),
        grid=(gn3,),
        in_specs=[
            pl.BlockSpec((block_n3, H, W, Cout), lambda i: (i, 0, 0, 0)),
            pl.BlockSpec((1, Cout), lambda i: (0, 0)),
            pl.BlockSpec((1, Cout), lambda i: (0, 0)),
            pl.BlockSpec((block_n3, H, W, C), lambda i: (i, 0, 0, 0)),
        ],
        out_specs=pl.BlockSpec((block_n3, H, W, Cout), lambda i: (i, 0, 0, 0)),
        compiler_params=_compiler_params(plan3),
        cost_estimate=pl.CostEstimate(
            flops=4 * M * Cout, transcendentals=0,
            bytes_accessed=M * Cout * 2 + M * C * 2 + M * Cout * 4),
    )(y2, scale2, shift2, x_bf16)

    return jnp.transpose(out_nhwc, (0, 3, 1, 2))                 # back to NCHW


# ---------------------------------------------------------------------------
# Pure-JAX reference (PyTorch forward semantics, train-mode BN) and self-test
# ---------------------------------------------------------------------------
def reference(x_nchw, w1_oihw, w2_oihw, g1, b1, g2, b2):
    def conv(x, w):
        return jax.lax.conv_general_dilated(
            x, w, window_strides=(1, 1), padding=((1, 1), (1, 1)),
            dimension_numbers=("NCHW", "OIHW", "NCHW"))

    def bn(x, g, b):
        mean = jnp.mean(x, axis=(0, 2, 3), keepdims=True)
        var = jnp.mean((x - mean) ** 2, axis=(0, 2, 3), keepdims=True)
        return ((x - mean) * jax.lax.rsqrt(var + EPS)
                * g.reshape(1, -1, 1, 1) + b.reshape(1, -1, 1, 1))

    out = jnp.maximum(bn(conv(x_nchw, w1_oihw), g1, b1), 0.0)
    out = bn(conv(out, w2_oihw), g2, b2)
    return jnp.maximum(out + x_nchw, 0.0)


if __name__ == "__main__":
    key = jax.random.PRNGKey(0)
    kx, k1, k2 = jax.random.split(key, 3)

    N, C, H, W = 2, 4, 16, 16
    x = jax.random.normal(kx, (N, C, H, W), jnp.float32)

    # PyTorch shapes: Conv2d weight OIHW; BatchNorm2d default init gamma=1, beta=0.
    w1 = 0.1 * jax.random.normal(k1, (C, C, 3, 3), jnp.float32)
    w2 = 0.1 * jax.random.normal(k2, (C, C, 3, 3), jnp.float32)
    g1 = jnp.ones((C,), jnp.float32)
    b1 = jnp.zeros((C,), jnp.float32)
    g2 = jnp.ones((C,), jnp.float32)
    b2 = jnp.zeros((C,), jnp.float32)

    out = jax.block_until_ready(residual_block(x, w1, w2, g1, b1, g2, b2))

    ref = reference(x, w1, w2, g1, b1, g2, b2)
    assert out.shape == ref.shape == (N, C, H, W)
    max_err = float(jnp.max(jnp.abs(out - ref)))
    # bf16 MXU operands + bf16 residual read (per perf review); f32 accumulation
    # and BN math -> slightly loose tolerance.
    assert jnp.allclose(out, ref, atol=4e-2, rtol=4e-2), f"max_err={max_err}"

    print("KERNEL_OK")
</pallas_src>

<mosaic_0001>
module attributes {stable_mosaic.version = 11 : i64} {
  func.func @conv_bn_stats_kernel(%arg0: i32, %arg1: memref<1x16x16x4xbf16, #tpu.memory_space<vmem>>, %arg2: memref<1x4xf32, #tpu.memory_space<vmem>>, %arg3: memref<1x4xf32, #tpu.memory_space<vmem>>, %arg4: memref<36x4xbf16, #tpu.memory_space<vmem>>, %arg5: memref<1x16x16x4xbf16, #tpu.memory_space<vmem>>, %arg6: memref<1x2x4xf32, #tpu.memory_space<vmem>>, %arg7: memref<1x18x18x4xbf16, #tpu.memory_space<vmem>>, %arg8: memref<256x36xbf16, #tpu.memory_space<vmem>>) attributes {dimension_semantics = [#tpu.dimension_semantics<parallel>], iteration_bounds = array<i64: 2>, scalar_prefetch = 0 : i64, scratch_operands = 2 : i64, tpu.core_type = #tpu.core_type<tc>, window_params = [{transform_indices = @transform_0, window_bounds = array<i64: 1, 16, 16, 4>}, {pipeline_mode = #tpu.pipeline_mode<synchronous>, transform_indices = @transform_1, window_bounds = array<i64: 1, 4>}, {pipeline_mode = #tpu.pipeline_mode<synchronous>, transform_indices = @transform_2, window_bounds = array<i64: 1, 4>}, {pipeline_mode = #tpu.pipeline_mode<synchronous>, transform_indices = @transform_3, window_bounds = array<i64: 36, 4>}, {transform_indices = @transform_4, window_bounds = array<i64: 1, 16, 16, 4>}, {transform_indices = @transform_5, window_bounds = array<i64: 1, 2, 4>}]} {
    %c0 = arith.constant 0 : index
    %c0_0 = arith.constant 0 : index
    %c0_1 = arith.constant 0 : index
    %c0_2 = arith.constant 0 : index
    %0 = vector.load %arg1[%c0, %c0_0, %c0_1, %c0_2] : memref<1x16x16x4xbf16, #tpu.memory_space<vmem>>, vector<1x16x16x4xbf16>
    %cst = arith.constant 0.000000e+00 : bf16
    %1 = vector.broadcast %cst : bf16 to vector<1x18x18x4xbf16>
    %c0_3 = arith.constant 0 : index
    %c0_4 = arith.constant 0 : index
    %c0_5 = arith.constant 0 : index
    %c0_6 = arith.constant 0 : index
    %2 = vector.load %arg7[%c0_3, %c0_4, %c0_5, %c0_6] : memref<1x18x18x4xbf16, #tpu.memory_space<vmem>>, vector<1x18x18x4xbf16>
    tpu.vector_store %arg7[%c0_3, %c0_4, %c0_5, %c0_6], %1 {strides = array<i32>} : memref<1x18x18x4xbf16, #tpu.memory_space<vmem>>, vector<1x18x18x4xbf16>,
    %c0_7 = arith.constant 0 : index
    %c1 = arith.constant 1 : index
    %c1_8 = arith.constant 1 : index
    %c0_9 = arith.constant 0 : index
    %3 = vector.load %arg7[%c0_7, %c1, %c1_8, %c0_9] : memref<1x18x18x4xbf16, #tpu.memory_space<vmem>>, vector<1x16x16x4xbf16>
    tpu.vector_store %arg7[%c0_7, %c1, %c1_8, %c0_9], %0 {strides = array<i32>} : memref<1x18x18x4xbf16, #tpu.memory_space<vmem>>, vector<1x16x16x4xbf16>,
    %c0_10 = arith.constant 0 : index
    %c0_11 = arith.constant 0 : index
    %c0_12 = arith.constant 0 : index
    %c0_13 = arith.constant 0 : index
    %4 = vector.load %arg7[%c0_10, %c0_11, %c0_12, %c0_13] : memref<1x18x18x4xbf16, #tpu.memory_space<vmem>>, vector<1x16x16x4xbf16>
    %5 = vector.shape_cast %4 : vector<1x16x16x4xbf16> to vector<256x4xbf16>
    %c0_14 = arith.constant 0 : index
    %c0_15 = arith.constant 0 : index
    %6 = vector.load %arg8[%c0_14, %c0_15] : memref<256x36xbf16, #tpu.memory_space<vmem>>, vector<256x4xbf16>
    tpu.vector_store %arg8[%c0_14, %c0_15], %5 {strides = array<i32>} : memref<256x36xbf16, #tpu.memory_space<vmem>>, vector<256x4xbf16>,
    %c0_16 = arith.constant 0 : index
    %c0_17 = arith.constant 0 : index
    %c1_18 = arith.constant 1 : index
    %c0_19 = arith.constant 0 : index
    %7 = vector.load %arg7[%c0_16, %c0_17, %c1_18, %c0_19] : memref<1x18x18x4xbf16, #tpu.memory_space<vmem>>, vector<1x16x16x4xbf16>
    %8 = vector.shape_cast %7 : vector<1x16x16x4xbf16> to vector<256x4xbf16>
    %c0_20 = arith.constant 0 : index
    %c4 = arith.constant 4 : index
    %9 = vector.load %arg8[%c0_20, %c4] : memref<256x36xbf16, #tpu.memory_space<vmem>>, vector<256x4xbf16>
    tpu.vector_store %arg8[%c0_20, %c4], %8 {strides = array<i32>} : memref<256x36xbf16, #tpu.memory_space<vmem>>, vector<256x4xbf16>,
    %c0_21 = arith.constant 0 : index
    %c0_22 = arith.constant 0 : index
    %c2 = arith.constant 2 : index
    %c0_23 = arith.constant 0 : index
    %10 = vector.load %arg7[%c0_21, %c0_22, %c2, %c0_23] : memref<1x18x18x4xbf16, #tpu.memory_space<vmem>>, vector<1x16x16x4xbf16>
    %11 = vector.shape_cast %10 : vector<1x16x16x4xbf16> to vector<256x4xbf16>
    %c0_24 = arith.constant 0 : index
    %c8 = arith.constant 8 : index
    %12 = vector.load %arg8[%c0_24, %c8] : memref<256x36xbf16, #tpu.memory_space<vmem>>, vector<256x4xbf16>
    tpu.vector_store %arg8[%c0_24, %c8], %11 {strides = array<i32>} : memref<256x36xbf16, #tpu.memory_space<vmem>>, vector<256x4xbf16>,
    %c0_25 = arith.constant 0 : index
    %c1_26 = arith.constant 1 : index
    %c0_27 = arith.constant 0 : index
    %c0_28 = arith.constant 0 : index
    %13 = vector.load %arg7[%c0_25, %c1_26, %c0_27, %c0_28] : memref<1x18x18x4xbf16, #tpu.memory_space<vmem>>, vector<1x16x16x4xbf16>
    %14 = vector.shape_cast %13 : vector<1x16x16x4xbf16> to vector<256x4xbf16>
    %c0_29 = arith.constant 0 : index
    %c12 = arith.constant 12 : index
    %15 = vector.load %arg8[%c0_29, %c12] : memref<256x36xbf16, #tpu.memory_space<vmem>>, vector<256x4xbf16>
    tpu.vector_store %arg8[%c0_29, %c12], %14 {strides = array<i32>} : memref<256x36xbf16, #tpu.memory_space<vmem>>, vector<256x4xbf16>,
    %c0_30 = arith.constant 0 : index
    %c1_31 = arith.constant 1 : index
    %c1_32 = arith.constant 1 : index
    %c0_33 = arith.constant 0 : index
    %16 = vector.load %arg7[%c0_30, %c1_31, %c1_32, %c0_33] : memref<1x18x18x4xbf16, #tpu.memory_space<vmem>>, vector<1x16x16x4xbf16>
    %17 = vector.shape_cast %16 : vector<1x16x16x4xbf16> to vector<256x4xbf16>
    %c0_34 = arith.constant 0 : index
    %c16 = arith.constant 16 : index
    %18 = vector.load %arg8[%c0_34, %c16] : memref<256x36xbf16, #tpu.memory_space<vmem>>, vector<256x4xbf16>
    tpu.vector_store %arg8[%c0_34, %c16], %17 {strides = array<i32>} : memref<256x36xbf16, #tpu.memory_space<vmem>>, vector<256x4xbf16>,
    %c0_35 = arith.constant 0 : index
    %c1_36 = arith.constant 1 : index
    %c2_37 = arith.constant 2 : index
    %c0_38 = arith.constant 0 : index
    %19 = vector.load %arg7[%c0_35, %c1_36, %c2_37, %c0_38] : memref<1x18x18x4xbf16, #tpu.memory_space<vmem>>, vector<1x16x16x4xbf16>
    %20 = vector.shape_cast %19 : vector<1x16x16x4xbf16> to vector<256x4xbf16>
    %c0_39 = arith.constant 0 : index
    %c20 = arith.constant 20 : index
    %21 = vector.load %arg8[%c0_39, %c20] : memref<256x36xbf16, #tpu.memory_space<vmem>>, vector<256x4xbf16>
    tpu.vector_store %arg8[%c0_39, %c20], %20 {strides = array<i32>} : memref<256x36xbf16, #tpu.memory_space<vmem>>, vector<256x4xbf16>,
    %c0_40 = arith.constant 0 : index
    %c2_41 = arith.constant 2 : index
    %c0_42 = arith.constant 0 : index
    %c0_43 = arith.constant 0 : index
    %22 = vector.load %arg7[%c0_40, %c2_41, %c0_42, %c0_43] : memref<1x18x18x4xbf16, #tpu.memory_space<vmem>>, vector<1x16x16x4xbf16>
    %23 = vector.shape_cast %22 : vector<1x16x16x4xbf16> to vector<256x4xbf16>
    %c0_44 = arith.constant 0 : index
    %c24 = arith.constant 24 : index
    %24 = vector.load %arg8[%c0_44, %c24] : memref<256x36xbf16, #tpu.memory_space<vmem>>, vector<256x4xbf16>
    tpu.vector_store %arg8[%c0_44, %c24], %23 {strides = array<i32>} : memref<256x36xbf16, #tpu.memory_space<vmem>>, vector<256x4xbf16>,
    %c0_45 = arith.constant 0 : index
    %c2_46 = arith.constant 2 : index
    %c1_47 = arith.constant 1 : index
    %c0_48 = arith.constant 0 : index
    %25 = vector.load %arg7[%c0_45, %c2_46, %c1_47, %c0_48] : memref<1x18x18x4xbf16, #tpu.memory_space<vmem>>, vector<1x16x16x4xbf16>
    %26 = vector.shape_cast %25 : vector<1x16x16x4xbf16> to vector<256x4xbf16>
    %c0_49 = arith.constant 0 : index
    %c28 = arith.constant 28 : index
    %27 = vector.load %arg8[%c0_49, %c28] : memref<256x36xbf16, #tpu.memory_space<vmem>>, vector<256x4xbf16>
    tpu.vector_store %arg8[%c0_49, %c28], %26 {strides = array<i32>} : memref<256x36xbf16, #tpu.memory_space<vmem>>, vector<256x4xbf16>,
    %c0_50 = arith.constant 0 : index
    %c2_51 = arith.constant 2 : index
    %c2_52 = arith.constant 2 : index
    %c0_53 = arith.constant 0 : index
    %28 = vector.load %arg7[%c0_50, %c2_51, %c2_52, %c0_53] : memref<1x18x18x4xbf16, #tpu.memory_space<vmem>>, vector<1x16x16x4xbf16>
    %29 = vector.shape_cast %28 : vector<1x16x16x4xbf16> to vector<256x4xbf16>
    %c0_54 = arith.constant 0 : index
    %c32 = arith.constant 32 : index
    %30 = vector.load %arg8[%c0_54, %c32] : memref<256x36xbf16, #tpu.memory_space<vmem>>, vector<256x4xbf16>
    tpu.vector_store %arg8[%c0_54, %c32], %29 {strides = array<i32>} : memref<256x36xbf16, #tpu.memory_space<vmem>>, vector<256x4xbf16>,
    %c0_55 = arith.constant 0 : index
    %c0_56 = arith.constant 0 : index
    %31 = vector.load %arg8[%c0_55, %c0_56] : memref<256x36xbf16, #tpu.memory_space<vmem>>, vector<256x36xbf16>
    %c0_57 = arith.constant 0 : index
    %c0_58 = arith.constant 0 : index
    %32 = vector.load %arg4[%c0_57, %c0_58] : memref<36x4xbf16, #tpu.memory_space<vmem>>, vector<36x4xbf16>
    %cst_59 = arith.constant dense<0.000000e+00> : vector<256x4xf32>
    %33 = tpu.matmul %31, %32, %cst_59 {dimension_numbers = #tpu.dot_dimension_numbers<[1], [0], [0], [1], [0, 0, 1, 1], [], []>} : vector<256x36xbf16>, vector<36x4xbf16>, vector<256x4xf32> -> vector<256x4xf32>
    %34 = arith.truncf %33 : vector<256x4xf32> to vector<256x4xbf16>
    %35 = vector.shape_cast %34 : vector<256x4xbf16> to vector<1x16x16x4xbf16>
    %c0_60 = arith.constant 0 : index
    %c0_61 = arith.constant 0 : index
    %c0_62 = arith.constant 0 : index
    %c0_63 = arith.constant 0 : index
    %36 = vector.load %arg5[%c0_60, %c0_61, %c0_62, %c0_63] : memref<1x16x16x4xbf16, #tpu.memory_space<vmem>>, vector<1x16x16x4xbf16>
    tpu.vector_store %arg5[%c0_60, %c0_61, %c0_62, %c0_63], %35 {strides = array<i32>} : memref<1x16x16x4xbf16, #tpu.memory_space<vmem>>, vector<1x16x16x4xbf16>,
    %37 = arith.extf %34 : vector<256x4xbf16> to vector<256x4xf32>
    %cst_64 = arith.constant dense<0.000000e+00> : vector<4xf32>
    %38 = vector.multi_reduction <add>, %37, %cst_64 [0] : vector<256x4xf32> to vector<4xf32>
    %39 = vector.shape_cast %38 : vector<4xf32> to vector<1x4xf32>
    %c0_65 = arith.constant 0 : index
    %c0_66 = arith.constant 0 : index
    %c0_67 = arith.constant 0 : index
    %40 = vector.load %arg6[%c0_65, %c0_66, %c0_67] : memref<1x2x4xf32, #tpu.memory_space<vmem>>, vector<1x1x4xf32>
    %41 = vector.shape_cast %40 : vector<1x1x4xf32> to vector<1x4xf32>
    %42 = vector.shape_cast %39 : vector<1x4xf32> to vector<1x1x4xf32>
    tpu.vector_store %arg6[%c0_65, %c0_66, %c0_67], %42 {strides = array<i32>} : memref<1x2x4xf32, #tpu.memory_space<vmem>>, vector<1x1x4xf32>,
    %43 = arith.mulf %37, %37 : vector<256x4xf32>
    %cst_68 = arith.constant dense<0.000000e+00> : vector<4xf32>
    %44 = vector.multi_reduction <add>, %43, %cst_68 [0] : vector<256x4xf32> to vector<4xf32>
    %45 = vector.shape_cast %44 : vector<4xf32> to vector<1x4xf32>
    %c0_69 = arith.constant 0 : index
    %c1_70 = arith.constant 1 : index
    %c0_71 = arith.constant 0 : index
    %46 = vector.load %arg6[%c0_69, %c1_70, %c0_71] : memref<1x2x4xf32, #tpu.memory_space<vmem>>, vector<1x1x4xf32>
    %47 = vector.shape_cast %46 : vector<1x1x4xf32> to vector<1x4xf32>
    %48 = vector.shape_cast %45 : vector<1x4xf32> to vector<1x1x4xf32>
    tpu.vector_store %arg6[%c0_69, %c1_70, %c0_71], %48 {strides = array<i32>} : memref<1x2x4xf32, #tpu.memory_space<vmem>>, vector<1x1x4xf32>,
    return
  }
  func.func @transform_0(%arg0: i32) -> (i32, i32, i32, i32) {
    %c0_i32 = arith.constant 0 : i32
    %c0_i32_0 = arith.constant 0 : i32
    %c0_i32_1 = arith.constant 0 : i32
    %c0_i32_2 = arith.constant 0 : i32
    return %arg0, %c0_i32, %c0_i32_0, %c0_i32_1 : i32, i32, i32, i32
  }
  func.func @transform_1(%arg0: i32) -> (i32, i32) {
    %c0_i32 = arith.constant 0 : i32
    %c0_i32_0 = arith.constant 0 : i32
    %c0_i32_1 = arith.constant 0 : i32
    return %c0_i32, %c0_i32_0 : i32, i32
  }
  func.func @transform_2(%arg0: i32) -> (i32, i32) {
    %c0_i32 = arith.constant 0 : i32
    %c0_i32_0 = arith.constant 0 : i32
    %c0_i32_1 = arith.constant 0 : i32
    return %c0_i32, %c0_i32_0 : i32, i32
  }
  func.func @transform_3(%arg0: i32) -> (i32, i32) {
    %c0_i32 = arith.constant 0 : i32
    %c0_i32_0 = arith.constant 0 : i32
    %c0_i32_1 = arith.constant 0 : i32
    return %c0_i32, %c0_i32_0 : i32, i32
  }
  func.func @transform_4(%arg0: i32) -> (i32, i32, i32, i32) {
    %c0_i32 = arith.constant 0 : i32
    %c0_i32_0 = arith.constant 0 : i32
    %c0_i32_1 = arith.constant 0 : i32
    %c0_i32_2 = arith.constant 0 : i32
    return %arg0, %c0_i32, %c0_i32_0, %c0_i32_1 : i32, i32, i32, i32
  }
  func.func @transform_5(%arg0: i32) -> (i32, i32, i32) {
    %c0_i32 = arith.constant 0 : i32
    %c0_i32_0 = arith.constant 0 : i32
    %c0_i32_1 = arith.constant 0 : i32
    return %arg0, %c0_i32, %c0_i32_0 : i32, i32, i32
  }
}

module attributes {stable_mosaic.version = 11 : i64} {
  func.func @conv_bn_stats_kernel(%arg0: i32, %arg1: memref<1x16x16x4xbf16, #tpu.memory_space<vmem>>, %arg2: memref<1x4xf32, #tpu.memory_space<vmem>>, %arg3: memref<1x4xf32, #tpu.memory_space<vmem>>, %arg4: memref<36x4xbf16, #tpu.memory_space<vmem>>, %arg5: memref<1x16x16x4xbf16, #tpu.memory_space<vmem>>, %arg6: memref<1x2x4xf32, #tpu.memory_space<vmem>>, %arg7: memref<1x18x18x4xbf16, #tpu.memory_space<vmem>>, %arg8: memref<256x36xbf16, #tpu.memory_space<vmem>>) attributes {dimension_semantics = [#tpu.dimension_semantics<parallel>], iteration_bounds = array<i64: 2>, scalar_prefetch = 0 : i64, scratch_operands = 2 : i64, tpu.core_type = #tpu.core_type<tc>, window_params = [{transform_indices = @transform_0, window_bounds = array<i64: 1, 16, 16, 4>}, {pipeline_mode = #tpu.pipeline_mode<synchronous>, transform_indices = @transform_1, window_bounds = array<i64: 1, 4>}, {pipeline_mode = #tpu.pipeline_mode<synchronous>, transform_indices = @transform_2, window_bounds = array<i64: 1, 4>}, {pipeline_mode = #tpu.pipeline_mode<synchronous>, transform_indices = @transform_3, window_bounds = array<i64: 36, 4>}, {transform_indices = @transform_4, window_bounds = array<i64: 1, 16, 16, 4>}, {transform_indices = @transform_5, window_bounds = array<i64: 1, 2, 4>}]} {
    %c0 = arith.constant 0 : index
    %c0_0 = arith.constant 0 : index
    %c0_1 = arith.constant 0 : index
    %c0_2 = arith.constant 0 : index
    %0 = vector.load %arg1[%c0, %c0_0, %c0_1, %c0_2] : memref<1x16x16x4xbf16, #tpu.memory_space<vmem>>, vector<1x16x16x4xbf16>
    %1 = arith.extf %0 : vector<1x16x16x4xbf16> to vector<1x16x16x4xf32>
    %c0_3 = arith.constant 0 : index
    %c0_4 = arith.constant 0 : index
    %2 = vector.load %arg2[%c0_3, %c0_4] : memref<1x4xf32, #tpu.memory_space<vmem>>, vector<1x4xf32>
    %3 = vector.shape_cast %2 : vector<1x4xf32> to vector<1x1x1x4xf32>
    %4 = vector.broadcast %3 : vector<1x1x1x4xf32> to vector<1x16x16x4xf32>
    %5 = arith.mulf %1, %4 : vector<1x16x16x4xf32>
    %c0_5 = arith.constant 0 : index
    %c0_6 = arith.constant 0 : index
    %6 = vector.load %arg3[%c0_5, %c0_6] : memref<1x4xf32, #tpu.memory_space<vmem>>, vector<1x4xf32>
    %7 = vector.shape_cast %6 : vector<1x4xf32> to vector<1x1x1x4xf32>
    %8 = vector.broadcast %7 : vector<1x1x1x4xf32> to vector<1x16x16x4xf32>
    %9 = arith.addf %5, %8 : vector<1x16x16x4xf32>
    %cst = arith.constant 0.000000e+00 : f32
    %10 = vector.broadcast %cst : f32 to vector<1x16x16x4xf32>
    %11 = arith.maximumf %9, %10 : vector<1x16x16x4xf32>
    %12 = arith.truncf %11 : vector<1x16x16x4xf32> to vector<1x16x16x4xbf16>
    %cst_7 = arith.constant 0.000000e+00 : bf16
    %13 = vector.broadcast %cst_7 : bf16 to vector<1x18x18x4xbf16>
    %c0_8 = arith.constant 0 : index
    %c0_9 = arith.constant 0 : index
    %c0_10 = arith.constant 0 : index
    %c0_11 = arith.constant 0 : index
    %14 = vector.load %arg7[%c0_8, %c0_9, %c0_10, %c0_11] : memref<1x18x18x4xbf16, #tpu.memory_space<vmem>>, vector<1x18x18x4xbf16>
    tpu.vector_store %arg7[%c0_8, %c0_9, %c0_10, %c0_11], %13 {strides = array<i32>} : memref<1x18x18x4xbf16, #tpu.memory_space<vmem>>, vector<1x18x18x4xbf16>,
    %c0_12 = arith.constant 0 : index
    %c1 = arith.constant 1 : index
    %c1_13 = arith.constant 1 : index
    %c0_14 = arith.constant 0 : index
    %15 = vector.load %arg7[%c0_12, %c1, %c1_13, %c0_14] : memref<1x18x18x4xbf16, #tpu.memory_space<vmem>>, vector<1x16x16x4xbf16>
    tpu.vector_store %arg7[%c0_12, %c1, %c1_13, %c0_14], %12 {strides = array<i32>} : memref<1x18x18x4xbf16, #tpu.memory_space<vmem>>, vector<1x16x16x4xbf16>,
    %c0_15 = arith.constant 0 : index
    %c0_16 = arith.constant 0 : index
    %c0_17 = arith.constant 0 : index
    %c0_18 = arith.constant 0 : index
    %16 = vector.load %arg7[%c0_15, %c0_16, %c0_17, %c0_18] : memref<1x18x18x4xbf16, #tpu.memory_space<vmem>>, vector<1x16x16x4xbf16>
    %17 = vector.shape_cast %16 : vector<1x16x16x4xbf16> to vector<256x4xbf16>
    %c0_19 = arith.constant 0 : index
    %c0_20 = arith.constant 0 : index
    %18 = vector.load %arg8[%c0_19, %c0_20] : memref<256x36xbf16, #tpu.memory_space<vmem>>, vector<256x4xbf16>
    tpu.vector_store %arg8[%c0_19, %c0_20], %17 {strides = array<i32>} : memref<256x36xbf16, #tpu.memory_space<vmem>>, vector<256x4xbf16>,
    %c0_21 = arith.constant 0 : index
    %c0_22 = arith.constant 0 : index
    %c1_23 = arith.constant 1 : index
    %c0_24 = arith.constant 0 : index
    %19 = vector.load %arg7[%c0_21, %c0_22, %c1_23, %c0_24] : memref<1x18x18x4xbf16, #tpu.memory_space<vmem>>, vector<1x16x16x4xbf16>
    %20 = vector.shape_cast %19 : vector<1x16x16x4xbf16> to vector<256x4xbf16>
    %c0_25 = arith.constant 0 : index
    %c4 = arith.constant 4 : index
    %21 = vector.load %arg8[%c0_25, %c4] : memref<256x36xbf16, #tpu.memory_space<vmem>>, vector<256x4xbf16>
    tpu.vector_store %arg8[%c0_25, %c4], %20 {strides = array<i32>} : memref<256x36xbf16, #tpu.memory_space<vmem>>, vector<256x4xbf16>,
    %c0_26 = arith.constant 0 : index
    %c0_27 = arith.constant 0 : index
    %c2 = arith.constant 2 : index
    %c0_28 = arith.constant 0 : index
    %22 = vector.load %arg7[%c0_26, %c0_27, %c2, %c0_28] : memref<1x18x18x4xbf16, #tpu.memory_space<vmem>>, vector<1x16x16x4xbf16>
    %23 = vector.shape_cast %22 : vector<1x16x16x4xbf16> to vector<256x4xbf16>
    %c0_29 = arith.constant 0 : index
    %c8 = arith.constant 8 : index
    %24 = vector.load %arg8[%c0_29, %c8] : memref<256x36xbf16, #tpu.memory_space<vmem>>, vector<256x4xbf16>
    tpu.vector_store %arg8[%c0_29, %c8], %23 {strides = array<i32>} : memref<256x36xbf16, #tpu.memory_space<vmem>>, vector<256x4xbf16>,
    %c0_30 = arith.constant 0 : index
    %c1_31 = arith.constant 1 : index
    %c0_32 = arith.constant 0 : index
    %c0_33 = arith.constant 0 : index
    %25 = vector.load %arg7[%c0_30, %c1_31, %c0_32, %c0_33] : memref<1x18x18x4xbf16, #tpu.memory_space<vmem>>, vector<1x16x16x4xbf16>
    %26 = vector.shape_cast %25 : vector<1x16x16x4xbf16> to vector<256x4xbf16>
    %c0_34 = arith.constant 0 : index
    %c12 = arith.constant 12 : index
    %27 = vector.load %arg8[%c0_34, %c12] : memref<256x36xbf16, #tpu.memory_space<vmem>>, vector<256x4xbf16>
    tpu.vector_store %arg8[%c0_34, %c12], %26 {strides = array<i32>} : memref<256x36xbf16, #tpu.memory_space<vmem>>, vector<256x4xbf16>,
    %c0_35 = arith.constant 0 : index
    %c1_36 = arith.constant 1 : index
    %c1_37 = arith.constant 1 : index
    %c0_38 = arith.constant 0 : index
    %28 = vector.load %arg7[%c0_35, %c1_36, %c1_37, %c0_38] : memref<1x18x18x4xbf16, #tpu.memory_space<vmem>>, vector<1x16x16x4xbf16>
    %29 = vector.shape_cast %28 : vector<1x16x16x4xbf16> to vector<256x4xbf16>
    %c0_39 = arith.constant 0 : index
    %c16 = arith.constant 16 : index
    %30 = vector.load %arg8[%c0_39, %c16] : memref<256x36xbf16, #tpu.memory_space<vmem>>, vector<256x4xbf16>
    tpu.vector_store %arg8[%c0_39, %c16], %29 {strides = array<i32>} : memref<256x36xbf16, #tpu.memory_space<vmem>>, vector<256x4xbf16>,
    %c0_40 = arith.constant 0 : index
    %c1_41 = arith.constant 1 : index
    %c2_42 = arith.constant 2 : index
    %c0_43 = arith.constant 0 : index
    %31 = vector.load %arg7[%c0_40, %c1_41, %c2_42, %c0_43] : memref<1x18x18x4xbf16, #tpu.memory_space<vmem>>, vector<1x16x16x4xbf16>
    %32 = vector.shape_cast %31 : vector<1x16x16x4xbf16> to vector<256x4xbf16>
    %c0_44 = arith.constant 0 : index
    %c20 = arith.constant 20 : index
    %33 = vector.load %arg8[%c0_44, %c20] : memref<256x36xbf16, #tpu.memory_space<vmem>>, vector<256x4xbf16>
    tpu.vector_store %arg8[%c0_44, %c20], %32 {strides = array<i32>} : memref<256x36xbf16, #tpu.memory_space<vmem>>, vector<256x4xbf16>,
    %c0_45 = arith.constant 0 : index
    %c2_46 = arith.constant 2 : index
    %c0_47 = arith.constant 0 : index
    %c0_48 = arith.constant 0 : index
    %34 = vector.load %arg7[%c0_45, %c2_46, %c0_47, %c0_48] : memref<1x18x18x4xbf16, #tpu.memory_space<vmem>>, vector<1x16x16x4xbf16>
    %35 = vector.shape_cast %34 : vector<1x16x16x4xbf16> to vector<256x4xbf16>
    %c0_49 = arith.constant 0 : index
    %c24 = arith.constant 24 : index
    %36 = vector.load %arg8[%c0_49, %c24] : memref<256x36xbf16, #tpu.memory_space<vmem>>, vector<256x4xbf16>
    tpu.vector_store %arg8[%c0_49, %c24], %35 {strides = array<i32>} : memref<256x36xbf16, #tpu.memory_space<vmem>>, vector<256x4xbf16>,
    %c0_50 = arith.constant 0 : index
    %c2_51 = arith.constant 2 : index
    %c1_52 = arith.constant 1 : index
    %c0_53 = arith.constant 0 : index
    %37 = vector.load %arg7[%c0_50, %c2_51, %c1_52, %c0_53] : memref<1x18x18x4xbf16, #tpu.memory_space<vmem>>, vector<1x16x16x4xbf16>
    %38 = vector.shape_cast %37 : vector<1x16x16x4xbf16> to vector<256x4xbf16>
    %c0_54 = arith.constant 0 : index
    %c28 = arith.constant 28 : index
    %39 = vector.load %arg8[%c0_54, %c28] : memref<256x36xbf16, #tpu.memory_space<vmem>>, vector<256x4xbf16>
    tpu.vector_store %arg8[%c0_54, %c28], %38 {strides = array<i32>} : memref<256x36xbf16, #tpu.memory_space<vmem>>, vector<256x4xbf16>,
    %c0_55 = arith.constant 0 : index
    %c2_56 = arith.constant 2 : index
    %c2_57 = arith.constant 2 : index
    %c0_58 = arith.constant 0 : index
    %40 = vector.load %arg7[%c0_55, %c2_56, %c2_57, %c0_58] : memref<1x18x18x4xbf16, #tpu.memory_space<vmem>>, vector<1x16x16x4xbf16>
    %41 = vector.shape_cast %40 : vector<1x16x16x4xbf16> to vector<256x4xbf16>
    %c0_59 = arith.constant 0 : index
    %c32 = arith.constant 32 : index
    %42 = vector.load %arg8[%c0_59, %c32] : memref<256x36xbf16, #tpu.memory_space<vmem>>, vector<256x4xbf16>
    tpu.vector_store %arg8[%c0_59, %c32], %41 {strides = array<i32>} : memref<256x36xbf16, #tpu.memory_space<vmem>>, vector<256x4xbf16>,
    %c0_60 = arith.constant 0 : index
    %c0_61 = arith.constant 0 : index
    %43 = vector.load %arg8[%c0_60, %c0_61] : memref<256x36xbf16, #tpu.memory_space<vmem>>, vector<256x36xbf16>
    %c0_62 = arith.constant 0 : index
    %c0_63 = arith.constant 0 : index
    %44 = vector.load %arg4[%c0_62, %c0_63] : memref<36x4xbf16, #tpu.memory_space<vmem>>, vector<36x4xbf16>
    %cst_64 = arith.constant dense<0.000000e+00> : vector<256x4xf32>
    %45 = tpu.matmul %43, %44, %cst_64 {dimension_numbers = #tpu.dot_dimension_numbers<[1], [0], [0], [1], [0, 0, 1, 1], [], []>} : vector<256x36xbf16>, vector<36x4xbf16>, vector<256x4xf32> -> vector<256x4xf32>
    %46 = arith.truncf %45 : vector<256x4xf32> to vector<256x4xbf16>
    %47 = vector.shape_cast %46 : vector<256x4xbf16> to vector<1x16x16x4xbf16>
    %c0_65 = arith.constant 0 : index
    %c0_66 = arith.constant 0 : index
    %c0_67 = arith.constant 0 : index
    %c0_68 = arith.constant 0 : index
    %48 = vector.load %arg5[%c0_65, %c0_66, %c0_67, %c0_68] : memref<1x16x16x4xbf16, #tpu.memory_space<vmem>>, vector<1x16x16x4xbf16>
    tpu.vector_store %arg5[%c0_65, %c0_66, %c0_67, %c0_68], %47 {strides = array<i32>} : memref<1x16x16x4xbf16, #tpu.memory_space<vmem>>, vector<1x16x16x4xbf16>,
    %49 = arith.extf %46 : vector<256x4xbf16> to vector<256x4xf32>
    %cst_69 = arith.constant dense<0.000000e+00> : vector<4xf32>
    %50 = vector.multi_reduction <add>, %49, %cst_69 [0] : vector<256x4xf32> to vector<4xf32>
    %51 = vector.shape_cast %50 : vector<4xf32> to vector<1x4xf32>
    %c0_70 = arith.constant 0 : index
    %c0_71 = arith.constant 0 : index
    %c0_72 = arith.constant 0 : index
    %52 = vector.load %arg6[%c0_70, %c0_71, %c0_72] : memref<1x2x4xf32, #tpu.memory_space<vmem>>, vector<1x1x4xf32>
    %53 = vector.shape_cast %52 : vector<1x1x4xf32> to vector<1x4xf32>
    %54 = vector.shape_cast %51 : vector<1x4xf32> to vector<1x1x4xf32>
    tpu.vector_store %arg6[%c0_70, %c0_71, %c0_72], %54 {strides = array<i32>} : memref<1x2x4xf32, #tpu.memory_space<vmem>>, vector<1x1x4xf32>,
    %55 = arith.mulf %49, %49 : vector<256x4xf32>
    %cst_73 = arith.constant dense<0.000000e+00> : vector<4xf32>
    %56 = vector.multi_reduction <add>, %55, %cst_73 [0] : vector<256x4xf32> to vector<4xf32>
    %57 = vector.shape_cast %56 : vector<4xf32> to vector<1x4xf32>
    %c0_74 = arith.constant 0 : index
    %c1_75 = arith.constant 1 : index
    %c0_76 = arith.constant 0 : index
    %58 = vector.load %arg6[%c0_74, %c1_75, %c0_76] : memref<1x2x4xf32, #tpu.memory_space<vmem>>, vector<1x1x4xf32>
    %59 = vector.shape_cast %58 : vector<1x1x4xf32> to vector<1x4xf32>
    %60 = vector.shape_cast %57 : vector<1x4xf32> to vector<1x1x4xf32>
    tpu.vector_store %arg6[%c0_74, %c1_75, %c0_76], %60 {strides = array<i32>} : memref<1x2x4xf32, #tpu.memory_space<vmem>>, vector<1x1x4xf32>,
    return
  }
  func.func @transform_0(%arg0: i32) -> (i32, i32, i32, i32) {
    %c0_i32 = arith.constant 0 : i32
    %c0_i32_0 = arith.constant 0 : i32
    %c0_i32_1 = arith.constant 0 : i32
    %c0_i32_2 = arith.constant 0 : i32
    return %arg0, %c0_i32, %c0_i32_0, %c0_i32_1 : i32, i32, i32, i32
  }
  func.func @transform_1(%arg0: i32) -> (i32, i32) {
    %c0_i32 = arith.constant 0 : i32
    %c0_i32_0 = arith.constant 0 : i32
    %c0_i32_1 = arith.constant 0 : i32
    return %c0_i32, %c0_i32_0 : i32, i32
  }
  func.func @transform_2(%arg0: i32) -> (i32, i32) {
    %c0_i32 = arith.constant 0 : i32
    %c0_i32_0 = arith.constant 0 : i32
    %c0_i32_1 = arith.constant 0 : i32
    return %c0_i32, %c0_i32_0 : i32, i32
  }
  func.func @transform_3(%arg0: i32) -> (i32, i32) {
    %c0_i32 = arith.constant 0 : i32
    %c0_i32_0 = arith.constant 0 : i32
    %c0_i32_1 = arith.constant 0 : i32
    return %c0_i32, %c0_i32_0 : i32, i32
  }
  func.func @transform_4(%arg0: i32) -> (i32, i32, i32, i32) {
    %c0_i32 = arith.constant 0 : i32
    %c0_i32_0 = arith.constant 0 : i32
    %c0_i32_1 = arith.constant 0 : i32
    %c0_i32_2 = arith.constant 0 : i32
    return %arg0, %c0_i32, %c0_i32_0, %c0_i32_1 : i32, i32, i32, i32
  }
  func.func @transform_5(%arg0: i32) -> (i32, i32, i32) {
    %c0_i32 = arith.constant 0 : i32
    %c0_i32_0 = arith.constant 0 : i32
    %c0_i32_1 = arith.constant 0 : i32
    return %arg0, %c0_i32, %c0_i32_0 : i32, i32, i32
  }
}

module attributes {stable_mosaic.version = 11 : i64} {
  func.func @bn_add_relu_kernel(%arg0: i32, %arg1: memref<1x16x16x4xbf16, #tpu.memory_space<vmem>>, %arg2: memref<1x4xf32, #tpu.memory_space<vmem>>, %arg3: memref<1x4xf32, #tpu.memory_space<vmem>>, %arg4: memref<1x16x16x4xbf16, #tpu.memory_space<vmem>>, %arg5: memref<1x16x16x4xf32, #tpu.memory_space<vmem>>) attributes {dimension_semantics = [#tpu.dimension_semantics<parallel>], iteration_bounds = array<i64: 2>, scalar_prefetch = 0 : i64, scratch_operands = 0 : i64, tpu.core_type = #tpu.core_type<tc>, window_params = [{transform_indices = @transform_0, window_bounds = array<i64: 1, 16, 16, 4>}, {pipeline_mode = #tpu.pipeline_mode<synchronous>, transform_indices = @transform_1, window_bounds = array<i64: 1, 4>}, {pipeline_mode = #tpu.pipeline_mode<synchronous>, transform_indices = @transform_2, window_bounds = array<i64: 1, 4>}, {transform_indices = @transform_3, window_bounds = array<i64: 1, 16, 16, 4>}, {transform_indices = @transform_4, window_bounds = array<i64: 1, 16, 16, 4>}]} {
    %c0 = arith.constant 0 : index
    %c0_0 = arith.constant 0 : index
    %c0_1 = arith.constant 0 : index
    %c0_2 = arith.constant 0 : index
    %0 = vector.load %arg1[%c0, %c0_0, %c0_1, %c0_2] : memref<1x16x16x4xbf16, #tpu.memory_space<vmem>>, vector<1x16x16x4xbf16>
    %1 = arith.extf %0 : vector<1x16x16x4xbf16> to vector<1x16x16x4xf32>
    %c0_3 = arith.constant 0 : index
    %c0_4 = arith.constant 0 : index
    %2 = vector.load %arg2[%c0_3, %c0_4] : memref<1x4xf32, #tpu.memory_space<vmem>>, vector<1x4xf32>
    %3 = vector.shape_cast %2 : vector<1x4xf32> to vector<1x1x1x4xf32>
    %4 = vector.broadcast %3 : vector<1x1x1x4xf32> to vector<1x16x16x4xf32>
    %5 = arith.mulf %1, %4 : vector<1x16x16x4xf32>
    %c0_5 = arith.constant 0 : index
    %c0_6 = arith.constant 0 : index
    %6 = vector.load %arg3[%c0_5, %c0_6] : memref<1x4xf32, #tpu.memory_space<vmem>>, vector<1x4xf32>
    %7 = vector.shape_cast %6 : vector<1x4xf32> to vector<1x1x1x4xf32>
    %8 = vector.broadcast %7 : vector<1x1x1x4xf32> to vector<1x16x16x4xf32>
    %9 = arith.addf %5, %8 : vector<1x16x16x4xf32>
    %c0_7 = arith.constant 0 : index
    %c0_8 = arith.constant 0 : index
    %c0_9 = arith.constant 0 : index
    %c0_10 = arith.constant 0 : index
    %10 = vector.load %arg4[%c0_7, %c0_8, %c0_9, %c0_10] : memref<1x16x16x4xbf16, #tpu.memory_space<vmem>>, vector<1x16x16x4xbf16>
    %11 = arith.extf %10 : vector<1x16x16x4xbf16> to vector<1x16x16x4xf32>
    %12 = arith.addf %9, %11 : vector<1x16x16x4xf32>
    %cst = arith.constant 0.000000e+00 : f32
    %13 = vector.broadcast %cst : f32 to vector<1x16x16x4xf32>
    %14 = arith.maximumf %12, %13 : vector<1x16x16x4xf32>
    %c0_11 = arith.constant 0 : index
    %c0_12 = arith.constant 0 : index
    %c0_13 = arith.constant 0 : index
    %c0_14 = arith.constant 0 : index
    %15 = vector.load %arg5[%c0_11, %c0_12, %c0_13, %c0_14] : memref<1x16x16x4xf32, #tpu.memory_space<vmem>>, vector<1x16x16x4xf32>
    tpu.vector_store %arg5[%c0_11, %c0_12, %c0_13, %c0_14], %14 {strides = array<i32>} : memref<1x16x16x4xf32, #tpu.memory_space<vmem>>, vector<1x16x16x4xf32>,
    return
  }
  func.func @transform_0(%arg0: i32) -> (i32, i32, i32, i32) {
    %c0_i32 = arith.constant 0 : i32
    %c0_i32_0 = arith.constant 0 : i32
    %c0_i32_1 = arith.constant 0 : i32
    %c0_i32_2 = arith.constant 0 : i32
    return %arg0, %c0_i32, %c0_i32_0, %c0_i32_1 : i32, i32, i32, i32
  }
  func.func @transform_1(%arg0: i32) -> (i32, i32) {
    %c0_i32 = arith.constant 0 : i32
    %c0_i32_0 = arith.constant 0 : i32
    %c0_i32_1 = arith.constant 0 : i32
    return %c0_i32, %c0_i32_0 : i32, i32
  }
  func.func @transform_2(%arg0: i32) -> (i32, i32) {
    %c0_i32 = arith.constant 0 : i32
    %c0_i32_0 = arith.constant 0 : i32
    %c0_i32_1 = arith.constant 0 : i32
    return %c0_i32, %c0_i32_0 : i32, i32
  }
  func.func @transform_3(%arg0: i32) -> (i32, i32, i32, i32) {
    %c0_i32 = arith.constant 0 : i32
    %c0_i32_0 = arith.constant 0 : i32
    %c0_i32_1 = arith.constant 0 : i32
    %c0_i32_2 = arith.constant 0 : i32
    return %arg0, %c0_i32, %c0_i32_0, %c0_i32_1 : i32, i32, i32, i32
  }
  func.func @transform_4(%arg0: i32) -> (i32, i32, i32, i32) {
    %c0_i32 = arith.constant 0 : i32
    %c0_i32_0 = arith.constant 0 : i32
    %c0_i32_1 = arith.constant 0 : i32
    %c0_i32_2 = arith.constant 0 : i32
    return %arg0, %c0_i32, %c0_i32_0, %c0_i32_1 : i32, i32, i32, i32
  }
}

</mosaic_0001>

<llo_original>
// kernel: residual_block.5
$region0: #{residual_block.5}
  #allocation0 [shape = 'u32[]', space=smem, size = 0x4, offset = 0x4, fixed_abs, tag = 'smem constant byte address 0x4 - core index']
  #allocation1 [shape = 'u32[72,128]{1,0:T(1,128)}', space=vmem, size = 0x9000, scoped, tag = 'internal scratch']
  %s0 = inlined_call_operand.vmem [shape: bf16[2,16,16,4], index: 0, kind: input, shape index: {}]
  %s1 = inlined_call_operand.vmem [shape: f32[1,4], index: 1, kind: input, shape index: {}]
  %s2 = inlined_call_operand.vmem [shape: f32[1,4], index: 2, kind: input, shape index: {}]
  %s3 = inlined_call_operand.vmem [shape: bf16[2,16,16,4], index: 3, kind: input, shape index: {}]
  %s4 = inlined_call_operand.vmem [shape: f32[2,16,16,4], index: 4, kind: output, shape index: {}]
  %s5 = sld [smem:[#allocation0]]
  $region49: #{residual_block.5} parent=0
    _
  %s7 = ssub.s32 1, %s5
  %s8 = scalar_select 0, %s7, %s5
  loop: start=0, step=1, limit=4
  $region2: #{residual_block.5} parent=0 // loop_pre_header
    _
  $region3: #{residual_block.5} parent=0 // loop_header
    %s10 = sphi 0, %s14
    %p11 = scmp.ge.s32.totalorder %s10, 4
    %s20 = sphi 0, %s22
    %s23 = sphi 0, %s20
    %s24 = sphi 0, %s23
    %s40 = sphi 0, %s24
    %s44 = sphi 0, %s44
    %s46 = sphi 0, %s44
    %s47 = sphi 0, %s46
    %s61 = sphi 0, %s47
    %s65 = sphi 0, %s65
    %s67 = sphi 0, %s65
    %s68 = sphi 0, %s67
    %s82 = sphi 0, %s68
    %s88 = sphi 0, %s90
    %s91 = sphi 0, %s88
    %s92 = sphi 0, %s91
    %s108 = sphi 0, %s92
    %s114 = sphi 0, %s116
    %s117 = sphi 0, %s114
    %s118 = sphi 0, %s117
    %s134 = sphi 0, %s118
  $region4: #{residual_block.5} parent=0 // loop_header_branch
    %13 = sbr.rel (%p11) target = $region8
  $region5: #{residual_block.5} parent=0 // loop_body
    %s15 = ssub.s32 %s10, 1
    %s16 = ssub.s32 %s10, 2
    %s17 = sadd.s32 %s10, 1
    %s18 = ssub.s32 %s10, %s17
    %p19 = scmp.eq.s32.totalorder %s18, 0
    %s21 = sadd.s32 %s20, 1
    %s22 = scalar_select %p19, %s20, %s21
    %p25 = pneg %p19
    %p26 = scmp.eq.s32.totalorder %s10, 1
    %p27 = por %p25, %p26
    %p28 = scmp.ne.s32.totalorder %s20, %s23
    %p29 = scmp.eq.s32.totalorder %s10, 0
    %p30 = por %p28, %p29
    %p31 = scmp.ne.s32.totalorder %s20, %s23
    %p32 = scmp.eq.s32.totalorder %s15, 1
    %p33 = por %p31, %p32
    %p34 = scmp.ne.s32.totalorder %s23, %s24
    %p35 = scmp.eq.s32.totalorder %s15, 0
    %p36 = por %p34, %p35
    %p37 = scmp.ne.s32.totalorder %s23, %s24
    %p38 = scmp.eq.s32.totalorder %s16, 1
    %p39 = por %p37, %p38
    %p41 = scmp.ne.s32.totalorder %s24, %s40
    %p42 = scmp.eq.s32.totalorder %s16, 0
    %p43 = por %p41, %p42
    %s45 = sadd.s32 %s44, 1
    %p48 = scmp.eq.s32.totalorder %s10, 1
    %p49 = scmp.ne.s32.totalorder %s44, %s46
    %p50 = scmp.eq.s32.totalorder %s10, 0
    %p51 = por %p49, %p50
    %p52 = scmp.ne.s32.totalorder %s44, %s46
    %p53 = scmp.eq.s32.totalorder %s15, 1
    %p54 = por %p52, %p53
    %p55 = scmp.ne.s32.totalorder %s46, %s47
    %p56 = scmp.eq.s32.totalorder %s15, 0
    %p57 = por %p55, %p56
    %p58 = scmp.ne.s32.totalorder %s46, %s47
    %p59 = scmp.eq.s32.totalorder %s16, 1
    %p60 = por %p58, %p59
    %p62 = scmp.ne.s32.totalorder %s47, %s61
    %p63 = scmp.eq.s32.totalorder %s16, 0
    %p64 = por %p62, %p63
    %s66 = sadd.s32 %s65, 1
    %p69 = scmp.eq.s32.totalorder %s10, 1
    %p70 = scmp.ne.s32.totalorder %s65, %s67
    %p71 = scmp.eq.s32.totalorder %s10, 0
    %p72 = por %p70, %p71
    %p73 = scmp.ne.s32.totalorder %s65, %s67
    %p74 = scmp.eq.s32.totalorder %s15, 1
    %p75 = por %p73, %p74
    %p76 = scmp.ne.s32.totalorder %s67, %s68
    %p77 = scmp.eq.s32.totalorder %s15, 0
    %p78 = por %p76, %p77
    %p79 = scmp.ne.s32.totalorder %s67, %s68
    %p80 = scmp.eq.s32.totalorder %s16, 1
    %p81 = por %p79, %p80
    %p83 = scmp.ne.s32.totalorder %s68, %s82
    %p84 = scmp.eq.s32.totalorder %s16, 0
    %p85 = por %p83, %p84
    %s86 = ssub.s32 %s10, %s17
    %p87 = scmp.eq.s32.totalorder %s86, 0
    %s89 = sadd.s32 %s88, 1
    %s90 = scalar_select %p87, %s88, %s89
    %p93 = pneg %p87
    %p94 = scmp.eq.s32.totalorder %s10, 1
    %p95 = por %p93, %p94
    %p96 = scmp.ne.s32.totalorder %s88, %s91
    %p97 = scmp.eq.s32.totalorder %s10, 0
    %p98 = por %p96, %p97
    %p99 = scmp.ne.s32.totalorder %s88, %s91
    %p100 = scmp.eq.s32.totalorder %s15, 1
    %p101 = por %p99, %p100
    %p102 = scmp.ne.s32.totalorder %s91, %s92
    %p103 = scmp.eq.s32.totalorder %s15, 0
    %p104 = por %p102, %p103
    %p105 = scmp.ne.s32.totalorder %s91, %s92
    %p106 = scmp.eq.s32.totalorder %s16, 1
    %p107 = por %p105, %p106
    %p109 = scmp.ne.s32.totalorder %s92, %s108
    %p110 = scmp.eq.s32.totalorder %s16, 0
    %p111 = por %p109, %p110
    %s112 = ssub.s32 %s10, %s17
    %p113 = scmp.eq.s32.totalorder %s112, 0
    %s115 = sadd.s32 %s114, 1
    %s116 = scalar_select %p113, %s114, %s115
    %p119 = pneg %p113
    %p120 = scmp.eq.s32.totalorder %s10, 1
    %p121 = por %p119, %p120
    %p122 = scmp.ne.s32.totalorder %s114, %s117
    %p123 = scmp.eq.s32.totalorder %s10, 0
    %p124 = por %p122, %p123
    %p125 = scmp.ne.s32.totalorder %s114, %s117
    %p126 = scmp.eq.s32.totalorder %s15, 1
    %p127 = por %p125, %p126
    %p128 = scmp.ne.s32.totalorder %s117, %s118
    %p129 = scmp.eq.s32.totalorder %s15, 0
    %p130 = por %p128, %p129
    %p131 = scmp.ne.s32.totalorder %s117, %s118
    %p132 = scmp.eq.s32.totalorder %s16, 1
    %p133 = por %p131, %p132
    %p135 = scmp.ne.s32.totalorder %s118, %s134
    %p136 = scmp.eq.s32.totalorder %s16, 0
    %p137 = por %p135, %p136
    %p138 = scmp.le.s32.totalorder 1, %s10
    %p139 = scmp.lt.s32.totalorder %s10, 3
    %p140 = pnand %p138, %p139
    %p141 = pneg %p140
    // Predicated region
    $region9: #{residual_block.5} parent=5 // pred_check
      _
    $region10: #{residual_block.5} parent=5 // pred_check_branch
      %143 = sbr.rel (%p140) target = $region12
    $region11: #{residual_block.5} parent=5 // pred_region
      %s144 = ssub.s32 %s10, 1
      // Predicated region
      $region13: #{residual_block.5} parent=11 // pred_check
        %p145 = pneg %p57
      $region14: #{residual_block.5} parent=11 // pred_check_branch
        %147 = sbr.rel (%p145) target = $region16
      $region15: #{residual_block.5} parent=11 // pred_region
        _
      $region16: #{residual_block.5} parent=11 // pred_fallthru
        _
      // Predicated region
      $region17: #{residual_block.5} parent=11 // pred_check
        %p148 = pneg %p78
      $region18: #{residual_block.5} parent=11 // pred_check_branch
        %150 = sbr.rel (%p148) target = $region20
      $region19: #{residual_block.5} parent=11 // pred_region
        _
      $region20: #{residual_block.5} parent=11 // pred_fallthru
        _
    $region12: #{residual_block.5} parent=5 // pred_fallthru
      _
    %p151 = scmp.lt.s32.totalorder %s10, 2
    // Predicated region
    $region21: #{residual_block.5} parent=5 // pred_check
      %p152 = pneg %p151
    $region22: #{residual_block.5} parent=5 // pred_check_branch
      %154 = sbr.rel (%p152) target = $region24
    $region23: #{residual_block.5} parent=5 // pred_region
      // Predicated region
      $region25: #{residual_block.5} parent=23 // pred_check
        %p155 = pneg %p30
      $region26: #{residual_block.5} parent=23 // pred_check_branch
        %157 = sbr.rel (%p155) target = $region28
      $region27: #{residual_block.5} parent=23 // pred_region
        %p158 = scmp.lt.s32.totalorder %s10, 1
        %s159 = scalar_select %p158, %s10, 1
        %s160 = smul.addr %s159, 32
        %s161 = smul.addr %s160, 4
        %s162 = scalar_lea.vmem %s0, %s161
      $region28: #{residual_block.5} parent=23 // pred_fallthru
        _
      // Predicated region
      $region29: #{residual_block.5} parent=23 // pred_check
        %p163 = pneg %p98
      $region30: #{residual_block.5} parent=23 // pred_check_branch
        %165 = sbr.rel (%p163) target = $region32
      $region31: #{residual_block.5} parent=23 // pred_region
        %p166 = scmp.lt.s32.totalorder %s10, 1
        %s167 = scalar_select %p166, %s10, 1
        %s168 = smul.addr %s167, 32
        %s169 = smul.addr %s168, 4
        %s170 = scalar_lea.vmem %s3, %s169
      $region32: #{residual_block.5} parent=23 // pred_fallthru
        _
    $region24: #{residual_block.5} parent=5 // pred_fallthru
      _
    %p171 = scmp.le.s32.totalorder 1, %s10
    %p172 = scmp.lt.s32.totalorder %s10, 3
    %p173 = pnand %p171, %p172
    %p174 = pneg %p173
    // Predicated region
    $region33: #{residual_block.5} parent=5 // pred_check
      _
    $region34: #{residual_block.5} parent=5 // pred_check_branch
      %176 = sbr.rel (%p173) target = $region36
    $region35: #{residual_block.5} parent=5 // pred_region
      %s177 = ssub.s32 %s10, 1
      %p178 = scmp.lt.s32.totalorder %s15, 1
      %s179 = scalar_select %p178, %s15, 1
      %s180 = smul.addr %s179, 32
      %s181 = smul.addr %s180, 4
      %s182 = scalar_lea.vmem %s0, %s181
      %p183 = pneg %p36
      %p184 = pneg %p33
      %p185 = pneg %p57
      %p186 = pneg %p54
      %p187 = pneg %p78
      %p188 = pneg %p75
      %p189 = scmp.lt.s32.totalorder %s15, 1
      %s190 = scalar_select %p189, %s15, 1
      %s191 = smul.addr %s190, 32
      %s192 = smul.addr %s191, 4
      %s193 = scalar_lea.vmem %s3, %s192
      %p194 = pneg %p104
      %p195 = pneg %p101
      %p196 = pneg %p130
      %p197 = pneg %p127
      %p198 = scmp.lt.s32.totalorder %s15, 1
      %s199 = scalar_select %p198, %s15, 1
      %s200 = smul.addr %s199, 32
      %s201 = smul.addr %s200, 8
      %s202 = scalar_lea.vmem %s4, %s201
      %p203 = scmp.lt.s32.totalorder %s15, 1
      %s204 = scalar_select %p203, %s15, 1
      %s205 = smul.addr %s204, 32
      %s206 = smul.addr %s205, 4
      %s207 = scalar_lea.vmem %s0, %s206
      %p208 = scmp.lt.s32.totalorder %s15, 1
      %s209 = scalar_select %p208, %s15, 1
      %s210 = smul.addr %s209, 32
      %s211 = smul.addr %s210, 4
      %s212 = scalar_lea.vmem %s3, %s211
      %p213 = scmp.lt.s32.totalorder %s15, 1
      %s214 = scalar_select %p213, %s15, 1
      %s215 = smul.addr %s214, 32
      %s216 = smul.addr %s215, 8
      %s217 = scalar_lea.vmem %s4, %s216
      %v218 = vld [vmem:[%s207] sm:$0xf]
      %v219 = vld [vmem:[%s207 + $0x4] sm:$0xf]
      %v220 = vld [vmem:[%s207 + $0x8] sm:$0xf]
      %v221 = vld [vmem:[%s207 + $0xc] sm:$0xf]
      %v222 = vld [vmem:[%s207 + $0x10] sm:$0xf]
      %v223 = vld [vmem:[%s207 + $0x14] sm:$0xf]
      %v224 = vld [vmem:[%s207 + $0x18] sm:$0xf]
      %v225 = vld [vmem:[%s207 + $0x1c] sm:$0xf]
      %v226 = vld [vmem:[%s207 + $0x20] sm:$0xf]
      %v227 = vld [vmem:[%s207 + $0x24] sm:$0xf]
      %v228 = vld [vmem:[%s207 + $0x28] sm:$0xf]
      %v229 = vld [vmem:[%s207 + $0x2c] sm:$0xf]
      %v230 = vld [vmem:[%s207 + $0x30] sm:$0xf]
      %v231 = vld [vmem:[%s207 + $0x34] sm:$0xf]
      %v232 = vld [vmem:[%s207 + $0x38] sm:$0xf]
      %v233 = vld [vmem:[%s207 + $0x3c] sm:$0xf]
      %v234 = vld [vmem:[%s207 + $0x40] sm:$0xf]
      %v235 = vld [vmem:[%s207 + $0x44] sm:$0xf]
      %v236 = vld [vmem:[%s207 + $0x48] sm:$0xf]
      %v237 = vld [vmem:[%s207 + $0x4c] sm:$0xf]
      %v238 = vld [vmem:[%s207 + $0x50] sm:$0xf]
      %v239 = vld [vmem:[%s207 + $0x54] sm:$0xf]
      %v240 = vld [vmem:[%s207 + $0x58] sm:$0xf]
      %v241 = vld [vmem:[%s207 + $0x5c] sm:$0xf]
      %v242 = vld [vmem:[%s207 + $0x60] sm:$0xf]
      %v243 = vld [vmem:[%s207 + $0x64] sm:$0xf]
      %v244 = vld [vmem:[%s207 + $0x68] sm:$0xf]
      %v245 = vld [vmem:[%s207 + $0x6c] sm:$0xf]
      %v246 = vld [vmem:[%s207 + $0x70] sm:$0xf]
      %v247 = vld [vmem:[%s207 + $0x74] sm:$0xf]
      %v248 = vld [vmem:[%s207 + $0x78] sm:$0xf]
      %v249 = vld [vmem:[%s207 + $0x7c] sm:$0xf]
      %v250 = vunpack.c.l.bf16 %v218
      %v251 = vunpack.c.l.bf16 %v219
      %v252 = vunpack.c.l.bf16 %v220
      %v253 = vunpack.c.l.bf16 %v221
      %v254 = vunpack.c.l.bf16 %v222
      %v255 = vunpack.c.l.bf16 %v223
      %v256 = vunpack.c.l.bf16 %v224
      %v257 = vunpack.c.l.bf16 %v225
      %v258 = vunpack.c.l.bf16 %v226
      %v259 = vunpack.c.l.bf16 %v227
      %v260 = vunpack.c.l.bf16 %v228
      %v261 = vunpack.c.l.bf16 %v229
      %v262 = vunpack.c.l.bf16 %v230
      %v263 = vunpack.c.l.bf16 %v231
      %v264 = vunpack.c.l.bf16 %v232
      %v265 = vunpack.c.l.bf16 %v233
      %v266 = vunpack.c.l.bf16 %v234
      %v267 = vunpack.c.l.bf16 %v235
      %v268 = vunpack.c.l.bf16 %v236
      %v269 = vunpack.c.l.bf16 %v237
      %v270 = vunpack.c.l.bf16 %v238
      %v271 = vunpack.c.l.bf16 %v239
      %v272 = vunpack.c.l.bf16 %v240
      %v273 = vunpack.c.l.bf16 %v241
      %v274 = vunpack.c.l.bf16 %v242
      %v275 = vunpack.c.l.bf16 %v243
      %v276 = vunpack.c.l.bf16 %v244
      %v277 = vunpack.c.l.bf16 %v245
      %v278 = vunpack.c.l.bf16 %v246
      %v279 = vunpack.c.l.bf16 %v247
      %v280 = vunpack.c.l.bf16 %v248
      %v281 = vunpack.c.l.bf16 %v249
      %v282 = vld [vmem:[%s1] sm:$0x1]
      %v284 = vperm.slane %v282, 0
      %v286 = vmul.f32 %v250, %v284
      %v287 = vmul.f32 %v251, %v284
      %v288 = vmul.f32 %v252, %v284
      %v289 = vmul.f32 %v253, %v284
      %v290 = vmul.f32 %v254, %v284
      %v291 = vmul.f32 %v255, %v284
      %v292 = vmul.f32 %v256, %v284
      %v293 = vmul.f32 %v257, %v284
      %v294 = vmul.f32 %v258, %v284
      %v295 = vmul.f32 %v259, %v284
      %v296 = vmul.f32 %v260, %v284
      %v297 = vmul.f32 %v261, %v284
      %v298 = vmul.f32 %v262, %v284
      %v299 = vmul.f32 %v263, %v284
      %v300 = vmul.f32 %v264, %v284
      %v301 = vmul.f32 %v265, %v284
      %v302 = vmul.f32 %v266, %v284
      %v303 = vmul.f32 %v267, %v284
      %v304 = vmul.f32 %v268, %v284
      %v305 = vmul.f32 %v269, %v284
      %v306 = vmul.f32 %v270, %v284
      %v307 = vmul.f32 %v271, %v284
      %v308 = vmul.f32 %v272, %v284
      %v309 = vmul.f32 %v273, %v284
      %v310 = vmul.f32 %v274, %v284
      %v311 = vmul.f32 %v275, %v284
      %v312 = vmul.f32 %v276, %v284
      %v313 = vmul.f32 %v277, %v284
      %v314 = vmul.f32 %v278, %v284
      %v315 = vmul.f32 %v279, %v284
      %v316 = vmul.f32 %v280, %v284
      %v317 = vmul.f32 %v281, %v284
      %v318 = vld [vmem:[%s2] sm:$0x1]
      %v320 = vperm.slane %v318, 0
      %v322 = vadd.f32 %v286, %v320
      %v323 = vadd.f32 %v287, %v320
      %v324 = vadd.f32 %v288, %v320
      %v325 = vadd.f32 %v289, %v320
      %v326 = vadd.f32 %v290, %v320
      %v327 = vadd.f32 %v291, %v320
      %v328 = vadd.f32 %v292, %v320
      %v329 = vadd.f32 %v293, %v320
      %v330 = vadd.f32 %v294, %v320
      %v331 = vadd.f32 %v295, %v320
      %v332 = vadd.f32 %v296, %v320
      %v333 = vadd.f32 %v297, %v320
      %v334 = vadd.f32 %v298, %v320
      %v335 = vadd.f32 %v299, %v320
      %v336 = vadd.f32 %v300, %v320
      %v337 = vadd.f32 %v301, %v320
      %v338 = vadd.f32 %v302, %v320
      %v339 = vadd.f32 %v303, %v320
      %v340 = vadd.f32 %v304, %v320
      %v341 = vadd.f32 %v305, %v320
      %v342 = vadd.f32 %v306, %v320
      %v343 = vadd.f32 %v307, %v320
      %v344 = vadd.f32 %v308, %v320
      %v345 = vadd.f32 %v309, %v320
      %v346 = vadd.f32 %v310, %v320
      %v347 = vadd.f32 %v311, %v320
      %v348 = vadd.f32 %v312, %v320
      %v349 = vadd.f32 %v313, %v320
      %v350 = vadd.f32 %v314, %v320
      %v351 = vadd.f32 %v315, %v320
      %v352 = vadd.f32 %v316, %v320
      %v353 = vadd.f32 %v317, %v320
      %v354 = vld [vmem:[%s212] sm:$0xf]
      %v355 = vld [vmem:[%s212 + $0x4] sm:$0xf]
      %v356 = vld [vmem:[%s212 + $0x8] sm:$0xf]
      %v357 = vld [vmem:[%s212 + $0xc] sm:$0xf]
      %v358 = vld [vmem:[%s212 + $0x10] sm:$0xf]
      %v359 = vld [vmem:[%s212 + $0x14] sm:$0xf]
      %v360 = vld [vmem:[%s212 + $0x18] sm:$0xf]
      %v361 = vld [vmem:[%s212 + $0x1c] sm:$0xf]
      %v362 = vld [vmem:[%s212 + $0x20] sm:$0xf]
      %v363 = vld [vmem:[%s212 + $0x24] sm:$0xf]
      %v364 = vld [vmem:[%s212 + $0x28] sm:$0xf]
      %v365 = vld [vmem:[%s212 + $0x2c] sm:$0xf]
      %v366 = vld [vmem:[%s212 + $0x30] sm:$0xf]
      %v367 = vld [vmem:[%s212 + $0x34] sm:$0xf]
      %v368 = vld [vmem:[%s212 + $0x38] sm:$0xf]
      %v369 = vld [vmem:[%s212 + $0x3c] sm:$0xf]
      %v370 = vld [vmem:[%s212 + $0x40] sm:$0xf]
      %v371 = vld [vmem:[%s212 + $0x44] sm:$0xf]
      %v372 = vld [vmem:[%s212 + $0x48] sm:$0xf]
      %v373 = vld [vmem:[%s212 + $0x4c] sm:$0xf]
      %v374 = vld [vmem:[%s212 + $0x50] sm:$0xf]
      %v375 = vld [vmem:[%s212 + $0x54] sm:$0xf]
      %v376 = vld [vmem:[%s212 + $0x58] sm:$0xf]
      %v377 = vld [vmem:[%s212 + $0x5c] sm:$0xf]
      %v378 = vld [vmem:[%s212 + $0x60] sm:$0xf]
      %v379 = vld [vmem:[%s212 + $0x64] sm:$0xf]
      %v380 = vld [vmem:[%s212 + $0x68] sm:$0xf]
      %v381 = vld [vmem:[%s212 + $0x6c] sm:$0xf]
      %v382 = vld [vmem:[%s212 + $0x70] sm:$0xf]
      %v383 = vld [vmem:[%s212 + $0x74] sm:$0xf]
      %v384 = vld [vmem:[%s212 + $0x78] sm:$0xf]
      %v385 = vld [vmem:[%s212 + $0x7c] sm:$0xf]
      %v386 = vunpack.c.l.bf16 %v354
      %v387 = vunpack.c.l.bf16 %v355
      %v388 = vunpack.c.l.bf16 %v356
      %v389 = vunpack.c.l.bf16 %v357
      %v390 = vunpack.c.l.bf16 %v358
      %v391 = vunpack.c.l.bf16 %v359
      %v392 = vunpack.c.l.bf16 %v360
      %v393 = vunpack.c.l.bf16 %v361
      %v394 = vunpack.c.l.bf16 %v362
      %v395 = vunpack.c.l.bf16 %v363
      %v396 = vunpack.c.l.bf16 %v364
      %v397 = vunpack.c.l.bf16 %v365
      %v398 = vunpack.c.l.bf16 %v366
      %v399 = vunpack.c.l.bf16 %v367
      %v400 = vunpack.c.l.bf16 %v368
      %v401 = vunpack.c.l.bf16 %v369
      %v402 = vunpack.c.l.bf16 %v370
      %v403 = vunpack.c.l.bf16 %v371
      %v404 = vunpack.c.l.bf16 %v372
      %v405 = vunpack.c.l.bf16 %v373
      %v406 = vunpack.c.l.bf16 %v374
      %v407 = vunpack.c.l.bf16 %v375
      %v408 = vunpack.c.l.bf16 %v376
      %v409 = vunpack.c.l.bf16 %v377
      %v410 = vunpack.c.l.bf16 %v378
      %v411 = vunpack.c.l.bf16 %v379
      %v412 = vunpack.c.l.bf16 %v380
      %v413 = vunpack.c.l.bf16 %v381
      %v414 = vunpack.c.l.bf16 %v382
      %v415 = vunpack.c.l.bf16 %v383
      %v416 = vunpack.c.l.bf16 %v384
      %v417 = vunpack.c.l.bf16 %v385
      %v418 = vadd.f32 %v322, %v386
      %v419 = vadd.f32 %v323, %v387
      %v420 = vadd.f32 %v324, %v388
      %v421 = vadd.f32 %v325, %v389
      %v422 = vadd.f32 %v326, %v390
      %v423 = vadd.f32 %v327, %v391
      %v424 = vadd.f32 %v328, %v392
      %v425 = vadd.f32 %v329, %v393
      %v426 = vadd.f32 %v330, %v394
      %v427 = vadd.f32 %v331, %v395
      %v428 = vadd.f32 %v332, %v396
      %v429 = vadd.f32 %v333, %v397
      %v430 = vadd.f32 %v334, %v398
      %v431 = vadd.f32 %v335, %v399
      %v432 = vadd.f32 %v336, %v400
      %v433 = vadd.f32 %v337, %v401
      %v434 = vadd.f32 %v338, %v402
      %v435 = vadd.f32 %v339, %v403
      %v436 = vadd.f32 %v340, %v404
      %v437 = vadd.f32 %v341, %v405
      %v438 = vadd.f32 %v342, %v406
      %v439 = vadd.f32 %v343, %v407
      %v440 = vadd.f32 %v344, %v408
      %v441 = vadd.f32 %v345, %v409
      %v442 = vadd.f32 %v346, %v410
      %v443 = vadd.f32 %v347, %v411
      %v444 = vadd.f32 %v348, %v412
      %v445 = vadd.f32 %v349, %v413
      %v446 = vadd.f32 %v350, %v414
      %v447 = vadd.f32 %v351, %v415
      %v448 = vadd.f32 %v352, %v416
      %v449 = vadd.f32 %v353, %v417
      %v450 = vmax.f32 %v418, 0.0
      %v451 = vmax.f32 %v419, 0.0
      %v452 = vmax.f32 %v420, 0.0
      %v453 = vmax.f32 %v421, 0.0
      %v454 = vmax.f32 %v422, 0.0
      %v455 = vmax.f32 %v423, 0.0
      %v456 = vmax.f32 %v424, 0.0
      %v457 = vmax.f32 %v425, 0.0
      %v458 = vmax.f32 %v426, 0.0
      %v459 = vmax.f32 %v427, 0.0
      %v460 = vmax.f32 %v428, 0.0
      %v461 = vmax.f32 %v429, 0.0
      %v462 = vmax.f32 %v430, 0.0
      %v463 = vmax.f32 %v431, 0.0
      %v464 = vmax.f32 %v432, 0.0
      %v465 = vmax.f32 %v433, 0.0
      %v466 = vmax.f32 %v434, 0.0
      %v467 = vmax.f32 %v435, 0.0
      %v468 = vmax.f32 %v436, 0.0
      %v469 = vmax.f32 %v437, 0.0
      %v470 = vmax.f32 %v438, 0.0
      %v471 = vmax.f32 %v439, 0.0
      %v472 = vmax.f32 %v440, 0.0
      %v473 = vmax.f32 %v441, 0.0
      %v474 = vmax.f32 %v442, 0.0
      %v475 = vmax.f32 %v443, 0.0
      %v476 = vmax.f32 %v444, 0.0
      %v477 = vmax.f32 %v445, 0.0
      %v478 = vmax.f32 %v446, 0.0
      %v479 = vmax.f32 %v447, 0.0
      %v480 = vmax.f32 %v448, 0.0
      %v481 = vmax.f32 %v449, 0.0
      %vm482 = vcmask 31744
      %483 = vst.msk [vmem:[%s217] sm:$0xff] %vm482, %v450
      %484 = vst.msk [vmem:[%s217 + $0x8] sm:$0xff] %vm482, %v451
      %485 = vst.msk [vmem:[%s217 + $0x10] sm:$0xff] %vm482, %v452
      %486 = vst.msk [vmem:[%s217 + $0x18] sm:$0xff] %vm482, %v453
      %487 = vst.msk [vmem:[%s217 + $0x20] sm:$0xff] %vm482, %v454
      %488 = vst.msk [vmem:[%s217 + $0x28] sm:$0xff] %vm482, %v455
      %489 = vst.msk [vmem:[%s217 + $0x30] sm:$0xff] %vm482, %v456
      %490 = vst.msk [vmem:[%s217 + $0x38] sm:$0xff] %vm482, %v457
      %491 = vst.msk [vmem:[%s217 + $0x40] sm:$0xff] %vm482, %v458
      %492 = vst.msk [vmem:[%s217 + $0x48] sm:$0xff] %vm482, %v459
      %493 = vst.msk [vmem:[%s217 + $0x50] sm:$0xff] %vm482, %v460
      %494 = vst.msk [vmem:[%s217 + $0x58] sm:$0xff] %vm482, %v461
      %495 = vst.msk [vmem:[%s217 + $0x60] sm:$0xff] %vm482, %v462
      %496 = vst.msk [vmem:[%s217 + $0x68] sm:$0xff] %vm482, %v463
      %497 = vst.msk [vmem:[%s217 + $0x70] sm:$0xff] %vm482, %v464
      %498 = vst.msk [vmem:[%s217 + $0x78] sm:$0xff] %vm482, %v465
      %499 = vst.msk [vmem:[%s217 + $0x80] sm:$0xff] %vm482, %v466
      %500 = vst.msk [vmem:[%s217 + $0x88] sm:$0xff] %vm482, %v467
      %501 = vst.msk [vmem:[%s217 + $0x90] sm:$0xff] %vm482, %v468
      %502 = vst.msk [vmem:[%s217 + $0x98] sm:$0xff] %vm482, %v469
      %503 = vst.msk [vmem:[%s217 + $0xa0] sm:$0xff] %vm482, %v470
      %504 = vst.msk [vmem:[%s217 + $0xa8] sm:$0xff] %vm482, %v471
      %505 = vst.msk [vmem:[%s217 + $0xb0] sm:$0xff] %vm482, %v472
      %506 = vst.msk [vmem:[%s217 + $0xb8] sm:$0xff] %vm482, %v473
      %507 = vst.msk [vmem:[%s217 + $0xc0] sm:$0xff] %vm482, %v474
      %508 = vst.msk [vmem:[%s217 + $0xc8] sm:$0xff] %vm482, %v475
      %509 = vst.msk [vmem:[%s217 + $0xd0] sm:$0xff] %vm482, %v476
      %510 = vst.msk [vmem:[%s217 + $0xd8] sm:$0xff] %vm482, %v477
      %511 = vst.msk [vmem:[%s217 + $0xe0] sm:$0xff] %vm482, %v478
      %512 = vst.msk [vmem:[%s217 + $0xe8] sm:$0xff] %vm482, %v479
      %513 = vst.msk [vmem:[%s217 + $0xf0] sm:$0xff] %vm482, %v480
      %514 = vst.msk [vmem:[%s217 + $0xf8] sm:$0xff] %vm482, %v481
      %p515 = scmp.lt.s32.totalorder %s15, 1
      %s516 = scalar_select %p515, %s15, 1
      %s517 = smul.addr %s516, 32
      %s518 = smul.addr %s517, 8
      %s519 = scalar_lea.vmem %s4, %s518
      // Predicated region
      $region37: #{residual_block.5} parent=35 // pred_check
        %p520 = pneg %p127
      $region38: #{residual_block.5} parent=35 // pred_check_branch
        %522 = sbr.rel (%p520) target = $region40
      $region39: #{residual_block.5} parent=35 // pred_region
        _
      $region40: #{residual_block.5} parent=35 // pred_fallthru
        _
    $region36: #{residual_block.5} parent=5 // pred_fallthru
      _
    %p523 = scmp.le.s32.totalorder 2, %s10
    // Predicated region
    $region41: #{residual_block.5} parent=5 // pred_check
      %p524 = pneg %p523
    $region42: #{residual_block.5} parent=5 // pred_check_branch
      %526 = sbr.rel (%p524) target = $region44
    $region43: #{residual_block.5} parent=5 // pred_region
      %s527 = ssub.s32 %s10, 2
      // Predicated region
      $region45: #{residual_block.5} parent=43 // pred_check
        %p528 = pneg %p133
      $region46: #{residual_block.5} parent=43 // pred_check_branch
        %530 = sbr.rel (%p528) target = $region48
      $region47: #{residual_block.5} parent=43 // pred_region
        %p531 = scmp.lt.s32.totalorder %s16, 1
        %s532 = scalar_select %p531, %s16, 1
        %s533 = smul.addr %s532, 32
        %s534 = smul.addr %s533, 8
        %s535 = scalar_lea.vmem %s4, %s534
      $region48: #{residual_block.5} parent=43 // pred_fallthru
        _
    $region44: #{residual_block.5} parent=5 // pred_fallthru
      _
  $region6: #{residual_block.5} parent=0 // loop_footer
    %s14 = sadd.s32 1, %s10
  $region7: #{residual_block.5} parent=0 // loop_footer_branch
    %9 = sbr.rel target = $region3
  $region8: #{residual_block.5} parent=0 // loop_exit
    _

// kernel: residual_block.3
$region0: #{residual_block.3}
  #allocation0 [shape = 'u32[]', space=smem, size = 0x4, offset = 0x4, fixed_abs, tag = 'smem constant byte address 0x4 - core index']
  #allocation1 [shape = 'u32[72,128]{1,0:T(1,128)}', space=vmem, size = 0x9000, scoped, tag = 'internal scratch']
  #allocation2 [shape = 'bf16[1,18,18,4]{3,2,1,0:T(8,128)(2,1)}', space=vmem, size = 0x1b000, scoped, tag = 'scratch operand']
  #allocation3 [shape = 'bf16[256,36]{1,0:T(8,128)(2,1)}', space=vmem, size = 0x10000, scoped, tag = 'scratch operand']
  %s0 = inlined_call_operand.vmem [shape: bf16[2,16,16,4], index: 0, kind: input, shape index: {}]
  %s1 = inlined_call_operand.vmem [shape: f32[1,4], index: 1, kind: input, shape index: {}]
  %s2 = inlined_call_operand.vmem [shape: f32[1,4], index: 2, kind: input, shape index: {}]
  %s3 = inlined_call_operand.vmem [shape: bf16[36,4], index: 3, kind: input, shape index: {}]
  %s4 = inlined_call_operand.vmem [shape: bf16[2,16,16,4], index: 4, kind: output, shape index: {0}]
  %s5 = inlined_call_operand.vmem [shape: f32[2,2,4], index: 5, kind: output, shape index: {1}]
  %6 = xla_tuple %s4, %s5
  %s7 = sld [smem:[#allocation0]]
  $region57: #{residual_block.3} parent=0
    _
  %s9 = ssub.s32 1, %s7
  %s10 = scalar_select 0, %s9, %s7
  loop: start=0, step=1, limit=4
  $region2: #{residual_block.3} parent=0 // loop_pre_header
    _
  $region3: #{residual_block.3} parent=0 // loop_header
    %s12 = sphi 0, %s16
    %p13 = scmp.ge.s32.totalorder %s12, 4
    %s22 = sphi 0, %s24
    %s25 = sphi 0, %s22
    %s26 = sphi 0, %s25
    %s42 = sphi 0, %s26
    %s46 = sphi 0, %s46
    %s48 = sphi 0, %s46
    %s49 = sphi 0, %s48
    %s63 = sphi 0, %s49
    %s67 = sphi 0, %s67
    %s69 = sphi 0, %s67
    %s70 = sphi 0, %s69
    %s84 = sphi 0, %s70
    %s88 = sphi 0, %s88
    %s90 = sphi 0, %s88
    %s91 = sphi 0, %s90
    %s105 = sphi 0, %s91
    %s111 = sphi 0, %s113
    %s114 = sphi 0, %s111
    %s115 = sphi 0, %s114
    %s131 = sphi 0, %s115
    %s137 = sphi 0, %s139
    %s140 = sphi 0, %s137
    %s141 = sphi 0, %s140
    %s157 = sphi 0, %s141
  $region4: #{residual_block.3} parent=0 // loop_header_branch
    %15 = sbr.rel (%p13) target = $region8
  $region5: #{residual_block.3} parent=0 // loop_body
    %s17 = ssub.s32 %s12, 1
    %s18 = ssub.s32 %s12, 2
    %s19 = sadd.s32 %s12, 1
    %s20 = ssub.s32 %s12, %s19
    %p21 = scmp.eq.s32.totalorder %s20, 0
    %s23 = sadd.s32 %s22, 1
    %s24 = scalar_select %p21, %s22, %s23
    %p27 = pneg %p21
    %p28 = scmp.eq.s32.totalorder %s12, 1
    %p29 = por %p27, %p28
    %p30 = scmp.ne.s32.totalorder %s22, %s25
    %p31 = scmp.eq.s32.totalorder %s12, 0
    %p32 = por %p30, %p31
    %p33 = scmp.ne.s32.totalorder %s22, %s25
    %p34 = scmp.eq.s32.totalorder %s17, 1
    %p35 = por %p33, %p34
    %p36 = scmp.ne.s32.totalorder %s25, %s26
    %p37 = scmp.eq.s32.totalorder %s17, 0
    %p38 = por %p36, %p37
    %p39 = scmp.ne.s32.totalorder %s25, %s26
    %p40 = scmp.eq.s32.totalorder %s18, 1
    %p41 = por %p39, %p40
    %p43 = scmp.ne.s32.totalorder %s26, %s42
    %p44 = scmp.eq.s32.totalorder %s18, 0
    %p45 = por %p43, %p44
    %s47 = sadd.s32 %s46, 1
    %p50 = scmp.eq.s32.totalorder %s12, 1
    %p51 = scmp.ne.s32.totalorder %s46, %s48
    %p52 = scmp.eq.s32.totalorder %s12, 0
    %p53 = por %p51, %p52
    %p54 = scmp.ne.s32.totalorder %s46, %s48
    %p55 = scmp.eq.s32.totalorder %s17, 1
    %p56 = por %p54, %p55
    %p57 = scmp.ne.s32.totalorder %s48, %s49
    %p58 = scmp.eq.s32.totalorder %s17, 0
    %p59 = por %p57, %p58
    %p60 = scmp.ne.s32.totalorder %s48, %s49
    %p61 = scmp.eq.s32.totalorder %s18, 1
    %p62 = por %p60, %p61
    %p64 = scmp.ne.s32.totalorder %s49, %s63
    %p65 = scmp.eq.s32.totalorder %s18, 0
    %p66 = por %p64, %p65
    %s68 = sadd.s32 %s67, 1
    %p71 = scmp.eq.s32.totalorder %s12, 1
    %p72 = scmp.ne.s32.totalorder %s67, %s69
    %p73 = scmp.eq.s32.totalorder %s12, 0
    %p74 = por %p72, %p73
    %p75 = scmp.ne.s32.totalorder %s67, %s69
    %p76 = scmp.eq.s32.totalorder %s17, 1
    %p77 = por %p75, %p76
    %p78 = scmp.ne.s32.totalorder %s69, %s70
    %p79 = scmp.eq.s32.totalorder %s17, 0
    %p80 = por %p78, %p79
    %p81 = scmp.ne.s32.totalorder %s69, %s70
    %p82 = scmp.eq.s32.totalorder %s18, 1
    %p83 = por %p81, %p82
    %p85 = scmp.ne.s32.totalorder %s70, %s84
    %p86 = scmp.eq.s32.totalorder %s18, 0
    %p87 = por %p85, %p86
    %s89 = sadd.s32 %s88, 1
    %p92 = scmp.eq.s32.totalorder %s12, 1
    %p93 = scmp.ne.s32.totalorder %s88, %s90
    %p94 = scmp.eq.s32.totalorder %s12, 0
    %p95 = por %p93, %p94
    %p96 = scmp.ne.s32.totalorder %s88, %s90
    %p97 = scmp.eq.s32.totalorder %s17, 1
    %p98 = por %p96, %p97
    %p99 = scmp.ne.s32.totalorder %s90, %s91
    %p100 = scmp.eq.s32.totalorder %s17, 0
    %p101 = por %p99, %p100
    %p102 = scmp.ne.s32.totalorder %s90, %s91
    %p103 = scmp.eq.s32.totalorder %s18, 1
    %p104 = por %p102, %p103
    %p106 = scmp.ne.s32.totalorder %s91, %s105
    %p107 = scmp.eq.s32.totalorder %s18, 0
    %p108 = por %p106, %p107
    %s109 = ssub.s32 %s12, %s19
    %p110 = scmp.eq.s32.totalorder %s109, 0
    %s112 = sadd.s32 %s111, 1
    %s113 = scalar_select %p110, %s111, %s112
    %p116 = pneg %p110
    %p117 = scmp.eq.s32.totalorder %s12, 1
    %p118 = por %p116, %p117
    %p119 = scmp.ne.s32.totalorder %s111, %s114
    %p120 = scmp.eq.s32.totalorder %s12, 0
    %p121 = por %p119, %p120
    %p122 = scmp.ne.s32.totalorder %s111, %s114
    %p123 = scmp.eq.s32.totalorder %s17, 1
    %p124 = por %p122, %p123
    %p125 = scmp.ne.s32.totalorder %s114, %s115
    %p126 = scmp.eq.s32.totalorder %s17, 0
    %p127 = por %p125, %p126
    %p128 = scmp.ne.s32.totalorder %s114, %s115
    %p129 = scmp.eq.s32.totalorder %s18, 1
    %p130 = por %p128, %p129
    %p132 = scmp.ne.s32.totalorder %s115, %s131
    %p133 = scmp.eq.s32.totalorder %s18, 0
    %p134 = por %p132, %p133
    %s135 = ssub.s32 %s12, %s19
    %p136 = scmp.eq.s32.totalorder %s135, 0
    %s138 = sadd.s32 %s137, 1
    %s139 = scalar_select %p136, %s137, %s138
    %p142 = pneg %p136
    %p143 = scmp.eq.s32.totalorder %s12, 1
    %p144 = por %p142, %p143
    %p145 = scmp.ne.s32.totalorder %s137, %s140
    %p146 = scmp.eq.s32.totalorder %s12, 0
    %p147 = por %p145, %p146
    %p148 = scmp.ne.s32.totalorder %s137, %s140
    %p149 = scmp.eq.s32.totalorder %s17, 1
    %p150 = por %p148, %p149
    %p151 = scmp.ne.s32.totalorder %s140, %s141
    %p152 = scmp.eq.s32.totalorder %s17, 0
    %p153 = por %p151, %p152
    %p154 = scmp.ne.s32.totalorder %s140, %s141
    %p155 = scmp.eq.s32.totalorder %s18, 1
    %p156 = por %p154, %p155
    %p158 = scmp.ne.s32.totalorder %s141, %s157
    %p159 = scmp.eq.s32.totalorder %s18, 0
    %p160 = por %p158, %p159
    %p161 = scmp.le.s32.totalorder 1, %s12
    %p162 = scmp.lt.s32.totalorder %s12, 3
    %p163 = pnand %p161, %p162
    %p164 = pneg %p163
    // Predicated region
    $region9: #{residual_block.3} parent=5 // pred_check
      _
    $region10: #{residual_block.3} parent=5 // pred_check_branch
      %166 = sbr.rel (%p163) target = $region12
    $region11: #{residual_block.3} parent=5 // pred_region
      %s167 = ssub.s32 %s12, 1
      // Predicated region
      $region13: #{residual_block.3} parent=11 // pred_check
        %p168 = pneg %p59
      $region14: #{residual_block.3} parent=11 // pred_check_branch
        %170 = sbr.rel (%p168) target = $region16
      $region15: #{residual_block.3} parent=11 // pred_region
        _
      $region16: #{residual_block.3} parent=11 // pred_fallthru
        _
      // Predicated region
      $region17: #{residual_block.3} parent=11 // pred_check
        %p171 = pneg %p80
      $region18: #{residual_block.3} parent=11 // pred_check_branch
        %173 = sbr.rel (%p171) target = $region20
      $region19: #{residual_block.3} parent=11 // pred_region
        _
      $region20: #{residual_block.3} parent=11 // pred_fallthru
        _
      // Predicated region
      $region21: #{residual_block.3} parent=11 // pred_check
        %p174 = pneg %p101
      $region22: #{residual_block.3} parent=11 // pred_check_branch
        %176 = sbr.rel (%p174) target = $region24
      $region23: #{residual_block.3} parent=11 // pred_region
        _
      $region24: #{residual_block.3} parent=11 // pred_fallthru
        _
    $region12: #{residual_block.3} parent=5 // pred_fallthru
      _
    %p177 = scmp.lt.s32.totalorder %s12, 2
    // Predicated region
    $region25: #{residual_block.3} parent=5 // pred_check
      %p178 = pneg %p177
    $region26: #{residual_block.3} parent=5 // pred_check_branch
      %180 = sbr.rel (%p178) target = $region28
    $region27: #{residual_block.3} parent=5 // pred_region
      // Predicated region
      $region29: #{residual_block.3} parent=27 // pred_check
        %p181 = pneg %p32
      $region30: #{residual_block.3} parent=27 // pred_check_branch
        %183 = sbr.rel (%p181) target = $region32
      $region31: #{residual_block.3} parent=27 // pred_region
        %p184 = scmp.lt.s32.totalorder %s12, 1
        %s185 = scalar_select %p184, %s12, 1
        %s186 = smul.addr %s185, 32
        %s187 = smul.addr %s186, 4
        %s188 = scalar_lea.vmem %s0, %s187
      $region32: #{residual_block.3} parent=27 // pred_fallthru
        _
    $region28: #{residual_block.3} parent=5 // pred_fallthru
      _
    %p189 = scmp.le.s32.totalorder 1, %s12
    %p190 = scmp.lt.s32.totalorder %s12, 3
    %p191 = pnand %p189, %p190
    %p192 = pneg %p191
    // Predicated region
    $region33: #{residual_block.3} parent=5 // pred_check
      _
    $region34: #{residual_block.3} parent=5 // pred_check_branch
      %194 = sbr.rel (%p191) target = $region36
    $region35: #{residual_block.3} parent=5 // pred_region
      %s195 = ssub.s32 %s12, 1
      %p196 = scmp.lt.s32.totalorder %s17, 1
      %s197 = scalar_select %p196, %s17, 1
      %s198 = smul.addr %s197, 32
      %s199 = smul.addr %s198, 4
      %s200 = scalar_lea.vmem %s0, %s199
      %p201 = pneg %p38
      %p202 = pneg %p35
      %p203 = pneg %p59
      %p204 = pneg %p56
      %p205 = pneg %p80
      %p206 = pneg %p77
      %p207 = pneg %p101
      %p208 = pneg %p98
      %p209 = pneg %p127
      %p210 = pneg %p124
      %p211 = scmp.lt.s32.totalorder %s17, 1
      %s212 = scalar_select %p211, %s17, 1
      %s213 = smul.addr %s212, 32
      %s214 = smul.addr %s213, 4
      %s215 = scalar_lea.vmem %s4, %s214
      %p216 = pneg %p153
      %p217 = pneg %p150
      %p218 = scmp.lt.s32.totalorder %s17, 1
      %s219 = scalar_select %p218, %s17, 1
      %s220 = smul.addr %s219, 2
      %s221 = scalar_lea.vmem %s5, %s220
      %p222 = scmp.lt.s32.totalorder %s17, 1
      %s223 = scalar_select %p222, %s17, 1
      %s224 = smul.addr %s223, 32
      %s225 = smul.addr %s224, 4
      %s226 = scalar_lea.vmem %s0, %s225
      %p227 = scmp.lt.s32.totalorder %s17, 1
      %s228 = scalar_select %p227, %s17, 1
      %s229 = smul.addr %s228, 32
      %s230 = smul.addr %s229, 4
      %s231 = scalar_lea.vmem %s4, %s230
      %p232 = scmp.lt.s32.totalorder %s17, 1
      %s233 = scalar_select %p232, %s17, 1
      %s234 = smul.addr %s233, 2
      %s235 = scalar_lea.vmem %s5, %s234
      %v237 = vld [vmem:[%s226] sm:$0xf]
      %v238 = vld [vmem:[%s226 + $0x4] sm:$0xf]
      %v239 = vld [vmem:[%s226 + $0x8] sm:$0xf]
      %v240 = vld [vmem:[%s226 + $0xc] sm:$0xf]
      %v241 = vld [vmem:[%s226 + $0x10] sm:$0xf]
      %v242 = vld [vmem:[%s226 + $0x14] sm:$0xf]
      %v243 = vld [vmem:[%s226 + $0x18] sm:$0xf]
      %v244 = vld [vmem:[%s226 + $0x1c] sm:$0xf]
      %v245 = vld [vmem:[%s226 + $0x20] sm:$0xf]
      %v246 = vld [vmem:[%s226 + $0x24] sm:$0xf]
      %v247 = vld [vmem:[%s226 + $0x28] sm:$0xf]
      %v248 = vld [vmem:[%s226 + $0x2c] sm:$0xf]
      %v249 = vld [vmem:[%s226 + $0x30] sm:$0xf]
      %v250 = vld [vmem:[%s226 + $0x34] sm:$0xf]
      %v251 = vld [vmem:[%s226 + $0x38] sm:$0xf]
      %v252 = vld [vmem:[%s226 + $0x3c] sm:$0xf]
      %v253 = vld [vmem:[%s226 + $0x40] sm:$0xf]
      %v254 = vld [vmem:[%s226 + $0x44] sm:$0xf]
      %v255 = vld [vmem:[%s226 + $0x48] sm:$0xf]
      %v256 = vld [vmem:[%s226 + $0x4c] sm:$0xf]
      %v257 = vld [vmem:[%s226 + $0x50] sm:$0xf]
      %v258 = vld [vmem:[%s226 + $0x54] sm:$0xf]
      %v259 = vld [vmem:[%s226 + $0x58] sm:$0xf]
      %v260 = vld [vmem:[%s226 + $0x5c] sm:$0xf]
      %v261 = vld [vmem:[%s226 + $0x60] sm:$0xf]
      %v262 = vld [vmem:[%s226 + $0x64] sm:$0xf]
      %v263 = vld [vmem:[%s226 + $0x68] sm:$0xf]
      %v264 = vld [vmem:[%s226 + $0x6c] sm:$0xf]
      %v265 = vld [vmem:[%s226 + $0x70] sm:$0xf]
      %v266 = vld [vmem:[%s226 + $0x74] sm:$0xf]
      %v267 = vld [vmem:[%s226 + $0x78] sm:$0xf]
      %v268 = vld [vmem:[%s226 + $0x7c] sm:$0xf]
      %vm269 = vcmask 27648
      %270 = vst.msk [vmem:[#allocation2] sm:$0xf] %vm269, 0
      %271 = vst.msk [vmem:[#allocation2 + $0x4] sm:$0xf] %vm269, 0
      %vm272 = vcmask 24576
      %273 = vst.msk [vmem:[#allocation2 + $0x8] sm:$0x1] %vm272, 0
      %274 = vst.msk [vmem:[#allocation2 + $0xc] sm:$0xf] %vm269, 0
      %275 = vst.msk [vmem:[#allocation2 + $0x10] sm:$0xf] %vm269, 0
      %276 = vst.msk [vmem:[#allocation2 + $0x14] sm:$0x1] %vm272, 0
      %277 = vst.msk [vmem:[#allocation2 + $0x18] sm:$0xf] %vm269, 0
      %278 = vst.msk [vmem:[#allocation2 + $0x1c] sm:$0xf] %vm269, 0
      %279 = vst.msk [vmem:[#allocation2 + $0x20] sm:$0x1] %vm272, 0
      %280 = vst.msk [vmem:[#allocation2 + $0x24] sm:$0xf] %vm269, 0
      %281 = vst.msk [vmem:[#allocation2 + $0x28] sm:$0xf] %vm269, 0
      %282 = vst.msk [vmem:[#allocation2 + $0x2c] sm:$0x1] %vm272, 0
      %283 = vst.msk [vmem:[#allocation2 + $0x30] sm:$0xf] %vm269, 0
      %284 = vst.msk [vmem:[#allocation2 + $0x34] sm:$0xf] %vm269, 0
      %285 = vst.msk [vmem:[#allocation2 + $0x38] sm:$0x1] %vm272, 0
      %286 = vst.msk [vmem:[#allocation2 + $0x3c] sm:$0xf] %vm269, 0
      %287 = vst.msk [vmem:[#allocation2 + $0x40] sm:$0xf] %vm269, 0
      %288 = vst.msk [vmem:[#allocation2 + $0x44] sm:$0x1] %vm272, 0
      %289 = vst.msk [vmem:[#allocation2 + $0x48] sm:$0xf] %vm269, 0
      %290 = vst.msk [vmem:[#allocation2 + $0x4c] sm:$0xf] %vm269, 0
      %291 = vst.msk [vmem:[#allocation2 + $0x50] sm:$0x1] %vm272, 0
      %292 = vst.msk [vmem:[#allocation2 + $0x54] sm:$0xf] %vm269, 0
      %293 = vst.msk [vmem:[#allocation2 + $0x58] sm:$0xf] %vm269, 0
      %294 = vst.msk [vmem:[#allocation2 + $0x5c] sm:$0x1] %vm272, 0
      %295 = vst.msk [vmem:[#allocation2 + $0x60] sm:$0xf] %vm269, 0
      %296 = vst.msk [vmem:[#allocation2 + $0x64] sm:$0xf] %vm269, 0
      %297 = vst.msk [vmem:[#allocation2 + $0x68] sm:$0x1] %vm272, 0
      %298 = vst.msk [vmem:[#allocation2 + $0x6c] sm:$0xf] %vm269, 0
      %299 = vst.msk [vmem:[#allocation2 + $0x70] sm:$0xf] %vm269, 0
      %300 = vst.msk [vmem:[#allocation2 + $0x74] sm:$0x1] %vm272, 0
      %301 = vst.msk [vmem:[#allocation2 + $0x78] sm:$0xf] %vm269, 0
      %302 = vst.msk [vmem:[#allocation2 + $0x7c] sm:$0xf] %vm269, 0
      %303 = vst.msk [vmem:[#allocation2 + $0x80] sm:$0x1] %vm272, 0
      %304 = vst.msk [vmem:[#allocation2 + $0x84] sm:$0xf] %vm269, 0
      %305 = vst.msk [vmem:[#allocation2 + $0x88] sm:$0xf] %vm269, 0
      %306 = vst.msk [vmem:[#allocation2 + $0x8c] sm:$0x1] %vm272, 0
      %307 = vst.msk [vmem:[#allocation2 + $0x90] sm:$0xf] %vm269, 0
      %308 = vst.msk [vmem:[#allocation2 + $0x94] sm:$0xf] %vm269, 0
      %309 = vst.msk [vmem:[#allocation2 + $0x98] sm:$0x1] %vm272, 0
      %310 = vst.msk [vmem:[#allocation2 + $0x9c] sm:$0xf] %vm269, 0
      %311 = vst.msk [vmem:[#allocation2 + $0xa0] sm:$0xf] %vm269, 0
      %312 = vst.msk [vmem:[#allocation2 + $0xa4] sm:$0x1] %vm272, 0
      %313 = vst.msk [vmem:[#allocation2 + $0xa8] sm:$0xf] %vm269, 0
      %314 = vst.msk [vmem:[#allocation2 + $0xac] sm:$0xf] %vm269, 0
      %315 = vst.msk [vmem:[#allocation2 + $0xb0] sm:$0x1] %vm272, 0
      %316 = vst.msk [vmem:[#allocation2 + $0xb4] sm:$0xf] %vm269, 0
      %317 = vst.msk [vmem:[#allocation2 + $0xb8] sm:$0xf] %vm269, 0
      %318 = vst.msk [vmem:[#allocation2 + $0xbc] sm:$0x1] %vm272, 0
      %319 = vst.msk [vmem:[#allocation2 + $0xc0] sm:$0xf] %vm269, 0
      %320 = vst.msk [vmem:[#allocation2 + $0xc4] sm:$0xf] %vm269, 0
      %321 = vst.msk [vmem:[#allocation2 + $0xc8] sm:$0x1] %vm272, 0
      %322 = vst.msk [vmem:[#allocation2 + $0xcc] sm:$0xf] %vm269, 0
      %323 = vst.msk [vmem:[#allocation2 + $0xd0] sm:$0xf] %vm269, 0
      %324 = vst.msk [vmem:[#allocation2 + $0xd4] sm:$0x1] %vm272, 0
      %vm325 = vsmask.f32 256
      %vm326 = vsmask.f32 4368
      %vm327 = vmor %vm325, %vm326
      %v329 = vshrl.u32 %v237, 16
      %v331 = vrot.slane %v329, 7
      %v332 = vshll.u32 %v237, 16
      %v334 = vor.u32 %v331, %v332
      %v335 = vrot.slane %v331, 4
      %v337 = vshrl.u32 %v238, 16
      %v339 = vrot.slane %v337, 7
      %v340 = vshll.u32 %v238, 16
      %v342 = vor.u32 %v339, %v340
      %v343 = vsel %vm327, %v335, %v342
      %v344 = vrot.slane %v339, 4
      %v346 = vshrl.u32 %v239, 16
      %v348 = vrot.slane %v346, 7
      %v349 = vshll.u32 %v239, 16
      %v351 = vor.u32 %v348, %v349
      %v352 = vrot.slane %v348, 4
      %v354 = vshrl.u32 %v240, 16
      %v356 = vrot.slane %v354, 7
      %v357 = vshll.u32 %v240, 16
      %v359 = vor.u32 %v356, %v357
      %v360 = vsel %vm327, %v352, %v359
      %v361 = vrot.slane %v356, 4
      %v363 = vshrl.u32 %v241, 16
      %v365 = vrot.slane %v363, 7
      %v366 = vshll.u32 %v241, 16
      %v368 = vor.u32 %v365, %v366
      %v369 = vrot.slane %v365, 4
      %v371 = vshrl.u32 %v242, 16
      %v373 = vrot.slane %v371, 7
      %v374 = vshll.u32 %v242, 16
      %v376 = vor.u32 %v373, %v374
      %v377 = vsel %vm327, %v369, %v376
      %v378 = vrot.slane %v373, 4
      %v380 = vshrl.u32 %v243, 16
      %v382 = vrot.slane %v380, 7
      %v383 = vshll.u32 %v243, 16
      %v385 = vor.u32 %v382, %v383
      %v386 = vrot.slane %v382, 4
      %v388 = vshrl.u32 %v244, 16
      %v390 = vrot.slane %v388, 7
      %v391 = vshll.u32 %v244, 16
      %v393 = vor.u32 %v390, %v391
      %v394 = vsel %vm327, %v386, %v393
      %v395 = vrot.slane %v390, 4
      %v397 = vshrl.u32 %v245, 16
      %v399 = vrot.slane %v397, 7
      %v400 = vshll.u32 %v245, 16
      %v402 = vor.u32 %v399, %v400
      %v403 = vrot.slane %v399, 4
      %v405 = vshrl.u32 %v246, 16
      %v407 = vrot.slane %v405, 7
      %v408 = vshll.u32 %v246, 16
      %v410 = vor.u32 %v407, %v408
      %v411 = vsel %vm327, %v403, %v410
      %v412 = vrot.slane %v407, 4
      %v414 = vshrl.u32 %v247, 16
      %v416 = vrot.slane %v414, 7
      %v417 = vshll.u32 %v247, 16
      %v419 = vor.u32 %v416, %v417
      %v420 = vrot.slane %v416, 4
      %v422 = vshrl.u32 %v248, 16
      %v424 = vrot.slane %v422, 7
      %v425 = vshll.u32 %v248, 16
      %v427 = vor.u32 %v424, %v425
      %v428 = vsel %vm327, %v420, %v427
      %v429 = vrot.slane %v424, 4
      %v431 = vshrl.u32 %v249, 16
      %v433 = vrot.slane %v431, 7
      %v434 = vshll.u32 %v249, 16
      %v436 = vor.u32 %v433, %v434
      %v437 = vrot.slane %v433, 4
      %v439 = vshrl.u32 %v250, 16
      %v441 = vrot.slane %v439, 7
      %v442 = vshll.u32 %v250, 16
      %v444 = vor.u32 %v441, %v442
      %v445 = vsel %vm327, %v437, %v444
      %v446 = vrot.slane %v441, 4
      %v448 = vshrl.u32 %v251, 16
      %v450 = vrot.slane %v448, 7
      %v451 = vshll.u32 %v251, 16
      %v453 = vor.u32 %v450, %v451
      %v454 = vrot.slane %v450, 4
      %v456 = vshrl.u32 %v252, 16
      %v458 = vrot.slane %v456, 7
      %v459 = vshll.u32 %v252, 16
      %v461 = vor.u32 %v458, %v459
      %v462 = vsel %vm327, %v454, %v461
      %v463 = vrot.slane %v458, 4
      %v465 = vshrl.u32 %v253, 16
      %v467 = vrot.slane %v465, 7
      %v468 = vshll.u32 %v253, 16
      %v470 = vor.u32 %v467, %v468
      %v471 = vrot.slane %v467, 4
      %v473 = vshrl.u32 %v254, 16
      %v475 = vrot.slane %v473, 7
      %v476 = vshll.u32 %v254, 16
      %v478 = vor.u32 %v475, %v476
      %v479 = vsel %vm327, %v471, %v478
      %v480 = vrot.slane %v475, 4
      %v482 = vshrl.u32 %v255, 16
      %v484 = vrot.slane %v482, 7
      %v485 = vshll.u32 %v255, 16
      %v487 = vor.u32 %v484, %v485
      %v488 = vrot.slane %v484, 4
      %v490 = vshrl.u32 %v256, 16
      %v492 = vrot.slane %v490, 7
      %v493 = vshll.u32 %v256, 16
      %v495 = vor.u32 %v492, %v493
      %v496 = vsel %vm327, %v488, %v495
      %v497 = vrot.slane %v492, 4
      %v499 = vshrl.u32 %v257, 16
      %v501 = vrot.slane %v499, 7
      %v502 = vshll.u32 %v257, 16
      %v504 = vor.u32 %v501, %v502
      %v505 = vrot.slane %v501, 4
      %v507 = vshrl.u32 %v258, 16
      %v509 = vrot.slane %v507, 7
      %v510 = vshll.u32 %v258, 16
      %v512 = vor.u32 %v509, %v510
      %v513 = vsel %vm327, %v505, %v512
      %v514 = vrot.slane %v509, 4
      %v516 = vshrl.u32 %v259, 16
      %v518 = vrot.slane %v516, 7
      %v519 = vshll.u32 %v259, 16
      %v521 = vor.u32 %v518, %v519
      %v522 = vrot.slane %v518, 4
      %v524 = vshrl.u32 %v260, 16
      %v526 = vrot.slane %v524, 7
      %v527 = vshll.u32 %v260, 16
      %v529 = vor.u32 %v526, %v527
      %v530 = vsel %vm327, %v522, %v529
      %v531 = vrot.slane %v526, 4
      %v533 = vshrl.u32 %v261, 16
      %v535 = vrot.slane %v533, 7
      %v536 = vshll.u32 %v261, 16
      %v538 = vor.u32 %v535, %v536
      %v539 = vrot.slane %v535, 4
      %v541 = vshrl.u32 %v262, 16
      %v543 = vrot.slane %v541, 7
      %v544 = vshll.u32 %v262, 16
      %v546 = vor.u32 %v543, %v544
      %v547 = vsel %vm327, %v539, %v546
      %v548 = vrot.slane %v543, 4
      %v550 = vshrl.u32 %v263, 16
      %v552 = vrot.slane %v550, 7
      %v553 = vshll.u32 %v263, 16
      %v555 = vor.u32 %v552, %v553
      %v556 = vrot.slane %v552, 4
      %v558 = vshrl.u32 %v264, 16
      %v560 = vrot.slane %v558, 7
      %v561 = vshll.u32 %v264, 16
      %v563 = vor.u32 %v560, %v561
      %v564 = vsel %vm327, %v556, %v563
      %v565 = vrot.slane %v560, 4
      %v567 = vshrl.u32 %v265, 16
      %v569 = vrot.slane %v567, 7
      %v570 = vshll.u32 %v265, 16
      %v572 = vor.u32 %v569, %v570
      %v573 = vrot.slane %v569, 4
      %v575 = vshrl.u32 %v266, 16
      %v577 = vrot.slane %v575, 7
      %v578 = vshll.u32 %v266, 16
      %v580 = vor.u32 %v577, %v578
      %v581 = vsel %vm327, %v573, %v580
      %v582 = vrot.slane %v577, 4
      %v584 = vshrl.u32 %v267, 16
      %v586 = vrot.slane %v584, 7
      %v587 = vshll.u32 %v267, 16
      %v589 = vor.u32 %v586, %v587
      %v590 = vrot.slane %v586, 4
      %v592 = vshrl.u32 %v268, 16
      %v594 = vrot.slane %v592, 7
      %v595 = vshll.u32 %v268, 16
      %v597 = vor.u32 %v594, %v595
      %v598 = vsel %vm327, %v590, %v597
      %v599 = vrot.slane %v594, 4
      %s648 = scalar_lea.vmem [#allocation2], 12
      %vm649 = vcmask 27648
      %vm650 = vsmask.f32 7938
      %vm651 = vmand %vm649, %vm650
      %v652 = vld [vmem:[%s648] sm:$0xf]
      %v653 = vsel %vm651, %v334, %v652
      %654 = vst [vmem:[%s648] sm:$0xf] %v653
      %655 = vst.msk [vmem:[%s648 + $0x4] sm:$0xf] %vm269, %v343
      %vm656 = vcmask 24576
      %vm657 = vmand %vm656, %vm325
      %v658 = vld [vmem:[%s648 + $0x8] sm:$0x1]
      %v659 = vsel %vm657, %v344, %v658
      %660 = vst [vmem:[%s648 + $0x8] sm:$0x1] %v659
      %v661 = vld [vmem:[%s648 + $0xc] sm:$0xf]
      %v662 = vsel %vm651, %v351, %v661
      %663 = vst [vmem:[%s648 + $0xc] sm:$0xf] %v662
      %664 = vst.msk [vmem:[%s648 + $0x10] sm:$0xf] %vm269, %v360
      %v665 = vld [vmem:[%s648 + $0x14] sm:$0x1]
      %v666 = vsel %vm657, %v361, %v665
      %667 = vst [vmem:[%s648 + $0x14] sm:$0x1] %v666
      %v668 = vld [vmem:[%s648 + $0x18] sm:$0xf]
      %v669 = vsel %vm651, %v368, %v668
      %670 = vst [vmem:[%s648 + $0x18] sm:$0xf] %v669
      %671 = vst.msk [vmem:[%s648 + $0x1c] sm:$0xf] %vm269, %v377
      %v672 = vld [vmem:[%s648 + $0x20] sm:$0x1]
      %v673 = vsel %vm657, %v378, %v672
      %674 = vst [vmem:[%s648 + $0x20] sm:$0x1] %v673
      %v675 = vld [vmem:[%s648 + $0x24] sm:$0xf]
      %v676 = vsel %vm651, %v385, %v675
      %677 = vst [vmem:[%s648 + $0x24] sm:$0xf] %v676
      %678 = vst.msk [vmem:[%s648 + $0x28] sm:$0xf] %vm269, %v394
      %v679 = vld [vmem:[%s648 + $0x2c] sm:$0x1]
      %v680 = vsel %vm657, %v395, %v679
      %681 = vst [vmem:[%s648 + $0x2c] sm:$0x1] %v680
      %v682 = vld [vmem:[%s648 + $0x30] sm:$0xf]
      %v683 = vsel %vm651, %v402, %v682
      %684 = vst [vmem:[%s648 + $0x30] sm:$0xf] %v683
      %685 = vst.msk [vmem:[%s648 + $0x34] sm:$0xf] %vm269, %v411
      %v686 = vld [vmem:[%s648 + $0x38] sm:$0x1]
      %v687 = vsel %vm657, %v412, %v686
      %688 = vst [vmem:[%s648 + $0x38] sm:$0x1] %v687
      %v689 = vld [vmem:[%s648 + $0x3c] sm:$0xf]
      %v690 = vsel %vm651, %v419, %v689
      %691 = vst [vmem:[%s648 + $0x3c] sm:$0xf] %v690
      %692 = vst.msk [vmem:[%s648 + $0x40] sm:$0xf] %vm269, %v428
      %v693 = vld [vmem:[%s648 + $0x44] sm:$0x1]
      %v694 = vsel %vm657, %v429, %v693
      %695 = vst [vmem:[%s648 + $0x44] sm:$0x1] %v694
      %v696 = vld [vmem:[%s648 + $0x48] sm:$0xf]
      %v697 = vsel %vm651, %v436, %v696
      %698 = vst [vmem:[%s648 + $0x48] sm:$0xf] %v697
      %699 = vst.msk [vmem:[%s648 + $0x4c] sm:$0xf] %vm269, %v445
      %v700 = vld [vmem:[%s648 + $0x50] sm:$0x1]
      %v701 = vsel %vm657, %v446, %v700
      %702 = vst [vmem:[%s648 + $0x50] sm:$0x1] %v701
      %v703 = vld [vmem:[%s648 + $0x54] sm:$0xf]
      %v704 = vsel %vm651, %v453, %v703
      %705 = vst [vmem:[%s648 + $0x54] sm:$0xf] %v704
      %706 = vst.msk [vmem:[%s648 + $0x58] sm:$0xf] %vm269, %v462
      %v707 = vld [vmem:[%s648 + $0x5c] sm:$0x1]
      %v708 = vsel %vm657, %v463, %v707
      %709 = vst [vmem:[%s648 + $0x5c] sm:$0x1] %v708
      %v710 = vld [vmem:[%s648 + $0x60] sm:$0xf]
      %v711 = vsel %vm651, %v470, %v710
      %712 = vst [vmem:[%s648 + $0x60] sm:$0xf] %v711
      %713 = vst.msk [vmem:[%s648 + $0x64] sm:$0xf] %vm269, %v479
      %v714 = vld [vmem:[%s648 + $0x68] sm:$0x1]
      %v715 = vsel %vm657, %v480, %v714
      %716 = vst [vmem:[%s648 + $0x68] sm:$0x1] %v715
      %v717 = vld [vmem:[%s648 + $0x6c] sm:$0xf]
      %v718 = vsel %vm651, %v487, %v717
      %719 = vst [vmem:[%s648 + $0x6c] sm:$0xf] %v718
      %720 = vst.msk [vmem:[%s648 + $0x70] sm:$0xf] %vm269, %v496
      %v721 = vld [vmem:[%s648 + $0x74] sm:$0x1]
      %v722 = vsel %vm657, %v497, %v721
      %723 = vst [vmem:[%s648 + $0x74] sm:$0x1] %v722
      %v724 = vld [vmem:[%s648 + $0x78] sm:$0xf]
      %v725 = vsel %vm651, %v504, %v724
      %726 = vst [vmem:[%s648 + $0x78] sm:$0xf] %v725
      %727 = vst.msk [vmem:[%s648 + $0x7c] sm:$0xf] %vm269, %v513
      %v728 = vld [vmem:[%s648 + $0x80] sm:$0x1]
      %v729 = vsel %vm657, %v514, %v728
      %730 = vst [vmem:[%s648 + $0x80] sm:$0x1] %v729
      %v731 = vld [vmem:[%s648 + $0x84] sm:$0xf]
      %v732 = vsel %vm651, %v521, %v731
      %733 = vst [vmem:[%s648 + $0x84] sm:$0xf] %v732
      %734 = vst.msk [vmem:[%s648 + $0x88] sm:$0xf] %vm269, %v530
      %v735 = vld [vmem:[%s648 + $0x8c] sm:$0x1]
      %v736 = vsel %vm657, %v531, %v735
      %737 = vst [vmem:[%s648 + $0x8c] sm:$0x1] %v736
      %v738 = vld [vmem:[%s648 + $0x90] sm:$0xf]
      %v739 = vsel %vm651, %v538, %v738
      %740 = vst [vmem:[%s648 + $0x90] sm:$0xf] %v739
      %741 = vst.msk [vmem:[%s648 + $0x94] sm:$0xf] %vm269, %v547
      %v742 = vld [vmem:[%s648 + $0x98] sm:$0x1]
      %v743 = vsel %vm657, %v548, %v742
      %744 = vst [vmem:[%s648 + $0x98] sm:$0x1] %v743
      %v745 = vld [vmem:[%s648 + $0x9c] sm:$0xf]
      %v746 = vsel %vm651, %v555, %v745
      %747 = vst [vmem:[%s648 + $0x9c] sm:$0xf] %v746
      %748 = vst.msk [vmem:[%s648 + $0xa0] sm:$0xf] %vm269, %v564
      %v749 = vld [vmem:[%s648 + $0xa4] sm:$0x1]
      %v750 = vsel %vm657, %v565, %v749
      %751 = vst [vmem:[%s648 + $0xa4] sm:$0x1] %v750
      %v752 = vld [vmem:[%s648 + $0xa8] sm:$0xf]
      %v753 = vsel %vm651, %v572, %v752
      %754 = vst [vmem:[%s648 + $0xa8] sm:$0xf] %v753
      %755 = vst.msk [vmem:[%s648 + $0xac] sm:$0xf] %vm269, %v581
      %v756 = vld [vmem:[%s648 + $0xb0] sm:$0x1]
      %v757 = vsel %vm657, %v582, %v756
      %758 = vst [vmem:[%s648 + $0xb0] sm:$0x1] %v757
      %v759 = vld [vmem:[%s648 + $0xb4] sm:$0xf]
      %v760 = vsel %vm651, %v589, %v759
      %761 = vst [vmem:[%s648 + $0xb4] sm:$0xf] %v760
      %762 = vst.msk [vmem:[%s648 + $0xb8] sm:$0xf] %vm269, %v598
      %v763 = vld [vmem:[%s648 + $0xbc] sm:$0x1]
      %v764 = vsel %vm657, %v599, %v763
      %765 = vst [vmem:[%s648 + $0xbc] sm:$0x1] %v764
      %v766 = vld [vmem:[#allocation2] sm:$0xf]
      %v767 = vld [vmem:[#allocation2 + $0x4] sm:$0xf]
      %v768 = vld [vmem:[#allocation2 + $0xc] sm:$0xf]
      %v769 = vld [vmem:[#allocation2 + $0x10] sm:$0xf]
      %v770 = vld [vmem:[#allocation2 + $0x18] sm:$0xf]
      %v771 = vld [vmem:[#allocation2 + $0x1c] sm:$0xf]
      %v772 = vld [vmem:[#allocation2 + $0x24] sm:$0xf]
      %v773 = vld [vmem:[#allocation2 + $0x28] sm:$0xf]
      %v774 = vld [vmem:[#allocation2 + $0x30] sm:$0xf]
      %v775 = vld [vmem:[#allocation2 + $0x34] sm:$0xf]
      %v776 = vld [vmem:[#allocation2 + $0x3c] sm:$0xf]
      %v777 = vld [vmem:[#allocation2 + $0x40] sm:$0xf]
      %v778 = vld [vmem:[#allocation2 + $0x48] sm:$0xf]
      %v779 = vld [vmem:[#allocation2 + $0x4c] sm:$0xf]
      %v780 = vld [vmem:[#allocation2 + $0x54] sm:$0xf]
      %v781 = vld [vmem:[#allocation2 + $0x58] sm:$0xf]
      %v782 = vld [vmem:[#allocation2 + $0x60] sm:$0xf]
      %v783 = vld [vmem:[#allocation2 + $0x64] sm:$0xf]
      %v784 = vld [vmem:[#allocation2 + $0x6c] sm:$0xf]
      %v785 = vld [vmem:[#allocation2 + $0x70] sm:$0xf]
      %v786 = vld [vmem:[#allocation2 + $0x78] sm:$0xf]
      %v787 = vld [vmem:[#allocation2 + $0x7c] sm:$0xf]
      %v788 = vld [vmem:[#allocation2 + $0x84] sm:$0xf]
      %v789 = vld [vmem:[#allocation2 + $0x88] sm:$0xf]
      %v790 = vld [vmem:[#allocation2 + $0x90] sm:$0xf]
      %v791 = vld [vmem:[#allocation2 + $0x94] sm:$0xf]
      %v792 = vld [vmem:[#allocation2 + $0x9c] sm:$0xf]
      %v793 = vld [vmem:[#allocation2 + $0xa0] sm:$0xf]
      %v794 = vld [vmem:[#allocation2 + $0xa8] sm:$0xf]
      %v795 = vld [vmem:[#allocation2 + $0xac] sm:$0xf]
      %v796 = vld [vmem:[#allocation2 + $0xb4] sm:$0xf]
      %v797 = vld [vmem:[#allocation2 + $0xb8] sm:$0xf]
      %798 = vst.msk [vmem:[#allocation3] sm:$0xf] %vm269, %v766
      %799 = vst.msk [vmem:[#allocation3 + $0x4] sm:$0xf] %vm269, %v767
      %800 = vst.msk [vmem:[#allocation3 + $0x8] sm:$0xf] %vm269, %v768
      %801 = vst.msk [vmem:[#allocation3 + $0xc] sm:$0xf] %vm269, %v769
      %802 = vst.msk [vmem:[#allocation3 + $0x10] sm:$0xf] %vm269, %v770
      %803 = vst.msk [vmem:[#allocation3 + $0x14] sm:$0xf] %vm269, %v771
      %804 = vst.msk [vmem:[#allocation3 + $0x18] sm:$0xf] %vm269, %v772
      %805 = vst.msk [vmem:[#allocation3 + $0x1c] sm:$0xf] %vm269, %v773
      %806 = vst.msk [vmem:[#allocation3 + $0x20] sm:$0xf] %vm269, %v774
      %807 = vst.msk [vmem:[#allocation3 + $0x24] sm:$0xf] %vm269, %v775
      %808 = vst.msk [vmem:[#allocation3 + $0x28] sm:$0xf] %vm269, %v776
      %809 = vst.msk [vmem:[#allocation3 + $0x2c] sm:$0xf] %vm269, %v777
      %810 = vst.msk [vmem:[#allocation3 + $0x30] sm:$0xf] %vm269, %v778
      %811 = vst.msk [vmem:[#allocation3 + $0x34] sm:$0xf] %vm269, %v779
      %812 = vst.msk [vmem:[#allocation3 + $0x38] sm:$0xf] %vm269, %v780
      %813 = vst.msk [vmem:[#allocation3 + $0x3c] sm:$0xf] %vm269, %v781
      %814 = vst.msk [vmem:[#allocation3 + $0x40] sm:$0xf] %vm269, %v782
      %815 = vst.msk [vmem:[#allocation3 + $0x44] sm:$0xf] %vm269, %v783
      %816 = vst.msk [vmem:[#allocation3 + $0x48] sm:$0xf] %vm269, %v784
      %817 = vst.msk [vmem:[#allocation3 + $0x4c] sm:$0xf] %vm269, %v785
      %818 = vst.msk [vmem:[#allocation3 + $0x50] sm:$0xf] %vm269, %v786
      %819 = vst.msk [vmem:[#allocation3 + $0x54] sm:$0xf] %vm269, %v787
      %820 = vst.msk [vmem:[#allocation3 + $0x58] sm:$0xf] %vm269, %v788
      %821 = vst.msk [vmem:[#allocation3 + $0x5c] sm:$0xf] %vm269, %v789
      %822 = vst.msk [vmem:[#allocation3 + $0x60] sm:$0xf] %vm269, %v790
      %823 = vst.msk [vmem:[#allocation3 + $0x64] sm:$0xf] %vm269, %v791
      %824 = vst.msk [vmem:[#allocation3 + $0x68] sm:$0xf] %vm269, %v792
      %825 = vst.msk [vmem:[#allocation3 + $0x6c] sm:$0xf] %vm269, %v793
      %826 = vst.msk [vmem:[#allocation3 + $0x70] sm:$0xf] %vm269, %v794
      %827 = vst.msk [vmem:[#allocation3 + $0x74] sm:$0xf] %vm269, %v795
      %828 = vst.msk [vmem:[#allocation3 + $0x78] sm:$0xf] %vm269, %v796
      %829 = vst.msk [vmem:[#allocation3 + $0x7c] sm:$0xf] %vm269, %v797
      %v830 = vld [vmem:[#allocation2] sm:$0xf]
      %v831 = vld [vmem:[#allocation2 + $0x4] sm:$0xf]
      %v832 = vld [vmem:[#allocation2 + $0x8] sm:$0x1]
      %v833 = vld [vmem:[#allocation2 + $0xc] sm:$0xf]
      %v834 = vld [vmem:[#allocation2 + $0x10] sm:$0xf]
      %v835 = vld [vmem:[#allocation2 + $0x14] sm:$0x1]
      %v836 = vld [vmem:[#allocation2 + $0x18] sm:$0xf]
      %v837 = vld [vmem:[#allocation2 + $0x1c] sm:$0xf]
      %v838 = vld [vmem:[#allocation2 + $0x20] sm:$0x1]
      %v839 = vld [vmem:[#allocation2 + $0x24] sm:$0xf]
      %v840 = vld [vmem:[#allocation2 + $0x28] sm:$0xf]
      %v841 = vld [vmem:[#allocation2 + $0x2c] sm:$0x1]
      %v842 = vld [vmem:[#allocation2 + $0x30] sm:$0xf]
      %v843 = vld [vmem:[#allocation2 + $0x34] sm:$0xf]
      %v844 = vld [vmem:[#allocation2 + $0x38] sm:$0x1]
      %v845 = vld [vmem:[#allocation2 + $0x3c] sm:$0xf]
      %v846 = vld [vmem:[#allocation2 + $0x40] sm:$0xf]
      %v847 = vld [vmem:[#allocation2 + $0x44] sm:$0x1]
      %v848 = vld [vmem:[#allocation2 + $0x48] sm:$0xf]
      %v849 = vld [vmem:[#allocation2 + $0x4c] sm:$0xf]
      %v850 = vld [vmem:[#allocation2 + $0x50] sm:$0x1]
      %v851 = vld [vmem:[#allocation2 + $0x54] sm:$0xf]
      %v852 = vld [vmem:[#allocation2 + $0x58] sm:$0xf]
      %v853 = vld [vmem:[#allocation2 + $0x5c] sm:$0x1]
      %v854 = vld [vmem:[#allocation2 + $0x60] sm:$0xf]
      %v855 = vld [vmem:[#allocation2 + $0x64] sm:$0xf]
      %v856 = vld [vmem:[#allocation2 + $0x68] sm:$0x1]
      %v857 = vld [vmem:[#allocation2 + $0x6c] sm:$0xf]
      %v858 = vld [vmem:[#allocation2 + $0x70] sm:$0xf]
      %v859 = vld [vmem:[#allocation2 + $0x74] sm:$0x1]
      %v860 = vld [vmem:[#allocation2 + $0x78] sm:$0xf]
      %v861 = vld [vmem:[#allocation2 + $0x7c] sm:$0xf]
      %v862 = vld [vmem:[#allocation2 + $0x80] sm:$0x1]
      %v863 = vld [vmem:[#allocation2 + $0x84] sm:$0xf]
      %v864 = vld [vmem:[#allocation2 + $0x88] sm:$0xf]
      %v865 = vld [vmem:[#allocation2 + $0x8c] sm:$0x1]
      %v866 = vld [vmem:[#allocation2 + $0x90] sm:$0xf]
      %v867 = vld [vmem:[#allocation2 + $0x94] sm:$0xf]
      %v868 = vld [vmem:[#allocation2 + $0x98] sm:$0x1]
      %v869 = vld [vmem:[#allocation2 + $0x9c] sm:$0xf]
      %v870 = vld [vmem:[#allocation2 + $0xa0] sm:$0xf]
      %v871 = vld [vmem:[#allocation2 + $0xa4] sm:$0x1]
      %v872 = vld [vmem:[#allocation2 + $0xa8] sm:$0xf]
      %v873 = vld [vmem:[#allocation2 + $0xac] sm:$0xf]
      %v874 = vld [vmem:[#allocation2 + $0xb0] sm:$0x1]
      %v875 = vld [vmem:[#allocation2 + $0xb4] sm:$0xf]
      %v876 = vld [vmem:[#allocation2 + $0xb8] sm:$0xf]
      %v877 = vld [vmem:[#allocation2 + $0xbc] sm:$0x1]
      %vm878 = vsmask.f32 3328
      %vm879 = vsmask.f32 7440
      %vm880 = vmor %vm878, %vm879
      %v882 = vshrl.u32 %v830, 16
      %v884 = vrot.slane %v882, 4
      %v885 = vshll.u32 %v830, 16
      %v887 = vrot.slane %v885, 5
      %v888 = vor.u32 %v884, %v887
      %v889 = vrot.slane %v888, 4
      %v891 = vshll.u32 %v831, 16
      %v893 = vrot.slane %v891, 5
      %v894 = vsel %vm880, %v889, %v893
      %v895 = vshrl.u32 %v831, 16
      %v897 = vrot.slane %v895, 4
      %v898 = vor.u32 %v897, %v893
      %v899 = vrot.slane %v898, 4
      %v901 = vshll.u32 %v832, 16
      %v903 = vrot.slane %v901, 5
      %v904 = vsel %vm880, %v899, %v903
      %v906 = vshrl.u32 %v833, 16
      %v908 = vrot.slane %v906, 4
      %v909 = vshll.u32 %v833, 16
      %v911 = vrot.slane %v909, 5
      %v912 = vor.u32 %v908, %v911
      %v913 = vrot.slane %v912, 4
      %v915 = vshll.u32 %v834, 16
      %v917 = vrot.slane %v915, 5
      %v918 = vsel %vm880, %v913, %v917
      %v919 = vshrl.u32 %v834, 16
      %v921 = vrot.slane %v919, 4
      %v922 = vor.u32 %v921, %v917
      %v923 = vrot.slane %v922, 4
      %v925 = vshll.u32 %v835, 16
      %v927 = vrot.slane %v925, 5
      %v928 = vsel %vm880, %v923, %v927
      %v930 = vshrl.u32 %v836, 16
      %v932 = vrot.slane %v930, 4
      %v933 = vshll.u32 %v836, 16
      %v935 = vrot.slane %v933, 5
      %v936 = vor.u32 %v932, %v935
      %v937 = vrot.slane %v936, 4
      %v939 = vshll.u32 %v837, 16
      %v941 = vrot.slane %v939, 5
      %v942 = vsel %vm880, %v937, %v941
      %v943 = vshrl.u32 %v837, 16
      %v945 = vrot.slane %v943, 4
      %v946 = vor.u32 %v945, %v941
      %v947 = vrot.slane %v946, 4
      %v949 = vshll.u32 %v838, 16
      %v951 = vrot.slane %v949, 5
      %v952 = vsel %vm880, %v947, %v951
      %v954 = vshrl.u32 %v839, 16
      %v956 = vrot.slane %v954, 4
      %v957 = vshll.u32 %v839, 16
      %v959 = vrot.slane %v957, 5
      %v960 = vor.u32 %v956, %v959
      %v961 = vrot.slane %v960, 4
      %v963 = vshll.u32 %v840, 16
      %v965 = vrot.slane %v963, 5
      %v966 = vsel %vm880, %v961, %v965
      %v967 = vshrl.u32 %v840, 16
      %v969 = vrot.slane %v967, 4
      %v970 = vor.u32 %v969, %v965
      %v971 = vrot.slane %v970, 4
      %v973 = vshll.u32 %v841, 16
      %v975 = vrot.slane %v973, 5
      %v976 = vsel %vm880, %v971, %v975
      %v978 = vshrl.u32 %v842, 16
      %v980 = vrot.slane %v978, 4
      %v981 = vshll.u32 %v842, 16
      %v983 = vrot.slane %v981, 5
      %v984 = vor.u32 %v980, %v983
      %v985 = vrot.slane %v984, 4
      %v987 = vshll.u32 %v843, 16
      %v989 = vrot.slane %v987, 5
      %v990 = vsel %vm880, %v985, %v989
      %v991 = vshrl.u32 %v843, 16
      %v993 = vrot.slane %v991, 4
      %v994 = vor.u32 %v993, %v989
      %v995 = vrot.slane %v994, 4
      %v997 = vshll.u32 %v844, 16
      %v999 = vrot.slane %v997, 5
      %v1000 = vsel %vm880, %v995, %v999
      %v1002 = vshrl.u32 %v845, 16
      %v1004 = vrot.slane %v1002, 4
      %v1005 = vshll.u32 %v845, 16
      %v1007 = vrot.slane %v1005, 5
      %v1008 = vor.u32 %v1004, %v1007
      %v1009 = vrot.slane %v1008, 4
      %v1011 = vshll.u32 %v846, 16
      %v1013 = vrot.slane %v1011, 5
      %v1014 = vsel %vm880, %v1009, %v1013
      %v1015 = vshrl.u32 %v846, 16
      %v1017 = vrot.slane %v1015, 4
      %v1018 = vor.u32 %v1017, %v1013
      %v1019 = vrot.slane %v1018, 4
      %v1021 = vshll.u32 %v847, 16
      %v1023 = vrot.slane %v1021, 5
      %v1024 = vsel %vm880, %v1019, %v1023
      %v1026 = vshrl.u32 %v848, 16
      %v1028 = vrot.slane %v1026, 4
      %v1029 = vshll.u32 %v848, 16
      %v1031 = vrot.slane %v1029, 5
      %v1032 = vor.u32 %v1028, %v1031
      %v1033 = vrot.slane %v1032, 4
      %v1035 = vshll.u32 %v849, 16
      %v1037 = vrot.slane %v1035, 5
      %v1038 = vsel %vm880, %v1033, %v1037
      %v1039 = vshrl.u32 %v849, 16
      %v1041 = vrot.slane %v1039, 4
      %v1042 = vor.u32 %v1041, %v1037
      %v1043 = vrot.slane %v1042, 4
      %v1045 = vshll.u32 %v850, 16
      %v1047 = vrot.slane %v1045, 5
      %v1048 = vsel %vm880, %v1043, %v1047
      %v1050 = vshrl.u32 %v851, 16
      %v1052 = vrot.slane %v1050, 4
      %v1053 = vshll.u32 %v851, 16
      %v1055 = vrot.slane %v1053, 5
      %v1056 = vor.u32 %v1052, %v1055
      %v1057 = vrot.slane %v1056, 4
      %v1059 = vshll.u32 %v852, 16
      %v1061 = vrot.slane %v1059, 5
      %v1062 = vsel %vm880, %v1057, %v1061
      %v1063 = vshrl.u32 %v852, 16
      %v1065 = vrot.slane %v1063, 4
      %v1066 = vor.u32 %v1065, %v1061
      %v1067 = vrot.slane %v1066, 4
      %v1069 = vshll.u32 %v853, 16
      %v1071 = vrot.slane %v1069, 5
      %v1072 = vsel %vm880, %v1067, %v1071
      %v1074 = vshrl.u32 %v854, 16
      %v1076 = vrot.slane %v1074, 4
      %v1077 = vshll.u32 %v854, 16
      %v1079 = vrot.slane %v1077, 5
      %v1080 = vor.u32 %v1076, %v1079
      %v1081 = vrot.slane %v1080, 4
      %v1083 = vshll.u32 %v855, 16
      %v1085 = vrot.slane %v1083, 5
      %v1086 = vsel %vm880, %v1081, %v1085
      %v1087 = vshrl.u32 %v855, 16
      %v1089 = vrot.slane %v1087, 4
      %v1090 = vor.u32 %v1089, %v1085
      %v1091 = vrot.slane %v1090, 4
      %v1093 = vshll.u32 %v856, 16
      %v1095 = vrot.slane %v1093, 5
      %v1096 = vsel %vm880, %v1091, %v1095
      %v1098 = vshrl.u32 %v857, 16
      %v1100 = vrot.slane %v1098, 4
      %v1101 = vshll.u32 %v857, 16
      %v1103 = vrot.slane %v1101, 5
      %v1104 = vor.u32 %v1100, %v1103
      %v1105 = vrot.slane %v1104, 4
      %v1107 = vshll.u32 %v858, 16
      %v1109 = vrot.slane %v1107, 5
      %v1110 = vsel %vm880, %v1105, %v1109
      %v1111 = vshrl.u32 %v858, 16
      %v1113 = vrot.slane %v1111, 4
      %v1114 = vor.u32 %v1113, %v1109
      %v1115 = vrot.slane %v1114, 4
      %v1117 = vshll.u32 %v859, 16
      %v1119 = vrot.slane %v1117, 5
      %v1120 = vsel %vm880, %v1115, %v1119
      %v1122 = vshrl.u32 %v860, 16
      %v1124 = vrot.slane %v1122, 4
      %v1125 = vshll.u32 %v860, 16
      %v1127 = vrot.slane %v1125, 5
      %v1128 = vor.u32 %v1124, %v1127
      %v1129 = vrot.slane %v1128, 4
      %v1131 = vshll.u32 %v861, 16
      %v1133 = vrot.slane %v1131, 5
      %v1134 = vsel %vm880, %v1129, %v1133
      %v1135 = vshrl.u32 %v861, 16
      %v1137 = vrot.slane %v1135, 4
      %v1138 = vor.u32 %v1137, %v1133
      %v1139 = vrot.slane %v1138, 4
      %v1141 = vshll.u32 %v862, 16
      %v1143 = vrot.slane %v1141, 5
      %v1144 = vsel %vm880, %v1139, %v1143
      %v1146 = vshrl.u32 %v863, 16
      %v1148 = vrot.slane %v1146, 4
      %v1149 = vshll.u32 %v863, 16
      %v1151 = vrot.slane %v1149, 5
      %v1152 = vor.u32 %v1148, %v1151
      %v1153 = vrot.slane %v1152, 4
      %v1155 = vshll.u32 %v864, 16
      %v1157 = vrot.slane %v1155, 5
      %v1158 = vsel %vm880, %v1153, %v1157
      %v1159 = vshrl.u32 %v864, 16
      %v1161 = vrot.slane %v1159, 4
      %v1162 = vor.u32 %v1161, %v1157
      %v1163 = vrot.slane %v1162, 4
      %v1165 = vshll.u32 %v865, 16
      %v1167 = vrot.slane %v1165, 5
      %v1168 = vsel %vm880, %v1163, %v1167
      %v1170 = vshrl.u32 %v866, 16
      %v1172 = vrot.slane %v1170, 4
      %v1173 = vshll.u32 %v866, 16
      %v1175 = vrot.slane %v1173, 5
      %v1176 = vor.u32 %v1172, %v1175
      %v1177 = vrot.slane %v1176, 4
      %v1179 = vshll.u32 %v867, 16
      %v1181 = vrot.slane %v1179, 5
      %v1182 = vsel %vm880, %v1177, %v1181
      %v1183 = vshrl.u32 %v867, 16
      %v1185 = vrot.slane %v1183, 4
      %v1186 = vor.u32 %v1185, %v1181
      %v1187 = vrot.slane %v1186, 4
      %v1189 = vshll.u32 %v868, 16
      %v1191 = vrot.slane %v1189, 5
      %v1192 = vsel %vm880, %v1187, %v1191
      %v1194 = vshrl.u32 %v869, 16
      %v1196 = vrot.slane %v1194, 4
      %v1197 = vshll.u32 %v869, 16
      %v1199 = vrot.slane %v1197, 5
      %v1200 = vor.u32 %v1196, %v1199
      %v1201 = vrot.slane %v1200, 4
      %v1203 = vshll.u32 %v870, 16
      %v1205 = vrot.slane %v1203, 5
      %v1206 = vsel %vm880, %v1201, %v1205
      %v1207 = vshrl.u32 %v870, 16
      %v1209 = vrot.slane %v1207, 4
      %v1210 = vor.u32 %v1209, %v1205
      %v1211 = vrot.slane %v1210, 4
      %v1213 = vshll.u32 %v871, 16
      %v1215 = vrot.slane %v1213, 5
      %v1216 = vsel %vm880, %v1211, %v1215
      %v1218 = vshrl.u32 %v872, 16
      %v1220 = vrot.slane %v1218, 4
      %v1221 = vshll.u32 %v872, 16
      %v1223 = vrot.slane %v1221, 5
      %v1224 = vor.u32 %v1220, %v1223
      %v1225 = vrot.slane %v1224, 4
      %v1227 = vshll.u32 %v873, 16
      %v1229 = vrot.slane %v1227, 5
      %v1230 = vsel %vm880, %v1225, %v1229
      %v1231 = vshrl.u32 %v873, 16
      %v1233 = vrot.slane %v1231, 4
      %v1234 = vor.u32 %v1233, %v1229
      %v1235 = vrot.slane %v1234, 4
      %v1237 = vshll.u32 %v874, 16
      %v1239 = vrot.slane %v1237, 5
      %v1240 = vsel %vm880, %v1235, %v1239
      %v1242 = vshrl.u32 %v875, 16
      %v1244 = vrot.slane %v1242, 4
      %v1245 = vshll.u32 %v875, 16
      %v1247 = vrot.slane %v1245, 5
      %v1248 = vor.u32 %v1244, %v1247
      %v1249 = vrot.slane %v1248, 4
      %v1251 = vshll.u32 %v876, 16
      %v1253 = vrot.slane %v1251, 5
      %v1254 = vsel %vm880, %v1249, %v1253
      %v1255 = vshrl.u32 %v876, 16
      %v1257 = vrot.slane %v1255, 4
      %v1258 = vor.u32 %v1257, %v1253
      %v1259 = vrot.slane %v1258, 4
      %v1261 = vshll.u32 %v877, 16
      %v1263 = vrot.slane %v1261, 5
      %v1264 = vsel %vm880, %v1259, %v1263
      %1265 = vrot.lane.b32.xlu0 %v894, 4
      %v1266 = vpop.permute.xlu0 %1265
      %1267 = vrot.lane.b32.xlu0 %v904, 4
      %v1268 = vpop.permute.xlu0 %1267
      %1269 = vrot.lane.b32.xlu0 %v918, 4
      %v1270 = vpop.permute.xlu0 %1269
      %1271 = vrot.lane.b32.xlu0 %v928, 4
      %v1272 = vpop.permute.xlu0 %1271
      %1273 = vrot.lane.b32.xlu0 %v942, 4
      %v1274 = vpop.permute.xlu0 %1273
      %1275 = vrot.lane.b32.xlu0 %v952, 4
      %v1276 = vpop.permute.xlu0 %1275
      %1277 = vrot.lane.b32.xlu0 %v966, 4
      %v1278 = vpop.permute.xlu0 %1277
      %1279 = vrot.lane.b32.xlu0 %v976, 4
      %v1280 = vpop.permute.xlu0 %1279
      %1281 = vrot.lane.b32.xlu0 %v990, 4
      %v1282 = vpop.permute.xlu0 %1281
      %1283 = vrot.lane.b32.xlu0 %v1000, 4
      %v1284 = vpop.permute.xlu0 %1283
      %1285 = vrot.lane.b32.xlu0 %v1014, 4
      %v1286 = vpop.permute.xlu0 %1285
      %1287 = vrot.lane.b32.xlu0 %v1024, 4
      %v1288 = vpop.permute.xlu0 %1287
      %1289 = vrot.lane.b32.xlu0 %v1038, 4
      %v1290 = vpop.permute.xlu0 %1289
      %1291 = vrot.lane.b32.xlu0 %v1048, 4
      %v1292 = vpop.permute.xlu0 %1291
      %1293 = vrot.lane.b32.xlu0 %v1062, 4
      %v1294 = vpop.permute.xlu0 %1293
      %1295 = vrot.lane.b32.xlu0 %v1072, 4
      %v1296 = vpop.permute.xlu0 %1295
      %1297 = vrot.lane.b32.xlu0 %v1086, 4
      %v1298 = vpop.permute.xlu0 %1297
      %1299 = vrot.lane.b32.xlu0 %v1096, 4
      %v1300 = vpop.permute.xlu0 %1299
      %1301 = vrot.lane.b32.xlu0 %v1110, 4
      %v1302 = vpop.permute.xlu0 %1301
      %1303 = vrot.lane.b32.xlu0 %v1120, 4
      %v1304 = vpop.permute.xlu0 %1303
      %1305 = vrot.lane.b32.xlu0 %v1134, 4
      %v1306 = vpop.permute.xlu0 %1305
      %1307 = vrot.lane.b32.xlu0 %v1144, 4
      %v1308 = vpop.permute.xlu0 %1307
      %1309 = vrot.lane.b32.xlu0 %v1158, 4
      %v1310 = vpop.permute.xlu0 %1309
      %1311 = vrot.lane.b32.xlu0 %v1168, 4
      %v1312 = vpop.permute.xlu0 %1311
      %1313 = vrot.lane.b32.xlu0 %v1182, 4
      %v1314 = vpop.permute.xlu0 %1313
      %1315 = vrot.lane.b32.xlu0 %v1192, 4
      %v1316 = vpop.permute.xlu0 %1315
      %1317 = vrot.lane.b32.xlu0 %v1206, 4
      %v1318 = vpop.permute.xlu0 %1317
      %1319 = vrot.lane.b32.xlu0 %v1216, 4
      %v1320 = vpop.permute.xlu0 %1319
      %1321 = vrot.lane.b32.xlu0 %v1230, 4
      %v1322 = vpop.permute.xlu0 %1321
      %1323 = vrot.lane.b32.xlu0 %v1240, 4
      %v1324 = vpop.permute.xlu0 %1323
      %1325 = vrot.lane.b32.xlu0 %v1254, 4
      %v1326 = vpop.permute.xlu0 %1325
      %1327 = vrot.lane.b32.xlu0 %v1264, 4
      %v1328 = vpop.permute.xlu0 %1327
      %vm1361 = vcmask 60448
      %1362 = vst.msk [vmem:[#allocation3] sm:$0xf] %vm1361, %v1266
      %1363 = vst.msk [vmem:[#allocation3 + $0x4] sm:$0xf] %vm1361, %v1268
      %1364 = vst.msk [vmem:[#allocation3 + $0x8] sm:$0xf] %vm1361, %v1270
      %1365 = vst.msk [vmem:[#allocation3 + $0xc] sm:$0xf] %vm1361, %v1272
      %1366 = vst.msk [vmem:[#allocation3 + $0x10] sm:$0xf] %vm1361, %v1274
      %1367 = vst.msk [vmem:[#allocation3 + $0x14] sm:$0xf] %vm1361, %v1276
      %1368 = vst.msk [vmem:[#allocation3 + $0x18] sm:$0xf] %vm1361, %v1278
      %1369 = vst.msk [vmem:[#allocation3 + $0x1c] sm:$0xf] %vm1361, %v1280
      %1370 = vst.msk [vmem:[#allocation3 + $0x20] sm:$0xf] %vm1361, %v1282
      %1371 = vst.msk [vmem:[#allocation3 + $0x24] sm:$0xf] %vm1361, %v1284
      %1372 = vst.msk [vmem:[#allocation3 + $0x28] sm:$0xf] %vm1361, %v1286
      %1373 = vst.msk [vmem:[#allocation3 + $0x2c] sm:$0xf] %vm1361, %v1288
      %1374 = vst.msk [vmem:[#allocation3 + $0x30] sm:$0xf] %vm1361, %v1290
      %1375 = vst.msk [vmem:[#allocation3 + $0x34] sm:$0xf] %vm1361, %v1292
      %1376 = vst.msk [vmem:[#allocation3 + $0x38] sm:$0xf] %vm1361, %v1294
      %1377 = vst.msk [vmem:[#allocation3 + $0x3c] sm:$0xf] %vm1361, %v1296
      %1378 = vst.msk [vmem:[#allocation3 + $0x40] sm:$0xf] %vm1361, %v1298
      %1379 = vst.msk [vmem:[#allocation3 + $0x44] sm:$0xf] %vm1361, %v1300
      %1380 = vst.msk [vmem:[#allocation3 + $0x48] sm:$0xf] %vm1361, %v1302
      %1381 = vst.msk [vmem:[#allocation3 + $0x4c] sm:$0xf] %vm1361, %v1304
      %1382 = vst.msk [vmem:[#allocation3 + $0x50] sm:$0xf] %vm1361, %v1306
      %1383 = vst.msk [vmem:[#allocation3 + $0x54] sm:$0xf] %vm1361, %v1308
      %1384 = vst.msk [vmem:[#allocation3 + $0x58] sm:$0xf] %vm1361, %v1310
      %1385 = vst.msk [vmem:[#allocation3 + $0x5c] sm:$0xf] %vm1361, %v1312
      %1386 = vst.msk [vmem:[#allocation3 + $0x60] sm:$0xf] %vm1361, %v1314
      %1387 = vst.msk [vmem:[#allocation3 + $0x64] sm:$0xf] %vm1361, %v1316
      %1388 = vst.msk [vmem:[#allocation3 + $0x68] sm:$0xf] %vm1361, %v1318
      %1389 = vst.msk [vmem:[#allocation3 + $0x6c] sm:$0xf] %vm1361, %v1320
      %1390 = vst.msk [vmem:[#allocation3 + $0x70] sm:$0xf] %vm1361, %v1322
      %1391 = vst.msk [vmem:[#allocation3 + $0x74] sm:$0xf] %vm1361, %v1324
      %1392 = vst.msk [vmem:[#allocation3 + $0x78] sm:$0xf] %vm1361, %v1326
      %1393 = vst.msk [vmem:[#allocation3 + $0x7c] sm:$0xf] %vm1361, %v1328
      %v1394 = vld [vmem:[#allocation2] sm:$0xe]
      %v1395 = vld [vmem:[#allocation2 + $0x4] sm:$0xf]
      %v1396 = vld [vmem:[#allocation2 + $0x8] sm:$0x1]
      %v1397 = vld [vmem:[#allocation2 + $0xc] sm:$0xe]
      %v1398 = vld [vmem:[#allocation2 + $0x10] sm:$0xf]
      %v1399 = vld [vmem:[#allocation2 + $0x14] sm:$0x1]
      %v1400 = vld [vmem:[#allocation2 + $0x18] sm:$0xe]
      %v1401 = vld [vmem:[#allocation2 + $0x1c] sm:$0xf]
      %v1402 = vld [vmem:[#allocation2 + $0x20] sm:$0x1]
      %v1403 = vld [vmem:[#allocation2 + $0x24] sm:$0xe]
      %v1404 = vld [vmem:[#allocation2 + $0x28] sm:$0xf]
      %v1405 = vld [vmem:[#allocation2 + $0x2c] sm:$0x1]
      %v1406 = vld [vmem:[#allocation2 + $0x30] sm:$0xe]
      %v1407 = vld [vmem:[#allocation2 + $0x34] sm:$0xf]
      %v1408 = vld [vmem:[#allocation2 + $0x38] sm:$0x1]
      %v1409 = vld [vmem:[#allocation2 + $0x3c] sm:$0xe]
      %v1410 = vld [vmem:[#allocation2 + $0x40] sm:$0xf]
      %v1411 = vld [vmem:[#allocation2 + $0x44] sm:$0x1]
      %v1412 = vld [vmem:[#allocation2 + $0x48] sm:$0xe]
      %v1413 = vld [vmem:[#allocation2 + $0x4c] sm:$0xf]
      %v1414 = vld [vmem:[#allocation2 + $0x50] sm:$0x1]
      %v1415 = vld [vmem:[#allocation2 + $0x54] sm:$0xe]
      %v1416 = vld [vmem:[#allocation2 + $0x58] sm:$0xf]
      %v1417 = vld [vmem:[#allocation2 + $0x5c] sm:$0x1]
      %v1418 = vld [vmem:[#allocation2 + $0x60] sm:$0xe]
      %v1419 = vld [vmem:[#allocation2 + $0x64] sm:$0xf]
      %v1420 = vld [vmem:[#allocation2 + $0x68] sm:$0x1]
      %v1421 = vld [vmem:[#allocation2 + $0x6c] sm:$0xe]
      %v1422 = vld [vmem:[#allocation2 + $0x70] sm:$0xf]
      %v1423 = vld [vmem:[#allocation2 + $0x74] sm:$0x1]
      %v1424 = vld [vmem:[#allocation2 + $0x78] sm:$0xe]
      %v1425 = vld [vmem:[#allocation2 + $0x7c] sm:$0xf]
      %v1426 = vld [vmem:[#allocation2 + $0x80] sm:$0x1]
      %v1427 = vld [vmem:[#allocation2 + $0x84] sm:$0xe]
      %v1428 = vld [vmem:[#allocation2 + $0x88] sm:$0xf]
      %v1429 = vld [vmem:[#allocation2 + $0x8c] sm:$0x1]
      %v1430 = vld [vmem:[#allocation2 + $0x90] sm:$0xe]
      %v1431 = vld [vmem:[#allocation2 + $0x94] sm:$0xf]
      %v1432 = vld [vmem:[#allocation2 + $0x98] sm:$0x1]
      %v1433 = vld [vmem:[#allocation2 + $0x9c] sm:$0xe]
      %v1434 = vld [vmem:[#allocation2 + $0xa0] sm:$0xf]
      %v1435 = vld [vmem:[#allocation2 + $0xa4] sm:$0x1]
      %v1436 = vld [vmem:[#allocation2 + $0xa8] sm:$0xe]
      %v1437 = vld [vmem:[#allocation2 + $0xac] sm:$0xf]
      %v1438 = vld [vmem:[#allocation2 + $0xb0] sm:$0x1]
      %v1439 = vld [vmem:[#allocation2 + $0xb4] sm:$0xe]
      %v1440 = vld [vmem:[#allocation2 + $0xb8] sm:$0xf]
      %v1441 = vld [vmem:[#allocation2 + $0xbc] sm:$0x1]
      %vm1490 = vcmask 1042432
      %vm1491 = vcmask 1046532
      %vm1492 = vmor %vm1490, %vm1491
      %v1493 = vrot.slane %v1394, 5
      %v1494 = vrot.slane %v1493, 4
      %v1495 = vrot.slane %v1395, 5
      %v1496 = vsel %vm1492, %v1494, %v1495
      %v1497 = vrot.slane %v1495, 4
      %v1498 = vrot.slane %v1396, 5
      %v1499 = vsel %vm1492, %v1497, %v1498
      %v1500 = vrot.slane %v1397, 5
      %v1501 = vrot.slane %v1500, 4
      %v1502 = vrot.slane %v1398, 5
      %v1503 = vsel %vm1492, %v1501, %v1502
      %v1504 = vrot.slane %v1502, 4
      %v1505 = vrot.slane %v1399, 5
      %v1506 = vsel %vm1492, %v1504, %v1505
      %v1507 = vrot.slane %v1400, 5
      %v1508 = vrot.slane %v1507, 4
      %v1509 = vrot.slane %v1401, 5
      %v1510 = vsel %vm1492, %v1508, %v1509
      %v1511 = vrot.slane %v1509, 4
      %v1512 = vrot.slane %v1402, 5
      %v1513 = vsel %vm1492, %v1511, %v1512
      %v1514 = vrot.slane %v1403, 5
      %v1515 = vrot.slane %v1514, 4
      %v1516 = vrot.slane %v1404, 5
      %v1517 = vsel %vm1492, %v1515, %v1516
      %v1518 = vrot.slane %v1516, 4
      %v1519 = vrot.slane %v1405, 5
      %v1520 = vsel %vm1492, %v1518, %v1519
      %v1521 = vrot.slane %v1406, 5
      %v1522 = vrot.slane %v1521, 4
      %v1523 = vrot.slane %v1407, 5
      %v1524 = vsel %vm1492, %v1522, %v1523
      %v1525 = vrot.slane %v1523, 4
      %v1526 = vrot.slane %v1408, 5
      %v1527 = vsel %vm1492, %v1525, %v1526
      %v1528 = vrot.slane %v1409, 5
      %v1529 = vrot.slane %v1528, 4
      %v1530 = vrot.slane %v1410, 5
      %v1531 = vsel %vm1492, %v1529, %v1530
      %v1532 = vrot.slane %v1530, 4
      %v1533 = vrot.slane %v1411, 5
      %v1534 = vsel %vm1492, %v1532, %v1533
      %v1535 = vrot.slane %v1412, 5
      %v1536 = vrot.slane %v1535, 4
      %v1537 = vrot.slane %v1413, 5
      %v1538 = vsel %vm1492, %v1536, %v1537
      %v1539 = vrot.slane %v1537, 4
      %v1540 = vrot.slane %v1414, 5
      %v1541 = vsel %vm1492, %v1539, %v1540
      %v1542 = vrot.slane %v1415, 5
      %v1543 = vrot.slane %v1542, 4
      %v1544 = vrot.slane %v1416, 5
      %v1545 = vsel %vm1492, %v1543, %v1544
      %v1546 = vrot.slane %v1544, 4
      %v1547 = vrot.slane %v1417, 5
      %v1548 = vsel %vm1492, %v1546, %v1547
      %v1549 = vrot.slane %v1418, 5
      %v1550 = vrot.slane %v1549, 4
      %v1551 = vrot.slane %v1419, 5
      %v1552 = vsel %vm1492, %v1550, %v1551
      %v1553 = vrot.slane %v1551, 4
      %v1554 = vrot.slane %v1420, 5
      %v1555 = vsel %vm1492, %v1553, %v1554
      %v1556 = vrot.slane %v1421, 5
      %v1557 = vrot.slane %v1556, 4
      %v1558 = vrot.slane %v1422, 5
      %v1559 = vsel %vm1492, %v1557, %v1558
      %v1560 = vrot.slane %v1558, 4
      %v1561 = vrot.slane %v1423, 5
      %v1562 = vsel %vm1492, %v1560, %v1561
      %v1563 = vrot.slane %v1424, 5
      %v1564 = vrot.slane %v1563, 4
      %v1565 = vrot.slane %v1425, 5
      %v1566 = vsel %vm1492, %v1564, %v1565
      %v1567 = vrot.slane %v1565, 4
      %v1568 = vrot.slane %v1426, 5
      %v1569 = vsel %vm1492, %v1567, %v1568
      %v1570 = vrot.slane %v1427, 5
      %v1571 = vrot.slane %v1570, 4
      %v1572 = vrot.slane %v1428, 5
      %v1573 = vsel %vm1492, %v1571, %v1572
      %v1574 = vrot.slane %v1572, 4
      %v1575 = vrot.slane %v1429, 5
      %v1576 = vsel %vm1492, %v1574, %v1575
      %v1577 = vrot.slane %v1430, 5
      %v1578 = vrot.slane %v1577, 4
      %v1579 = vrot.slane %v1431, 5
      %v1580 = vsel %vm1492, %v1578, %v1579
      %v1581 = vrot.slane %v1579, 4
      %v1582 = vrot.slane %v1432, 5
      %v1583 = vsel %vm1492, %v1581, %v1582
      %v1584 = vrot.slane %v1433, 5
      %v1585 = vrot.slane %v1584, 4
      %v1586 = vrot.slane %v1434, 5
      %v1587 = vsel %vm1492, %v1585, %v1586
      %v1588 = vrot.slane %v1586, 4
      %v1589 = vrot.slane %v1435, 5
      %v1590 = vsel %vm1492, %v1588, %v1589
      %v1591 = vrot.slane %v1436, 5
      %v1592 = vrot.slane %v1591, 4
      %v1593 = vrot.slane %v1437, 5
      %v1594 = vsel %vm1492, %v1592, %v1593
      %v1595 = vrot.slane %v1593, 4
      %v1596 = vrot.slane %v1438, 5
      %v1597 = vsel %vm1492, %v1595, %v1596
      %v1598 = vrot.slane %v1439, 5
      %v1599 = vrot.slane %v1598, 4
      %v1600 = vrot.slane %v1440, 5
      %v1601 = vsel %vm1492, %v1599, %v1600
      %v1602 = vrot.slane %v1600, 4
      %v1603 = vrot.slane %v1441, 5
      %v1604 = vsel %vm1492, %v1602, %v1603
      %1605 = vrot.lane.b32.xlu0 %v1496, 8
      %v1606 = vpop.permute.xlu0 %1605
      %1607 = vrot.lane.b32.xlu0 %v1499, 8
      %v1608 = vpop.permute.xlu0 %1607
      %1609 = vrot.lane.b32.xlu0 %v1503, 8
      %v1610 = vpop.permute.xlu0 %1609
      %1611 = vrot.lane.b32.xlu0 %v1506, 8
      %v1612 = vpop.permute.xlu0 %1611
      %1613 = vrot.lane.b32.xlu0 %v1510, 8
      %v1614 = vpop.permute.xlu0 %1613
      %1615 = vrot.lane.b32.xlu0 %v1513, 8
      %v1616 = vpop.permute.xlu0 %1615
      %1617 = vrot.lane.b32.xlu0 %v1517, 8
      %v1618 = vpop.permute.xlu0 %1617
      %1619 = vrot.lane.b32.xlu0 %v1520, 8
      %v1620 = vpop.permute.xlu0 %1619
      %1621 = vrot.lane.b32.xlu0 %v1524, 8
      %v1622 = vpop.permute.xlu0 %1621
      %1623 = vrot.lane.b32.xlu0 %v1527, 8
      %v1624 = vpop.permute.xlu0 %1623
      %1625 = vrot.lane.b32.xlu0 %v1531, 8
      %v1626 = vpop.permute.xlu0 %1625
      %1627 = vrot.lane.b32.xlu0 %v1534, 8
      %v1628 = vpop.permute.xlu0 %1627
      %1629 = vrot.lane.b32.xlu0 %v1538, 8
      %v1630 = vpop.permute.xlu0 %1629
      %1631 = vrot.lane.b32.xlu0 %v1541, 8
      %v1632 = vpop.permute.xlu0 %1631
      %1633 = vrot.lane.b32.xlu0 %v1545, 8
      %v1634 = vpop.permute.xlu0 %1633
      %1635 = vrot.lane.b32.xlu0 %v1548, 8
      %v1636 = vpop.permute.xlu0 %1635
      %1637 = vrot.lane.b32.xlu0 %v1552, 8
      %v1638 = vpop.permute.xlu0 %1637
      %1639 = vrot.lane.b32.xlu0 %v1555, 8
      %v1640 = vpop.permute.xlu0 %1639
      %1641 = vrot.lane.b32.xlu0 %v1559, 8
      %v1642 = vpop.permute.xlu0 %1641
      %1643 = vrot.lane.b32.xlu0 %v1562, 8
      %v1644 = vpop.permute.xlu0 %1643
      %1645 = vrot.lane.b32.xlu0 %v1566, 8
      %v1646 = vpop.permute.xlu0 %1645
      %1647 = vrot.lane.b32.xlu0 %v1569, 8
      %v1648 = vpop.permute.xlu0 %1647
      %1649 = vrot.lane.b32.xlu0 %v1573, 8
      %v1650 = vpop.permute.xlu0 %1649
      %1651 = vrot.lane.b32.xlu0 %v1576, 8
      %v1652 = vpop.permute.xlu0 %1651
      %1653 = vrot.lane.b32.xlu0 %v1580, 8
      %v1654 = vpop.permute.xlu0 %1653
      %1655 = vrot.lane.b32.xlu0 %v1583, 8
      %v1656 = vpop.permute.xlu0 %1655
      %1657 = vrot.lane.b32.xlu0 %v1587, 8
      %v1658 = vpop.permute.xlu0 %1657
      %1659 = vrot.lane.b32.xlu0 %v1590, 8
      %v1660 = vpop.permute.xlu0 %1659
      %1661 = vrot.lane.b32.xlu0 %v1594, 8
      %v1662 = vpop.permute.xlu0 %1661
      %1663 = vrot.lane.b32.xlu0 %v1597, 8
      %v1664 = vpop.permute.xlu0 %1663
      %1665 = vrot.lane.b32.xlu0 %v1601, 8
      %v1666 = vpop.permute.xlu0 %1665
      %1667 = vrot.lane.b32.xlu0 %v1604, 8
      %v1668 = vpop.permute.xlu0 %1667
      %vm1701 = vcmask 93248
      %1702 = vst.msk [vmem:[#allocation3] sm:$0xf] %vm1701, %v1606
      %1703 = vst.msk [vmem:[#allocation3 + $0x4] sm:$0xf] %vm1701, %v1608
      %1704 = vst.msk [vmem:[#allocation3 + $0x8] sm:$0xf] %vm1701, %v1610
      %1705 = vst.msk [vmem:[#allocation3 + $0xc] sm:$0xf] %vm1701, %v1612
      %1706 = vst.msk [vmem:[#allocation3 + $0x10] sm:$0xf] %vm1701, %v1614
      %1707 = vst.msk [vmem:[#allocation3 + $0x14] sm:$0xf] %vm1701, %v1616
      %1708 = vst.msk [vmem:[#allocation3 + $0x18] sm:$0xf] %vm1701, %v1618
      %1709 = vst.msk [vmem:[#allocation3 + $0x1c] sm:$0xf] %vm1701, %v1620
      %1710 = vst.msk [vmem:[#allocation3 + $0x20] sm:$0xf] %vm1701, %v1622
      %1711 = vst.msk [vmem:[#allocation3 + $0x24] sm:$0xf] %vm1701, %v1624
      %1712 = vst.msk [vmem:[#allocation3 + $0x28] sm:$0xf] %vm1701, %v1626
      %1713 = vst.msk [vmem:[#allocation3 + $0x2c] sm:$0xf] %vm1701, %v1628
      %1714 = vst.msk [vmem:[#allocation3 + $0x30] sm:$0xf] %vm1701, %v1630
      %1715 = vst.msk [vmem:[#allocation3 + $0x34] sm:$0xf] %vm1701, %v1632
      %1716 = vst.msk [vmem:[#allocation3 + $0x38] sm:$0xf] %vm1701, %v1634
      %1717 = vst.msk [vmem:[#allocation3 + $0x3c] sm:$0xf] %vm1701, %v1636
      %1718 = vst.msk [vmem:[#allocation3 + $0x40] sm:$0xf] %vm1701, %v1638
      %1719 = vst.msk [vmem:[#allocation3 + $0x44] sm:$0xf] %vm1701, %v1640
      %1720 = vst.msk [vmem:[#allocation3 + $0x48] sm:$0xf] %vm1701, %v1642
      %1721 = vst.msk [vmem:[#allocation3 + $0x4c] sm:$0xf] %vm1701, %v1644
      %1722 = vst.msk [vmem:[#allocation3 + $0x50] sm:$0xf] %vm1701, %v1646
      %1723 = vst.msk [vmem:[#allocation3 + $0x54] sm:$0xf] %vm1701, %v1648
      %1724 = vst.msk [vmem:[#allocation3 + $0x58] sm:$0xf] %vm1701, %v1650
      %1725 = vst.msk [vmem:[#allocation3 + $0x5c] sm:$0xf] %vm1701, %v1652
      %1726 = vst.msk [vmem:[#allocation3 + $0x60] sm:$0xf] %vm1701, %v1654
      %1727 = vst.msk [vmem:[#allocation3 + $0x64] sm:$0xf] %vm1701, %v1656
      %1728 = vst.msk [vmem:[#allocation3 + $0x68] sm:$0xf] %vm1701, %v1658
      %1729 = vst.msk [vmem:[#allocation3 + $0x6c] sm:$0xf] %vm1701, %v1660
      %1730 = vst.msk [vmem:[#allocation3 + $0x70] sm:$0xf] %vm1701, %v1662
      %1731 = vst.msk [vmem:[#allocation3 + $0x74] sm:$0xf] %vm1701, %v1664
      %1732 = vst.msk [vmem:[#allocation3 + $0x78] sm:$0xf] %vm1701, %v1666
      %1733 = vst.msk [vmem:[#allocation3 + $0x7c] sm:$0xf] %vm1701, %v1668
      %v1734 = vld [vmem:[%s648] sm:$0xf]
      %v1735 = vld [vmem:[%s648 + $0x4] sm:$0xf]
      %v1736 = vld [vmem:[%s648 + $0xc] sm:$0xf]
      %v1737 = vld [vmem:[%s648 + $0x10] sm:$0xf]
      %v1738 = vld [vmem:[%s648 + $0x18] sm:$0xf]
      %v1739 = vld [vmem:[%s648 + $0x1c] sm:$0xf]
      %v1740 = vld [vmem:[%s648 + $0x24] sm:$0xf]
      %v1741 = vld [vmem:[%s648 + $0x28] sm:$0xf]
      %v1742 = vld [vmem:[%s648 + $0x30] sm:$0xf]
      %v1743 = vld [vmem:[%s648 + $0x34] sm:$0xf]
      %v1744 = vld [vmem:[%s648 + $0x3c] sm:$0xf]
      %v1745 = vld [vmem:[%s648 + $0x40] sm:$0xf]
      %v1746 = vld [vmem:[%s648 + $0x48] sm:$0xf]
      %v1747 = vld [vmem:[%s648 + $0x4c] sm:$0xf]
      %v1748 = vld [vmem:[%s648 + $0x54] sm:$0xf]
      %v1749 = vld [vmem:[%s648 + $0x58] sm:$0xf]
      %v1750 = vld [vmem:[%s648 + $0x60] sm:$0xf]
      %v1751 = vld [vmem:[%s648 + $0x64] sm:$0xf]
      %v1752 = vld [vmem:[%s648 + $0x6c] sm:$0xf]
      %v1753 = vld [vmem:[%s648 + $0x70] sm:$0xf]
      %v1754 = vld [vmem:[%s648 + $0x78] sm:$0xf]
      %v1755 = vld [vmem:[%s648 + $0x7c] sm:$0xf]
      %v1756 = vld [vmem:[%s648 + $0x84] sm:$0xf]
      %v1757 = vld [vmem:[%s648 + $0x88] sm:$0xf]
      %v1758 = vld [vmem:[%s648 + $0x90] sm:$0xf]
      %v1759 = vld [vmem:[%s648 + $0x94] sm:$0xf]
      %v1760 = vld [vmem:[%s648 + $0x9c] sm:$0xf]
      %v1761 = vld [vmem:[%s648 + $0xa0] sm:$0xf]
      %v1762 = vld [vmem:[%s648 + $0xa8] sm:$0xf]
      %v1763 = vld [vmem:[%s648 + $0xac] sm:$0xf]
      %v1764 = vld [vmem:[%s648 + $0xb4] sm:$0xf]
      %v1765 = vld [vmem:[%s648 + $0xb8] sm:$0xf]
      %1798 = vrot.lane.b32.xlu0 %v1734, 12
      %v1799 = vpop.permute.xlu0 %1798
      %1800 = vrot.lane.b32.xlu0 %v1735, 12
      %v1801 = vpop.permute.xlu0 %1800
      %1802 = vrot.lane.b32.xlu0 %v1736, 12
      %v1803 = vpop.permute.xlu0 %1802
      %1804 = vrot.lane.b32.xlu0 %v1737, 12
      %v1805 = vpop.permute.xlu0 %1804
      %1806 = vrot.lane.b32.xlu0 %v1738, 12
      %v1807 = vpop.permute.xlu0 %1806
      %1808 = vrot.lane.b32.xlu0 %v1739, 12
      %v1809 = vpop.permute.xlu0 %1808
      %1810 = vrot.lane.b32.xlu0 %v1740, 12
      %v1811 = vpop.permute.xlu0 %1810
      %1812 = vrot.lane.b32.xlu0 %v1741, 12
      %v1813 = vpop.permute.xlu0 %1812
      %1814 = vrot.lane.b32.xlu0 %v1742, 12
      %v1815 = vpop.permute.xlu0 %1814
      %1816 = vrot.lane.b32.xlu0 %v1743, 12
      %v1817 = vpop.permute.xlu0 %1816
      %1818 = vrot.lane.b32.xlu0 %v1744, 12
      %v1819 = vpop.permute.xlu0 %1818
      %1820 = vrot.lane.b32.xlu0 %v1745, 12
      %v1821 = vpop.permute.xlu0 %1820
      %1822 = vrot.lane.b32.xlu0 %v1746, 12
      %v1823 = vpop.permute.xlu0 %1822
      %1824 = vrot.lane.b32.xlu0 %v1747, 12
      %v1825 = vpop.permute.xlu0 %1824
      %1826 = vrot.lane.b32.xlu0 %v1748, 12
      %v1827 = vpop.permute.xlu0 %1826
      %1828 = vrot.lane.b32.xlu0 %v1749, 12
      %v1829 = vpop.permute.xlu0 %1828
      %1830 = vrot.lane.b32.xlu0 %v1750, 12
      %v1831 = vpop.permute.xlu0 %1830
      %1832 = vrot.lane.b32.xlu0 %v1751, 12
      %v1833 = vpop.permute.xlu0 %1832
      %1834 = vrot.lane.b32.xlu0 %v1752, 12
      %v1835 = vpop.permute.xlu0 %1834
      %1836 = vrot.lane.b32.xlu0 %v1753, 12
      %v1837 = vpop.permute.xlu0 %1836
      %1838 = vrot.lane.b32.xlu0 %v1754, 12
      %v1839 = vpop.permute.xlu0 %1838
      %1840 = vrot.lane.b32.xlu0 %v1755, 12
      %v1841 = vpop.permute.xlu0 %1840
      %1842 = vrot.lane.b32.xlu0 %v1756, 12
      %v1843 = vpop.permute.xlu0 %1842
      %1844 = vrot.lane.b32.xlu0 %v1757, 12
      %v1845 = vpop.permute.xlu0 %1844
      %1846 = vrot.lane.b32.xlu0 %v1758, 12
      %v1847 = vpop.permute.xlu0 %1846
      %1848 = vrot.lane.b32.xlu0 %v1759, 12
      %v1849 = vpop.permute.xlu0 %1848
      %1850 = vrot.lane.b32.xlu0 %v1760, 12
      %v1851 = vpop.permute.xlu0 %1850
      %1852 = vrot.lane.b32.xlu0 %v1761, 12
      %v1853 = vpop.permute.xlu0 %1852
      %1854 = vrot.lane.b32.xlu0 %v1762, 12
      %v1855 = vpop.permute.xlu0 %1854
      %1856 = vrot.lane.b32.xlu0 %v1763, 12
      %v1857 = vpop.permute.xlu0 %1856
      %1858 = vrot.lane.b32.xlu0 %v1764, 12
      %v1859 = vpop.permute.xlu0 %1858
      %1860 = vrot.lane.b32.xlu0 %v1765, 12
      %v1861 = vpop.permute.xlu0 %1860
      %vm1894 = vcmask 126048
      %1895 = vst.msk [vmem:[#allocation3] sm:$0xf] %vm1894, %v1799
      %1896 = vst.msk [vmem:[#allocation3 + $0x4] sm:$0xf] %vm1894, %v1801
      %1897 = vst.msk [vmem:[#allocation3 + $0x8] sm:$0xf] %vm1894, %v1803
      %1898 = vst.msk [vmem:[#allocation3 + $0xc] sm:$0xf] %vm1894, %v1805
      %1899 = vst.msk [vmem:[#allocation3 + $0x10] sm:$0xf] %vm1894, %v1807
      %1900 = vst.msk [vmem:[#allocation3 + $0x14] sm:$0xf] %vm1894, %v1809
      %1901 = vst.msk [vmem:[#allocation3 + $0x18] sm:$0xf] %vm1894, %v1811
      %1902 = vst.msk [vmem:[#allocation3 + $0x1c] sm:$0xf] %vm1894, %v1813
      %1903 = vst.msk [vmem:[#allocation3 + $0x20] sm:$0xf] %vm1894, %v1815
      %1904 = vst.msk [vmem:[#allocation3 + $0x24] sm:$0xf] %vm1894, %v1817
      %1905 = vst.msk [vmem:[#allocation3 + $0x28] sm:$0xf] %vm1894, %v1819
      %1906 = vst.msk [vmem:[#allocation3 + $0x2c] sm:$0xf] %vm1894, %v1821
      %1907 = vst.msk [vmem:[#allocation3 + $0x30] sm:$0xf] %vm1894, %v1823
      %1908 = vst.msk [vmem:[#allocation3 + $0x34] sm:$0xf] %vm1894, %v1825
      %1909 = vst.msk [vmem:[#allocation3 + $0x38] sm:$0xf] %vm1894, %v1827
      %1910 = vst.msk [vmem:[#allocation3 + $0x3c] sm:$0xf] %vm1894, %v1829
      %1911 = vst.msk [vmem:[#allocation3 + $0x40] sm:$0xf] %vm1894, %v1831
      %1912 = vst.msk [vmem:[#allocation3 + $0x44] sm:$0xf] %vm1894, %v1833
      %1913 = vst.msk [vmem:[#allocation3 + $0x48] sm:$0xf] %vm1894, %v1835
      %1914 = vst.msk [vmem:[#allocation3 + $0x4c] sm:$0xf] %vm1894, %v1837
      %1915 = vst.msk [vmem:[#allocation3 + $0x50] sm:$0xf] %vm1894, %v1839
      %1916 = vst.msk [vmem:[#allocation3 + $0x54] sm:$0xf] %vm1894, %v1841
      %1917 = vst.msk [vmem:[#allocation3 + $0x58] sm:$0xf] %vm1894, %v1843
      %1918 = vst.msk [vmem:[#allocation3 + $0x5c] sm:$0xf] %vm1894, %v1845
      %1919 = vst.msk [vmem:[#allocation3 + $0x60] sm:$0xf] %vm1894, %v1847
      %1920 = vst.msk [vmem:[#allocation3 + $0x64] sm:$0xf] %vm1894, %v1849
      %1921 = vst.msk [vmem:[#allocation3 + $0x68] sm:$0xf] %vm1894, %v1851
      %1922 = vst.msk [vmem:[#allocation3 + $0x6c] sm:$0xf] %vm1894, %v1853
      %1923 = vst.msk [vmem:[#allocation3 + $0x70] sm:$0xf] %vm1894, %v1855
      %1924 = vst.msk [vmem:[#allocation3 + $0x74] sm:$0xf] %vm1894, %v1857
      %1925 = vst.msk [vmem:[#allocation3 + $0x78] sm:$0xf] %vm1894, %v1859
      %1926 = vst.msk [vmem:[#allocation3 + $0x7c] sm:$0xf] %vm1894, %v1861
      %v1927 = vld [vmem:[%s648] sm:$0xf]
      %v1928 = vld [vmem:[%s648 + $0x4] sm:$0xf]
      %v1929 = vld [vmem:[%s648 + $0x8] sm:$0x1]
      %v1930 = vld [vmem:[%s648 + $0xc] sm:$0xf]
      %v1931 = vld [vmem:[%s648 + $0x10] sm:$0xf]
      %v1932 = vld [vmem:[%s648 + $0x14] sm:$0x1]
      %v1933 = vld [vmem:[%s648 + $0x18] sm:$0xf]
      %v1934 = vld [vmem:[%s648 + $0x1c] sm:$0xf]
      %v1935 = vld [vmem:[%s648 + $0x20] sm:$0x1]
      %v1936 = vld [vmem:[%s648 + $0x24] sm:$0xf]
      %v1937 = vld [vmem:[%s648 + $0x28] sm:$0xf]
      %v1938 = vld [vmem:[%s648 + $0x2c] sm:$0x1]
      %v1939 = vld [vmem:[%s648 + $0x30] sm:$0xf]
      %v1940 = vld [vmem:[%s648 + $0x34] sm:$0xf]
      %v1941 = vld [vmem:[%s648 + $0x38] sm:$0x1]
      %v1942 = vld [vmem:[%s648 + $0x3c] sm:$0xf]
      %v1943 = vld [vmem:[%s648 + $0x40] sm:$0xf]
      %v1944 = vld [vmem:[%s648 + $0x44] sm:$0x1]
      %v1945 = vld [vmem:[%s648 + $0x48] sm:$0xf]
      %v1946 = vld [vmem:[%s648 + $0x4c] sm:$0xf]
      %v1947 = vld [vmem:[%s648 + $0x50] sm:$0x1]
      %v1948 = vld [vmem:[%s648 + $0x54] sm:$0xf]
      %v1949 = vld [vmem:[%s648 + $0x58] sm:$0xf]
      %v1950 = vld [vmem:[%s648 + $0x5c] sm:$0x1]
      %v1951 = vld [vmem:[%s648 + $0x60] sm:$0xf]
      %v1952 = vld [vmem:[%s648 + $0x64] sm:$0xf]
      %v1953 = vld [vmem:[%s648 + $0x68] sm:$0x1]
      %v1954 = vld [vmem:[%s648 + $0x6c] sm:$0xf]
      %v1955 = vld [vmem:[%s648 + $0x70] sm:$0xf]
      %v1956 = vld [vmem:[%s648 + $0x74] sm:$0x1]
      %v1957 = vld [vmem:[%s648 + $0x78] sm:$0xf]
      %v1958 = vld [vmem:[%s648 + $0x7c] sm:$0xf]
      %v1959 = vld [vmem:[%s648 + $0x80] sm:$0x1]
      %v1960 = vld [vmem:[%s648 + $0x84] sm:$0xf]
      %v1961 = vld [vmem:[%s648 + $0x88] sm:$0xf]
      %v1962 = vld [vmem:[%s648 + $0x8c] sm:$0x1]
      %v1963 = vld [vmem:[%s648 + $0x90] sm:$0xf]
      %v1964 = vld [vmem:[%s648 + $0x94] sm:$0xf]
      %v1965 = vld [vmem:[%s648 + $0x98] sm:$0x1]
      %v1966 = vld [vmem:[%s648 + $0x9c] sm:$0xf]
      %v1967 = vld [vmem:[%s648 + $0xa0] sm:$0xf]
      %v1968 = vld [vmem:[%s648 + $0xa4] sm:$0x1]
      %v1969 = vld [vmem:[%s648 + $0xa8] sm:$0xf]
      %v1970 = vld [vmem:[%s648 + $0xac] sm:$0xf]
      %v1971 = vld [vmem:[%s648 + $0xb0] sm:$0x1]
      %v1972 = vld [vmem:[%s648 + $0xb4] sm:$0xf]
      %v1973 = vld [vmem:[%s648 + $0xb8] sm:$0xf]
      %v1974 = vld [vmem:[%s648 + $0xbc] sm:$0x1]
      %v1976 = vshrl.u32 %v1927, 16
      %v1978 = vrot.slane %v1976, 4
      %v1979 = vshll.u32 %v1927, 16
      %v1981 = vrot.slane %v1979, 5
      %v1982 = vor.u32 %v1978, %v1981
      %v1983 = vrot.slane %v1982, 4
      %v1985 = vshll.u32 %v1928, 16
      %v1987 = vrot.slane %v1985, 5
      %v1988 = vsel %vm880, %v1983, %v1987
      %v1989 = vshrl.u32 %v1928, 16
      %v1991 = vrot.slane %v1989, 4
      %v1992 = vor.u32 %v1991, %v1987
      %v1993 = vrot.slane %v1992, 4
      %v1995 = vshll.u32 %v1929, 16
      %v1997 = vrot.slane %v1995, 5
      %v1998 = vsel %vm880, %v1993, %v1997
      %v2000 = vshrl.u32 %v1930, 16
      %v2002 = vrot.slane %v2000, 4
      %v2003 = vshll.u32 %v1930, 16
      %v2005 = vrot.slane %v2003, 5
      %v2006 = vor.u32 %v2002, %v2005
      %v2007 = vrot.slane %v2006, 4
      %v2009 = vshll.u32 %v1931, 16
      %v2011 = vrot.slane %v2009, 5
      %v2012 = vsel %vm880, %v2007, %v2011
      %v2013 = vshrl.u32 %v1931, 16
      %v2015 = vrot.slane %v2013, 4
      %v2016 = vor.u32 %v2015, %v2011
      %v2017 = vrot.slane %v2016, 4
      %v2019 = vshll.u32 %v1932, 16
      %v2021 = vrot.slane %v2019, 5
      %v2022 = vsel %vm880, %v2017, %v2021
      %v2024 = vshrl.u32 %v1933, 16
      %v2026 = vrot.slane %v2024, 4
      %v2027 = vshll.u32 %v1933, 16
      %v2029 = vrot.slane %v2027, 5
      %v2030 = vor.u32 %v2026, %v2029
      %v2031 = vrot.slane %v2030, 4
      %v2033 = vshll.u32 %v1934, 16
      %v2035 = vrot.slane %v2033, 5
      %v2036 = vsel %vm880, %v2031, %v2035
      %v2037 = vshrl.u32 %v1934, 16
      %v2039 = vrot.slane %v2037, 4
      %v2040 = vor.u32 %v2039, %v2035
      %v2041 = vrot.slane %v2040, 4
      %v2043 = vshll.u32 %v1935, 16
      %v2045 = vrot.slane %v2043, 5
      %v2046 = vsel %vm880, %v2041, %v2045
      %v2048 = vshrl.u32 %v1936, 16
      %v2050 = vrot.slane %v2048, 4
      %v2051 = vshll.u32 %v1936, 16
      %v2053 = vrot.slane %v2051, 5
      %v2054 = vor.u32 %v2050, %v2053
      %v2055 = vrot.slane %v2054, 4
      %v2057 = vshll.u32 %v1937, 16
      %v2059 = vrot.slane %v2057, 5
      %v2060 = vsel %vm880, %v2055, %v2059
      %v2061 = vshrl.u32 %v1937, 16
      %v2063 = vrot.slane %v2061, 4
      %v2064 = vor.u32 %v2063, %v2059
      %v2065 = vrot.slane %v2064, 4
      %v2067 = vshll.u32 %v1938, 16
      %v2069 = vrot.slane %v2067, 5
      %v2070 = vsel %vm880, %v2065, %v2069
      %v2072 = vshrl.u32 %v1939, 16
      %v2074 = vrot.slane %v2072, 4
      %v2075 = vshll.u32 %v1939, 16
      %v2077 = vrot.slane %v2075, 5
      %v2078 = vor.u32 %v2074, %v2077
      %v2079 = vrot.slane %v2078, 4
      %v2081 = vshll.u32 %v1940, 16
      %v2083 = vrot.slane %v2081, 5
      %v2084 = vsel %vm880, %v2079, %v2083
      %v2085 = vshrl.u32 %v1940, 16
      %v2087 = vrot.slane %v2085, 4
      %v2088 = vor.u32 %v2087, %v2083
      %v2089 = vrot.slane %v2088, 4
      %v2091 = vshll.u32 %v1941, 16
      %v2093 = vrot.slane %v2091, 5
      %v2094 = vsel %vm880, %v2089, %v2093
      %v2096 = vshrl.u32 %v1942, 16
      %v2098 = vrot.slane %v2096, 4
      %v2099 = vshll.u32 %v1942, 16
      %v2101 = vrot.slane %v2099, 5
      %v2102 = vor.u32 %v2098, %v2101
      %v2103 = vrot.slane %v2102, 4
      %v2105 = vshll.u32 %v1943, 16
      %v2107 = vrot.slane %v2105, 5
      %v2108 = vsel %vm880, %v2103, %v2107
      %v2109 = vshrl.u32 %v1943, 16
      %v2111 = vrot.slane %v2109, 4
      %v2112 = vor.u32 %v2111, %v2107
      %v2113 = vrot.slane %v2112, 4
      %v2115 = vshll.u32 %v1944, 16
      %v2117 = vrot.slane %v2115, 5
      %v2118 = vsel %vm880, %v2113, %v2117
      %v2120 = vshrl.u32 %v1945, 16
      %v2122 = vrot.slane %v2120, 4
      %v2123 = vshll.u32 %v1945, 16
      %v2125 = vrot.slane %v2123, 5
      %v2126 = vor.u32 %v2122, %v2125
      %v2127 = vrot.slane %v2126, 4
      %v2129 = vshll.u32 %v1946, 16
      %v2131 = vrot.slane %v2129, 5
      %v2132 = vsel %vm880, %v2127, %v2131
      %v2133 = vshrl.u32 %v1946, 16
      %v2135 = vrot.slane %v2133, 4
      %v2136 = vor.u32 %v2135, %v2131
      %v2137 = vrot.slane %v2136, 4
      %v2139 = vshll.u32 %v1947, 16
      %v2141 = vrot.slane %v2139, 5
      %v2142 = vsel %vm880, %v2137, %v2141
      %v2144 = vshrl.u32 %v1948, 16
      %v2146 = vrot.slane %v2144, 4
      %v2147 = vshll.u32 %v1948, 16
      %v2149 = vrot.slane %v2147, 5
      %v2150 = vor.u32 %v2146, %v2149
      %v2151 = vrot.slane %v2150, 4
      %v2153 = vshll.u32 %v1949, 16
      %v2155 = vrot.slane %v2153, 5
      %v2156 = vsel %vm880, %v2151, %v2155
      %v2157 = vshrl.u32 %v1949, 16
      %v2159 = vrot.slane %v2157, 4
      %v2160 = vor.u32 %v2159, %v2155
      %v2161 = vrot.slane %v2160, 4
      %v2163 = vshll.u32 %v1950, 16
      %v2165 = vrot.slane %v2163, 5
      %v2166 = vsel %vm880, %v2161, %v2165
      %v2168 = vshrl.u32 %v1951, 16
      %v2170 = vrot.slane %v2168, 4
      %v2171 = vshll.u32 %v1951, 16
      %v2173 = vrot.slane %v2171, 5
      %v2174 = vor.u32 %v2170, %v2173
      %v2175 = vrot.slane %v2174, 4
      %v2177 = vshll.u32 %v1952, 16
      %v2179 = vrot.slane %v2177, 5
      %v2180 = vsel %vm880, %v2175, %v2179
      %v2181 = vshrl.u32 %v1952, 16
      %v2183 = vrot.slane %v2181, 4
      %v2184 = vor.u32 %v2183, %v2179
      %v2185 = vrot.slane %v2184, 4
      %v2187 = vshll.u32 %v1953, 16
      %v2189 = vrot.slane %v2187, 5
      %v2190 = vsel %vm880, %v2185, %v2189
      %v2192 = vshrl.u32 %v1954, 16
      %v2194 = vrot.slane %v2192, 4
      %v2195 = vshll.u32 %v1954, 16
      %v2197 = vrot.slane %v2195, 5
      %v2198 = vor.u32 %v2194, %v2197
      %v2199 = vrot.slane %v2198, 4
      %v2201 = vshll.u32 %v1955, 16
      %v2203 = vrot.slane %v2201, 5
      %v2204 = vsel %vm880, %v2199, %v2203
      %v2205 = vshrl.u32 %v1955, 16
      %v2207 = vrot.slane %v2205, 4
      %v2208 = vor.u32 %v2207, %v2203
      %v2209 = vrot.slane %v2208, 4
      %v2211 = vshll.u32 %v1956, 16
      %v2213 = vrot.slane %v2211, 5
      %v2214 = vsel %vm880, %v2209, %v2213
      %v2216 = vshrl.u32 %v1957, 16
      %v2218 = vrot.slane %v2216, 4
      %v2219 = vshll.u32 %v1957, 16
      %v2221 = vrot.slane %v2219, 5
      %v2222 = vor.u32 %v2218, %v2221
      %v2223 = vrot.slane %v2222, 4
      %v2225 = vshll.u32 %v1958, 16
      %v2227 = vrot.slane %v2225, 5
      %v2228 = vsel %vm880, %v2223, %v2227
      %v2229 = vshrl.u32 %v1958, 16
      %v2231 = vrot.slane %v2229, 4
      %v2232 = vor.u32 %v2231, %v2227
      %v2233 = vrot.slane %v2232, 4
      %v2235 = vshll.u32 %v1959, 16
      %v2237 = vrot.slane %v2235, 5
      %v2238 = vsel %vm880, %v2233, %v2237
      %v2240 = vshrl.u32 %v1960, 16
      %v2242 = vrot.slane %v2240, 4
      %v2243 = vshll.u32 %v1960, 16
      %v2245 = vrot.slane %v2243, 5
      %v2246 = vor.u32 %v2242, %v2245
      %v2247 = vrot.slane %v2246, 4
      %v2249 = vshll.u32 %v1961, 16
      %v2251 = vrot.slane %v2249, 5
      %v2252 = vsel %vm880, %v2247, %v2251
      %v2253 = vshrl.u32 %v1961, 16
      %v2255 = vrot.slane %v2253, 4
      %v2256 = vor.u32 %v2255, %v2251
      %v2257 = vrot.slane %v2256, 4
      %v2259 = vshll.u32 %v1962, 16
      %v2261 = vrot.slane %v2259, 5
      %v2262 = vsel %vm880, %v2257, %v2261
      %v2264 = vshrl.u32 %v1963, 16
      %v2266 = vrot.slane %v2264, 4
      %v2267 = vshll.u32 %v1963, 16
      %v2269 = vrot.slane %v2267, 5
      %v2270 = vor.u32 %v2266, %v2269
      %v2271 = vrot.slane %v2270, 4
      %v2273 = vshll.u32 %v1964, 16
      %v2275 = vrot.slane %v2273, 5
      %v2276 = vsel %vm880, %v2271, %v2275
      %v2277 = vshrl.u32 %v1964, 16
      %v2279 = vrot.slane %v2277, 4
      %v2280 = vor.u32 %v2279, %v2275
      %v2281 = vrot.slane %v2280, 4
      %v2283 = vshll.u32 %v1965, 16
      %v2285 = vrot.slane %v2283, 5
      %v2286 = vsel %vm880, %v2281, %v2285
      %v2288 = vshrl.u32 %v1966, 16
      %v2290 = vrot.slane %v2288, 4
      %v2291 = vshll.u32 %v1966, 16
      %v2293 = vrot.slane %v2291, 5
      %v2294 = vor.u32 %v2290, %v2293
      %v2295 = vrot.slane %v2294, 4
      %v2297 = vshll.u32 %v1967, 16
      %v2299 = vrot.slane %v2297, 5
      %v2300 = vsel %vm880, %v2295, %v2299
      %v2301 = vshrl.u32 %v1967, 16
      %v2303 = vrot.slane %v2301, 4
      %v2304 = vor.u32 %v2303, %v2299
      %v2305 = vrot.slane %v2304, 4
      %v2307 = vshll.u32 %v1968, 16
      %v2309 = vrot.slane %v2307, 5
      %v2310 = vsel %vm880, %v2305, %v2309
      %v2312 = vshrl.u32 %v1969, 16
      %v2314 = vrot.slane %v2312, 4
      %v2315 = vshll.u32 %v1969, 16
      %v2317 = vrot.slane %v2315, 5
      %v2318 = vor.u32 %v2314, %v2317
      %v2319 = vrot.slane %v2318, 4
      %v2321 = vshll.u32 %v1970, 16
      %v2323 = vrot.slane %v2321, 5
      %v2324 = vsel %vm880, %v2319, %v2323
      %v2325 = vshrl.u32 %v1970, 16
      %v2327 = vrot.slane %v2325, 4
      %v2328 = vor.u32 %v2327, %v2323
      %v2329 = vrot.slane %v2328, 4
      %v2331 = vshll.u32 %v1971, 16
      %v2333 = vrot.slane %v2331, 5
      %v2334 = vsel %vm880, %v2329, %v2333
      %v2336 = vshrl.u32 %v1972, 16
      %v2338 = vrot.slane %v2336, 4
      %v2339 = vshll.u32 %v1972, 16
      %v2341 = vrot.slane %v2339, 5
      %v2342 = vor.u32 %v2338, %v2341
      %v2343 = vrot.slane %v2342, 4
      %v2345 = vshll.u32 %v1973, 16
      %v2347 = vrot.slane %v2345, 5
      %v2348 = vsel %vm880, %v2343, %v2347
      %v2349 = vshrl.u32 %v1973, 16
      %v2351 = vrot.slane %v2349, 4
      %v2352 = vor.u32 %v2351, %v2347
      %v2353 = vrot.slane %v2352, 4
      %v2355 = vshll.u32 %v1974, 16
      %v2357 = vrot.slane %v2355, 5
      %v2358 = vsel %vm880, %v2353, %v2357
      %2359 = vrot.lane.b32.xlu0 %v1988, 16
      %v2360 = vpop.permute.xlu0 %2359
      %2361 = vrot.lane.b32.xlu0 %v1998, 16
      %v2362 = vpop.permute.xlu0 %2361
      %2363 = vrot.lane.b32.xlu0 %v2012, 16
      %v2364 = vpop.permute.xlu0 %2363
      %2365 = vrot.lane.b32.xlu0 %v2022, 16
      %v2366 = vpop.permute.xlu0 %2365
      %2367 = vrot.lane.b32.xlu0 %v2036, 16
      %v2368 = vpop.permute.xlu0 %2367
      %2369 = vrot.lane.b32.xlu0 %v2046, 16
      %v2370 = vpop.permute.xlu0 %2369
      %2371 = vrot.lane.b32.xlu0 %v2060, 16
      %v2372 = vpop.permute.xlu0 %2371
      %2373 = vrot.lane.b32.xlu0 %v2070, 16
      %v2374 = vpop.permute.xlu0 %2373
      %2375 = vrot.lane.b32.xlu0 %v2084, 16
      %v2376 = vpop.permute.xlu0 %2375
      %2377 = vrot.lane.b32.xlu0 %v2094, 16
      %v2378 = vpop.permute.xlu0 %2377
      %2379 = vrot.lane.b32.xlu0 %v2108, 16
      %v2380 = vpop.permute.xlu0 %2379
      %2381 = vrot.lane.b32.xlu0 %v2118, 16
      %v2382 = vpop.permute.xlu0 %2381
      %2383 = vrot.lane.b32.xlu0 %v2132, 16
      %v2384 = vpop.permute.xlu0 %2383
      %2385 = vrot.lane.b32.xlu0 %v2142, 16
      %v2386 = vpop.permute.xlu0 %2385
      %2387 = vrot.lane.b32.xlu0 %v2156, 16
      %v2388 = vpop.permute.xlu0 %2387
      %2389 = vrot.lane.b32.xlu0 %v2166, 16
      %v2390 = vpop.permute.xlu0 %2389
      %2391 = vrot.lane.b32.xlu0 %v2180, 16
      %v2392 = vpop.permute.xlu0 %2391
      %2393 = vrot.lane.b32.xlu0 %v2190, 16
      %v2394 = vpop.permute.xlu0 %2393
      %2395 = vrot.lane.b32.xlu0 %v2204, 16
      %v2396 = vpop.permute.xlu0 %2395
      %2397 = vrot.lane.b32.xlu0 %v2214, 16
      %v2398 = vpop.permute.xlu0 %2397
      %2399 = vrot.lane.b32.xlu0 %v2228, 16
      %v2400 = vpop.permute.xlu0 %2399
      %2401 = vrot.lane.b32.xlu0 %v2238, 16
      %v2402 = vpop.permute.xlu0 %2401
      %2403 = vrot.lane.b32.xlu0 %v2252, 16
      %v2404 = vpop.permute.xlu0 %2403
      %2405 = vrot.lane.b32.xlu0 %v2262, 16
      %v2406 = vpop.permute.xlu0 %2405
      %2407 = vrot.lane.b32.xlu0 %v2276, 16
      %v2408 = vpop.permute.xlu0 %2407
      %2409 = vrot.lane.b32.xlu0 %v2286, 16
      %v2410 = vpop.permute.xlu0 %2409
      %2411 = vrot.lane.b32.xlu0 %v2300, 16
      %v2412 = vpop.permute.xlu0 %2411
      %2413 = vrot.lane.b32.xlu0 %v2310, 16
      %v2414 = vpop.permute.xlu0 %2413
      %2415 = vrot.lane.b32.xlu0 %v2324, 16
      %v2416 = vpop.permute.xlu0 %2415
      %2417 = vrot.lane.b32.xlu0 %v2334, 16
      %v2418 = vpop.permute.xlu0 %2417
      %2419 = vrot.lane.b32.xlu0 %v2348, 16
      %v2420 = vpop.permute.xlu0 %2419
      %2421 = vrot.lane.b32.xlu0 %v2358, 16
      %v2422 = vpop.permute.xlu0 %2421
      %vm2455 = vcmask 158848
      %2456 = vst.msk [vmem:[#allocation3] sm:$0xf] %vm2455, %v2360
      %2457 = vst.msk [vmem:[#allocation3 + $0x4] sm:$0xf] %vm2455, %v2362
      %2458 = vst.msk [vmem:[#allocation3 + $0x8] sm:$0xf] %vm2455, %v2364
      %2459 = vst.msk [vmem:[#allocation3 + $0xc] sm:$0xf] %vm2455, %v2366
      %2460 = vst.msk [vmem:[#allocation3 + $0x10] sm:$0xf] %vm2455, %v2368
      %2461 = vst.msk [vmem:[#allocation3 + $0x14] sm:$0xf] %vm2455, %v2370
      %2462 = vst.msk [vmem:[#allocation3 + $0x18] sm:$0xf] %vm2455, %v2372
      %2463 = vst.msk [vmem:[#allocation3 + $0x1c] sm:$0xf] %vm2455, %v2374
      %2464 = vst.msk [vmem:[#allocation3 + $0x20] sm:$0xf] %vm2455, %v2376
      %2465 = vst.msk [vmem:[#allocation3 + $0x24] sm:$0xf] %vm2455, %v2378
      %2466 = vst.msk [vmem:[#allocation3 + $0x28] sm:$0xf] %vm2455, %v2380
      %2467 = vst.msk [vmem:[#allocation3 + $0x2c] sm:$0xf] %vm2455, %v2382
      %2468 = vst.msk [vmem:[#allocation3 + $0x30] sm:$0xf] %vm2455, %v2384
      %2469 = vst.msk [vmem:[#allocation3 + $0x34] sm:$0xf] %vm2455, %v2386
      %2470 = vst.msk [vmem:[#allocation3 + $0x38] sm:$0xf] %vm2455, %v2388
      %2471 = vst.msk [vmem:[#allocation3 + $0x3c] sm:$0xf] %vm2455, %v2390
      %2472 = vst.msk [vmem:[#allocation3 + $0x40] sm:$0xf] %vm2455, %v2392
      %2473 = vst.msk [vmem:[#allocation3 + $0x44] sm:$0xf] %vm2455, %v2394
      %2474 = vst.msk [vmem:[#allocation3 + $0x48] sm:$0xf] %vm2455, %v2396
      %2475 = vst.msk [vmem:[#allocation3 + $0x4c] sm:$0xf] %vm2455, %v2398
      %2476 = vst.msk [vmem:[#allocation3 + $0x50] sm:$0xf] %vm2455, %v2400
      %2477 = vst.msk [vmem:[#allocation3 + $0x54] sm:$0xf] %vm2455, %v2402
      %2478 = vst.msk [vmem:[#allocation3 + $0x58] sm:$0xf] %vm2455, %v2404
      %2479 = vst.msk [vmem:[#allocation3 + $0x5c] sm:$0xf] %vm2455, %v2406
      %2480 = vst.msk [vmem:[#allocation3 + $0x60] sm:$0xf] %vm2455, %v2408
      %2481 = vst.msk [vmem:[#allocation3 + $0x64] sm:$0xf] %vm2455, %v2410
      %2482 = vst.msk [vmem:[#allocation3 + $0x68] sm:$0xf] %vm2455, %v2412
      %2483 = vst.msk [vmem:[#allocation3 + $0x6c] sm:$0xf] %vm2455, %v2414
      %2484 = vst.msk [vmem:[#allocation3 + $0x70] sm:$0xf] %vm2455, %v2416
      %2485 = vst.msk [vmem:[#allocation3 + $0x74] sm:$0xf] %vm2455, %v2418
      %2486 = vst.msk [vmem:[#allocation3 + $0x78] sm:$0xf] %vm2455, %v2420
      %2487 = vst.msk [vmem:[#allocation3 + $0x7c] sm:$0xf] %vm2455, %v2422
      %v2488 = vld [vmem:[%s648] sm:$0xe]
      %v2489 = vld [vmem:[%s648 + $0x4] sm:$0xf]
      %v2490 = vld [vmem:[%s648 + $0x8] sm:$0x1]
      %v2491 = vld [vmem:[%s648 + $0xc] sm:$0xe]
      %v2492 = vld [vmem:[%s648 + $0x10] sm:$0xf]
      %v2493 = vld [vmem:[%s648 + $0x14] sm:$0x1]
      %v2494 = vld [vmem:[%s648 + $0x18] sm:$0xe]
      %v2495 = vld [vmem:[%s648 + $0x1c] sm:$0xf]
      %v2496 = vld [vmem:[%s648 + $0x20] sm:$0x1]
      %v2497 = vld [vmem:[%s648 + $0x24] sm:$0xe]
      %v2498 = vld [vmem:[%s648 + $0x28] sm:$0xf]
      %v2499 = vld [vmem:[%s648 + $0x2c] sm:$0x1]
      %v2500 = vld [vmem:[%s648 + $0x30] sm:$0xe]
      %v2501 = vld [vmem:[%s648 + $0x34] sm:$0xf]
      %v2502 = vld [vmem:[%s648 + $0x38] sm:$0x1]
      %v2503 = vld [vmem:[%s648 + $0x3c] sm:$0xe]
      %v2504 = vld [vmem:[%s648 + $0x40] sm:$0xf]
      %v2505 = vld [vmem:[%s648 + $0x44] sm:$0x1]
      %v2506 = vld [vmem:[%s648 + $0x48] sm:$0xe]
      %v2507 = vld [vmem:[%s648 + $0x4c] sm:$0xf]
      %v2508 = vld [vmem:[%s648 + $0x50] sm:$0x1]
      %v2509 = vld [vmem:[%s648 + $0x54] sm:$0xe]
      %v2510 = vld [vmem:[%s648 + $0x58] sm:$0xf]
      %v2511 = vld [vmem:[%s648 + $0x5c] sm:$0x1]
      %v2512 = vld [vmem:[%s648 + $0x60] sm:$0xe]
      %v2513 = vld [vmem:[%s648 + $0x64] sm:$0xf]
      %v2514 = vld [vmem:[%s648 + $0x68] sm:$0x1]
      %v2515 = vld [vmem:[%s648 + $0x6c] sm:$0xe]
      %v2516 = vld [vmem:[%s648 + $0x70] sm:$0xf]
      %v2517 = vld [vmem:[%s648 + $0x74] sm:$0x1]
      %v2518 = vld [vmem:[%s648 + $0x78] sm:$0xe]
      %v2519 = vld [vmem:[%s648 + $0x7c] sm:$0xf]
      %v2520 = vld [vmem:[%s648 + $0x80] sm:$0x1]
      %v2521 = vld [vmem:[%s648 + $0x84] sm:$0xe]
      %v2522 = vld [vmem:[%s648 + $0x88] sm:$0xf]
      %v2523 = vld [vmem:[%s648 + $0x8c] sm:$0x1]
      %v2524 = vld [vmem:[%s648 + $0x90] sm:$0xe]
      %v2525 = vld [vmem:[%s648 + $0x94] sm:$0xf]
      %v2526 = vld [vmem:[%s648 + $0x98] sm:$0x1]
      %v2527 = vld [vmem:[%s648 + $0x9c] sm:$0xe]
      %v2528 = vld [vmem:[%s648 + $0xa0] sm:$0xf]
      %v2529 = vld [vmem:[%s648 + $0xa4] sm:$0x1]
      %v2530 = vld [vmem:[%s648 + $0xa8] sm:$0xe]
      %v2531 = vld [vmem:[%s648 + $0xac] sm:$0xf]
      %v2532 = vld [vmem:[%s648 + $0xb0] sm:$0x1]
      %v2533 = vld [vmem:[%s648 + $0xb4] sm:$0xe]
      %v2534 = vld [vmem:[%s648 + $0xb8] sm:$0xf]
      %v2535 = vld [vmem:[%s648 + $0xbc] sm:$0x1]
      %v2584 = vrot.slane %v2488, 5
      %v2585 = vrot.slane %v2584, 4
      %v2586 = vrot.slane %v2489, 5
      %v2587 = vsel %vm1492, %v2585, %v2586
      %v2588 = vrot.slane %v2586, 4
      %v2589 = vrot.slane %v2490, 5
      %v2590 = vsel %vm1492, %v2588, %v2589
      %v2591 = vrot.slane %v2491, 5
      %v2592 = vrot.slane %v2591, 4
      %v2593 = vrot.slane %v2492, 5
      %v2594 = vsel %vm1492, %v2592, %v2593
      %v2595 = vrot.slane %v2593, 4
      %v2596 = vrot.slane %v2493, 5
      %v2597 = vsel %vm1492, %v2595, %v2596
      %v2598 = vrot.slane %v2494, 5
      %v2599 = vrot.slane %v2598, 4
      %v2600 = vrot.slane %v2495, 5
      %v2601 = vsel %vm1492, %v2599, %v2600
      %v2602 = vrot.slane %v2600, 4
      %v2603 = vrot.slane %v2496, 5
      %v2604 = vsel %vm1492, %v2602, %v2603
      %v2605 = vrot.slane %v2497, 5
      %v2606 = vrot.slane %v2605, 4
      %v2607 = vrot.slane %v2498, 5
      %v2608 = vsel %vm1492, %v2606, %v2607
      %v2609 = vrot.slane %v2607, 4
      %v2610 = vrot.slane %v2499, 5
      %v2611 = vsel %vm1492, %v2609, %v2610
      %v2612 = vrot.slane %v2500, 5
      %v2613 = vrot.slane %v2612, 4
      %v2614 = vrot.slane %v2501, 5
      %v2615 = vsel %vm1492, %v2613, %v2614
      %v2616 = vrot.slane %v2614, 4
      %v2617 = vrot.slane %v2502, 5
      %v2618 = vsel %vm1492, %v2616, %v2617
      %v2619 = vrot.slane %v2503, 5
      %v2620 = vrot.slane %v2619, 4
      %v2621 = vrot.slane %v2504, 5
      %v2622 = vsel %vm1492, %v2620, %v2621
      %v2623 = vrot.slane %v2621, 4
      %v2624 = vrot.slane %v2505, 5
      %v2625 = vsel %vm1492, %v2623, %v2624
      %v2626 = vrot.slane %v2506, 5
      %v2627 = vrot.slane %v2626, 4
      %v2628 = vrot.slane %v2507, 5
      %v2629 = vsel %vm1492, %v2627, %v2628
      %v2630 = vrot.slane %v2628, 4
      %v2631 = vrot.slane %v2508, 5
      %v2632 = vsel %vm1492, %v2630, %v2631
      %v2633 = vrot.slane %v2509, 5
      %v2634 = vrot.slane %v2633, 4
      %v2635 = vrot.slane %v2510, 5
      %v2636 = vsel %vm1492, %v2634, %v2635
      %v2637 = vrot.slane %v2635, 4
      %v2638 = vrot.slane %v2511, 5
      %v2639 = vsel %vm1492, %v2637, %v2638
      %v2640 = vrot.slane %v2512, 5
      %v2641 = vrot.slane %v2640, 4
      %v2642 = vrot.slane %v2513, 5
      %v2643 = vsel %vm1492, %v2641, %v2642
      %v2644 = vrot.slane %v2642, 4
      %v2645 = vrot.slane %v2514, 5
      %v2646 = vsel %vm1492, %v2644, %v2645
      %v2647 = vrot.slane %v2515, 5
      %v2648 = vrot.slane %v2647, 4
      %v2649 = vrot.slane %v2516, 5
      %v2650 = vsel %vm1492, %v2648, %v2649
      %v2651 = vrot.slane %v2649, 4
      %v2652 = vrot.slane %v2517, 5
      %v2653 = vsel %vm1492, %v2651, %v2652
      %v2654 = vrot.slane %v2518, 5
      %v2655 = vrot.slane %v2654, 4
      %v2656 = vrot.slane %v2519, 5
      %v2657 = vsel %vm1492, %v2655, %v2656
      %v2658 = vrot.slane %v2656, 4
      %v2659 = vrot.slane %v2520, 5
      %v2660 = vsel %vm1492, %v2658, %v2659
      %v2661 = vrot.slane %v2521, 5
      %v2662 = vrot.slane %v2661, 4
      %v2663 = vrot.slane %v2522, 5
      %v2664 = vsel %vm1492, %v2662, %v2663
      %v2665 = vrot.slane %v2663, 4
      %v2666 = vrot.slane %v2523, 5
      %v2667 = vsel %vm1492, %v2665, %v2666
      %v2668 = vrot.slane %v2524, 5
      %v2669 = vrot.slane %v2668, 4
      %v2670 = vrot.slane %v2525, 5
      %v2671 = vsel %vm1492, %v2669, %v2670
      %v2672 = vrot.slane %v2670, 4
      %v2673 = vrot.slane %v2526, 5
      %v2674 = vsel %vm1492, %v2672, %v2673
      %v2675 = vrot.slane %v2527, 5
      %v2676 = vrot.slane %v2675, 4
      %v2677 = vrot.slane %v2528, 5
      %v2678 = vsel %vm1492, %v2676, %v2677
      %v2679 = vrot.slane %v2677, 4
      %v2680 = vrot.slane %v2529, 5
      %v2681 = vsel %vm1492, %v2679, %v2680
      %v2682 = vrot.slane %v2530, 5
      %v2683 = vrot.slane %v2682, 4
      %v2684 = vrot.slane %v2531, 5
      %v2685 = vsel %vm1492, %v2683, %v2684
      %v2686 = vrot.slane %v2684, 4
      %v2687 = vrot.slane %v2532, 5
      %v2688 = vsel %vm1492, %v2686, %v2687
      %v2689 = vrot.slane %v2533, 5
      %v2690 = vrot.slane %v2689, 4
      %v2691 = vrot.slane %v2534, 5
      %v2692 = vsel %vm1492, %v2690, %v2691
      %v2693 = vrot.slane %v2691, 4
      %v2694 = vrot.slane %v2535, 5
      %v2695 = vsel %vm1492, %v2693, %v2694
      %2696 = vrot.lane.b32.xlu0 %v2587, 20
      %v2697 = vpop.permute.xlu0 %2696
      %2698 = vrot.lane.b32.xlu0 %v2590, 20
      %v2699 = vpop.permute.xlu0 %2698
      %2700 = vrot.lane.b32.xlu0 %v2594, 20
      %v2701 = vpop.permute.xlu0 %2700
      %2702 = vrot.lane.b32.xlu0 %v2597, 20
      %v2703 = vpop.permute.xlu0 %2702
      %2704 = vrot.lane.b32.xlu0 %v2601, 20
      %v2705 = vpop.permute.xlu0 %2704
      %2706 = vrot.lane.b32.xlu0 %v2604, 20
      %v2707 = vpop.permute.xlu0 %2706
      %2708 = vrot.lane.b32.xlu0 %v2608, 20
      %v2709 = vpop.permute.xlu0 %2708
      %2710 = vrot.lane.b32.xlu0 %v2611, 20
      %v2711 = vpop.permute.xlu0 %2710
      %2712 = vrot.lane.b32.xlu0 %v2615, 20
      %v2713 = vpop.permute.xlu0 %2712
      %2714 = vrot.lane.b32.xlu0 %v2618, 20
      %v2715 = vpop.permute.xlu0 %2714
      %2716 = vrot.lane.b32.xlu0 %v2622, 20
      %v2717 = vpop.permute.xlu0 %2716
      %2718 = vrot.lane.b32.xlu0 %v2625, 20
      %v2719 = vpop.permute.xlu0 %2718
      %2720 = vrot.lane.b32.xlu0 %v2629, 20
      %v2721 = vpop.permute.xlu0 %2720
      %2722 = vrot.lane.b32.xlu0 %v2632, 20
      %v2723 = vpop.permute.xlu0 %2722
      %2724 = vrot.lane.b32.xlu0 %v2636, 20
      %v2725 = vpop.permute.xlu0 %2724
      %2726 = vrot.lane.b32.xlu0 %v2639, 20
      %v2727 = vpop.permute.xlu0 %2726
      %2728 = vrot.lane.b32.xlu0 %v2643, 20
      %v2729 = vpop.permute.xlu0 %2728
      %2730 = vrot.lane.b32.xlu0 %v2646, 20
      %v2731 = vpop.permute.xlu0 %2730
      %2732 = vrot.lane.b32.xlu0 %v2650, 20
      %v2733 = vpop.permute.xlu0 %2732
      %2734 = vrot.lane.b32.xlu0 %v2653, 20
      %v2735 = vpop.permute.xlu0 %2734
      %2736 = vrot.lane.b32.xlu0 %v2657, 20
      %v2737 = vpop.permute.xlu0 %2736
      %2738 = vrot.lane.b32.xlu0 %v2660, 20
      %v2739 = vpop.permute.xlu0 %2738
      %2740 = vrot.lane.b32.xlu0 %v2664, 20
      %v2741 = vpop.permute.xlu0 %2740
      %2742 = vrot.lane.b32.xlu0 %v2667, 20
      %v2743 = vpop.permute.xlu0 %2742
      %2744 = vrot.lane.b32.xlu0 %v2671, 20
      %v2745 = vpop.permute.xlu0 %2744
      %2746 = vrot.lane.b32.xlu0 %v2674, 20
      %v2747 = vpop.permute.xlu0 %2746
      %2748 = vrot.lane.b32.xlu0 %v2678, 20
      %v2749 = vpop.permute.xlu0 %2748
      %2750 = vrot.lane.b32.xlu0 %v2681, 20
      %v2751 = vpop.permute.xlu0 %2750
      %2752 = vrot.lane.b32.xlu0 %v2685, 20
      %v2753 = vpop.permute.xlu0 %2752
      %2754 = vrot.lane.b32.xlu0 %v2688, 20
      %v2755 = vpop.permute.xlu0 %2754
      %2756 = vrot.lane.b32.xlu0 %v2692, 20
      %v2757 = vpop.permute.xlu0 %2756
      %2758 = vrot.lane.b32.xlu0 %v2695, 20
      %v2759 = vpop.permute.xlu0 %2758
      %vm2792 = vcmask 191648
      %2793 = vst.msk [vmem:[#allocation3] sm:$0xf] %vm2792, %v2697
      %2794 = vst.msk [vmem:[#allocation3 + $0x4] sm:$0xf] %vm2792, %v2699
      %2795 = vst.msk [vmem:[#allocation3 + $0x8] sm:$0xf] %vm2792, %v2701
      %2796 = vst.msk [vmem:[#allocation3 + $0xc] sm:$0xf] %vm2792, %v2703
      %2797 = vst.msk [vmem:[#allocation3 + $0x10] sm:$0xf] %vm2792, %v2705
      %2798 = vst.msk [vmem:[#allocation3 + $0x14] sm:$0xf] %vm2792, %v2707
      %2799 = vst.msk [vmem:[#allocation3 + $0x18] sm:$0xf] %vm2792, %v2709
      %2800 = vst.msk [vmem:[#allocation3 + $0x1c] sm:$0xf] %vm2792, %v2711
      %2801 = vst.msk [vmem:[#allocation3 + $0x20] sm:$0xf] %vm2792, %v2713
      %2802 = vst.msk [vmem:[#allocation3 + $0x24] sm:$0xf] %vm2792, %v2715
      %2803 = vst.msk [vmem:[#allocation3 + $0x28] sm:$0xf] %vm2792, %v2717
      %2804 = vst.msk [vmem:[#allocation3 + $0x2c] sm:$0xf] %vm2792, %v2719
      %2805 = vst.msk [vmem:[#allocation3 + $0x30] sm:$0xf] %vm2792, %v2721
      %2806 = vst.msk [vmem:[#allocation3 + $0x34] sm:$0xf] %vm2792, %v2723
      %2807 = vst.msk [vmem:[#allocation3 + $0x38] sm:$0xf] %vm2792, %v2725
      %2808 = vst.msk [vmem:[#allocation3 + $0x3c] sm:$0xf] %vm2792, %v2727
      %2809 = vst.msk [vmem:[#allocation3 + $0x40] sm:$0xf] %vm2792, %v2729
      %2810 = vst.msk [vmem:[#allocation3 + $0x44] sm:$0xf] %vm2792, %v2731
      %2811 = vst.msk [vmem:[#allocation3 + $0x48] sm:$0xf] %vm2792, %v2733
      %2812 = vst.msk [vmem:[#allocation3 + $0x4c] sm:$0xf] %vm2792, %v2735
      %2813 = vst.msk [vmem:[#allocation3 + $0x50] sm:$0xf] %vm2792, %v2737
      %2814 = vst.msk [vmem:[#allocation3 + $0x54] sm:$0xf] %vm2792, %v2739
      %2815 = vst.msk [vmem:[#allocation3 + $0x58] sm:$0xf] %vm2792, %v2741
      %2816 = vst.msk [vmem:[#allocation3 + $0x5c] sm:$0xf] %vm2792, %v2743
      %2817 = vst.msk [vmem:[#allocation3 + $0x60] sm:$0xf] %vm2792, %v2745
      %2818 = vst.msk [vmem:[#allocation3 + $0x64] sm:$0xf] %vm2792, %v2747
      %2819 = vst.msk [vmem:[#allocation3 + $0x68] sm:$0xf] %vm2792, %v2749
      %2820 = vst.msk [vmem:[#allocation3 + $0x6c] sm:$0xf] %vm2792, %v2751
      %2821 = vst.msk [vmem:[#allocation3 + $0x70] sm:$0xf] %vm2792, %v2753
      %2822 = vst.msk [vmem:[#allocation3 + $0x74] sm:$0xf] %vm2792, %v2755
      %2823 = vst.msk [vmem:[#allocation3 + $0x78] sm:$0xf] %vm2792, %v2757
      %2824 = vst.msk [vmem:[#allocation3 + $0x7c] sm:$0xf] %vm2792, %v2759
      %s2825 = scalar_lea.vmem [#allocation2], 24
      %v2826 = vld [vmem:[%s2825] sm:$0xf]
      %v2827 = vld [vmem:[%s2825 + $0x4] sm:$0xf]
      %v2828 = vld [vmem:[%s2825 + $0xc] sm:$0xf]
      %v2829 = vld [vmem:[%s2825 + $0x10] sm:$0xf]
      %v2830 = vld [vmem:[%s2825 + $0x18] sm:$0xf]
      %v2831 = vld [vmem:[%s2825 + $0x1c] sm:$0xf]
      %v2832 = vld [vmem:[%s2825 + $0x24] sm:$0xf]
      %v2833 = vld [vmem:[%s2825 + $0x28] sm:$0xf]
      %v2834 = vld [vmem:[%s2825 + $0x30] sm:$0xf]
      %v2835 = vld [vmem:[%s2825 + $0x34] sm:$0xf]
      %v2836 = vld [vmem:[%s2825 + $0x3c] sm:$0xf]
      %v2837 = vld [vmem:[%s2825 + $0x40] sm:$0xf]
      %v2838 = vld [vmem:[%s2825 + $0x48] sm:$0xf]
      %v2839 = vld [vmem:[%s2825 + $0x4c] sm:$0xf]
      %v2840 = vld [vmem:[%s2825 + $0x54] sm:$0xf]
      %v2841 = vld [vmem:[%s2825 + $0x58] sm:$0xf]
      %v2842 = vld [vmem:[%s2825 + $0x60] sm:$0xf]
      %v2843 = vld [vmem:[%s2825 + $0x64] sm:$0xf]
      %v2844 = vld [vmem:[%s2825 + $0x6c] sm:$0xf]
      %v2845 = vld [vmem:[%s2825 + $0x70] sm:$0xf]
      %v2846 = vld [vmem:[%s2825 + $0x78] sm:$0xf]
      %v2847 = vld [vmem:[%s2825 + $0x7c] sm:$0xf]
      %v2848 = vld [vmem:[%s2825 + $0x84] sm:$0xf]
      %v2849 = vld [vmem:[%s2825 + $0x88] sm:$0xf]
      %v2850 = vld [vmem:[%s2825 + $0x90] sm:$0xf]
      %v2851 = vld [vmem:[%s2825 + $0x94] sm:$0xf]
      %v2852 = vld [vmem:[%s2825 + $0x9c] sm:$0xf]
      %v2853 = vld [vmem:[%s2825 + $0xa0] sm:$0xf]
      %v2854 = vld [vmem:[%s2825 + $0xa8] sm:$0xf]
      %v2855 = vld [vmem:[%s2825 + $0xac] sm:$0xf]
      %v2856 = vld [vmem:[%s2825 + $0xb4] sm:$0xf]
      %v2857 = vld [vmem:[%s2825 + $0xb8] sm:$0xf]
      %2890 = vrot.lane.b32.xlu0 %v2826, 24
      %v2891 = vpop.permute.xlu0 %2890
      %2892 = vrot.lane.b32.xlu0 %v2827, 24
      %v2893 = vpop.permute.xlu0 %2892
      %2894 = vrot.lane.b32.xlu0 %v2828, 24
      %v2895 = vpop.permute.xlu0 %2894
      %2896 = vrot.lane.b32.xlu0 %v2829, 24
      %v2897 = vpop.permute.xlu0 %2896
      %2898 = vrot.lane.b32.xlu0 %v2830, 24
      %v2899 = vpop.permute.xlu0 %2898
      %2900 = vrot.lane.b32.xlu0 %v2831, 24
      %v2901 = vpop.permute.xlu0 %2900
      %2902 = vrot.lane.b32.xlu0 %v2832, 24
      %v2903 = vpop.permute.xlu0 %2902
      %2904 = vrot.lane.b32.xlu0 %v2833, 24
      %v2905 = vpop.permute.xlu0 %2904
      %2906 = vrot.lane.b32.xlu0 %v2834, 24
      %v2907 = vpop.permute.xlu0 %2906
      %2908 = vrot.lane.b32.xlu0 %v2835, 24
      %v2909 = vpop.permute.xlu0 %2908
      %2910 = vrot.lane.b32.xlu0 %v2836, 24
      %v2911 = vpop.permute.xlu0 %2910
      %2912 = vrot.lane.b32.xlu0 %v2837, 24
      %v2913 = vpop.permute.xlu0 %2912
      %2914 = vrot.lane.b32.xlu0 %v2838, 24
      %v2915 = vpop.permute.xlu0 %2914
      %2916 = vrot.lane.b32.xlu0 %v2839, 24
      %v2917 = vpop.permute.xlu0 %2916
      %2918 = vrot.lane.b32.xlu0 %v2840, 24
      %v2919 = vpop.permute.xlu0 %2918
      %2920 = vrot.lane.b32.xlu0 %v2841, 24
      %v2921 = vpop.permute.xlu0 %2920
      %2922 = vrot.lane.b32.xlu0 %v2842, 24
      %v2923 = vpop.permute.xlu0 %2922
      %2924 = vrot.lane.b32.xlu0 %v2843, 24
      %v2925 = vpop.permute.xlu0 %2924
      %2926 = vrot.lane.b32.xlu0 %v2844, 24
      %v2927 = vpop.permute.xlu0 %2926
      %2928 = vrot.lane.b32.xlu0 %v2845, 24
      %v2929 = vpop.permute.xlu0 %2928
      %2930 = vrot.lane.b32.xlu0 %v2846, 24
      %v2931 = vpop.permute.xlu0 %2930
      %2932 = vrot.lane.b32.xlu0 %v2847, 24
      %v2933 = vpop.permute.xlu0 %2932
      %2934 = vrot.lane.b32.xlu0 %v2848, 24
      %v2935 = vpop.permute.xlu0 %2934
      %2936 = vrot.lane.b32.xlu0 %v2849, 24
      %v2937 = vpop.permute.xlu0 %2936
      %2938 = vrot.lane.b32.xlu0 %v2850, 24
      %v2939 = vpop.permute.xlu0 %2938
      %2940 = vrot.lane.b32.xlu0 %v2851, 24
      %v2941 = vpop.permute.xlu0 %2940
      %2942 = vrot.lane.b32.xlu0 %v2852, 24
      %v2943 = vpop.permute.xlu0 %2942
      %2944 = vrot.lane.b32.xlu0 %v2853, 24
      %v2945 = vpop.permute.xlu0 %2944
      %2946 = vrot.lane.b32.xlu0 %v2854, 24
      %v2947 = vpop.permute.xlu0 %2946
      %2948 = vrot.lane.b32.xlu0 %v2855, 24
      %v2949 = vpop.permute.xlu0 %2948
      %2950 = vrot.lane.b32.xlu0 %v2856, 24
      %v2951 = vpop.permute.xlu0 %2950
      %2952 = vrot.lane.b32.xlu0 %v2857, 24
      %v2953 = vpop.permute.xlu0 %2952
      %vm2986 = vcmask 224448
      %2987 = vst.msk [vmem:[#allocation3] sm:$0xf] %vm2986, %v2891
      %2988 = vst.msk [vmem:[#allocation3 + $0x4] sm:$0xf] %vm2986, %v2893
      %2989 = vst.msk [vmem:[#allocation3 + $0x8] sm:$0xf] %vm2986, %v2895
      %2990 = vst.msk [vmem:[#allocation3 + $0xc] sm:$0xf] %vm2986, %v2897
      %2991 = vst.msk [vmem:[#allocation3 + $0x10] sm:$0xf] %vm2986, %v2899
      %2992 = vst.msk [vmem:[#allocation3 + $0x14] sm:$0xf] %vm2986, %v2901
      %2993 = vst.msk [vmem:[#allocation3 + $0x18] sm:$0xf] %vm2986, %v2903
      %2994 = vst.msk [vmem:[#allocation3 + $0x1c] sm:$0xf] %vm2986, %v2905
      %2995 = vst.msk [vmem:[#allocation3 + $0x20] sm:$0xf] %vm2986, %v2907
      %2996 = vst.msk [vmem:[#allocation3 + $0x24] sm:$0xf] %vm2986, %v2909
      %2997 = vst.msk [vmem:[#allocation3 + $0x28] sm:$0xf] %vm2986, %v2911
      %2998 = vst.msk [vmem:[#allocation3 + $0x2c] sm:$0xf] %vm2986, %v2913
      %2999 = vst.msk [vmem:[#allocation3 + $0x30] sm:$0xf] %vm2986, %v2915
      %3000 = vst.msk [vmem:[#allocation3 + $0x34] sm:$0xf] %vm2986, %v2917
      %3001 = vst.msk [vmem:[#allocation3 + $0x38] sm:$0xf] %vm2986, %v2919
      %3002 = vst.msk [vmem:[#allocation3 + $0x3c] sm:$0xf] %vm2986, %v2921
      %3003 = vst.msk [vmem:[#allocation3 + $0x40] sm:$0xf] %vm2986, %v2923
      %3004 = vst.msk [vmem:[#allocation3 + $0x44] sm:$0xf] %vm2986, %v2925
      %3005 = vst.msk [vmem:[#allocation3 + $0x48] sm:$0xf] %vm2986, %v2927
      %3006 = vst.msk [vmem:[#allocation3 + $0x4c] sm:$0xf] %vm2986, %v2929
      %3007 = vst.msk [vmem:[#allocation3 + $0x50] sm:$0xf] %vm2986, %v2931
      %3008 = vst.msk [vmem:[#allocation3 + $0x54] sm:$0xf] %vm2986, %v2933
      %3009 = vst.msk [vmem:[#allocation3 + $0x58] sm:$0xf] %vm2986, %v2935
      %3010 = vst.msk [vmem:[#allocation3 + $0x5c] sm:$0xf] %vm2986, %v2937
      %3011 = vst.msk [vmem:[#allocation3 + $0x60] sm:$0xf] %vm2986, %v2939
      %3012 = vst.msk [vmem:[#allocation3 + $0x64] sm:$0xf] %vm2986, %v2941
      %3013 = vst.msk [vmem:[#allocation3 + $0x68] sm:$0xf] %vm2986, %v2943
      %3014 = vst.msk [vmem:[#allocation3 + $0x6c] sm:$0xf] %vm2986, %v2945
      %3015 = vst.msk [vmem:[#allocation3 + $0x70] sm:$0xf] %vm2986, %v2947
      %3016 = vst.msk [vmem:[#allocation3 + $0x74] sm:$0xf] %vm2986, %v2949
      %3017 = vst.msk [vmem:[#allocation3 + $0x78] sm:$0xf] %vm2986, %v2951
      %3018 = vst.msk [vmem:[#allocation3 + $0x7c] sm:$0xf] %vm2986, %v2953
      %v3019 = vld [vmem:[%s2825] sm:$0xf]
      %v3020 = vld [vmem:[%s2825 + $0x4] sm:$0xf]
      %v3021 = vld [vmem:[%s2825 + $0x8] sm:$0x1]
      %v3022 = vld [vmem:[%s2825 + $0xc] sm:$0xf]
      %v3023 = vld [vmem:[%s2825 + $0x10] sm:$0xf]
      %v3024 = vld [vmem:[%s2825 + $0x14] sm:$0x1]
      %v3025 = vld [vmem:[%s2825 + $0x18] sm:$0xf]
      %v3026 = vld [vmem:[%s2825 + $0x1c] sm:$0xf]
      %v3027 = vld [vmem:[%s2825 + $0x20] sm:$0x1]
      %v3028 = vld [vmem:[%s2825 + $0x24] sm:$0xf]
      %v3029 = vld [vmem:[%s2825 + $0x28] sm:$0xf]
      %v3030 = vld [vmem:[%s2825 + $0x2c] sm:$0x1]
      %v3031 = vld [vmem:[%s2825 + $0x30] sm:$0xf]
      %v3032 = vld [vmem:[%s2825 + $0x34] sm:$0xf]
      %v3033 = vld [vmem:[%s2825 + $0x38] sm:$0x1]
      %v3034 = vld [vmem:[%s2825 + $0x3c] sm:$0xf]
      %v3035 = vld [vmem:[%s2825 + $0x40] sm:$0xf]
      %v3036 = vld [vmem:[%s2825 + $0x44] sm:$0x1]
      %v3037 = vld [vmem:[%s2825 + $0x48] sm:$0xf]
      %v3038 = vld [vmem:[%s2825 + $0x4c] sm:$0xf]
      %v3039 = vld [vmem:[%s2825 + $0x50] sm:$0x1]
      %v3040 = vld [vmem:[%s2825 + $0x54] sm:$0xf]
      %v3041 = vld [vmem:[%s2825 + $0x58] sm:$0xf]
      %v3042 = vld [vmem:[%s2825 + $0x5c] sm:$0x1]
      %v3043 = vld [vmem:[%s2825 + $0x60] sm:$0xf]
      %v3044 = vld [vmem:[%s2825 + $0x64] sm:$0xf]
      %v3045 = vld [vmem:[%s2825 + $0x68] sm:$0x1]
      %v3046 = vld [vmem:[%s2825 + $0x6c] sm:$0xf]
      %v3047 = vld [vmem:[%s2825 + $0x70] sm:$0xf]
      %v3048 = vld [vmem:[%s2825 + $0x74] sm:$0x1]
      %v3049 = vld [vmem:[%s2825 + $0x78] sm:$0xf]
      %v3050 = vld [vmem:[%s2825 + $0x7c] sm:$0xf]
      %v3051 = vld [vmem:[%s2825 + $0x80] sm:$0x1]
      %v3052 = vld [vmem:[%s2825 + $0x84] sm:$0xf]
      %v3053 = vld [vmem:[%s2825 + $0x88] sm:$0xf]
      %v3054 = vld [vmem:[%s2825 + $0x8c] sm:$0x1]
      %v3055 = vld [vmem:[%s2825 + $0x90] sm:$0xf]
      %v3056 = vld [vmem:[%s2825 + $0x94] sm:$0xf]
      %v3057 = vld [vmem:[%s2825 + $0x98] sm:$0x1]
      %v3058 = vld [vmem:[%s2825 + $0x9c] sm:$0xf]
      %v3059 = vld [vmem:[%s2825 + $0xa0] sm:$0xf]
      %v3060 = vld [vmem:[%s2825 + $0xa4] sm:$0x1]
      %v3061 = vld [vmem:[%s2825 + $0xa8] sm:$0xf]
      %v3062 = vld [vmem:[%s2825 + $0xac] sm:$0xf]
      %v3063 = vld [vmem:[%s2825 + $0xb0] sm:$0x1]
      %v3064 = vld [vmem:[%s2825 + $0xb4] sm:$0xf]
      %v3065 = vld [vmem:[%s2825 + $0xb8] sm:$0xf]
      %v3066 = vld [vmem:[%s2825 + $0xbc] sm:$0x1]
      %v3068 = vshrl.u32 %v3019, 16
      %v3070 = vrot.slane %v3068, 4
      %v3071 = vshll.u32 %v3019, 16
      %v3073 = vrot.slane %v3071, 5
      %v3074 = vor.u32 %v3070, %v3073
      %v3075 = vrot.slane %v3074, 4
      %v3077 = vshll.u32 %v3020, 16
      %v3079 = vrot.slane %v3077, 5
      %v3080 = vsel %vm880, %v3075, %v3079
      %v3081 = vshrl.u32 %v3020, 16
      %v3083 = vrot.slane %v3081, 4
      %v3084 = vor.u32 %v3083, %v3079
      %v3085 = vrot.slane %v3084, 4
      %v3087 = vshll.u32 %v3021, 16
      %v3089 = vrot.slane %v3087, 5
      %v3090 = vsel %vm880, %v3085, %v3089
      %v3092 = vshrl.u32 %v3022, 16
      %v3094 = vrot.slane %v3092, 4
      %v3095 = vshll.u32 %v3022, 16
      %v3097 = vrot.slane %v3095, 5
      %v3098 = vor.u32 %v3094, %v3097
      %v3099 = vrot.slane %v3098, 4
      %v3101 = vshll.u32 %v3023, 16
      %v3103 = vrot.slane %v3101, 5
      %v3104 = vsel %vm880, %v3099, %v3103
      %v3105 = vshrl.u32 %v3023, 16
      %v3107 = vrot.slane %v3105, 4
      %v3108 = vor.u32 %v3107, %v3103
      %v3109 = vrot.slane %v3108, 4
      %v3111 = vshll.u32 %v3024, 16
      %v3113 = vrot.slane %v3111, 5
      %v3114 = vsel %vm880, %v3109, %v3113
      %v3116 = vshrl.u32 %v3025, 16
      %v3118 = vrot.slane %v3116, 4
      %v3119 = vshll.u32 %v3025, 16
      %v3121 = vrot.slane %v3119, 5
      %v3122 = vor.u32 %v3118, %v3121
      %v3123 = vrot.slane %v3122, 4
      %v3125 = vshll.u32 %v3026, 16
      %v3127 = vrot.slane %v3125, 5
      %v3128 = vsel %vm880, %v3123, %v3127
      %v3129 = vshrl.u32 %v3026, 16
      %v3131 = vrot.slane %v3129, 4
      %v3132 = vor.u32 %v3131, %v3127
      %v3133 = vrot.slane %v3132, 4
      %v3135 = vshll.u32 %v3027, 16
      %v3137 = vrot.slane %v3135, 5
      %v3138 = vsel %vm880, %v3133, %v3137
      %v3140 = vshrl.u32 %v3028, 16
      %v3142 = vrot.slane %v3140, 4
      %v3143 = vshll.u32 %v3028, 16
      %v3145 = vrot.slane %v3143, 5
      %v3146 = vor.u32 %v3142, %v3145
      %v3147 = vrot.slane %v3146, 4
      %v3149 = vshll.u32 %v3029, 16
      %v3151 = vrot.slane %v3149, 5
      %v3152 = vsel %vm880, %v3147, %v3151
      %v3153 = vshrl.u32 %v3029, 16
      %v3155 = vrot.slane %v3153, 4
      %v3156 = vor.u32 %v3155, %v3151
      %v3157 = vrot.slane %v3156, 4
      %v3159 = vshll.u32 %v3030, 16
      %v3161 = vrot.slane %v3159, 5
      %v3162 = vsel %vm880, %v3157, %v3161
      %v3164 = vshrl.u32 %v3031, 16
      %v3166 = vrot.slane %v3164, 4
      %v3167 = vshll.u32 %v3031, 16
      %v3169 = vrot.slane %v3167, 5
      %v3170 = vor.u32 %v3166, %v3169
      %v3171 = vrot.slane %v3170, 4
      %v3173 = vshll.u32 %v3032, 16
      %v3175 = vrot.slane %v3173, 5
      %v3176 = vsel %vm880, %v3171, %v3175
      %v3177 = vshrl.u32 %v3032, 16
      %v3179 = vrot.slane %v3177, 4
      %v3180 = vor.u32 %v3179, %v3175
      %v3181 = vrot.slane %v3180, 4
      %v3183 = vshll.u32 %v3033, 16
      %v3185 = vrot.slane %v3183, 5
      %v3186 = vsel %vm880, %v3181, %v3185
      %v3188 = vshrl.u32 %v3034, 16
      %v3190 = vrot.slane %v3188, 4
      %v3191 = vshll.u32 %v3034, 16
      %v3193 = vrot.slane %v3191, 5
      %v3194 = vor.u32 %v3190, %v3193
      %v3195 = vrot.slane %v3194, 4
      %v3197 = vshll.u32 %v3035, 16
      %v3199 = vrot.slane %v3197, 5
      %v3200 = vsel %vm880, %v3195, %v3199
      %v3201 = vshrl.u32 %v3035, 16
      %v3203 = vrot.slane %v3201, 4
      %v3204 = vor.u32 %v3203, %v3199
      %v3205 = vrot.slane %v3204, 4
      %v3207 = vshll.u32 %v3036, 16
      %v3209 = vrot.slane %v3207, 5
      %v3210 = vsel %vm880, %v3205, %v3209
      %v3212 = vshrl.u32 %v3037, 16
      %v3214 = vrot.slane %v3212, 4
      %v3215 = vshll.u32 %v3037, 16
      %v3217 = vrot.slane %v3215, 5
      %v3218 = vor.u32 %v3214, %v3217
      %v3219 = vrot.slane %v3218, 4
      %v3221 = vshll.u32 %v3038, 16
      %v3223 = vrot.slane %v3221, 5
      %v3224 = vsel %vm880, %v3219, %v3223
      %v3225 = vshrl.u32 %v3038, 16
      %v3227 = vrot.slane %v3225, 4
      %v3228 = vor.u32 %v3227, %v3223
      %v3229 = vrot.slane %v3228, 4
      %v3231 = vshll.u32 %v3039, 16
      %v3233 = vrot.slane %v3231, 5
      %v3234 = vsel %vm880, %v3229, %v3233
      %v3236 = vshrl.u32 %v3040, 16
      %v3238 = vrot.slane %v3236, 4
      %v3239 = vshll.u32 %v3040, 16
      %v3241 = vrot.slane %v3239, 5
      %v3242 = vor.u32 %v3238, %v3241
      %v3243 = vrot.slane %v3242, 4
      %v3245 = vshll.u32 %v3041, 16
      %v3247 = vrot.slane %v3245, 5
      %v3248 = vsel %vm880, %v3243, %v3247
      %v3249 = vshrl.u32 %v3041, 16
      %v3251 = vrot.slane %v3249, 4
      %v3252 = vor.u32 %v3251, %v3247
      %v3253 = vrot.slane %v3252, 4
      %v3255 = vshll.u32 %v3042, 16
      %v3257 = vrot.slane %v3255, 5
      %v3258 = vsel %vm880, %v3253, %v3257
      %v3260 = vshrl.u32 %v3043, 16
      %v3262 = vrot.slane %v3260, 4
      %v3263 = vshll.u32 %v3043, 16
      %v3265 = vrot.slane %v3263, 5
      %v3266 = vor.u32 %v3262, %v3265
      %v3267 = vrot.slane %v3266, 4
      %v3269 = vshll.u32 %v3044, 16
      %v3271 = vrot.slane %v3269, 5
      %v3272 = vsel %vm880, %v3267, %v3271
      %v3273 = vshrl.u32 %v3044, 16
      %v3275 = vrot.slane %v3273, 4
      %v3276 = vor.u32 %v3275, %v3271
      %v3277 = vrot.slane %v3276, 4
      %v3279 = vshll.u32 %v3045, 16
      %v3281 = vrot.slane %v3279, 5
      %v3282 = vsel %vm880, %v3277, %v3281
      %v3284 = vshrl.u32 %v3046, 16
      %v3286 = vrot.slane %v3284, 4
      %v3287 = vshll.u32 %v3046, 16
      %v3289 = vrot.slane %v3287, 5
      %v3290 = vor.u32 %v3286, %v3289
      %v3291 = vrot.slane %v3290, 4
      %v3293 = vshll.u32 %v3047, 16
      %v3295 = vrot.slane %v3293, 5
      %v3296 = vsel %vm880, %v3291, %v3295
      %v3297 = vshrl.u32 %v3047, 16
      %v3299 = vrot.slane %v3297, 4
      %v3300 = vor.u32 %v3299, %v3295
      %v3301 = vrot.slane %v3300, 4
      %v3303 = vshll.u32 %v3048, 16
      %v3305 = vrot.slane %v3303, 5
      %v3306 = vsel %vm880, %v3301, %v3305
      %v3308 = vshrl.u32 %v3049, 16
      %v3310 = vrot.slane %v3308, 4
      %v3311 = vshll.u32 %v3049, 16
      %v3313 = vrot.slane %v3311, 5
      %v3314 = vor.u32 %v3310, %v3313
      %v3315 = vrot.slane %v3314, 4
      %v3317 = vshll.u32 %v3050, 16
      %v3319 = vrot.slane %v3317, 5
      %v3320 = vsel %vm880, %v3315, %v3319
      %v3321 = vshrl.u32 %v3050, 16
      %v3323 = vrot.slane %v3321, 4
      %v3324 = vor.u32 %v3323, %v3319
      %v3325 = vrot.slane %v3324, 4
      %v3327 = vshll.u32 %v3051, 16
      %v3329 = vrot.slane %v3327, 5
      %v3330 = vsel %vm880, %v3325, %v3329
      %v3332 = vshrl.u32 %v3052, 16
      %v3334 = vrot.slane %v3332, 4
      %v3335 = vshll.u32 %v3052, 16
      %v3337 = vrot.slane %v3335, 5
      %v3338 = vor.u32 %v3334, %v3337
      %v3339 = vrot.slane %v3338, 4
      %v3341 = vshll.u32 %v3053, 16
      %v3343 = vrot.slane %v3341, 5
      %v3344 = vsel %vm880, %v3339, %v3343
      %v3345 = vshrl.u32 %v3053, 16
      %v3347 = vrot.slane %v3345, 4
      %v3348 = vor.u32 %v3347, %v3343
      %v3349 = vrot.slane %v3348, 4
      %v3351 = vshll.u32 %v3054, 16
      %v3353 = vrot.slane %v3351, 5
      %v3354 = vsel %vm880, %v3349, %v3353
      %v3356 = vshrl.u32 %v3055, 16
      %v3358 = vrot.slane %v3356, 4
      %v3359 = vshll.u32 %v3055, 16
      %v3361 = vrot.slane %v3359, 5
      %v3362 = vor.u32 %v3358, %v3361
      %v3363 = vrot.slane %v3362, 4
      %v3365 = vshll.u32 %v3056, 16
      %v3367 = vrot.slane %v3365, 5
      %v3368 = vsel %vm880, %v3363, %v3367
      %v3369 = vshrl.u32 %v3056, 16
      %v3371 = vrot.slane %v3369, 4
      %v3372 = vor.u32 %v3371, %v3367
      %v3373 = vrot.slane %v3372, 4
      %v3375 = vshll.u32 %v3057, 16
      %v3377 = vrot.slane %v3375, 5
      %v3378 = vsel %vm880, %v3373, %v3377
      %v3380 = vshrl.u32 %v3058, 16
      %v3382 = vrot.slane %v3380, 4
      %v3383 = vshll.u32 %v3058, 16
      %v3385 = vrot.slane %v3383, 5
      %v3386 = vor.u32 %v3382, %v3385
      %v3387 = vrot.slane %v3386, 4
      %v3389 = vshll.u32 %v3059, 16
      %v3391 = vrot.slane %v3389, 5
      %v3392 = vsel %vm880, %v3387, %v3391
      %v3393 = vshrl.u32 %v3059, 16
      %v3395 = vrot.slane %v3393, 4
      %v3396 = vor.u32 %v3395, %v3391
      %v3397 = vrot.slane %v3396, 4
      %v3399 = vshll.u32 %v3060, 16
      %v3401 = vrot.slane %v3399, 5
      %v3402 = vsel %vm880, %v3397, %v3401
      %v3404 = vshrl.u32 %v3061, 16
      %v3406 = vrot.slane %v3404, 4
      %v3407 = vshll.u32 %v3061, 16
      %v3409 = vrot.slane %v3407, 5
      %v3410 = vor.u32 %v3406, %v3409
      %v3411 = vrot.slane %v3410, 4
      %v3413 = vshll.u32 %v3062, 16
      %v3415 = vrot.slane %v3413, 5
      %v3416 = vsel %vm880, %v3411, %v3415
      %v3417 = vshrl.u32 %v3062, 16
      %v3419 = vrot.slane %v3417, 4
      %v3420 = vor.u32 %v3419, %v3415
      %v3421 = vrot.slane %v3420, 4
      %v3423 = vshll.u32 %v3063, 16
      %v3425 = vrot.slane %v3423, 5
      %v3426 = vsel %vm880, %v3421, %v3425
      %v3428 = vshrl.u32 %v3064, 16
      %v3430 = vrot.slane %v3428, 4
      %v3431 = vshll.u32 %v3064, 16
      %v3433 = vrot.slane %v3431, 5
      %v3434 = vor.u32 %v3430, %v3433
      %v3435 = vrot.slane %v3434, 4
      %v3437 = vshll.u32 %v3065, 16
      %v3439 = vrot.slane %v3437, 5
      %v3440 = vsel %vm880, %v3435, %v3439
      %v3441 = vshrl.u32 %v3065, 16
      %v3443 = vrot.slane %v3441, 4
      %v3444 = vor.u32 %v3443, %v3439
      %v3445 = vrot.slane %v3444, 4
      %v3447 = vshll.u32 %v3066, 16
      %v3449 = vrot.slane %v3447, 5
      %v3450 = vsel %vm880, %v3445, %v3449
      %3451 = vrot.lane.b32.xlu0 %v3080, 28
      %v3452 = vpop.permute.xlu0 %3451
      %3453 = vrot.lane.b32.xlu0 %v3090, 28
      %v3454 = vpop.permute.xlu0 %3453
      %3455 = vrot.lane.b32.xlu0 %v3104, 28
      %v3456 = vpop.permute.xlu0 %3455
      %3457 = vrot.lane.b32.xlu0 %v3114, 28
      %v3458 = vpop.permute.xlu0 %3457
      %3459 = vrot.lane.b32.xlu0 %v3128, 28
      %v3460 = vpop.permute.xlu0 %3459
      %3461 = vrot.lane.b32.xlu0 %v3138, 28
      %v3462 = vpop.permute.xlu0 %3461
      %3463 = vrot.lane.b32.xlu0 %v3152, 28
      %v3464 = vpop.permute.xlu0 %3463
      %3465 = vrot.lane.b32.xlu0 %v3162, 28
      %v3466 = vpop.permute.xlu0 %3465
      %3467 = vrot.lane.b32.xlu0 %v3176, 28
      %v3468 = vpop.permute.xlu0 %3467
      %3469 = vrot.lane.b32.xlu0 %v3186, 28
      %v3470 = vpop.permute.xlu0 %3469
      %3471 = vrot.lane.b32.xlu0 %v3200, 28
      %v3472 = vpop.permute.xlu0 %3471
      %3473 = vrot.lane.b32.xlu0 %v3210, 28
      %v3474 = vpop.permute.xlu0 %3473
      %3475 = vrot.lane.b32.xlu0 %v3224, 28
      %v3476 = vpop.permute.xlu0 %3475
      %3477 = vrot.lane.b32.xlu0 %v3234, 28
      %v3478 = vpop.permute.xlu0 %3477
      %3479 = vrot.lane.b32.xlu0 %v3248, 28
      %v3480 = vpop.permute.xlu0 %3479
      %3481 = vrot.lane.b32.xlu0 %v3258, 28
      %v3482 = vpop.permute.xlu0 %3481
      %3483 = vrot.lane.b32.xlu0 %v3272, 28
      %v3484 = vpop.permute.xlu0 %3483
      %3485 = vrot.lane.b32.xlu0 %v3282, 28
      %v3486 = vpop.permute.xlu0 %3485
      %3487 = vrot.lane.b32.xlu0 %v3296, 28
      %v3488 = vpop.permute.xlu0 %3487
      %3489 = vrot.lane.b32.xlu0 %v3306, 28
      %v3490 = vpop.permute.xlu0 %3489
      %3491 = vrot.lane.b32.xlu0 %v3320, 28
      %v3492 = vpop.permute.xlu0 %3491
      %3493 = vrot.lane.b32.xlu0 %v3330, 28
      %v3494 = vpop.permute.xlu0 %3493
      %3495 = vrot.lane.b32.xlu0 %v3344, 28
      %v3496 = vpop.permute.xlu0 %3495
      %3497 = vrot.lane.b32.xlu0 %v3354, 28
      %v3498 = vpop.permute.xlu0 %3497
      %3499 = vrot.lane.b32.xlu0 %v3368, 28
      %v3500 = vpop.permute.xlu0 %3499
      %3501 = vrot.lane.b32.xlu0 %v3378, 28
      %v3502 = vpop.permute.xlu0 %3501
      %3503 = vrot.lane.b32.xlu0 %v3392, 28
      %v3504 = vpop.permute.xlu0 %3503
      %3505 = vrot.lane.b32.xlu0 %v3402, 28
      %v3506 = vpop.permute.xlu0 %3505
      %3507 = vrot.lane.b32.xlu0 %v3416, 28
      %v3508 = vpop.permute.xlu0 %3507
      %3509 = vrot.lane.b32.xlu0 %v3426, 28
      %v3510 = vpop.permute.xlu0 %3509
      %3511 = vrot.lane.b32.xlu0 %v3440, 28
      %v3512 = vpop.permute.xlu0 %3511
      %3513 = vrot.lane.b32.xlu0 %v3450, 28
      %v3514 = vpop.permute.xlu0 %3513
      %vm3547 = vcmask 257248
      %3548 = vst.msk [vmem:[#allocation3] sm:$0xf] %vm3547, %v3452
      %3549 = vst.msk [vmem:[#allocation3 + $0x4] sm:$0xf] %vm3547, %v3454
      %3550 = vst.msk [vmem:[#allocation3 + $0x8] sm:$0xf] %vm3547, %v3456
      %3551 = vst.msk [vmem:[#allocation3 + $0xc] sm:$0xf] %vm3547, %v3458
      %3552 = vst.msk [vmem:[#allocation3 + $0x10] sm:$0xf] %vm3547, %v3460
      %3553 = vst.msk [vmem:[#allocation3 + $0x14] sm:$0xf] %vm3547, %v3462
      %3554 = vst.msk [vmem:[#allocation3 + $0x18] sm:$0xf] %vm3547, %v3464
      %3555 = vst.msk [vmem:[#allocation3 + $0x1c] sm:$0xf] %vm3547, %v3466
      %3556 = vst.msk [vmem:[#allocation3 + $0x20] sm:$0xf] %vm3547, %v3468
      %3557 = vst.msk [vmem:[#allocation3 + $0x24] sm:$0xf] %vm3547, %v3470
      %3558 = vst.msk [vmem:[#allocation3 + $0x28] sm:$0xf] %vm3547, %v3472
      %3559 = vst.msk [vmem:[#allocation3 + $0x2c] sm:$0xf] %vm3547, %v3474
      %3560 = vst.msk [vmem:[#allocation3 + $0x30] sm:$0xf] %vm3547, %v3476
      %3561 = vst.msk [vmem:[#allocation3 + $0x34] sm:$0xf] %vm3547, %v3478
      %3562 = vst.msk [vmem:[#allocation3 + $0x38] sm:$0xf] %vm3547, %v3480
      %3563 = vst.msk [vmem:[#allocation3 + $0x3c] sm:$0xf] %vm3547, %v3482
      %3564 = vst.msk [vmem:[#allocation3 + $0x40] sm:$0xf] %vm3547, %v3484
      %3565 = vst.msk [vmem:[#allocation3 + $0x44] sm:$0xf] %vm3547, %v3486
      %3566 = vst.msk [vmem:[#allocation3 + $0x48] sm:$0xf] %vm3547, %v3488
      %3567 = vst.msk [vmem:[#allocation3 + $0x4c] sm:$0xf] %vm3547, %v3490
      %3568 = vst.msk [vmem:[#allocation3 + $0x50] sm:$0xf] %vm3547, %v3492
      %3569 = vst.msk [vmem:[#allocation3 + $0x54] sm:$0xf] %vm3547, %v3494
      %3570 = vst.msk [vmem:[#allocation3 + $0x58] sm:$0xf] %vm3547, %v3496
      %3571 = vst.msk [vmem:[#allocation3 + $0x5c] sm:$0xf] %vm3547, %v3498
      %3572 = vst.msk [vmem:[#allocation3 + $0x60] sm:$0xf] %vm3547, %v3500
      %3573 = vst.msk [vmem:[#allocation3 + $0x64] sm:$0xf] %vm3547, %v3502
      %3574 = vst.msk [vmem:[#allocation3 + $0x68] sm:$0xf] %vm3547, %v3504
      %3575 = vst.msk [vmem:[#allocation3 + $0x6c] sm:$0xf] %vm3547, %v3506
      %3576 = vst.msk [vmem:[#allocation3 + $0x70] sm:$0xf] %vm3547, %v3508
      %3577 = vst.msk [vmem:[#allocation3 + $0x74] sm:$0xf] %vm3547, %v3510
      %3578 = vst.msk [vmem:[#allocation3 + $0x78] sm:$0xf] %vm3547, %v3512
      %3579 = vst.msk [vmem:[#allocation3 + $0x7c] sm:$0xf] %vm3547, %v3514
      %v3580 = vld [vmem:[%s2825] sm:$0xe]
      %v3581 = vld [vmem:[%s2825 + $0x4] sm:$0xf]
      %v3582 = vld [vmem:[%s2825 + $0x8] sm:$0x1]
      %v3583 = vld [vmem:[%s2825 + $0xc] sm:$0xe]
      %v3584 = vld [vmem:[%s2825 + $0x10] sm:$0xf]
      %v3585 = vld [vmem:[%s2825 + $0x14] sm:$0x1]
      %v3586 = vld [vmem:[%s2825 + $0x18] sm:$0xe]
      %v3587 = vld [vmem:[%s2825 + $0x1c] sm:$0xf]
      %v3588 = vld [vmem:[%s2825 + $0x20] sm:$0x1]
      %v3589 = vld [vmem:[%s2825 + $0x24] sm:$0xe]
      %v3590 = vld [vmem:[%s2825 + $0x28] sm:$0xf]
      %v3591 = vld [vmem:[%s2825 + $0x2c] sm:$0x1]
      %v3592 = vld [vmem:[%s2825 + $0x30] sm:$0xe]
      %v3593 = vld [vmem:[%s2825 + $0x34] sm:$0xf]
      %v3594 = vld [vmem:[%s2825 + $0x38] sm:$0x1]
      %v3595 = vld [vmem:[%s2825 + $0x3c] sm:$0xe]
      %v3596 = vld [vmem:[%s2825 + $0x40] sm:$0xf]
      %v3597 = vld [vmem:[%s2825 + $0x44] sm:$0x1]
      %v3598 = vld [vmem:[%s2825 + $0x48] sm:$0xe]
      %v3599 = vld [vmem:[%s2825 + $0x4c] sm:$0xf]
      %v3600 = vld [vmem:[%s2825 + $0x50] sm:$0x1]
      %v3601 = vld [vmem:[%s2825 + $0x54] sm:$0xe]
      %v3602 = vld [vmem:[%s2825 + $0x58] sm:$0xf]
      %v3603 = vld [vmem:[%s2825 + $0x5c] sm:$0x1]
      %v3604 = vld [vmem:[%s2825 + $0x60] sm:$0xe]
      %v3605 = vld [vmem:[%s2825 + $0x64] sm:$0xf]
      %v3606 = vld [vmem:[%s2825 + $0x68] sm:$0x1]
      %v3607 = vld [vmem:[%s2825 + $0x6c] sm:$0xe]
      %v3608 = vld [vmem:[%s2825 + $0x70] sm:$0xf]
      %v3609 = vld [vmem:[%s2825 + $0x74] sm:$0x1]
      %v3610 = vld [vmem:[%s2825 + $0x78] sm:$0xe]
      %v3611 = vld [vmem:[%s2825 + $0x7c] sm:$0xf]
      %v3612 = vld [vmem:[%s2825 + $0x80] sm:$0x1]
      %v3613 = vld [vmem:[%s2825 + $0x84] sm:$0xe]
      %v3614 = vld [vmem:[%s2825 + $0x88] sm:$0xf]
      %v3615 = vld [vmem:[%s2825 + $0x8c] sm:$0x1]
      %v3616 = vld [vmem:[%s2825 + $0x90] sm:$0xe]
      %v3617 = vld [vmem:[%s2825 + $0x94] sm:$0xf]
      %v3618 = vld [vmem:[%s2825 + $0x98] sm:$0x1]
      %v3619 = vld [vmem:[%s2825 + $0x9c] sm:$0xe]
      %v3620 = vld [vmem:[%s2825 + $0xa0] sm:$0xf]
      %v3621 = vld [vmem:[%s2825 + $0xa4] sm:$0x1]
      %v3622 = vld [vmem:[%s2825 + $0xa8] sm:$0xe]
      %v3623 = vld [vmem:[%s2825 + $0xac] sm:$0xf]
      %v3624 = vld [vmem:[%s2825 + $0xb0] sm:$0x1]
      %v3625 = vld [vmem:[%s2825 + $0xb4] sm:$0xe]
      %v3626 = vld [vmem:[%s2825 + $0xb8] sm:$0xf]
      %v3627 = vld [vmem:[%s2825 + $0xbc] sm:$0x1]
      %v3676 = vrot.slane %v3580, 5
      %v3677 = vrot.slane %v3676, 4
      %v3678 = vrot.slane %v3581, 5
      %v3679 = vsel %vm1492, %v3677, %v3678
      %v3680 = vrot.slane %v3678, 4
      %v3681 = vrot.slane %v3582, 5
      %v3682 = vsel %vm1492, %v3680, %v3681
      %v3683 = vrot.slane %v3583, 5
      %v3684 = vrot.slane %v3683, 4
      %v3685 = vrot.slane %v3584, 5
      %v3686 = vsel %vm1492, %v3684, %v3685
      %v3687 = vrot.slane %v3685, 4
      %v3688 = vrot.slane %v3585, 5
      %v3689 = vsel %vm1492, %v3687, %v3688
      %v3690 = vrot.slane %v3586, 5
      %v3691 = vrot.slane %v3690, 4
      %v3692 = vrot.slane %v3587, 5
      %v3693 = vsel %vm1492, %v3691, %v3692
      %v3694 = vrot.slane %v3692, 4
      %v3695 = vrot.slane %v3588, 5
      %v3696 = vsel %vm1492, %v3694, %v3695
      %v3697 = vrot.slane %v3589, 5
      %v3698 = vrot.slane %v3697, 4
      %v3699 = vrot.slane %v3590, 5
      %v3700 = vsel %vm1492, %v3698, %v3699
      %v3701 = vrot.slane %v3699, 4
      %v3702 = vrot.slane %v3591, 5
      %v3703 = vsel %vm1492, %v3701, %v3702
      %v3704 = vrot.slane %v3592, 5
      %v3705 = vrot.slane %v3704, 4
      %v3706 = vrot.slane %v3593, 5
      %v3707 = vsel %vm1492, %v3705, %v3706
      %v3708 = vrot.slane %v3706, 4
      %v3709 = vrot.slane %v3594, 5
      %v3710 = vsel %vm1492, %v3708, %v3709
      %v3711 = vrot.slane %v3595, 5
      %v3712 = vrot.slane %v3711, 4
      %v3713 = vrot.slane %v3596, 5
      %v3714 = vsel %vm1492, %v3712, %v3713
      %v3715 = vrot.slane %v3713, 4
      %v3716 = vrot.slane %v3597, 5
      %v3717 = vsel %vm1492, %v3715, %v3716
      %v3718 = vrot.slane %v3598, 5
      %v3719 = vrot.slane %v3718, 4
      %v3720 = vrot.slane %v3599, 5
      %v3721 = vsel %vm1492, %v3719, %v3720
      %v3722 = vrot.slane %v3720, 4
      %v3723 = vrot.slane %v3600, 5
      %v3724 = vsel %vm1492, %v3722, %v3723
      %v3725 = vrot.slane %v3601, 5
      %v3726 = vrot.slane %v3725, 4
      %v3727 = vrot.slane %v3602, 5
      %v3728 = vsel %vm1492, %v3726, %v3727
      %v3729 = vrot.slane %v3727, 4
      %v3730 = vrot.slane %v3603, 5
      %v3731 = vsel %vm1492, %v3729, %v3730
      %v3732 = vrot.slane %v3604, 5
      %v3733 = vrot.slane %v3732, 4
      %v3734 = vrot.slane %v3605, 5
      %v3735 = vsel %vm1492, %v3733, %v3734
      %v3736 = vrot.slane %v3734, 4
      %v3737 = vrot.slane %v3606, 5
      %v3738 = vsel %vm1492, %v3736, %v3737
      %v3739 = vrot.slane %v3607, 5
      %v3740 = vrot.slane %v3739, 4
      %v3741 = vrot.slane %v3608, 5
      %v3742 = vsel %vm1492, %v3740, %v3741
      %v3743 = vrot.slane %v3741, 4
      %v3744 = vrot.slane %v3609, 5
      %v3745 = vsel %vm1492, %v3743, %v3744
      %v3746 = vrot.slane %v3610, 5
      %v3747 = vrot.slane %v3746, 4
      %v3748 = vrot.slane %v3611, 5
      %v3749 = vsel %vm1492, %v3747, %v3748
      %v3750 = vrot.slane %v3748, 4
      %v3751 = vrot.slane %v3612, 5
      %v3752 = vsel %vm1492, %v3750, %v3751
      %v3753 = vrot.slane %v3613, 5
      %v3754 = vrot.slane %v3753, 4
      %v3755 = vrot.slane %v3614, 5
      %v3756 = vsel %vm1492, %v3754, %v3755
      %v3757 = vrot.slane %v3755, 4
      %v3758 = vrot.slane %v3615, 5
      %v3759 = vsel %vm1492, %v3757, %v3758
      %v3760 = vrot.slane %v3616, 5
      %v3761 = vrot.slane %v3760, 4
      %v3762 = vrot.slane %v3617, 5
      %v3763 = vsel %vm1492, %v3761, %v3762
      %v3764 = vrot.slane %v3762, 4
      %v3765 = vrot.slane %v3618, 5
      %v3766 = vsel %vm1492, %v3764, %v3765
      %v3767 = vrot.slane %v3619, 5
      %v3768 = vrot.slane %v3767, 4
      %v3769 = vrot.slane %v3620, 5
      %v3770 = vsel %vm1492, %v3768, %v3769
      %v3771 = vrot.slane %v3769, 4
      %v3772 = vrot.slane %v3621, 5
      %v3773 = vsel %vm1492, %v3771, %v3772
      %v3774 = vrot.slane %v3622, 5
      %v3775 = vrot.slane %v3774, 4
      %v3776 = vrot.slane %v3623, 5
      %v3777 = vsel %vm1492, %v3775, %v3776
      %v3778 = vrot.slane %v3776, 4
      %v3779 = vrot.slane %v3624, 5
      %v3780 = vsel %vm1492, %v3778, %v3779
      %v3781 = vrot.slane %v3625, 5
      %v3782 = vrot.slane %v3781, 4
      %v3783 = vrot.slane %v3626, 5
      %v3784 = vsel %vm1492, %v3782, %v3783
      %v3785 = vrot.slane %v3783, 4
      %v3786 = vrot.slane %v3627, 5
      %v3787 = vsel %vm1492, %v3785, %v3786
      %3788 = vrot.lane.b32.xlu0 %v3679, 32
      %v3789 = vpop.permute.xlu0 %3788
      %3790 = vrot.lane.b32.xlu0 %v3682, 32
      %v3791 = vpop.permute.xlu0 %3790
      %3792 = vrot.lane.b32.xlu0 %v3686, 32
      %v3793 = vpop.permute.xlu0 %3792
      %3794 = vrot.lane.b32.xlu0 %v3689, 32
      %v3795 = vpop.permute.xlu0 %3794
      %3796 = vrot.lane.b32.xlu0 %v3693, 32
      %v3797 = vpop.permute.xlu0 %3796
      %3798 = vrot.lane.b32.xlu0 %v3696, 32
      %v3799 = vpop.permute.xlu0 %3798
      %3800 = vrot.lane.b32.xlu0 %v3700, 32
      %v3801 = vpop.permute.xlu0 %3800
      %3802 = vrot.lane.b32.xlu0 %v3703, 32
      %v3803 = vpop.permute.xlu0 %3802
      %3804 = vrot.lane.b32.xlu0 %v3707, 32
      %v3805 = vpop.permute.xlu0 %3804
      %3806 = vrot.lane.b32.xlu0 %v3710, 32
      %v3807 = vpop.permute.xlu0 %3806
      %3808 = vrot.lane.b32.xlu0 %v3714, 32
      %v3809 = vpop.permute.xlu0 %3808
      %3810 = vrot.lane.b32.xlu0 %v3717, 32
      %v3811 = vpop.permute.xlu0 %3810
      %3812 = vrot.lane.b32.xlu0 %v3721, 32
      %v3813 = vpop.permute.xlu0 %3812
      %3814 = vrot.lane.b32.xlu0 %v3724, 32
      %v3815 = vpop.permute.xlu0 %3814
      %3816 = vrot.lane.b32.xlu0 %v3728, 32
      %v3817 = vpop.permute.xlu0 %3816
      %3818 = vrot.lane.b32.xlu0 %v3731, 32
      %v3819 = vpop.permute.xlu0 %3818
      %3820 = vrot.lane.b32.xlu0 %v3735, 32
      %v3821 = vpop.permute.xlu0 %3820
      %3822 = vrot.lane.b32.xlu0 %v3738, 32
      %v3823 = vpop.permute.xlu0 %3822
      %3824 = vrot.lane.b32.xlu0 %v3742, 32
      %v3825 = vpop.permute.xlu0 %3824
      %3826 = vrot.lane.b32.xlu0 %v3745, 32
      %v3827 = vpop.permute.xlu0 %3826
      %3828 = vrot.lane.b32.xlu0 %v3749, 32
      %v3829 = vpop.permute.xlu0 %3828
      %3830 = vrot.lane.b32.xlu0 %v3752, 32
      %v3831 = vpop.permute.xlu0 %3830
      %3832 = vrot.lane.b32.xlu0 %v3756, 32
      %v3833 = vpop.permute.xlu0 %3832
      %3834 = vrot.lane.b32.xlu0 %v3759, 32
      %v3835 = vpop.permute.xlu0 %3834
      %3836 = vrot.lane.b32.xlu0 %v3763, 32
      %v3837 = vpop.permute.xlu0 %3836
      %3838 = vrot.lane.b32.xlu0 %v3766, 32
      %v3839 = vpop.permute.xlu0 %3838
      %3840 = vrot.lane.b32.xlu0 %v3770, 32
      %v3841 = vpop.permute.xlu0 %3840
      %3842 = vrot.lane.b32.xlu0 %v3773, 32
      %v3843 = vpop.permute.xlu0 %3842
      %3844 = vrot.lane.b32.xlu0 %v3777, 32
      %v3845 = vpop.permute.xlu0 %3844
      %3846 = vrot.lane.b32.xlu0 %v3780, 32
      %v3847 = vpop.permute.xlu0 %3846
      %3848 = vrot.lane.b32.xlu0 %v3784, 32
      %v3849 = vpop.permute.xlu0 %3848
      %3850 = vrot.lane.b32.xlu0 %v3787, 32
      %v3851 = vpop.permute.xlu0 %3850
      %vm3884 = vcmask 290048
      %3885 = vst.msk [vmem:[#allocation3] sm:$0xf] %vm3884, %v3789
      %3886 = vst.msk [vmem:[#allocation3 + $0x4] sm:$0xf] %vm3884, %v3791
      %3887 = vst.msk [vmem:[#allocation3 + $0x8] sm:$0xf] %vm3884, %v3793
      %3888 = vst.msk [vmem:[#allocation3 + $0xc] sm:$0xf] %vm3884, %v3795
      %3889 = vst.msk [vmem:[#allocation3 + $0x10] sm:$0xf] %vm3884, %v3797
      %3890 = vst.msk [vmem:[#allocation3 + $0x14] sm:$0xf] %vm3884, %v3799
      %3891 = vst.msk [vmem:[#allocation3 + $0x18] sm:$0xf] %vm3884, %v3801
      %3892 = vst.msk [vmem:[#allocation3 + $0x1c] sm:$0xf] %vm3884, %v3803
      %3893 = vst.msk [vmem:[#allocation3 + $0x20] sm:$0xf] %vm3884, %v3805
      %3894 = vst.msk [vmem:[#allocation3 + $0x24] sm:$0xf] %vm3884, %v3807
      %3895 = vst.msk [vmem:[#allocation3 + $0x28] sm:$0xf] %vm3884, %v3809
      %3896 = vst.msk [vmem:[#allocation3 + $0x2c] sm:$0xf] %vm3884, %v3811
      %3897 = vst.msk [vmem:[#allocation3 + $0x30] sm:$0xf] %vm3884, %v3813
      %3898 = vst.msk [vmem:[#allocation3 + $0x34] sm:$0xf] %vm3884, %v3815
      %3899 = vst.msk [vmem:[#allocation3 + $0x38] sm:$0xf] %vm3884, %v3817
      %3900 = vst.msk [vmem:[#allocation3 + $0x3c] sm:$0xf] %vm3884, %v3819
      %3901 = vst.msk [vmem:[#allocation3 + $0x40] sm:$0xf] %vm3884, %v3821
      %3902 = vst.msk [vmem:[#allocation3 + $0x44] sm:$0xf] %vm3884, %v3823
      %3903 = vst.msk [vmem:[#allocation3 + $0x48] sm:$0xf] %vm3884, %v3825
      %3904 = vst.msk [vmem:[#allocation3 + $0x4c] sm:$0xf] %vm3884, %v3827
      %3905 = vst.msk [vmem:[#allocation3 + $0x50] sm:$0xf] %vm3884, %v3829
      %3906 = vst.msk [vmem:[#allocation3 + $0x54] sm:$0xf] %vm3884, %v3831
      %3907 = vst.msk [vmem:[#allocation3 + $0x58] sm:$0xf] %vm3884, %v3833
      %3908 = vst.msk [vmem:[#allocation3 + $0x5c] sm:$0xf] %vm3884, %v3835
      %3909 = vst.msk [vmem:[#allocation3 + $0x60] sm:$0xf] %vm3884, %v3837
      %3910 = vst.msk [vmem:[#allocation3 + $0x64] sm:$0xf] %vm3884, %v3839
      %3911 = vst.msk [vmem:[#allocation3 + $0x68] sm:$0xf] %vm3884, %v3841
      %3912 = vst.msk [vmem:[#allocation3 + $0x6c] sm:$0xf] %vm3884, %v3843
      %3913 = vst.msk [vmem:[#allocation3 + $0x70] sm:$0xf] %vm3884, %v3845
      %3914 = vst.msk [vmem:[#allocation3 + $0x74] sm:$0xf] %vm3884, %v3847
      %3915 = vst.msk [vmem:[#allocation3 + $0x78] sm:$0xf] %vm3884, %v3849
      %3916 = vst.msk [vmem:[#allocation3 + $0x7c] sm:$0xf] %vm3884, %v3851
      %v3917 = vld [vmem:[#allocation3] sm:$0xf]
      %v3918 = vld [vmem:[#allocation3 + $0x4] sm:$0xf]
      %v3919 = vld [vmem:[#allocation3 + $0x8] sm:$0xf]
      %v3920 = vld [vmem:[#allocation3 + $0xc] sm:$0xf]
      %v3921 = vld [vmem:[#allocation3 + $0x10] sm:$0xf]
      %v3922 = vld [vmem:[#allocation3 + $0x14] sm:$0xf]
      %v3923 = vld [vmem:[#allocation3 + $0x18] sm:$0xf]
      %v3924 = vld [vmem:[#allocation3 + $0x1c] sm:$0xf]
      %v3925 = vld [vmem:[#allocation3 + $0x20] sm:$0xf]
      %v3926 = vld [vmem:[#allocation3 + $0x24] sm:$0xf]
      %v3927 = vld [vmem:[#allocation3 + $0x28] sm:$0xf]
      %v3928 = vld [vmem:[#allocation3 + $0x2c] sm:$0xf]
      %v3929 = vld [vmem:[#allocation3 + $0x30] sm:$0xf]
      %v3930 = vld [vmem:[#allocation3 + $0x34] sm:$0xf]
      %v3931 = vld [vmem:[#allocation3 + $0x38] sm:$0xf]
      %v3932 = vld [vmem:[#allocation3 + $0x3c] sm:$0xf]
      %v3933 = vld [vmem:[#allocation3 + $0x40] sm:$0xf]
      %v3934 = vld [vmem:[#allocation3 + $0x44] sm:$0xf]
      %v3935 = vld [vmem:[#allocation3 + $0x48] sm:$0xf]
      %v3936 = vld [vmem:[#allocation3 + $0x4c] sm:$0xf]
      %v3937 = vld [vmem:[#allocation3 + $0x50] sm:$0xf]
      %v3938 = vld [vmem:[#allocation3 + $0x54] sm:$0xf]
      %v3939 = vld [vmem:[#allocation3 + $0x58] sm:$0xf]
      %v3940 = vld [vmem:[#allocation3 + $0x5c] sm:$0xf]
      %v3941 = vld [vmem:[#allocation3 + $0x60] sm:$0xf]
      %v3942 = vld [vmem:[#allocation3 + $0x64] sm:$0xf]
      %v3943 = vld [vmem:[#allocation3 + $0x68] sm:$0xf]
      %v3944 = vld [vmem:[#allocation3 + $0x6c] sm:$0xf]
      %v3945 = vld [vmem:[#allocation3 + $0x70] sm:$0xf]
      %v3946 = vld [vmem:[#allocation3 + $0x74] sm:$0xf]
      %v3947 = vld [vmem:[#allocation3 + $0x78] sm:$0xf]
      %v3948 = vld [vmem:[#allocation3 + $0x7c] sm:$0xf]
      %v3949 = vld [vmem:[%s3] sm:$0xf]
      %v3950 = vld [vmem:[%s3 + $0x4] sm:$0xf]
      %v3951 = vld [vmem:[%s3 + $0x8] sm:$0xf]
      %v3952 = vld [vmem:[%s3 + $0xc] sm:$0xf]
      %v3953 = vld [vmem:[%s3 + $0x10] sm:$0x3]
      %v3986 = vunpack.c.l.b16 %v3917
      %v3987 = vunpack.c.l.b16 %v3918
      %v3988 = vunpack.c.l.b16 %v3919
      %v3989 = vunpack.c.l.b16 %v3920
      %v3990 = vunpack.c.l.b16 %v3921
      %v3991 = vunpack.c.l.b16 %v3922
      %v3992 = vunpack.c.l.b16 %v3923
      %v3993 = vunpack.c.l.b16 %v3924
      %v3994 = vunpack.c.l.b16 %v3925
      %v3995 = vunpack.c.l.b16 %v3926
      %v3996 = vunpack.c.l.b16 %v3927
      %v3997 = vunpack.c.l.b16 %v3928
      %v3998 = vunpack.c.l.b16 %v3929
      %v3999 = vunpack.c.l.b16 %v3930
      %v4000 = vunpack.c.l.b16 %v3931
      %v4001 = vunpack.c.l.b16 %v3932
      %v4002 = vunpack.c.l.b16 %v3933
      %v4003 = vunpack.c.l.b16 %v3934
      %v4004 = vunpack.c.l.b16 %v3935
      %v4005 = vunpack.c.l.b16 %v3936
      %v4006 = vunpack.c.l.b16 %v3937
      %v4007 = vunpack.c.l.b16 %v3938
      %v4008 = vunpack.c.l.b16 %v3939
      %v4009 = vunpack.c.l.b16 %v3940
      %v4010 = vunpack.c.l.b16 %v3941
      %v4011 = vunpack.c.l.b16 %v3942
      %v4012 = vunpack.c.l.b16 %v3943
      %v4013 = vunpack.c.l.b16 %v3944
      %v4014 = vunpack.c.l.b16 %v3945
      %v4015 = vunpack.c.l.b16 %v3946
      %v4016 = vunpack.c.l.b16 %v3947
      %v4017 = vunpack.c.l.b16 %v3948
      %v4018 = vpack.c.b16 %v3987, %v3986
      %v4019 = vpack.c.b16 %v3989, %v3988
      %v4020 = vpack.c.b16 %v3991, %v3990
      %v4021 = vpack.c.b16 %v3993, %v3992
      %v4022 = vpack.c.b16 %v3995, %v3994
      %v4023 = vpack.c.b16 %v3997, %v3996
      %v4024 = vpack.c.b16 %v3999, %v3998
      %v4025 = vpack.c.b16 %v4001, %v4000
      %v4026 = vpack.c.b16 %v4003, %v4002
      %v4027 = vpack.c.b16 %v4005, %v4004
      %v4028 = vpack.c.b16 %v4007, %v4006
      %v4029 = vpack.c.b16 %v4009, %v4008
      %v4030 = vpack.c.b16 %v4011, %v4010
      %v4031 = vpack.c.b16 %v4013, %v4012
      %v4032 = vpack.c.b16 %v4015, %v4014
      %v4033 = vpack.c.b16 %v4017, %v4016
      %v4039 = vunpack.c.l.b16 %v3949
      %v4040 = vunpack.c.l.b16 %v3950
      %v4041 = vunpack.c.l.b16 %v3951
      %v4042 = vunpack.c.l.b16 %v3952
      %v4043 = vunpack.c.l.b16 %v3953
      %v4044 = vpack.c.b16 %v4040, %v4039
      %v4045 = vpack.c.b16 %v4042, %v4041
      %v4046 = vpack.c.b16 %v4043, %v4043
      %vm4049 = vcmask 293888
      %v4051 = vsel %vm4049, %v4018, 0
      %v4054 = vsel %vm4049, %v4019, 0
      %v4057 = vsel %vm4049, %v4020, 0
      %v4060 = vsel %vm4049, %v4021, 0
      %v4063 = vsel %vm4049, %v4022, 0
      %v4066 = vsel %vm4049, %v4023, 0
      %v4069 = vsel %vm4049, %v4024, 0
      %v4072 = vsel %vm4049, %v4025, 0
      %v4075 = vsel %vm4049, %v4026, 0
      %v4078 = vsel %vm4049, %v4027, 0
      %v4081 = vsel %vm4049, %v4028, 0
      %v4084 = vsel %vm4049, %v4029, 0
      %v4087 = vsel %vm4049, %v4030, 0
      %v4090 = vsel %vm4049, %v4031, 0
      %v4093 = vsel %vm4049, %v4032, 0
      %v4096 = vsel %vm4049, %v4033, 0
      %vm4098 = vcmask 1041408
      %v4100 = vsel %vm4098, %v4046, 0
      %4102 = vmatpush.bf16.msra.mxu0 0
      %4103 = vmatpush.bf16.msra.mxu0 0
      %4104 = vmatpush.bf16.msra.mxu0 0
      %4105 = vmatpush.bf16.msra.mxu0 0
      %4106 = vmatpush.bf16.msra.mxu0 0
      %4107 = vmatpush.bf16.msra.mxu0 %v4100
      %4108 = vmatpush.bf16.msra.mxu0 %v4045
      %4109 = vmatpush.bf16.msra.mxu0 %v4044
      %4110 = vmatmul.bf16.gmra.mxu0 %v4051
      %v4111 = vpop.f32.mrf.mxu0
      %v4112 = vadd.f32 0.0, %v4111
      %v4113 = vpop.f32.mrf.mxu0
      %v4114 = vadd.f32 0.0, %v4113
      %4115 = vmatmul.bf16.gmra.mxu0 %v4054
      %v4116 = vpop.f32.mrf.mxu0
      %v4117 = vadd.f32 0.0, %v4116
      %v4118 = vpop.f32.mrf.mxu0
      %v4119 = vadd.f32 0.0, %v4118
      %4120 = vmatmul.bf16.gmra.mxu0 %v4057
      %v4121 = vpop.f32.mrf.mxu0
      %v4122 = vadd.f32 0.0, %v4121
      %v4123 = vpop.f32.mrf.mxu0
      %v4124 = vadd.f32 0.0, %v4123
      %4125 = vmatmul.bf16.gmra.mxu0 %v4060
      %v4126 = vpop.f32.mrf.mxu0
      %v4127 = vadd.f32 0.0, %v4126
      %v4128 = vpop.f32.mrf.mxu0
      %v4129 = vadd.f32 0.0, %v4128
      %4130 = vmatmul.bf16.gmra.mxu0 %v4063
      %v4131 = vpop.f32.mrf.mxu0
      %v4132 = vadd.f32 0.0, %v4131
      %v4133 = vpop.f32.mrf.mxu0
      %v4134 = vadd.f32 0.0, %v4133
      %4135 = vmatmul.bf16.gmra.mxu0 %v4066
      %v4136 = vpop.f32.mrf.mxu0
      %v4137 = vadd.f32 0.0, %v4136
      %v4138 = vpop.f32.mrf.mxu0
      %v4139 = vadd.f32 0.0, %v4138
      %4140 = vmatmul.bf16.gmra.mxu0 %v4069
      %v4141 = vpop.f32.mrf.mxu0
      %v4142 = vadd.f32 0.0, %v4141
      %v4143 = vpop.f32.mrf.mxu0
      %v4144 = vadd.f32 0.0, %v4143
      %4145 = vmatmul.bf16.gmra.mxu0 %v4072
      %v4146 = vpop.f32.mrf.mxu0
      %v4147 = vadd.f32 0.0, %v4146
      %v4148 = vpop.f32.mrf.mxu0
      %v4149 = vadd.f32 0.0, %v4148
      %4150 = vmatmul.bf16.gmra.mxu0 %v4075
      %v4151 = vpop.f32.mrf.mxu0
      %v4152 = vadd.f32 0.0, %v4151
      %v4153 = vpop.f32.mrf.mxu0
      %v4154 = vadd.f32 0.0, %v4153
      %4155 = vmatmul.bf16.gmra.mxu0 %v4078
      %v4156 = vpop.f32.mrf.mxu0
      %v4157 = vadd.f32 0.0, %v4156
      %v4158 = vpop.f32.mrf.mxu0
      %v4159 = vadd.f32 0.0, %v4158
      %4160 = vmatmul.bf16.gmra.mxu0 %v4081
      %v4161 = vpop.f32.mrf.mxu0
      %v4162 = vadd.f32 0.0, %v4161
      %v4163 = vpop.f32.mrf.mxu0
      %v4164 = vadd.f32 0.0, %v4163
      %4165 = vmatmul.bf16.gmra.mxu0 %v4084
      %v4166 = vpop.f32.mrf.mxu0
      %v4167 = vadd.f32 0.0, %v4166
      %v4168 = vpop.f32.mrf.mxu0
      %v4169 = vadd.f32 0.0, %v4168
      %4170 = vmatmul.bf16.gmra.mxu0 %v4087
      %v4171 = vpop.f32.mrf.mxu0
      %v4172 = vadd.f32 0.0, %v4171
      %v4173 = vpop.f32.mrf.mxu0
      %v4174 = vadd.f32 0.0, %v4173
      %4175 = vmatmul.bf16.gmra.mxu0 %v4090
      %v4176 = vpop.f32.mrf.mxu0
      %v4177 = vadd.f32 0.0, %v4176
      %v4178 = vpop.f32.mrf.mxu0
      %v4179 = vadd.f32 0.0, %v4178
      %4180 = vmatmul.bf16.gmra.mxu0 %v4093
      %v4181 = vpop.f32.mrf.mxu0
      %v4182 = vadd.f32 0.0, %v4181
      %v4183 = vpop.f32.mrf.mxu0
      %v4184 = vadd.f32 0.0, %v4183
      %4185 = vmatmul.bf16.gmra.mxu0 %v4096
      %v4186 = vpop.f32.mrf.mxu0
      %v4187 = vadd.f32 0.0, %v4186
      %v4188 = vpop.f32.mrf.mxu0
      %v4189 = vadd.f32 0.0, %v4188
      %4190 = vdwg.mxu0
      %v4191 = vpack.c.bf16 %v4112, %v4112
      %v4192 = vpack.c.bf16 %v4114, %v4114
      %v4193 = vpack.c.bf16 %v4117, %v4117
      %v4194 = vpack.c.bf16 %v4119, %v4119
      %v4195 = vpack.c.bf16 %v4122, %v4122
      %v4196 = vpack.c.bf16 %v4124, %v4124
      %v4197 = vpack.c.bf16 %v4127, %v4127
      %v4198 = vpack.c.bf16 %v4129, %v4129
      %v4199 = vpack.c.bf16 %v4132, %v4132
      %v4200 = vpack.c.bf16 %v4134, %v4134
      %v4201 = vpack.c.bf16 %v4137, %v4137
      %v4202 = vpack.c.bf16 %v4139, %v4139
      %v4203 = vpack.c.bf16 %v4142, %v4142
      %v4204 = vpack.c.bf16 %v4144, %v4144
      %v4205 = vpack.c.bf16 %v4147, %v4147
      %v4206 = vpack.c.bf16 %v4149, %v4149
      %v4207 = vpack.c.bf16 %v4152, %v4152
      %v4208 = vpack.c.bf16 %v4154, %v4154
      %v4209 = vpack.c.bf16 %v4157, %v4157
      %v4210 = vpack.c.bf16 %v4159, %v4159
      %v4211 = vpack.c.bf16 %v4162, %v4162
      %v4212 = vpack.c.bf16 %v4164, %v4164
      %v4213 = vpack.c.bf16 %v4167, %v4167
      %v4214 = vpack.c.bf16 %v4169, %v4169
      %v4215 = vpack.c.bf16 %v4172, %v4172
      %v4216 = vpack.c.bf16 %v4174, %v4174
      %v4217 = vpack.c.bf16 %v4177, %v4177
      %v4218 = vpack.c.bf16 %v4179, %v4179
      %v4219 = vpack.c.bf16 %v4182, %v4182
      %v4220 = vpack.c.bf16 %v4184, %v4184
      %v4221 = vpack.c.bf16 %v4187, %v4187
      %v4222 = vpack.c.bf16 %v4189, %v4189
      %4223 = vst.msk [vmem:[%s231] sm:$0xf] %vm269, %v4191
      %4224 = vst.msk [vmem:[%s231 + $0x4] sm:$0xf] %vm269, %v4192
      %4225 = vst.msk [vmem:[%s231 + $0x8] sm:$0xf] %vm269, %v4193
      %4226 = vst.msk [vmem:[%s231 + $0xc] sm:$0xf] %vm269, %v4194
      %4227 = vst.msk [vmem:[%s231 + $0x10] sm:$0xf] %vm269, %v4195
      %4228 = vst.msk [vmem:[%s231 + $0x14] sm:$0xf] %vm269, %v4196
      %4229 = vst.msk [vmem:[%s231 + $0x18] sm:$0xf] %vm269, %v4197
      %4230 = vst.msk [vmem:[%s231 + $0x1c] sm:$0xf] %vm269, %v4198
      %4231 = vst.msk [vmem:[%s231 + $0x20] sm:$0xf] %vm269, %v4199
      %4232 = vst.msk [vmem:[%s231 + $0x24] sm:$0xf] %vm269, %v4200
      %4233 = vst.msk [vmem:[%s231 + $0x28] sm:$0xf] %vm269, %v4201
      %4234 = vst.msk [vmem:[%s231 + $0x2c] sm:$0xf] %vm269, %v4202
      %4235 = vst.msk [vmem:[%s231 + $0x30] sm:$0xf] %vm269, %v4203
      %4236 = vst.msk [vmem:[%s231 + $0x34] sm:$0xf] %vm269, %v4204
      %4237 = vst.msk [vmem:[%s231 + $0x38] sm:$0xf] %vm269, %v4205
      %4238 = vst.msk [vmem:[%s231 + $0x3c] sm:$0xf] %vm269, %v4206
      %4239 = vst.msk [vmem:[%s231 + $0x40] sm:$0xf] %vm269, %v4207
      %4240 = vst.msk [vmem:[%s231 + $0x44] sm:$0xf] %vm269, %v4208
      %4241 = vst.msk [vmem:[%s231 + $0x48] sm:$0xf] %vm269, %v4209
      %4242 = vst.msk [vmem:[%s231 + $0x4c] sm:$0xf] %vm269, %v4210
      %4243 = vst.msk [vmem:[%s231 + $0x50] sm:$0xf] %vm269, %v4211
      %4244 = vst.msk [vmem:[%s231 + $0x54] sm:$0xf] %vm269, %v4212
      %4245 = vst.msk [vmem:[%s231 + $0x58] sm:$0xf] %vm269, %v4213
      %4246 = vst.msk [vmem:[%s231 + $0x5c] sm:$0xf] %vm269, %v4214
      %4247 = vst.msk [vmem:[%s231 + $0x60] sm:$0xf] %vm269, %v4215
      %4248 = vst.msk [vmem:[%s231 + $0x64] sm:$0xf] %vm269, %v4216
      %4249 = vst.msk [vmem:[%s231 + $0x68] sm:$0xf] %vm269, %v4217
      %4250 = vst.msk [vmem:[%s231 + $0x6c] sm:$0xf] %vm269, %v4218
      %4251 = vst.msk [vmem:[%s231 + $0x70] sm:$0xf] %vm269, %v4219
      %4252 = vst.msk [vmem:[%s231 + $0x74] sm:$0xf] %vm269, %v4220
      %4253 = vst.msk [vmem:[%s231 + $0x78] sm:$0xf] %vm269, %v4221
      %4254 = vst.msk [vmem:[%s231 + $0x7c] sm:$0xf] %vm269, %v4222
      %v4255 = vunpack.c.l.bf16 %v4191
      %v4256 = vunpack.c.l.bf16 %v4192
      %v4257 = vunpack.c.l.bf16 %v4193
      %v4258 = vunpack.c.l.bf16 %v4194
      %v4259 = vunpack.c.l.bf16 %v4195
      %v4260 = vunpack.c.l.bf16 %v4196
      %v4261 = vunpack.c.l.bf16 %v4197
      %v4262 = vunpack.c.l.bf16 %v4198
      %v4263 = vunpack.c.l.bf16 %v4199
      %v4264 = vunpack.c.l.bf16 %v4200
      %v4265 = vunpack.c.l.bf16 %v4201
      %v4266 = vunpack.c.l.bf16 %v4202
      %v4267 = vunpack.c.l.bf16 %v4203
      %v4268 = vunpack.c.l.bf16 %v4204
      %v4269 = vunpack.c.l.bf16 %v4205
      %v4270 = vunpack.c.l.bf16 %v4206
      %v4271 = vunpack.c.l.bf16 %v4207
      %v4272 = vunpack.c.l.bf16 %v4208
      %v4273 = vunpack.c.l.bf16 %v4209
      %v4274 = vunpack.c.l.bf16 %v4210
      %v4275 = vunpack.c.l.bf16 %v4211
      %v4276 = vunpack.c.l.bf16 %v4212
      %v4277 = vunpack.c.l.bf16 %v4213
      %v4278 = vunpack.c.l.bf16 %v4214
      %v4279 = vunpack.c.l.bf16 %v4215
      %v4280 = vunpack.c.l.bf16 %v4216
      %v4281 = vunpack.c.l.bf16 %v4217
      %v4282 = vunpack.c.l.bf16 %v4218
      %v4283 = vunpack.c.l.bf16 %v4219
      %v4284 = vunpack.c.l.bf16 %v4220
      %v4285 = vunpack.c.l.bf16 %v4221
      %v4286 = vunpack.c.l.bf16 %v4222
      %vm4287 = vcmask 31744
      %v4288 = vsel %vm4287, %v4255, 0.0
      %v4289 = vsel %vm4287, %v4256, 0.0
      %v4290 = vadd.f32 %v4288, %v4289
      %v4291 = vsel %vm4287, %v4257, 0.0
      %v4292 = vadd.f32 %v4290, %v4291
      %v4293 = vsel %vm4287, %v4258, 0.0
      %v4294 = vadd.f32 %v4292, %v4293
      %v4295 = vsel %vm4287, %v4259, 0.0
      %v4296 = vadd.f32 %v4294, %v4295
      %v4297 = vsel %vm4287, %v4260, 0.0
      %v4298 = vadd.f32 %v4296, %v4297
      %v4299 = vsel %vm4287, %v4261, 0.0
      %v4300 = vadd.f32 %v4298, %v4299
      %v4301 = vsel %vm4287, %v4262, 0.0
      %v4302 = vadd.f32 %v4300, %v4301
      %v4303 = vsel %vm4287, %v4263, 0.0
      %v4304 = vadd.f32 %v4302, %v4303
      %v4305 = vsel %vm4287, %v4264, 0.0
      %v4306 = vadd.f32 %v4304, %v4305
      %v4307 = vsel %vm4287, %v4265, 0.0
      %v4308 = vadd.f32 %v4306, %v4307
      %v4309 = vsel %vm4287, %v4266, 0.0
      %v4310 = vadd.f32 %v4308, %v4309
      %v4311 = vsel %vm4287, %v4267, 0.0
      %v4312 = vadd.f32 %v4310, %v4311
      %v4313 = vsel %vm4287, %v4268, 0.0
      %v4314 = vadd.f32 %v4312, %v4313
      %v4315 = vsel %vm4287, %v4269, 0.0
      %v4316 = vadd.f32 %v4314, %v4315
      %v4317 = vsel %vm4287, %v4270, 0.0
      %v4318 = vadd.f32 %v4316, %v4317
      %v4319 = vsel %vm4287, %v4271, 0.0
      %v4320 = vadd.f32 %v4318, %v4319
      %v4321 = vsel %vm4287, %v4272, 0.0
      %v4322 = vadd.f32 %v4320, %v4321
      %v4323 = vsel %vm4287, %v4273, 0.0
      %v4324 = vadd.f32 %v4322, %v4323
      %v4325 = vsel %vm4287, %v4274, 0.0
      %v4326 = vadd.f32 %v4324, %v4325
      %v4327 = vsel %vm4287, %v4275, 0.0
      %v4328 = vadd.f32 %v4326, %v4327
      %v4329 = vsel %vm4287, %v4276, 0.0
      %v4330 = vadd.f32 %v4328, %v4329
      %v4331 = vsel %vm4287, %v4277, 0.0
      %v4332 = vadd.f32 %v4330, %v4331
      %v4333 = vsel %vm4287, %v4278, 0.0
      %v4334 = vadd.f32 %v4332, %v4333
      %v4335 = vsel %vm4287, %v4279, 0.0
      %v4336 = vadd.f32 %v4334, %v4335
      %v4337 = vsel %vm4287, %v4280, 0.0
      %v4338 = vadd.f32 %v4336, %v4337
      %v4339 = vsel %vm4287, %v4281, 0.0
      %v4340 = vadd.f32 %v4338, %v4339
      %v4341 = vsel %vm4287, %v4282, 0.0
      %v4342 = vadd.f32 %v4340, %v4341
      %v4343 = vsel %vm4287, %v4283, 0.0
      %v4344 = vadd.f32 %v4342, %v4343
      %v4345 = vsel %vm4287, %v4284, 0.0
      %v4346 = vadd.f32 %v4344, %v4345
      %v4347 = vsel %vm4287, %v4285, 0.0
      %v4348 = vadd.f32 %v4346, %v4347
      %v4349 = vsel %vm4287, %v4286, 0.0
      %v4350 = vadd.f32 %v4348, %v4349
      %v4351 = vrot.slane %v4350, 4
      %v4352 = vadd.f32 %v4350, %v4351
      %v4353 = vrot.slane %v4352, 2
      %v4354 = vadd.f32 %v4352, %v4353
      %v4355 = vrot.slane %v4354, 1
      %v4356 = vadd.f32 %v4354, %v4355
      %4357 = vst.msk [vmem:[%s235] sm:$0x1] %vm272, %v4356
      %v4358 = vmul.f32 %v4255, %v4255
      %v4359 = vmul.f32 %v4256, %v4256
      %v4360 = vmul.f32 %v4257, %v4257
      %v4361 = vmul.f32 %v4258, %v4258
      %v4362 = vmul.f32 %v4259, %v4259
      %v4363 = vmul.f32 %v4260, %v4260
      %v4364 = vmul.f32 %v4261, %v4261
      %v4365 = vmul.f32 %v4262, %v4262
      %v4366 = vmul.f32 %v4263, %v4263
      %v4367 = vmul.f32 %v4264, %v4264
      %v4368 = vmul.f32 %v4265, %v4265
      %v4369 = vmul.f32 %v4266, %v4266
      %v4370 = vmul.f32 %v4267, %v4267
      %v4371 = vmul.f32 %v4268, %v4268
      %v4372 = vmul.f32 %v4269, %v4269
      %v4373 = vmul.f32 %v4270, %v4270
      %v4374 = vmul.f32 %v4271, %v4271
      %v4375 = vmul.f32 %v4272, %v4272
      %v4376 = vmul.f32 %v4273, %v4273
      %v4377 = vmul.f32 %v4274, %v4274
      %v4378 = vmul.f32 %v4275, %v4275
      %v4379 = vmul.f32 %v4276, %v4276
      %v4380 = vmul.f32 %v4277, %v4277
      %v4381 = vmul.f32 %v4278, %v4278
      %v4382 = vmul.f32 %v4279, %v4279
      %v4383 = vmul.f32 %v4280, %v4280
      %v4384 = vmul.f32 %v4281, %v4281
      %v4385 = vmul.f32 %v4282, %v4282
      %v4386 = vmul.f32 %v4283, %v4283
      %v4387 = vmul.f32 %v4284, %v4284
      %v4388 = vmul.f32 %v4285, %v4285
      %v4389 = vmul.f32 %v4286, %v4286
      %v4390 = vsel %vm4287, %v4358, 0.0
      %v4391 = vsel %vm4287, %v4359, 0.0
      %v4392 = vadd.f32 %v4390, %v4391
      %v4393 = vsel %vm4287, %v4360, 0.0
      %v4394 = vadd.f32 %v4392, %v4393
      %v4395 = vsel %vm4287, %v4361, 0.0
      %v4396 = vadd.f32 %v4394, %v4395
      %v4397 = vsel %vm4287, %v4362, 0.0
      %v4398 = vadd.f32 %v4396, %v4397
      %v4399 = vsel %vm4287, %v4363, 0.0
      %v4400 = vadd.f32 %v4398, %v4399
      %v4401 = vsel %vm4287, %v4364, 0.0
      %v4402 = vadd.f32 %v4400, %v4401
      %v4403 = vsel %vm4287, %v4365, 0.0
      %v4404 = vadd.f32 %v4402, %v4403
      %v4405 = vsel %vm4287, %v4366, 0.0
      %v4406 = vadd.f32 %v4404, %v4405
      %v4407 = vsel %vm4287, %v4367, 0.0
      %v4408 = vadd.f32 %v4406, %v4407
      %v4409 = vsel %vm4287, %v4368, 0.0
      %v4410 = vadd.f32 %v4408, %v4409
      %v4411 = vsel %vm4287, %v4369, 0.0
      %v4412 = vadd.f32 %v4410, %v4411
      %v4413 = vsel %vm4287, %v4370, 0.0
      %v4414 = vadd.f32 %v4412, %v4413
      %v4415 = vsel %vm4287, %v4371, 0.0
      %v4416 = vadd.f32 %v4414, %v4415
      %v4417 = vsel %vm4287, %v4372, 0.0
      %v4418 = vadd.f32 %v4416, %v4417
      %v4419 = vsel %vm4287, %v4373, 0.0
      %v4420 = vadd.f32 %v4418, %v4419
      %v4421 = vsel %vm4287, %v4374, 0.0
      %v4422 = vadd.f32 %v4420, %v4421
      %v4423 = vsel %vm4287, %v4375, 0.0
      %v4424 = vadd.f32 %v4422, %v4423
      %v4425 = vsel %vm4287, %v4376, 0.0
      %v4426 = vadd.f32 %v4424, %v4425
      %v4427 = vsel %vm4287, %v4377, 0.0
      %v4428 = vadd.f32 %v4426, %v4427
      %v4429 = vsel %vm4287, %v4378, 0.0
      %v4430 = vadd.f32 %v4428, %v4429
      %v4431 = vsel %vm4287, %v4379, 0.0
      %v4432 = vadd.f32 %v4430, %v4431
      %v4433 = vsel %vm4287, %v4380, 0.0
      %v4434 = vadd.f32 %v4432, %v4433
      %v4435 = vsel %vm4287, %v4381, 0.0
      %v4436 = vadd.f32 %v4434, %v4435
      %v4437 = vsel %vm4287, %v4382, 0.0
      %v4438 = vadd.f32 %v4436, %v4437
      %v4439 = vsel %vm4287, %v4383, 0.0
      %v4440 = vadd.f32 %v4438, %v4439
      %v4441 = vsel %vm4287, %v4384, 0.0
      %v4442 = vadd.f32 %v4440, %v4441
      %v4443 = vsel %vm4287, %v4385, 0.0
      %v4444 = vadd.f32 %v4442, %v4443
      %v4445 = vsel %vm4287, %v4386, 0.0
      %v4446 = vadd.f32 %v4444, %v4445
      %v4447 = vsel %vm4287, %v4387, 0.0
      %v4448 = vadd.f32 %v4446, %v4447
      %v4449 = vsel %vm4287, %v4388, 0.0
      %v4450 = vadd.f32 %v4448, %v4449
      %v4451 = vsel %vm4287, %v4389, 0.0
      %v4452 = vadd.f32 %v4450, %v4451
      %v4453 = vrot.slane %v4452, 4
      %v4454 = vadd.f32 %v4452, %v4453
      %v4455 = vrot.slane %v4454, 2
      %v4456 = vadd.f32 %v4454, %v4455
      %v4457 = vrot.slane %v4456, 1
      %v4458 = vadd.f32 %v4456, %v4457
      %4459 = vst.msk [vmem:[%s235 + $0x1] sm:$0x1] %vm272, %v4458
      %p4460 = scmp.lt.s32.totalorder %s17, 1
      %s4461 = scalar_select %p4460, %s17, 1
      %s4462 = smul.addr %s4461, 32
      %s4463 = smul.addr %s4462, 4
      %s4464 = scalar_lea.vmem %s4, %s4463
      %p4465 = scmp.lt.s32.totalorder %s17, 1
      %s4466 = scalar_select %p4465, %s17, 1
      %s4467 = smul.addr %s4466, 2
      %s4468 = scalar_lea.vmem %s5, %s4467
      // Predicated region
      $region37: #{residual_block.3} parent=35 // pred_check
        %p4469 = pneg %p124
      $region38: #{residual_block.3} parent=35 // pred_check_branch
        %4471 = sbr.rel (%p4469) target = $region40
      $region39: #{residual_block.3} parent=35 // pred_region
        _
      $region40: #{residual_block.3} parent=35 // pred_fallthru
        _
      // Predicated region
      $region41: #{residual_block.3} parent=35 // pred_check
        %p4472 = pneg %p150
      $region42: #{residual_block.3} parent=35 // pred_check_branch
        %4474 = sbr.rel (%p4472) target = $region44
      $region43: #{residual_block.3} parent=35 // pred_region
        _
      $region44: #{residual_block.3} parent=35 // pred_fallthru
        _
    $region36: #{residual_block.3} parent=5 // pred_fallthru
      _
    %p4475 = scmp.le.s32.totalorder 2, %s12
    // Predicated region
    $region45: #{residual_block.3} parent=5 // pred_check
      %p4476 = pneg %p4475
    $region46: #{residual_block.3} parent=5 // pred_check_branch
      %4478 = sbr.rel (%p4476) target = $region48
    $region47: #{residual_block.3} parent=5 // pred_region
      %s4479 = ssub.s32 %s12, 2
      // Predicated region
      $region49: #{residual_block.3} parent=47 // pred_check
        %p4480 = pneg %p130
      $region50: #{residual_block.3} parent=47 // pred_check_branch
        %4482 = sbr.rel (%p4480) target = $region52
      $region51: #{residual_block.3} parent=47 // pred_region
        %p4483 = scmp.lt.s32.totalorder %s18, 1
        %s4484 = scalar_select %p4483, %s18, 1
        %s4485 = smul.addr %s4484, 32
        %s4486 = smul.addr %s4485, 4
        %s4487 = scalar_lea.vmem %s4, %s4486
      $region52: #{residual_block.3} parent=47 // pred_fallthru
        _
      // Predicated region
      $region53: #{residual_block.3} parent=47 // pred_check
        %p4488 = pneg %p156
      $region54: #{residual_block.3} parent=47 // pred_check_branch
        %4490 = sbr.rel (%p4488) target = $region56
      $region55: #{residual_block.3} parent=47 // pred_region
        %p4491 = scmp.lt.s32.totalorder %s18, 1
        %s4492 = scalar_select %p4491, %s18, 1
        %s4493 = smul.addr %s4492, 2
        %s4494 = scalar_lea.vmem %s5, %s4493
      $region56: #{residual_block.3} parent=47 // pred_fallthru
        _
    $region48: #{residual_block.3} parent=5 // pred_fallthru
      _
  $region6: #{residual_block.3} parent=0 // loop_footer
    %s16 = sadd.s32 1, %s12
  $region7: #{residual_block.3} parent=0 // loop_footer_branch
    %11 = sbr.rel target = $region3
  $region8: #{residual_block.3} parent=0 // loop_exit
    _

// kernel: residual_block.4
$region0: #{residual_block.4}
  #allocation0 [shape = 'u32[]', space=smem, size = 0x4, offset = 0x4, fixed_abs, tag = 'smem constant byte address 0x4 - core index']
  #allocation1 [shape = 'u32[72,128]{1,0:T(1,128)}', space=vmem, size = 0x9000, scoped, tag = 'internal scratch']
  #allocation2 [shape = 'bf16[1,18,18,4]{3,2,1,0:T(8,128)(2,1)}', space=vmem, size = 0x1b000, scoped, tag = 'scratch operand']
  #allocation3 [shape = 'bf16[256,36]{1,0:T(8,128)(2,1)}', space=vmem, size = 0x10000, scoped, tag = 'scratch operand']
  %s0 = inlined_call_operand.vmem [shape: bf16[2,16,16,4], index: 0, kind: input, shape index: {}]
  %s1 = inlined_call_operand.vmem [shape: f32[1,4], index: 1, kind: input, shape index: {}]
  %s2 = inlined_call_operand.vmem [shape: f32[1,4], index: 2, kind: input, shape index: {}]
  %s3 = inlined_call_operand.vmem [shape: bf16[36,4], index: 3, kind: input, shape index: {}]
  %s4 = inlined_call_operand.vmem [shape: bf16[2,16,16,4], index: 4, kind: output, shape index: {0}]
  %s5 = inlined_call_operand.vmem [shape: f32[2,2,4], index: 5, kind: output, shape index: {1}]
  %6 = xla_tuple %s4, %s5
  %s7 = sld [smem:[#allocation0]]
  $region57: #{residual_block.4} parent=0
    _
  %s9 = ssub.s32 1, %s7
  %s10 = scalar_select 0, %s9, %s7
  loop: start=0, step=1, limit=4
  $region2: #{residual_block.4} parent=0 // loop_pre_header
    _
  $region3: #{residual_block.4} parent=0 // loop_header
    %s12 = sphi 0, %s16
    %p13 = scmp.ge.s32.totalorder %s12, 4
    %s22 = sphi 0, %s24
    %s25 = sphi 0, %s22
    %s26 = sphi 0, %s25
    %s42 = sphi 0, %s26
    %s46 = sphi 0, %s46
    %s48 = sphi 0, %s46
    %s49 = sphi 0, %s48
    %s63 = sphi 0, %s49
    %s67 = sphi 0, %s67
    %s69 = sphi 0, %s67
    %s70 = sphi 0, %s69
    %s84 = sphi 0, %s70
    %s88 = sphi 0, %s88
    %s90 = sphi 0, %s88
    %s91 = sphi 0, %s90
    %s105 = sphi 0, %s91
    %s111 = sphi 0, %s113
    %s114 = sphi 0, %s111
    %s115 = sphi 0, %s114
    %s131 = sphi 0, %s115
    %s137 = sphi 0, %s139
    %s140 = sphi 0, %s137
    %s141 = sphi 0, %s140
    %s157 = sphi 0, %s141
  $region4: #{residual_block.4} parent=0 // loop_header_branch
    %15 = sbr.rel (%p13) target = $region8
  $region5: #{residual_block.4} parent=0 // loop_body
    %s17 = ssub.s32 %s12, 1
    %s18 = ssub.s32 %s12, 2
    %s19 = sadd.s32 %s12, 1
    %s20 = ssub.s32 %s12, %s19
    %p21 = scmp.eq.s32.totalorder %s20, 0
    %s23 = sadd.s32 %s22, 1
    %s24 = scalar_select %p21, %s22, %s23
    %p27 = pneg %p21
    %p28 = scmp.eq.s32.totalorder %s12, 1
    %p29 = por %p27, %p28
    %p30 = scmp.ne.s32.totalorder %s22, %s25
    %p31 = scmp.eq.s32.totalorder %s12, 0
    %p32 = por %p30, %p31
    %p33 = scmp.ne.s32.totalorder %s22, %s25
    %p34 = scmp.eq.s32.totalorder %s17, 1
    %p35 = por %p33, %p34
    %p36 = scmp.ne.s32.totalorder %s25, %s26
    %p37 = scmp.eq.s32.totalorder %s17, 0
    %p38 = por %p36, %p37
    %p39 = scmp.ne.s32.totalorder %s25, %s26
    %p40 = scmp.eq.s32.totalorder %s18, 1
    %p41 = por %p39, %p40
    %p43 = scmp.ne.s32.totalorder %s26, %s42
    %p44 = scmp.eq.s32.totalorder %s18, 0
    %p45 = por %p43, %p44
    %s47 = sadd.s32 %s46, 1
    %p50 = scmp.eq.s32.totalorder %s12, 1
    %p51 = scmp.ne.s32.totalorder %s46, %s48
    %p52 = scmp.eq.s32.totalorder %s12, 0
    %p53 = por %p51, %p52
    %p54 = scmp.ne.s32.totalorder %s46, %s48
    %p55 = scmp.eq.s32.totalorder %s17, 1
    %p56 = por %p54, %p55
    %p57 = scmp.ne.s32.totalorder %s48, %s49
    %p58 = scmp.eq.s32.totalorder %s17, 0
    %p59 = por %p57, %p58
    %p60 = scmp.ne.s32.totalorder %s48, %s49
    %p61 = scmp.eq.s32.totalorder %s18, 1
    %p62 = por %p60, %p61
    %p64 = scmp.ne.s32.totalorder %s49, %s63
    %p65 = scmp.eq.s32.totalorder %s18, 0
    %p66 = por %p64, %p65
    %s68 = sadd.s32 %s67, 1
    %p71 = scmp.eq.s32.totalorder %s12, 1
    %p72 = scmp.ne.s32.totalorder %s67, %s69
    %p73 = scmp.eq.s32.totalorder %s12, 0
    %p74 = por %p72, %p73
    %p75 = scmp.ne.s32.totalorder %s67, %s69
    %p76 = scmp.eq.s32.totalorder %s17, 1
    %p77 = por %p75, %p76
    %p78 = scmp.ne.s32.totalorder %s69, %s70
    %p79 = scmp.eq.s32.totalorder %s17, 0
    %p80 = por %p78, %p79
    %p81 = scmp.ne.s32.totalorder %s69, %s70
    %p82 = scmp.eq.s32.totalorder %s18, 1
    %p83 = por %p81, %p82
    %p85 = scmp.ne.s32.totalorder %s70, %s84
    %p86 = scmp.eq.s32.totalorder %s18, 0
    %p87 = por %p85, %p86
    %s89 = sadd.s32 %s88, 1
    %p92 = scmp.eq.s32.totalorder %s12, 1
    %p93 = scmp.ne.s32.totalorder %s88, %s90
    %p94 = scmp.eq.s32.totalorder %s12, 0
    %p95 = por %p93, %p94
    %p96 = scmp.ne.s32.totalorder %s88, %s90
    %p97 = scmp.eq.s32.totalorder %s17, 1
    %p98 = por %p96, %p97
    %p99 = scmp.ne.s32.totalorder %s90, %s91
    %p100 = scmp.eq.s32.totalorder %s17, 0
    %p101 = por %p99, %p100
    %p102 = scmp.ne.s32.totalorder %s90, %s91
    %p103 = scmp.eq.s32.totalorder %s18, 1
    %p104 = por %p102, %p103
    %p106 = scmp.ne.s32.totalorder %s91, %s105
    %p107 = scmp.eq.s32.totalorder %s18, 0
    %p108 = por %p106, %p107
    %s109 = ssub.s32 %s12, %s19
    %p110 = scmp.eq.s32.totalorder %s109, 0
    %s112 = sadd.s32 %s111, 1
    %s113 = scalar_select %p110, %s111, %s112
    %p116 = pneg %p110
    %p117 = scmp.eq.s32.totalorder %s12, 1
    %p118 = por %p116, %p117
    %p119 = scmp.ne.s32.totalorder %s111, %s114
    %p120 = scmp.eq.s32.totalorder %s12, 0
    %p121 = por %p119, %p120
    %p122 = scmp.ne.s32.totalorder %s111, %s114
    %p123 = scmp.eq.s32.totalorder %s17, 1
    %p124 = por %p122, %p123
    %p125 = scmp.ne.s32.totalorder %s114, %s115
    %p126 = scmp.eq.s32.totalorder %s17, 0
    %p127 = por %p125, %p126
    %p128 = scmp.ne.s32.totalorder %s114, %s115
    %p129 = scmp.eq.s32.totalorder %s18, 1
    %p130 = por %p128, %p129
    %p132 = scmp.ne.s32.totalorder %s115, %s131
    %p133 = scmp.eq.s32.totalorder %s18, 0
    %p134 = por %p132, %p133
    %s135 = ssub.s32 %s12, %s19
    %p136 = scmp.eq.s32.totalorder %s135, 0
    %s138 = sadd.s32 %s137, 1
    %s139 = scalar_select %p136, %s137, %s138
    %p142 = pneg %p136
    %p143 = scmp.eq.s32.totalorder %s12, 1
    %p144 = por %p142, %p143
    %p145 = scmp.ne.s32.totalorder %s137, %s140
    %p146 = scmp.eq.s32.totalorder %s12, 0
    %p147 = por %p145, %p146
    %p148 = scmp.ne.s32.totalorder %s137, %s140
    %p149 = scmp.eq.s32.totalorder %s17, 1
    %p150 = por %p148, %p149
    %p151 = scmp.ne.s32.totalorder %s140, %s141
    %p152 = scmp.eq.s32.totalorder %s17, 0
    %p153 = por %p151, %p152
    %p154 = scmp.ne.s32.totalorder %s140, %s141
    %p155 = scmp.eq.s32.totalorder %s18, 1
    %p156 = por %p154, %p155
    %p158 = scmp.ne.s32.totalorder %s141, %s157
    %p159 = scmp.eq.s32.totalorder %s18, 0
    %p160 = por %p158, %p159
    %p161 = scmp.le.s32.totalorder 1, %s12
    %p162 = scmp.lt.s32.totalorder %s12, 3
    %p163 = pnand %p161, %p162
    %p164 = pneg %p163
    // Predicated region
    $region9: #{residual_block.4} parent=5 // pred_check
      _
    $region10: #{residual_block.4} parent=5 // pred_check_branch
      %166 = sbr.rel (%p163) target = $region12
    $region11: #{residual_block.4} parent=5 // pred_region
      %s167 = ssub.s32 %s12, 1
      // Predicated region
      $region13: #{residual_block.4} parent=11 // pred_check
        %p168 = pneg %p59
      $region14: #{residual_block.4} parent=11 // pred_check_branch
        %170 = sbr.rel (%p168) target = $region16
      $region15: #{residual_block.4} parent=11 // pred_region
        _
      $region16: #{residual_block.4} parent=11 // pred_fallthru
        _
      // Predicated region
      $region17: #{residual_block.4} parent=11 // pred_check
        %p171 = pneg %p80
      $region18: #{residual_block.4} parent=11 // pred_check_branch
        %173 = sbr.rel (%p171) target = $region20
      $region19: #{residual_block.4} parent=11 // pred_region
        _
      $region20: #{residual_block.4} parent=11 // pred_fallthru
        _
      // Predicated region
      $region21: #{residual_block.4} parent=11 // pred_check
        %p174 = pneg %p101
      $region22: #{residual_block.4} parent=11 // pred_check_branch
        %176 = sbr.rel (%p174) target = $region24
      $region23: #{residual_block.4} parent=11 // pred_region
        _
      $region24: #{residual_block.4} parent=11 // pred_fallthru
        _
    $region12: #{residual_block.4} parent=5 // pred_fallthru
      _
    %p177 = scmp.lt.s32.totalorder %s12, 2
    // Predicated region
    $region25: #{residual_block.4} parent=5 // pred_check
      %p178 = pneg %p177
    $region26: #{residual_block.4} parent=5 // pred_check_branch
      %180 = sbr.rel (%p178) target = $region28
    $region27: #{residual_block.4} parent=5 // pred_region
      // Predicated region
      $region29: #{residual_block.4} parent=27 // pred_check
        %p181 = pneg %p32
      $region30: #{residual_block.4} parent=27 // pred_check_branch
        %183 = sbr.rel (%p181) target = $region32
      $region31: #{residual_block.4} parent=27 // pred_region
        %p184 = scmp.lt.s32.totalorder %s12, 1
        %s185 = scalar_select %p184, %s12, 1
        %s186 = smul.addr %s185, 32
        %s187 = smul.addr %s186, 4
        %s188 = scalar_lea.vmem %s0, %s187
      $region32: #{residual_block.4} parent=27 // pred_fallthru
        _
    $region28: #{residual_block.4} parent=5 // pred_fallthru
      _
    %p189 = scmp.le.s32.totalorder 1, %s12
    %p190 = scmp.lt.s32.totalorder %s12, 3
    %p191 = pnand %p189, %p190
    %p192 = pneg %p191
    // Predicated region
    $region33: #{residual_block.4} parent=5 // pred_check
      _
    $region34: #{residual_block.4} parent=5 // pred_check_branch
      %194 = sbr.rel (%p191) target = $region36
    $region35: #{residual_block.4} parent=5 // pred_region
      %s195 = ssub.s32 %s12, 1
      %p196 = scmp.lt.s32.totalorder %s17, 1
      %s197 = scalar_select %p196, %s17, 1
      %s198 = smul.addr %s197, 32
      %s199 = smul.addr %s198, 4
      %s200 = scalar_lea.vmem %s0, %s199
      %p201 = pneg %p38
      %p202 = pneg %p35
      %p203 = pneg %p59
      %p204 = pneg %p56
      %p205 = pneg %p80
      %p206 = pneg %p77
      %p207 = pneg %p101
      %p208 = pneg %p98
      %p209 = pneg %p127
      %p210 = pneg %p124
      %p211 = scmp.lt.s32.totalorder %s17, 1
      %s212 = scalar_select %p211, %s17, 1
      %s213 = smul.addr %s212, 32
      %s214 = smul.addr %s213, 4
      %s215 = scalar_lea.vmem %s4, %s214
      %p216 = pneg %p153
      %p217 = pneg %p150
      %p218 = scmp.lt.s32.totalorder %s17, 1
      %s219 = scalar_select %p218, %s17, 1
      %s220 = smul.addr %s219, 2
      %s221 = scalar_lea.vmem %s5, %s220
      %p222 = scmp.lt.s32.totalorder %s17, 1
      %s223 = scalar_select %p222, %s17, 1
      %s224 = smul.addr %s223, 32
      %s225 = smul.addr %s224, 4
      %s226 = scalar_lea.vmem %s0, %s225
      %p227 = scmp.lt.s32.totalorder %s17, 1
      %s228 = scalar_select %p227, %s17, 1
      %s229 = smul.addr %s228, 32
      %s230 = smul.addr %s229, 4
      %s231 = scalar_lea.vmem %s4, %s230
      %p232 = scmp.lt.s32.totalorder %s17, 1
      %s233 = scalar_select %p232, %s17, 1
      %s234 = smul.addr %s233, 2
      %s235 = scalar_lea.vmem %s5, %s234
      %v237 = vld [vmem:[%s226] sm:$0xf]
      %v238 = vld [vmem:[%s226 + $0x4] sm:$0xf]
      %v239 = vld [vmem:[%s226 + $0x8] sm:$0xf]
      %v240 = vld [vmem:[%s226 + $0xc] sm:$0xf]
      %v241 = vld [vmem:[%s226 + $0x10] sm:$0xf]
      %v242 = vld [vmem:[%s226 + $0x14] sm:$0xf]
      %v243 = vld [vmem:[%s226 + $0x18] sm:$0xf]
      %v244 = vld [vmem:[%s226 + $0x1c] sm:$0xf]
      %v245 = vld [vmem:[%s226 + $0x20] sm:$0xf]
      %v246 = vld [vmem:[%s226 + $0x24] sm:$0xf]
      %v247 = vld [vmem:[%s226 + $0x28] sm:$0xf]
      %v248 = vld [vmem:[%s226 + $0x2c] sm:$0xf]
      %v249 = vld [vmem:[%s226 + $0x30] sm:$0xf]
      %v250 = vld [vmem:[%s226 + $0x34] sm:$0xf]
      %v251 = vld [vmem:[%s226 + $0x38] sm:$0xf]
      %v252 = vld [vmem:[%s226 + $0x3c] sm:$0xf]
      %v253 = vld [vmem:[%s226 + $0x40] sm:$0xf]
      %v254 = vld [vmem:[%s226 + $0x44] sm:$0xf]
      %v255 = vld [vmem:[%s226 + $0x48] sm:$0xf]
      %v256 = vld [vmem:[%s226 + $0x4c] sm:$0xf]
      %v257 = vld [vmem:[%s226 + $0x50] sm:$0xf]
      %v258 = vld [vmem:[%s226 + $0x54] sm:$0xf]
      %v259 = vld [vmem:[%s226 + $0x58] sm:$0xf]
      %v260 = vld [vmem:[%s226 + $0x5c] sm:$0xf]
      %v261 = vld [vmem:[%s226 + $0x60] sm:$0xf]
      %v262 = vld [vmem:[%s226 + $0x64] sm:$0xf]
      %v263 = vld [vmem:[%s226 + $0x68] sm:$0xf]
      %v264 = vld [vmem:[%s226 + $0x6c] sm:$0xf]
      %v265 = vld [vmem:[%s226 + $0x70] sm:$0xf]
      %v266 = vld [vmem:[%s226 + $0x74] sm:$0xf]
      %v267 = vld [vmem:[%s226 + $0x78] sm:$0xf]
      %v268 = vld [vmem:[%s226 + $0x7c] sm:$0xf]
      %v269 = vunpack.c.l.bf16 %v237
      %v270 = vunpack.c.l.bf16 %v238
      %v271 = vunpack.c.l.bf16 %v239
      %v272 = vunpack.c.l.bf16 %v240
      %v273 = vunpack.c.l.bf16 %v241
      %v274 = vunpack.c.l.bf16 %v242
      %v275 = vunpack.c.l.bf16 %v243
      %v276 = vunpack.c.l.bf16 %v244
      %v277 = vunpack.c.l.bf16 %v245
      %v278 = vunpack.c.l.bf16 %v246
      %v279 = vunpack.c.l.bf16 %v247
      %v280 = vunpack.c.l.bf16 %v248
      %v281 = vunpack.c.l.bf16 %v249
      %v282 = vunpack.c.l.bf16 %v250
      %v283 = vunpack.c.l.bf16 %v251
      %v284 = vunpack.c.l.bf16 %v252
      %v285 = vunpack.c.l.bf16 %v253
      %v286 = vunpack.c.l.bf16 %v254
      %v287 = vunpack.c.l.bf16 %v255
      %v288 = vunpack.c.l.bf16 %v256
      %v289 = vunpack.c.l.bf16 %v257
      %v290 = vunpack.c.l.bf16 %v258
      %v291 = vunpack.c.l.bf16 %v259
      %v292 = vunpack.c.l.bf16 %v260
      %v293 = vunpack.c.l.bf16 %v261
      %v294 = vunpack.c.l.bf16 %v262
      %v295 = vunpack.c.l.bf16 %v263
      %v296 = vunpack.c.l.bf16 %v264
      %v297 = vunpack.c.l.bf16 %v265
      %v298 = vunpack.c.l.bf16 %v266
      %v299 = vunpack.c.l.bf16 %v267
      %v300 = vunpack.c.l.bf16 %v268
      %v301 = vld [vmem:[%s1] sm:$0x1]
      %v303 = vperm.slane %v301, 0
      %v305 = vmul.f32 %v269, %v303
      %v306 = vmul.f32 %v270, %v303
      %v307 = vmul.f32 %v271, %v303
      %v308 = vmul.f32 %v272, %v303
      %v309 = vmul.f32 %v273, %v303
      %v310 = vmul.f32 %v274, %v303
      %v311 = vmul.f32 %v275, %v303
      %v312 = vmul.f32 %v276, %v303
      %v313 = vmul.f32 %v277, %v303
      %v314 = vmul.f32 %v278, %v303
      %v315 = vmul.f32 %v279, %v303
      %v316 = vmul.f32 %v280, %v303
      %v317 = vmul.f32 %v281, %v303
      %v318 = vmul.f32 %v282, %v303
      %v319 = vmul.f32 %v283, %v303
      %v320 = vmul.f32 %v284, %v303
      %v321 = vmul.f32 %v285, %v303
      %v322 = vmul.f32 %v286, %v303
      %v323 = vmul.f32 %v287, %v303
      %v324 = vmul.f32 %v288, %v303
      %v325 = vmul.f32 %v289, %v303
      %v326 = vmul.f32 %v290, %v303
      %v327 = vmul.f32 %v291, %v303
      %v328 = vmul.f32 %v292, %v303
      %v329 = vmul.f32 %v293, %v303
      %v330 = vmul.f32 %v294, %v303
      %v331 = vmul.f32 %v295, %v303
      %v332 = vmul.f32 %v296, %v303
      %v333 = vmul.f32 %v297, %v303
      %v334 = vmul.f32 %v298, %v303
      %v335 = vmul.f32 %v299, %v303
      %v336 = vmul.f32 %v300, %v303
      %v337 = vld [vmem:[%s2] sm:$0x1]
      %v339 = vperm.slane %v337, 0
      %v341 = vadd.f32 %v305, %v339
      %v342 = vadd.f32 %v306, %v339
      %v343 = vadd.f32 %v307, %v339
      %v344 = vadd.f32 %v308, %v339
      %v345 = vadd.f32 %v309, %v339
      %v346 = vadd.f32 %v310, %v339
      %v347 = vadd.f32 %v311, %v339
      %v348 = vadd.f32 %v312, %v339
      %v349 = vadd.f32 %v313, %v339
      %v350 = vadd.f32 %v314, %v339
      %v351 = vadd.f32 %v315, %v339
      %v352 = vadd.f32 %v316, %v339
      %v353 = vadd.f32 %v317, %v339
      %v354 = vadd.f32 %v318, %v339
      %v355 = vadd.f32 %v319, %v339
      %v356 = vadd.f32 %v320, %v339
      %v357 = vadd.f32 %v321, %v339
      %v358 = vadd.f32 %v322, %v339
      %v359 = vadd.f32 %v323, %v339
      %v360 = vadd.f32 %v324, %v339
      %v361 = vadd.f32 %v325, %v339
      %v362 = vadd.f32 %v326, %v339
      %v363 = vadd.f32 %v327, %v339
      %v364 = vadd.f32 %v328, %v339
      %v365 = vadd.f32 %v329, %v339
      %v366 = vadd.f32 %v330, %v339
      %v367 = vadd.f32 %v331, %v339
      %v368 = vadd.f32 %v332, %v339
      %v369 = vadd.f32 %v333, %v339
      %v370 = vadd.f32 %v334, %v339
      %v371 = vadd.f32 %v335, %v339
      %v372 = vadd.f32 %v336, %v339
      %v373 = vmax.f32 %v341, 0.0
      %v374 = vmax.f32 %v342, 0.0
      %v375 = vmax.f32 %v343, 0.0
      %v376 = vmax.f32 %v344, 0.0
      %v377 = vmax.f32 %v345, 0.0
      %v378 = vmax.f32 %v346, 0.0
      %v379 = vmax.f32 %v347, 0.0
      %v380 = vmax.f32 %v348, 0.0
      %v381 = vmax.f32 %v349, 0.0
      %v382 = vmax.f32 %v350, 0.0
      %v383 = vmax.f32 %v351, 0.0
      %v384 = vmax.f32 %v352, 0.0
      %v385 = vmax.f32 %v353, 0.0
      %v386 = vmax.f32 %v354, 0.0
      %v387 = vmax.f32 %v355, 0.0
      %v388 = vmax.f32 %v356, 0.0
      %v389 = vmax.f32 %v357, 0.0
      %v390 = vmax.f32 %v358, 0.0
      %v391 = vmax.f32 %v359, 0.0
      %v392 = vmax.f32 %v360, 0.0
      %v393 = vmax.f32 %v361, 0.0
      %v394 = vmax.f32 %v362, 0.0
      %v395 = vmax.f32 %v363, 0.0
      %v396 = vmax.f32 %v364, 0.0
      %v397 = vmax.f32 %v365, 0.0
      %v398 = vmax.f32 %v366, 0.0
      %v399 = vmax.f32 %v367, 0.0
      %v400 = vmax.f32 %v368, 0.0
      %v401 = vmax.f32 %v369, 0.0
      %v402 = vmax.f32 %v370, 0.0
      %v403 = vmax.f32 %v371, 0.0
      %v404 = vmax.f32 %v372, 0.0
      %v405 = vpack.c.bf16 %v373, %v373
      %v406 = vpack.c.bf16 %v374, %v374
      %v407 = vpack.c.bf16 %v375, %v375
      %v408 = vpack.c.bf16 %v376, %v376
      %v409 = vpack.c.bf16 %v377, %v377
      %v410 = vpack.c.bf16 %v378, %v378
      %v411 = vpack.c.bf16 %v379, %v379
      %v412 = vpack.c.bf16 %v380, %v380
      %v413 = vpack.c.bf16 %v381, %v381
      %v414 = vpack.c.bf16 %v382, %v382
      %v415 = vpack.c.bf16 %v383, %v383
      %v416 = vpack.c.bf16 %v384, %v384
      %v417 = vpack.c.bf16 %v385, %v385
      %v418 = vpack.c.bf16 %v386, %v386
      %v419 = vpack.c.bf16 %v387, %v387
      %v420 = vpack.c.bf16 %v388, %v388
      %v421 = vpack.c.bf16 %v389, %v389
      %v422 = vpack.c.bf16 %v390, %v390
      %v423 = vpack.c.bf16 %v391, %v391
      %v424 = vpack.c.bf16 %v392, %v392
      %v425 = vpack.c.bf16 %v393, %v393
      %v426 = vpack.c.bf16 %v394, %v394
      %v427 = vpack.c.bf16 %v395, %v395
      %v428 = vpack.c.bf16 %v396, %v396
      %v429 = vpack.c.bf16 %v397, %v397
      %v430 = vpack.c.bf16 %v398, %v398
      %v431 = vpack.c.bf16 %v399, %v399
      %v432 = vpack.c.bf16 %v400, %v400
      %v433 = vpack.c.bf16 %v401, %v401
      %v434 = vpack.c.bf16 %v402, %v402
      %v435 = vpack.c.bf16 %v403, %v403
      %v436 = vpack.c.bf16 %v404, %v404
      %vm437 = vcmask 27648
      %438 = vst.msk [vmem:[#allocation2] sm:$0xf] %vm437, 0
      %439 = vst.msk [vmem:[#allocation2 + $0x4] sm:$0xf] %vm437, 0
      %vm440 = vcmask 24576
      %441 = vst.msk [vmem:[#allocation2 + $0x8] sm:$0x1] %vm440, 0
      %442 = vst.msk [vmem:[#allocation2 + $0xc] sm:$0xf] %vm437, 0
      %443 = vst.msk [vmem:[#allocation2 + $0x10] sm:$0xf] %vm437, 0
      %444 = vst.msk [vmem:[#allocation2 + $0x14] sm:$0x1] %vm440, 0
      %445 = vst.msk [vmem:[#allocation2 + $0x18] sm:$0xf] %vm437, 0
      %446 = vst.msk [vmem:[#allocation2 + $0x1c] sm:$0xf] %vm437, 0
      %447 = vst.msk [vmem:[#allocation2 + $0x20] sm:$0x1] %vm440, 0
      %448 = vst.msk [vmem:[#allocation2 + $0x24] sm:$0xf] %vm437, 0
      %449 = vst.msk [vmem:[#allocation2 + $0x28] sm:$0xf] %vm437, 0
      %450 = vst.msk [vmem:[#allocation2 + $0x2c] sm:$0x1] %vm440, 0
      %451 = vst.msk [vmem:[#allocation2 + $0x30] sm:$0xf] %vm437, 0
      %452 = vst.msk [vmem:[#allocation2 + $0x34] sm:$0xf] %vm437, 0
      %453 = vst.msk [vmem:[#allocation2 + $0x38] sm:$0x1] %vm440, 0
      %454 = vst.msk [vmem:[#allocation2 + $0x3c] sm:$0xf] %vm437, 0
      %455 = vst.msk [vmem:[#allocation2 + $0x40] sm:$0xf] %vm437, 0
      %456 = vst.msk [vmem:[#allocation2 + $0x44] sm:$0x1] %vm440, 0
      %457 = vst.msk [vmem:[#allocation2 + $0x48] sm:$0xf] %vm437, 0
      %458 = vst.msk [vmem:[#allocation2 + $0x4c] sm:$0xf] %vm437, 0
      %459 = vst.msk [vmem:[#allocation2 + $0x50] sm:$0x1] %vm440, 0
      %460 = vst.msk [vmem:[#allocation2 + $0x54] sm:$0xf] %vm437, 0
      %461 = vst.msk [vmem:[#allocation2 + $0x58] sm:$0xf] %vm437, 0
      %462 = vst.msk [vmem:[#allocation2 + $0x5c] sm:$0x1] %vm440, 0
      %463 = vst.msk [vmem:[#allocation2 + $0x60] sm:$0xf] %vm437, 0
      %464 = vst.msk [vmem:[#allocation2 + $0x64] sm:$0xf] %vm437, 0
      %465 = vst.msk [vmem:[#allocation2 + $0x68] sm:$0x1] %vm440, 0
      %466 = vst.msk [vmem:[#allocation2 + $0x6c] sm:$0xf] %vm437, 0
      %467 = vst.msk [vmem:[#allocation2 + $0x70] sm:$0xf] %vm437, 0
      %468 = vst.msk [vmem:[#allocation2 + $0x74] sm:$0x1] %vm440, 0
      %469 = vst.msk [vmem:[#allocation2 + $0x78] sm:$0xf] %vm437, 0
      %470 = vst.msk [vmem:[#allocation2 + $0x7c] sm:$0xf] %vm437, 0
      %471 = vst.msk [vmem:[#allocation2 + $0x80] sm:$0x1] %vm440, 0
      %472 = vst.msk [vmem:[#allocation2 + $0x84] sm:$0xf] %vm437, 0
      %473 = vst.msk [vmem:[#allocation2 + $0x88] sm:$0xf] %vm437, 0
      %474 = vst.msk [vmem:[#allocation2 + $0x8c] sm:$0x1] %vm440, 0
      %475 = vst.msk [vmem:[#allocation2 + $0x90] sm:$0xf] %vm437, 0
      %476 = vst.msk [vmem:[#allocation2 + $0x94] sm:$0xf] %vm437, 0
      %477 = vst.msk [vmem:[#allocation2 + $0x98] sm:$0x1] %vm440, 0
      %478 = vst.msk [vmem:[#allocation2 + $0x9c] sm:$0xf] %vm437, 0
      %479 = vst.msk [vmem:[#allocation2 + $0xa0] sm:$0xf] %vm437, 0
      %480 = vst.msk [vmem:[#allocation2 + $0xa4] sm:$0x1] %vm440, 0
      %481 = vst.msk [vmem:[#allocation2 + $0xa8] sm:$0xf] %vm437, 0
      %482 = vst.msk [vmem:[#allocation2 + $0xac] sm:$0xf] %vm437, 0
      %483 = vst.msk [vmem:[#allocation2 + $0xb0] sm:$0x1] %vm440, 0
      %484 = vst.msk [vmem:[#allocation2 + $0xb4] sm:$0xf] %vm437, 0
      %485 = vst.msk [vmem:[#allocation2 + $0xb8] sm:$0xf] %vm437, 0
      %486 = vst.msk [vmem:[#allocation2 + $0xbc] sm:$0x1] %vm440, 0
      %487 = vst.msk [vmem:[#allocation2 + $0xc0] sm:$0xf] %vm437, 0
      %488 = vst.msk [vmem:[#allocation2 + $0xc4] sm:$0xf] %vm437, 0
      %489 = vst.msk [vmem:[#allocation2 + $0xc8] sm:$0x1] %vm440, 0
      %490 = vst.msk [vmem:[#allocation2 + $0xcc] sm:$0xf] %vm437, 0
      %491 = vst.msk [vmem:[#allocation2 + $0xd0] sm:$0xf] %vm437, 0
      %492 = vst.msk [vmem:[#allocation2 + $0xd4] sm:$0x1] %vm440, 0
      %vm493 = vsmask.f32 256
      %vm494 = vsmask.f32 4368
      %vm495 = vmor %vm493, %vm494
      %v497 = vshrl.u32 %v405, 16
      %v499 = vrot.slane %v497, 7
      %v500 = vshll.u32 %v405, 16
      %v502 = vor.u32 %v499, %v500
      %v503 = vrot.slane %v499, 4
      %v505 = vshrl.u32 %v406, 16
      %v507 = vrot.slane %v505, 7
      %v508 = vshll.u32 %v406, 16
      %v510 = vor.u32 %v507, %v508
      %v511 = vsel %vm495, %v503, %v510
      %v512 = vrot.slane %v507, 4
      %v514 = vshrl.u32 %v407, 16
      %v516 = vrot.slane %v514, 7
      %v517 = vshll.u32 %v407, 16
      %v519 = vor.u32 %v516, %v517
      %v520 = vrot.slane %v516, 4
      %v522 = vshrl.u32 %v408, 16
      %v524 = vrot.slane %v522, 7
      %v525 = vshll.u32 %v408, 16
      %v527 = vor.u32 %v524, %v525
      %v528 = vsel %vm495, %v520, %v527
      %v529 = vrot.slane %v524, 4
      %v531 = vshrl.u32 %v409, 16
      %v533 = vrot.slane %v531, 7
      %v534 = vshll.u32 %v409, 16
      %v536 = vor.u32 %v533, %v534
      %v537 = vrot.slane %v533, 4
      %v539 = vshrl.u32 %v410, 16
      %v541 = vrot.slane %v539, 7
      %v542 = vshll.u32 %v410, 16
      %v544 = vor.u32 %v541, %v542
      %v545 = vsel %vm495, %v537, %v544
      %v546 = vrot.slane %v541, 4
      %v548 = vshrl.u32 %v411, 16
      %v550 = vrot.slane %v548, 7
      %v551 = vshll.u32 %v411, 16
      %v553 = vor.u32 %v550, %v551
      %v554 = vrot.slane %v550, 4
      %v556 = vshrl.u32 %v412, 16
      %v558 = vrot.slane %v556, 7
      %v559 = vshll.u32 %v412, 16
      %v561 = vor.u32 %v558, %v559
      %v562 = vsel %vm495, %v554, %v561
      %v563 = vrot.slane %v558, 4
      %v565 = vshrl.u32 %v413, 16
      %v567 = vrot.slane %v565, 7
      %v568 = vshll.u32 %v413, 16
      %v570 = vor.u32 %v567, %v568
      %v571 = vrot.slane %v567, 4
      %v573 = vshrl.u32 %v414, 16
      %v575 = vrot.slane %v573, 7
      %v576 = vshll.u32 %v414, 16
      %v578 = vor.u32 %v575, %v576
      %v579 = vsel %vm495, %v571, %v578
      %v580 = vrot.slane %v575, 4
      %v582 = vshrl.u32 %v415, 16
      %v584 = vrot.slane %v582, 7
      %v585 = vshll.u32 %v415, 16
      %v587 = vor.u32 %v584, %v585
      %v588 = vrot.slane %v584, 4
      %v590 = vshrl.u32 %v416, 16
      %v592 = vrot.slane %v590, 7
      %v593 = vshll.u32 %v416, 16
      %v595 = vor.u32 %v592, %v593
      %v596 = vsel %vm495, %v588, %v595
      %v597 = vrot.slane %v592, 4
      %v599 = vshrl.u32 %v417, 16
      %v601 = vrot.slane %v599, 7
      %v602 = vshll.u32 %v417, 16
      %v604 = vor.u32 %v601, %v602
      %v605 = vrot.slane %v601, 4
      %v607 = vshrl.u32 %v418, 16
      %v609 = vrot.slane %v607, 7
      %v610 = vshll.u32 %v418, 16
      %v612 = vor.u32 %v609, %v610
      %v613 = vsel %vm495, %v605, %v612
      %v614 = vrot.slane %v609, 4
      %v616 = vshrl.u32 %v419, 16
      %v618 = vrot.slane %v616, 7
      %v619 = vshll.u32 %v419, 16
      %v621 = vor.u32 %v618, %v619
      %v622 = vrot.slane %v618, 4
      %v624 = vshrl.u32 %v420, 16
      %v626 = vrot.slane %v624, 7
      %v627 = vshll.u32 %v420, 16
      %v629 = vor.u32 %v626, %v627
      %v630 = vsel %vm495, %v622, %v629
      %v631 = vrot.slane %v626, 4
      %v633 = vshrl.u32 %v421, 16
      %v635 = vrot.slane %v633, 7
      %v636 = vshll.u32 %v421, 16
      %v638 = vor.u32 %v635, %v636
      %v639 = vrot.slane %v635, 4
      %v641 = vshrl.u32 %v422, 16
      %v643 = vrot.slane %v641, 7
      %v644 = vshll.u32 %v422, 16
      %v646 = vor.u32 %v643, %v644
      %v647 = vsel %vm495, %v639, %v646
      %v648 = vrot.slane %v643, 4
      %v650 = vshrl.u32 %v423, 16
      %v652 = vrot.slane %v650, 7
      %v653 = vshll.u32 %v423, 16
      %v655 = vor.u32 %v652, %v653
      %v656 = vrot.slane %v652, 4
      %v658 = vshrl.u32 %v424, 16
      %v660 = vrot.slane %v658, 7
      %v661 = vshll.u32 %v424, 16
      %v663 = vor.u32 %v660, %v661
      %v664 = vsel %vm495, %v656, %v663
      %v665 = vrot.slane %v660, 4
      %v667 = vshrl.u32 %v425, 16
      %v669 = vrot.slane %v667, 7
      %v670 = vshll.u32 %v425, 16
      %v672 = vor.u32 %v669, %v670
      %v673 = vrot.slane %v669, 4
      %v675 = vshrl.u32 %v426, 16
      %v677 = vrot.slane %v675, 7
      %v678 = vshll.u32 %v426, 16
      %v680 = vor.u32 %v677, %v678
      %v681 = vsel %vm495, %v673, %v680
      %v682 = vrot.slane %v677, 4
      %v684 = vshrl.u32 %v427, 16
      %v686 = vrot.slane %v684, 7
      %v687 = vshll.u32 %v427, 16
      %v689 = vor.u32 %v686, %v687
      %v690 = vrot.slane %v686, 4
      %v692 = vshrl.u32 %v428, 16
      %v694 = vrot.slane %v692, 7
      %v695 = vshll.u32 %v428, 16
      %v697 = vor.u32 %v694, %v695
      %v698 = vsel %vm495, %v690, %v697
      %v699 = vrot.slane %v694, 4
      %v701 = vshrl.u32 %v429, 16
      %v703 = vrot.slane %v701, 7
      %v704 = vshll.u32 %v429, 16
      %v706 = vor.u32 %v703, %v704
      %v707 = vrot.slane %v703, 4
      %v709 = vshrl.u32 %v430, 16
      %v711 = vrot.slane %v709, 7
      %v712 = vshll.u32 %v430, 16
      %v714 = vor.u32 %v711, %v712
      %v715 = vsel %vm495, %v707, %v714
      %v716 = vrot.slane %v711, 4
      %v718 = vshrl.u32 %v431, 16
      %v720 = vrot.slane %v718, 7
      %v721 = vshll.u32 %v431, 16
      %v723 = vor.u32 %v720, %v721
      %v724 = vrot.slane %v720, 4
      %v726 = vshrl.u32 %v432, 16
      %v728 = vrot.slane %v726, 7
      %v729 = vshll.u32 %v432, 16
      %v731 = vor.u32 %v728, %v729
      %v732 = vsel %vm495, %v724, %v731
      %v733 = vrot.slane %v728, 4
      %v735 = vshrl.u32 %v433, 16
      %v737 = vrot.slane %v735, 7
      %v738 = vshll.u32 %v433, 16
      %v740 = vor.u32 %v737, %v738
      %v741 = vrot.slane %v737, 4
      %v743 = vshrl.u32 %v434, 16
      %v745 = vrot.slane %v743, 7
      %v746 = vshll.u32 %v434, 16
      %v748 = vor.u32 %v745, %v746
      %v749 = vsel %vm495, %v741, %v748
      %v750 = vrot.slane %v745, 4
      %v752 = vshrl.u32 %v435, 16
      %v754 = vrot.slane %v752, 7
      %v755 = vshll.u32 %v435, 16
      %v757 = vor.u32 %v754, %v755
      %v758 = vrot.slane %v754, 4
      %v760 = vshrl.u32 %v436, 16
      %v762 = vrot.slane %v760, 7
      %v763 = vshll.u32 %v436, 16
      %v765 = vor.u32 %v762, %v763
      %v766 = vsel %vm495, %v758, %v765
      %v767 = vrot.slane %v762, 4
      %s816 = scalar_lea.vmem [#allocation2], 12
      %vm817 = vcmask 27648
      %vm818 = vsmask.f32 7938
      %vm819 = vmand %vm817, %vm818
      %v820 = vld [vmem:[%s816] sm:$0xf]
      %v821 = vsel %vm819, %v502, %v820
      %822 = vst [vmem:[%s816] sm:$0xf] %v821
      %823 = vst.msk [vmem:[%s816 + $0x4] sm:$0xf] %vm437, %v511
      %vm824 = vcmask 24576
      %vm825 = vmand %vm824, %vm493
      %v826 = vld [vmem:[%s816 + $0x8] sm:$0x1]
      %v827 = vsel %vm825, %v512, %v826
      %828 = vst [vmem:[%s816 + $0x8] sm:$0x1] %v827
      %v829 = vld [vmem:[%s816 + $0xc] sm:$0xf]
      %v830 = vsel %vm819, %v519, %v829
      %831 = vst [vmem:[%s816 + $0xc] sm:$0xf] %v830
      %832 = vst.msk [vmem:[%s816 + $0x10] sm:$0xf] %vm437, %v528
      %v833 = vld [vmem:[%s816 + $0x14] sm:$0x1]
      %v834 = vsel %vm825, %v529, %v833
      %835 = vst [vmem:[%s816 + $0x14] sm:$0x1] %v834
      %v836 = vld [vmem:[%s816 + $0x18] sm:$0xf]
      %v837 = vsel %vm819, %v536, %v836
      %838 = vst [vmem:[%s816 + $0x18] sm:$0xf] %v837
      %839 = vst.msk [vmem:[%s816 + $0x1c] sm:$0xf] %vm437, %v545
      %v840 = vld [vmem:[%s816 + $0x20] sm:$0x1]
      %v841 = vsel %vm825, %v546, %v840
      %842 = vst [vmem:[%s816 + $0x20] sm:$0x1] %v841
      %v843 = vld [vmem:[%s816 + $0x24] sm:$0xf]
      %v844 = vsel %vm819, %v553, %v843
      %845 = vst [vmem:[%s816 + $0x24] sm:$0xf] %v844
      %846 = vst.msk [vmem:[%s816 + $0x28] sm:$0xf] %vm437, %v562
      %v847 = vld [vmem:[%s816 + $0x2c] sm:$0x1]
      %v848 = vsel %vm825, %v563, %v847
      %849 = vst [vmem:[%s816 + $0x2c] sm:$0x1] %v848
      %v850 = vld [vmem:[%s816 + $0x30] sm:$0xf]
      %v851 = vsel %vm819, %v570, %v850
      %852 = vst [vmem:[%s816 + $0x30] sm:$0xf] %v851
      %853 = vst.msk [vmem:[%s816 + $0x34] sm:$0xf] %vm437, %v579
      %v854 = vld [vmem:[%s816 + $0x38] sm:$0x1]
      %v855 = vsel %vm825, %v580, %v854
      %856 = vst [vmem:[%s816 + $0x38] sm:$0x1] %v855
      %v857 = vld [vmem:[%s816 + $0x3c] sm:$0xf]
      %v858 = vsel %vm819, %v587, %v857
      %859 = vst [vmem:[%s816 + $0x3c] sm:$0xf] %v858
      %860 = vst.msk [vmem:[%s816 + $0x40] sm:$0xf] %vm437, %v596
      %v861 = vld [vmem:[%s816 + $0x44] sm:$0x1]
      %v862 = vsel %vm825, %v597, %v861
      %863 = vst [vmem:[%s816 + $0x44] sm:$0x1] %v862
      %v864 = vld [vmem:[%s816 + $0x48] sm:$0xf]
      %v865 = vsel %vm819, %v604, %v864
      %866 = vst [vmem:[%s816 + $0x48] sm:$0xf] %v865
      %867 = vst.msk [vmem:[%s816 + $0x4c] sm:$0xf] %vm437, %v613
      %v868 = vld [vmem:[%s816 + $0x50] sm:$0x1]
      %v869 = vsel %vm825, %v614, %v868
      %870 = vst [vmem:[%s816 + $0x50] sm:$0x1] %v869
      %v871 = vld [vmem:[%s816 + $0x54] sm:$0xf]
      %v872 = vsel %vm819, %v621, %v871
      %873 = vst [vmem:[%s816 + $0x54] sm:$0xf] %v872
      %874 = vst.msk [vmem:[%s816 + $0x58] sm:$0xf] %vm437, %v630
      %v875 = vld [vmem:[%s816 + $0x5c] sm:$0x1]
      %v876 = vsel %vm825, %v631, %v875
      %877 = vst [vmem:[%s816 + $0x5c] sm:$0x1] %v876
      %v878 = vld [vmem:[%s816 + $0x60] sm:$0xf]
      %v879 = vsel %vm819, %v638, %v878
      %880 = vst [vmem:[%s816 + $0x60] sm:$0xf] %v879
      %881 = vst.msk [vmem:[%s816 + $0x64] sm:$0xf] %vm437, %v647
      %v882 = vld [vmem:[%s816 + $0x68] sm:$0x1]
      %v883 = vsel %vm825, %v648, %v882
      %884 = vst [vmem:[%s816 + $0x68] sm:$0x1] %v883
      %v885 = vld [vmem:[%s816 + $0x6c] sm:$0xf]
      %v886 = vsel %vm819, %v655, %v885
      %887 = vst [vmem:[%s816 + $0x6c] sm:$0xf] %v886
      %888 = vst.msk [vmem:[%s816 + $0x70] sm:$0xf] %vm437, %v664
      %v889 = vld [vmem:[%s816 + $0x74] sm:$0x1]
      %v890 = vsel %vm825, %v665, %v889
      %891 = vst [vmem:[%s816 + $0x74] sm:$0x1] %v890
      %v892 = vld [vmem:[%s816 + $0x78] sm:$0xf]
      %v893 = vsel %vm819, %v672, %v892
      %894 = vst [vmem:[%s816 + $0x78] sm:$0xf] %v893
      %895 = vst.msk [vmem:[%s816 + $0x7c] sm:$0xf] %vm437, %v681
      %v896 = vld [vmem:[%s816 + $0x80] sm:$0x1]
      %v897 = vsel %vm825, %v682, %v896
      %898 = vst [vmem:[%s816 + $0x80] sm:$0x1] %v897
      %v899 = vld [vmem:[%s816 + $0x84] sm:$0xf]
      %v900 = vsel %vm819, %v689, %v899
      %901 = vst [vmem:[%s816 + $0x84] sm:$0xf] %v900
      %902 = vst.msk [vmem:[%s816 + $0x88] sm:$0xf] %vm437, %v698
      %v903 = vld [vmem:[%s816 + $0x8c] sm:$0x1]
      %v904 = vsel %vm825, %v699, %v903
      %905 = vst [vmem:[%s816 + $0x8c] sm:$0x1] %v904
      %v906 = vld [vmem:[%s816 + $0x90] sm:$0xf]
      %v907 = vsel %vm819, %v706, %v906
      %908 = vst [vmem:[%s816 + $0x90] sm:$0xf] %v907
      %909 = vst.msk [vmem:[%s816 + $0x94] sm:$0xf] %vm437, %v715
      %v910 = vld [vmem:[%s816 + $0x98] sm:$0x1]
      %v911 = vsel %vm825, %v716, %v910
      %912 = vst [vmem:[%s816 + $0x98] sm:$0x1] %v911
      %v913 = vld [vmem:[%s816 + $0x9c] sm:$0xf]
      %v914 = vsel %vm819, %v723, %v913
      %915 = vst [vmem:[%s816 + $0x9c] sm:$0xf] %v914
      %916 = vst.msk [vmem:[%s816 + $0xa0] sm:$0xf] %vm437, %v732
      %v917 = vld [vmem:[%s816 + $0xa4] sm:$0x1]
      %v918 = vsel %vm825, %v733, %v917
      %919 = vst [vmem:[%s816 + $0xa4] sm:$0x1] %v918
      %v920 = vld [vmem:[%s816 + $0xa8] sm:$0xf]
      %v921 = vsel %vm819, %v740, %v920
      %922 = vst [vmem:[%s816 + $0xa8] sm:$0xf] %v921
      %923 = vst.msk [vmem:[%s816 + $0xac] sm:$0xf] %vm437, %v749
      %v924 = vld [vmem:[%s816 + $0xb0] sm:$0x1]
      %v925 = vsel %vm825, %v750, %v924
      %926 = vst [vmem:[%s816 + $0xb0] sm:$0x1] %v925
      %v927 = vld [vmem:[%s816 + $0xb4] sm:$0xf]
      %v928 = vsel %vm819, %v757, %v927
      %929 = vst [vmem:[%s816 + $0xb4] sm:$0xf] %v928
      %930 = vst.msk [vmem:[%s816 + $0xb8] sm:$0xf] %vm437, %v766
      %v931 = vld [vmem:[%s816 + $0xbc] sm:$0x1]
      %v932 = vsel %vm825, %v767, %v931
      %933 = vst [vmem:[%s816 + $0xbc] sm:$0x1] %v932
      %v934 = vld [vmem:[#allocation2] sm:$0xf]
      %v935 = vld [vmem:[#allocation2 + $0x4] sm:$0xf]
      %v936 = vld [vmem:[#allocation2 + $0xc] sm:$0xf]
      %v937 = vld [vmem:[#allocation2 + $0x10] sm:$0xf]
      %v938 = vld [vmem:[#allocation2 + $0x18] sm:$0xf]
      %v939 = vld [vmem:[#allocation2 + $0x1c] sm:$0xf]
      %v940 = vld [vmem:[#allocation2 + $0x24] sm:$0xf]
      %v941 = vld [vmem:[#allocation2 + $0x28] sm:$0xf]
      %v942 = vld [vmem:[#allocation2 + $0x30] sm:$0xf]
      %v943 = vld [vmem:[#allocation2 + $0x34] sm:$0xf]
      %v944 = vld [vmem:[#allocation2 + $0x3c] sm:$0xf]
      %v945 = vld [vmem:[#allocation2 + $0x40] sm:$0xf]
      %v946 = vld [vmem:[#allocation2 + $0x48] sm:$0xf]
      %v947 = vld [vmem:[#allocation2 + $0x4c] sm:$0xf]
      %v948 = vld [vmem:[#allocation2 + $0x54] sm:$0xf]
      %v949 = vld [vmem:[#allocation2 + $0x58] sm:$0xf]
      %v950 = vld [vmem:[#allocation2 + $0x60] sm:$0xf]
      %v951 = vld [vmem:[#allocation2 + $0x64] sm:$0xf]
      %v952 = vld [vmem:[#allocation2 + $0x6c] sm:$0xf]
      %v953 = vld [vmem:[#allocation2 + $0x70] sm:$0xf]
      %v954 = vld [vmem:[#allocation2 + $0x78] sm:$0xf]
      %v955 = vld [vmem:[#allocation2 + $0x7c] sm:$0xf]
      %v956 = vld [vmem:[#allocation2 + $0x84] sm:$0xf]
      %v957 = vld [vmem:[#allocation2 + $0x88] sm:$0xf]
      %v958 = vld [vmem:[#allocation2 + $0x90] sm:$0xf]
      %v959 = vld [vmem:[#allocation2 + $0x94] sm:$0xf]
      %v960 = vld [vmem:[#allocation2 + $0x9c] sm:$0xf]
      %v961 = vld [vmem:[#allocation2 + $0xa0] sm:$0xf]
      %v962 = vld [vmem:[#allocation2 + $0xa8] sm:$0xf]
      %v963 = vld [vmem:[#allocation2 + $0xac] sm:$0xf]
      %v964 = vld [vmem:[#allocation2 + $0xb4] sm:$0xf]
      %v965 = vld [vmem:[#allocation2 + $0xb8] sm:$0xf]
      %966 = vst.msk [vmem:[#allocation3] sm:$0xf] %vm437, %v934
      %967 = vst.msk [vmem:[#allocation3 + $0x4] sm:$0xf] %vm437, %v935
      %968 = vst.msk [vmem:[#allocation3 + $0x8] sm:$0xf] %vm437, %v936
      %969 = vst.msk [vmem:[#allocation3 + $0xc] sm:$0xf] %vm437, %v937
      %970 = vst.msk [vmem:[#allocation3 + $0x10] sm:$0xf] %vm437, %v938
      %971 = vst.msk [vmem:[#allocation3 + $0x14] sm:$0xf] %vm437, %v939
      %972 = vst.msk [vmem:[#allocation3 + $0x18] sm:$0xf] %vm437, %v940
      %973 = vst.msk [vmem:[#allocation3 + $0x1c] sm:$0xf] %vm437, %v941
      %974 = vst.msk [vmem:[#allocation3 + $0x20] sm:$0xf] %vm437, %v942
      %975 = vst.msk [vmem:[#allocation3 + $0x24] sm:$0xf] %vm437, %v943
      %976 = vst.msk [vmem:[#allocation3 + $0x28] sm:$0xf] %vm437, %v944
      %977 = vst.msk [vmem:[#allocation3 + $0x2c] sm:$0xf] %vm437, %v945
      %978 = vst.msk [vmem:[#allocation3 + $0x30] sm:$0xf] %vm437, %v946
      %979 = vst.msk [vmem:[#allocation3 + $0x34] sm:$0xf] %vm437, %v947
      %980 = vst.msk [vmem:[#allocation3 + $0x38] sm:$0xf] %vm437, %v948
      %981 = vst.msk [vmem:[#allocation3 + $0x3c] sm:$0xf] %vm437, %v949
      %982 = vst.msk [vmem:[#allocation3 + $0x40] sm:$0xf] %vm437, %v950
      %983 = vst.msk [vmem:[#allocation3 + $0x44] sm:$0xf] %vm437, %v951
      %984 = vst.msk [vmem:[#allocation3 + $0x48] sm:$0xf] %vm437, %v952
      %985 = vst.msk [vmem:[#allocation3 + $0x4c] sm:$0xf] %vm437, %v953
      %986 = vst.msk [vmem:[#allocation3 + $0x50] sm:$0xf] %vm437, %v954
      %987 = vst.msk [vmem:[#allocation3 + $0x54] sm:$0xf] %vm437, %v955
      %988 = vst.msk [vmem:[#allocation3 + $0x58] sm:$0xf] %vm437, %v956
      %989 = vst.msk [vmem:[#allocation3 + $0x5c] sm:$0xf] %vm437, %v957
      %990 = vst.msk [vmem:[#allocation3 + $0x60] sm:$0xf] %vm437, %v958
      %991 = vst.msk [vmem:[#allocation3 + $0x64] sm:$0xf] %vm437, %v959
      %992 = vst.msk [vmem:[#allocation3 + $0x68] sm:$0xf] %vm437, %v960
      %993 = vst.msk [vmem:[#allocation3 + $0x6c] sm:$0xf] %vm437, %v961
      %994 = vst.msk [vmem:[#allocation3 + $0x70] sm:$0xf] %vm437, %v962
      %995 = vst.msk [vmem:[#allocation3 + $0x74] sm:$0xf] %vm437, %v963
      %996 = vst.msk [vmem:[#allocation3 + $0x78] sm:$0xf] %vm437, %v964
      %997 = vst.msk [vmem:[#allocation3 + $0x7c] sm:$0xf] %vm437, %v965
      %v998 = vld [vmem:[#allocation2] sm:$0xf]
      %v999 = vld [vmem:[#allocation2 + $0x4] sm:$0xf]
      %v1000 = vld [vmem:[#allocation2 + $0x8] sm:$0x1]
      %v1001 = vld [vmem:[#allocation2 + $0xc] sm:$0xf]
      %v1002 = vld [vmem:[#allocation2 + $0x10] sm:$0xf]
      %v1003 = vld [vmem:[#allocation2 + $0x14] sm:$0x1]
      %v1004 = vld [vmem:[#allocation2 + $0x18] sm:$0xf]
      %v1005 = vld [vmem:[#allocation2 + $0x1c] sm:$0xf]
      %v1006 = vld [vmem:[#allocation2 + $0x20] sm:$0x1]
      %v1007 = vld [vmem:[#allocation2 + $0x24] sm:$0xf]
      %v1008 = vld [vmem:[#allocation2 + $0x28] sm:$0xf]
      %v1009 = vld [vmem:[#allocation2 + $0x2c] sm:$0x1]
      %v1010 = vld [vmem:[#allocation2 + $0x30] sm:$0xf]
      %v1011 = vld [vmem:[#allocation2 + $0x34] sm:$0xf]
      %v1012 = vld [vmem:[#allocation2 + $0x38] sm:$0x1]
      %v1013 = vld [vmem:[#allocation2 + $0x3c] sm:$0xf]
      %v1014 = vld [vmem:[#allocation2 + $0x40] sm:$0xf]
      %v1015 = vld [vmem:[#allocation2 + $0x44] sm:$0x1]
      %v1016 = vld [vmem:[#allocation2 + $0x48] sm:$0xf]
      %v1017 = vld [vmem:[#allocation2 + $0x4c] sm:$0xf]
      %v1018 = vld [vmem:[#allocation2 + $0x50] sm:$0x1]
      %v1019 = vld [vmem:[#allocation2 + $0x54] sm:$0xf]
      %v1020 = vld [vmem:[#allocation2 + $0x58] sm:$0xf]
      %v1021 = vld [vmem:[#allocation2 + $0x5c] sm:$0x1]
      %v1022 = vld [vmem:[#allocation2 + $0x60] sm:$0xf]
      %v1023 = vld [vmem:[#allocation2 + $0x64] sm:$0xf]
      %v1024 = vld [vmem:[#allocation2 + $0x68] sm:$0x1]
      %v1025 = vld [vmem:[#allocation2 + $0x6c] sm:$0xf]
      %v1026 = vld [vmem:[#allocation2 + $0x70] sm:$0xf]
      %v1027 = vld [vmem:[#allocation2 + $0x74] sm:$0x1]
      %v1028 = vld [vmem:[#allocation2 + $0x78] sm:$0xf]
      %v1029 = vld [vmem:[#allocation2 + $0x7c] sm:$0xf]
      %v1030 = vld [vmem:[#allocation2 + $0x80] sm:$0x1]
      %v1031 = vld [vmem:[#allocation2 + $0x84] sm:$0xf]
      %v1032 = vld [vmem:[#allocation2 + $0x88] sm:$0xf]
      %v1033 = vld [vmem:[#allocation2 + $0x8c] sm:$0x1]
      %v1034 = vld [vmem:[#allocation2 + $0x90] sm:$0xf]
      %v1035 = vld [vmem:[#allocation2 + $0x94] sm:$0xf]
      %v1036 = vld [vmem:[#allocation2 + $0x98] sm:$0x1]
      %v1037 = vld [vmem:[#allocation2 + $0x9c] sm:$0xf]
      %v1038 = vld [vmem:[#allocation2 + $0xa0] sm:$0xf]
      %v1039 = vld [vmem:[#allocation2 + $0xa4] sm:$0x1]
      %v1040 = vld [vmem:[#allocation2 + $0xa8] sm:$0xf]
      %v1041 = vld [vmem:[#allocation2 + $0xac] sm:$0xf]
      %v1042 = vld [vmem:[#allocation2 + $0xb0] sm:$0x1]
      %v1043 = vld [vmem:[#allocation2 + $0xb4] sm:$0xf]
      %v1044 = vld [vmem:[#allocation2 + $0xb8] sm:$0xf]
      %v1045 = vld [vmem:[#allocation2 + $0xbc] sm:$0x1]
      %vm1046 = vsmask.f32 3328
      %vm1047 = vsmask.f32 7440
      %vm1048 = vmor %vm1046, %vm1047
      %v1050 = vshrl.u32 %v998, 16
      %v1052 = vrot.slane %v1050, 4
      %v1053 = vshll.u32 %v998, 16
      %v1055 = vrot.slane %v1053, 5
      %v1056 = vor.u32 %v1052, %v1055
      %v1057 = vrot.slane %v1056, 4
      %v1059 = vshll.u32 %v999, 16
      %v1061 = vrot.slane %v1059, 5
      %v1062 = vsel %vm1048, %v1057, %v1061
      %v1063 = vshrl.u32 %v999, 16
      %v1065 = vrot.slane %v1063, 4
      %v1066 = vor.u32 %v1065, %v1061
      %v1067 = vrot.slane %v1066, 4
      %v1069 = vshll.u32 %v1000, 16
      %v1071 = vrot.slane %v1069, 5
      %v1072 = vsel %vm1048, %v1067, %v1071
      %v1074 = vshrl.u32 %v1001, 16
      %v1076 = vrot.slane %v1074, 4
      %v1077 = vshll.u32 %v1001, 16
      %v1079 = vrot.slane %v1077, 5
      %v1080 = vor.u32 %v1076, %v1079
      %v1081 = vrot.slane %v1080, 4
      %v1083 = vshll.u32 %v1002, 16
      %v1085 = vrot.slane %v1083, 5
      %v1086 = vsel %vm1048, %v1081, %v1085
      %v1087 = vshrl.u32 %v1002, 16
      %v1089 = vrot.slane %v1087, 4
      %v1090 = vor.u32 %v1089, %v1085
      %v1091 = vrot.slane %v1090, 4
      %v1093 = vshll.u32 %v1003, 16
      %v1095 = vrot.slane %v1093, 5
      %v1096 = vsel %vm1048, %v1091, %v1095
      %v1098 = vshrl.u32 %v1004, 16
      %v1100 = vrot.slane %v1098, 4
      %v1101 = vshll.u32 %v1004, 16
      %v1103 = vrot.slane %v1101, 5
      %v1104 = vor.u32 %v1100, %v1103
      %v1105 = vrot.slane %v1104, 4
      %v1107 = vshll.u32 %v1005, 16
      %v1109 = vrot.slane %v1107, 5
      %v1110 = vsel %vm1048, %v1105, %v1109
      %v1111 = vshrl.u32 %v1005, 16
      %v1113 = vrot.slane %v1111, 4
      %v1114 = vor.u32 %v1113, %v1109
      %v1115 = vrot.slane %v1114, 4
      %v1117 = vshll.u32 %v1006, 16
      %v1119 = vrot.slane %v1117, 5
      %v1120 = vsel %vm1048, %v1115, %v1119
      %v1122 = vshrl.u32 %v1007, 16
      %v1124 = vrot.slane %v1122, 4
      %v1125 = vshll.u32 %v1007, 16
      %v1127 = vrot.slane %v1125, 5
      %v1128 = vor.u32 %v1124, %v1127
      %v1129 = vrot.slane %v1128, 4
      %v1131 = vshll.u32 %v1008, 16
      %v1133 = vrot.slane %v1131, 5
      %v1134 = vsel %vm1048, %v1129, %v1133
      %v1135 = vshrl.u32 %v1008, 16
      %v1137 = vrot.slane %v1135, 4
      %v1138 = vor.u32 %v1137, %v1133
      %v1139 = vrot.slane %v1138, 4
      %v1141 = vshll.u32 %v1009, 16
      %v1143 = vrot.slane %v1141, 5
      %v1144 = vsel %vm1048, %v1139, %v1143
      %v1146 = vshrl.u32 %v1010, 16
      %v1148 = vrot.slane %v1146, 4
      %v1149 = vshll.u32 %v1010, 16
      %v1151 = vrot.slane %v1149, 5
      %v1152 = vor.u32 %v1148, %v1151
      %v1153 = vrot.slane %v1152, 4
      %v1155 = vshll.u32 %v1011, 16
      %v1157 = vrot.slane %v1155, 5
      %v1158 = vsel %vm1048, %v1153, %v1157
      %v1159 = vshrl.u32 %v1011, 16
      %v1161 = vrot.slane %v1159, 4
      %v1162 = vor.u32 %v1161, %v1157
      %v1163 = vrot.slane %v1162, 4
      %v1165 = vshll.u32 %v1012, 16
      %v1167 = vrot.slane %v1165, 5
      %v1168 = vsel %vm1048, %v1163, %v1167
      %v1170 = vshrl.u32 %v1013, 16
      %v1172 = vrot.slane %v1170, 4
      %v1173 = vshll.u32 %v1013, 16
      %v1175 = vrot.slane %v1173, 5
      %v1176 = vor.u32 %v1172, %v1175
      %v1177 = vrot.slane %v1176, 4
      %v1179 = vshll.u32 %v1014, 16
      %v1181 = vrot.slane %v1179, 5
      %v1182 = vsel %vm1048, %v1177, %v1181
      %v1183 = vshrl.u32 %v1014, 16
      %v1185 = vrot.slane %v1183, 4
      %v1186 = vor.u32 %v1185, %v1181
      %v1187 = vrot.slane %v1186, 4
      %v1189 = vshll.u32 %v1015, 16
      %v1191 = vrot.slane %v1189, 5
      %v1192 = vsel %vm1048, %v1187, %v1191
      %v1194 = vshrl.u32 %v1016, 16
      %v1196 = vrot.slane %v1194, 4
      %v1197 = vshll.u32 %v1016, 16
      %v1199 = vrot.slane %v1197, 5
      %v1200 = vor.u32 %v1196, %v1199
      %v1201 = vrot.slane %v1200, 4
      %v1203 = vshll.u32 %v1017, 16
      %v1205 = vrot.slane %v1203, 5
      %v1206 = vsel %vm1048, %v1201, %v1205
      %v1207 = vshrl.u32 %v1017, 16
      %v1209 = vrot.slane %v1207, 4
      %v1210 = vor.u32 %v1209, %v1205
      %v1211 = vrot.slane %v1210, 4
      %v1213 = vshll.u32 %v1018, 16
      %v1215 = vrot.slane %v1213, 5
      %v1216 = vsel %vm1048, %v1211, %v1215
      %v1218 = vshrl.u32 %v1019, 16
      %v1220 = vrot.slane %v1218, 4
      %v1221 = vshll.u32 %v1019, 16
      %v1223 = vrot.slane %v1221, 5
      %v1224 = vor.u32 %v1220, %v1223
      %v1225 = vrot.slane %v1224, 4
      %v1227 = vshll.u32 %v1020, 16
      %v1229 = vrot.slane %v1227, 5
      %v1230 = vsel %vm1048, %v1225, %v1229
      %v1231 = vshrl.u32 %v1020, 16
      %v1233 = vrot.slane %v1231, 4
      %v1234 = vor.u32 %v1233, %v1229
      %v1235 = vrot.slane %v1234, 4
      %v1237 = vshll.u32 %v1021, 16
      %v1239 = vrot.slane %v1237, 5
      %v1240 = vsel %vm1048, %v1235, %v1239
      %v1242 = vshrl.u32 %v1022, 16
      %v1244 = vrot.slane %v1242, 4
      %v1245 = vshll.u32 %v1022, 16
      %v1247 = vrot.slane %v1245, 5
      %v1248 = vor.u32 %v1244, %v1247
      %v1249 = vrot.slane %v1248, 4
      %v1251 = vshll.u32 %v1023, 16
      %v1253 = vrot.slane %v1251, 5
      %v1254 = vsel %vm1048, %v1249, %v1253
      %v1255 = vshrl.u32 %v1023, 16
      %v1257 = vrot.slane %v1255, 4
      %v1258 = vor.u32 %v1257, %v1253
      %v1259 = vrot.slane %v1258, 4
      %v1261 = vshll.u32 %v1024, 16
      %v1263 = vrot.slane %v1261, 5
      %v1264 = vsel %vm1048, %v1259, %v1263
      %v1266 = vshrl.u32 %v1025, 16
      %v1268 = vrot.slane %v1266, 4
      %v1269 = vshll.u32 %v1025, 16
      %v1271 = vrot.slane %v1269, 5
      %v1272 = vor.u32 %v1268, %v1271
      %v1273 = vrot.slane %v1272, 4
      %v1275 = vshll.u32 %v1026, 16
      %v1277 = vrot.slane %v1275, 5
      %v1278 = vsel %vm1048, %v1273, %v1277
      %v1279 = vshrl.u32 %v1026, 16
      %v1281 = vrot.slane %v1279, 4
      %v1282 = vor.u32 %v1281, %v1277
      %v1283 = vrot.slane %v1282, 4
      %v1285 = vshll.u32 %v1027, 16
      %v1287 = vrot.slane %v1285, 5
      %v1288 = vsel %vm1048, %v1283, %v1287
      %v1290 = vshrl.u32 %v1028, 16
      %v1292 = vrot.slane %v1290, 4
      %v1293 = vshll.u32 %v1028, 16
      %v1295 = vrot.slane %v1293, 5
      %v1296 = vor.u32 %v1292, %v1295
      %v1297 = vrot.slane %v1296, 4
      %v1299 = vshll.u32 %v1029, 16
      %v1301 = vrot.slane %v1299, 5
      %v1302 = vsel %vm1048, %v1297, %v1301
      %v1303 = vshrl.u32 %v1029, 16
      %v1305 = vrot.slane %v1303, 4
      %v1306 = vor.u32 %v1305, %v1301
      %v1307 = vrot.slane %v1306, 4
      %v1309 = vshll.u32 %v1030, 16
      %v1311 = vrot.slane %v1309, 5
      %v1312 = vsel %vm1048, %v1307, %v1311
      %v1314 = vshrl.u32 %v1031, 16
      %v1316 = vrot.slane %v1314, 4
      %v1317 = vshll.u32 %v1031, 16
      %v1319 = vrot.slane %v1317, 5
      %v1320 = vor.u32 %v1316, %v1319
      %v1321 = vrot.slane %v1320, 4
      %v1323 = vshll.u32 %v1032, 16
      %v1325 = vrot.slane %v1323, 5
      %v1326 = vsel %vm1048, %v1321, %v1325
      %v1327 = vshrl.u32 %v1032, 16
      %v1329 = vrot.slane %v1327, 4
      %v1330 = vor.u32 %v1329, %v1325
      %v1331 = vrot.slane %v1330, 4
      %v1333 = vshll.u32 %v1033, 16
      %v1335 = vrot.slane %v1333, 5
      %v1336 = vsel %vm1048, %v1331, %v1335
      %v1338 = vshrl.u32 %v1034, 16
      %v1340 = vrot.slane %v1338, 4
      %v1341 = vshll.u32 %v1034, 16
      %v1343 = vrot.slane %v1341, 5
      %v1344 = vor.u32 %v1340, %v1343
      %v1345 = vrot.slane %v1344, 4
      %v1347 = vshll.u32 %v1035, 16
      %v1349 = vrot.slane %v1347, 5
      %v1350 = vsel %vm1048, %v1345, %v1349
      %v1351 = vshrl.u32 %v1035, 16
      %v1353 = vrot.slane %v1351, 4
      %v1354 = vor.u32 %v1353, %v1349
      %v1355 = vrot.slane %v1354, 4
      %v1357 = vshll.u32 %v1036, 16
      %v1359 = vrot.slane %v1357, 5
      %v1360 = vsel %vm1048, %v1355, %v1359
      %v1362 = vshrl.u32 %v1037, 16
      %v1364 = vrot.slane %v1362, 4
      %v1365 = vshll.u32 %v1037, 16
      %v1367 = vrot.slane %v1365, 5
      %v1368 = vor.u32 %v1364, %v1367
      %v1369 = vrot.slane %v1368, 4
      %v1371 = vshll.u32 %v1038, 16
      %v1373 = vrot.slane %v1371, 5
      %v1374 = vsel %vm1048, %v1369, %v1373
      %v1375 = vshrl.u32 %v1038, 16
      %v1377 = vrot.slane %v1375, 4
      %v1378 = vor.u32 %v1377, %v1373
      %v1379 = vrot.slane %v1378, 4
      %v1381 = vshll.u32 %v1039, 16
      %v1383 = vrot.slane %v1381, 5
      %v1384 = vsel %vm1048, %v1379, %v1383
      %v1386 = vshrl.u32 %v1040, 16
      %v1388 = vrot.slane %v1386, 4
      %v1389 = vshll.u32 %v1040, 16
      %v1391 = vrot.slane %v1389, 5
      %v1392 = vor.u32 %v1388, %v1391
      %v1393 = vrot.slane %v1392, 4
      %v1395 = vshll.u32 %v1041, 16
      %v1397 = vrot.slane %v1395, 5
      %v1398 = vsel %vm1048, %v1393, %v1397
      %v1399 = vshrl.u32 %v1041, 16
      %v1401 = vrot.slane %v1399, 4
      %v1402 = vor.u32 %v1401, %v1397
      %v1403 = vrot.slane %v1402, 4
      %v1405 = vshll.u32 %v1042, 16
      %v1407 = vrot.slane %v1405, 5
      %v1408 = vsel %vm1048, %v1403, %v1407
      %v1410 = vshrl.u32 %v1043, 16
      %v1412 = vrot.slane %v1410, 4
      %v1413 = vshll.u32 %v1043, 16
      %v1415 = vrot.slane %v1413, 5
      %v1416 = vor.u32 %v1412, %v1415
      %v1417 = vrot.slane %v1416, 4
      %v1419 = vshll.u32 %v1044, 16
      %v1421 = vrot.slane %v1419, 5
      %v1422 = vsel %vm1048, %v1417, %v1421
      %v1423 = vshrl.u32 %v1044, 16
      %v1425 = vrot.slane %v1423, 4
      %v1426 = vor.u32 %v1425, %v1421
      %v1427 = vrot.slane %v1426, 4
      %v1429 = vshll.u32 %v1045, 16
      %v1431 = vrot.slane %v1429, 5
      %v1432 = vsel %vm1048, %v1427, %v1431
      %1433 = vrot.lane.b32.xlu0 %v1062, 4
      %v1434 = vpop.permute.xlu0 %1433
      %1435 = vrot.lane.b32.xlu0 %v1072, 4
      %v1436 = vpop.permute.xlu0 %1435
      %1437 = vrot.lane.b32.xlu0 %v1086, 4
      %v1438 = vpop.permute.xlu0 %1437
      %1439 = vrot.lane.b32.xlu0 %v1096, 4
      %v1440 = vpop.permute.xlu0 %1439
      %1441 = vrot.lane.b32.xlu0 %v1110, 4
      %v1442 = vpop.permute.xlu0 %1441
      %1443 = vrot.lane.b32.xlu0 %v1120, 4
      %v1444 = vpop.permute.xlu0 %1443
      %1445 = vrot.lane.b32.xlu0 %v1134, 4
      %v1446 = vpop.permute.xlu0 %1445
      %1447 = vrot.lane.b32.xlu0 %v1144, 4
      %v1448 = vpop.permute.xlu0 %1447
      %1449 = vrot.lane.b32.xlu0 %v1158, 4
      %v1450 = vpop.permute.xlu0 %1449
      %1451 = vrot.lane.b32.xlu0 %v1168, 4
      %v1452 = vpop.permute.xlu0 %1451
      %1453 = vrot.lane.b32.xlu0 %v1182, 4
      %v1454 = vpop.permute.xlu0 %1453
      %1455 = vrot.lane.b32.xlu0 %v1192, 4
      %v1456 = vpop.permute.xlu0 %1455
      %1457 = vrot.lane.b32.xlu0 %v1206, 4
      %v1458 = vpop.permute.xlu0 %1457
      %1459 = vrot.lane.b32.xlu0 %v1216, 4
      %v1460 = vpop.permute.xlu0 %1459
      %1461 = vrot.lane.b32.xlu0 %v1230, 4
      %v1462 = vpop.permute.xlu0 %1461
      %1463 = vrot.lane.b32.xlu0 %v1240, 4
      %v1464 = vpop.permute.xlu0 %1463
      %1465 = vrot.lane.b32.xlu0 %v1254, 4
      %v1466 = vpop.permute.xlu0 %1465
      %1467 = vrot.lane.b32.xlu0 %v1264, 4
      %v1468 = vpop.permute.xlu0 %1467
      %1469 = vrot.lane.b32.xlu0 %v1278, 4
      %v1470 = vpop.permute.xlu0 %1469
      %1471 = vrot.lane.b32.xlu0 %v1288, 4
      %v1472 = vpop.permute.xlu0 %1471
      %1473 = vrot.lane.b32.xlu0 %v1302, 4
      %v1474 = vpop.permute.xlu0 %1473
      %1475 = vrot.lane.b32.xlu0 %v1312, 4
      %v1476 = vpop.permute.xlu0 %1475
      %1477 = vrot.lane.b32.xlu0 %v1326, 4
      %v1478 = vpop.permute.xlu0 %1477
      %1479 = vrot.lane.b32.xlu0 %v1336, 4
      %v1480 = vpop.permute.xlu0 %1479
      %1481 = vrot.lane.b32.xlu0 %v1350, 4
      %v1482 = vpop.permute.xlu0 %1481
      %1483 = vrot.lane.b32.xlu0 %v1360, 4
      %v1484 = vpop.permute.xlu0 %1483
      %1485 = vrot.lane.b32.xlu0 %v1374, 4
      %v1486 = vpop.permute.xlu0 %1485
      %1487 = vrot.lane.b32.xlu0 %v1384, 4
      %v1488 = vpop.permute.xlu0 %1487
      %1489 = vrot.lane.b32.xlu0 %v1398, 4
      %v1490 = vpop.permute.xlu0 %1489
      %1491 = vrot.lane.b32.xlu0 %v1408, 4
      %v1492 = vpop.permute.xlu0 %1491
      %1493 = vrot.lane.b32.xlu0 %v1422, 4
      %v1494 = vpop.permute.xlu0 %1493
      %1495 = vrot.lane.b32.xlu0 %v1432, 4
      %v1496 = vpop.permute.xlu0 %1495
      %vm1529 = vcmask 60448
      %1530 = vst.msk [vmem:[#allocation3] sm:$0xf] %vm1529, %v1434
      %1531 = vst.msk [vmem:[#allocation3 + $0x4] sm:$0xf] %vm1529, %v1436
      %1532 = vst.msk [vmem:[#allocation3 + $0x8] sm:$0xf] %vm1529, %v1438
      %1533 = vst.msk [vmem:[#allocation3 + $0xc] sm:$0xf] %vm1529, %v1440
      %1534 = vst.msk [vmem:[#allocation3 + $0x10] sm:$0xf] %vm1529, %v1442
      %1535 = vst.msk [vmem:[#allocation3 + $0x14] sm:$0xf] %vm1529, %v1444
      %1536 = vst.msk [vmem:[#allocation3 + $0x18] sm:$0xf] %vm1529, %v1446
      %1537 = vst.msk [vmem:[#allocation3 + $0x1c] sm:$0xf] %vm1529, %v1448
      %1538 = vst.msk [vmem:[#allocation3 + $0x20] sm:$0xf] %vm1529, %v1450
      %1539 = vst.msk [vmem:[#allocation3 + $0x24] sm:$0xf] %vm1529, %v1452
      %1540 = vst.msk [vmem:[#allocation3 + $0x28] sm:$0xf] %vm1529, %v1454
      %1541 = vst.msk [vmem:[#allocation3 + $0x2c] sm:$0xf] %vm1529, %v1456
      %1542 = vst.msk [vmem:[#allocation3 + $0x30] sm:$0xf] %vm1529, %v1458
      %1543 = vst.msk [vmem:[#allocation3 + $0x34] sm:$0xf] %vm1529, %v1460
      %1544 = vst.msk [vmem:[#allocation3 + $0x38] sm:$0xf] %vm1529, %v1462
      %1545 = vst.msk [vmem:[#allocation3 + $0x3c] sm:$0xf] %vm1529, %v1464
      %1546 = vst.msk [vmem:[#allocation3 + $0x40] sm:$0xf] %vm1529, %v1466
      %1547 = vst.msk [vmem:[#allocation3 + $0x44] sm:$0xf] %vm1529, %v1468
      %1548 = vst.msk [vmem:[#allocation3 + $0x48] sm:$0xf] %vm1529, %v1470
      %1549 = vst.msk [vmem:[#allocation3 + $0x4c] sm:$0xf] %vm1529, %v1472
      %1550 = vst.msk [vmem:[#allocation3 + $0x50] sm:$0xf] %vm1529, %v1474
      %1551 = vst.msk [vmem:[#allocation3 + $0x54] sm:$0xf] %vm1529, %v1476
      %1552 = vst.msk [vmem:[#allocation3 + $0x58] sm:$0xf] %vm1529, %v1478
      %1553 = vst.msk [vmem:[#allocation3 + $0x5c] sm:$0xf] %vm1529, %v1480
      %1554 = vst.msk [vmem:[#allocation3 + $0x60] sm:$0xf] %vm1529, %v1482
      %1555 = vst.msk [vmem:[#allocation3 + $0x64] sm:$0xf] %vm1529, %v1484
      %1556 = vst.msk [vmem:[#allocation3 + $0x68] sm:$0xf] %vm1529, %v1486
      %1557 = vst.msk [vmem:[#allocation3 + $0x6c] sm:$0xf] %vm1529, %v1488
      %1558 = vst.msk [vmem:[#allocation3 + $0x70] sm:$0xf] %vm1529, %v1490
      %1559 = vst.msk [vmem:[#allocation3 + $0x74] sm:$0xf] %vm1529, %v1492
      %1560 = vst.msk [vmem:[#allocation3 + $0x78] sm:$0xf] %vm1529, %v1494
      %1561 = vst.msk [vmem:[#allocation3 + $0x7c] sm:$0xf] %vm1529, %v1496
      %v1562 = vld [vmem:[#allocation2] sm:$0xe]
      %v1563 = vld [vmem:[#allocation2 + $0x4] sm:$0xf]
      %v1564 = vld [vmem:[#allocation2 + $0x8] sm:$0x1]
      %v1565 = vld [vmem:[#allocation2 + $0xc] sm:$0xe]
      %v1566 = vld [vmem:[#allocation2 + $0x10] sm:$0xf]
      %v1567 = vld [vmem:[#allocation2 + $0x14] sm:$0x1]
      %v1568 = vld [vmem:[#allocation2 + $0x18] sm:$0xe]
      %v1569 = vld [vmem:[#allocation2 + $0x1c] sm:$0xf]
      %v1570 = vld [vmem:[#allocation2 + $0x20] sm:$0x1]
      %v1571 = vld [vmem:[#allocation2 + $0x24] sm:$0xe]
      %v1572 = vld [vmem:[#allocation2 + $0x28] sm:$0xf]
      %v1573 = vld [vmem:[#allocation2 + $0x2c] sm:$0x1]
      %v1574 = vld [vmem:[#allocation2 + $0x30] sm:$0xe]
      %v1575 = vld [vmem:[#allocation2 + $0x34] sm:$0xf]
      %v1576 = vld [vmem:[#allocation2 + $0x38] sm:$0x1]
      %v1577 = vld [vmem:[#allocation2 + $0x3c] sm:$0xe]
      %v1578 = vld [vmem:[#allocation2 + $0x40] sm:$0xf]
      %v1579 = vld [vmem:[#allocation2 + $0x44] sm:$0x1]
      %v1580 = vld [vmem:[#allocation2 + $0x48] sm:$0xe]
      %v1581 = vld [vmem:[#allocation2 + $0x4c] sm:$0xf]
      %v1582 = vld [vmem:[#allocation2 + $0x50] sm:$0x1]
      %v1583 = vld [vmem:[#allocation2 + $0x54] sm:$0xe]
      %v1584 = vld [vmem:[#allocation2 + $0x58] sm:$0xf]
      %v1585 = vld [vmem:[#allocation2 + $0x5c] sm:$0x1]
      %v1586 = vld [vmem:[#allocation2 + $0x60] sm:$0xe]
      %v1587 = vld [vmem:[#allocation2 + $0x64] sm:$0xf]
      %v1588 = vld [vmem:[#allocation2 + $0x68] sm:$0x1]
      %v1589 = vld [vmem:[#allocation2 + $0x6c] sm:$0xe]
      %v1590 = vld [vmem:[#allocation2 + $0x70] sm:$0xf]
      %v1591 = vld [vmem:[#allocation2 + $0x74] sm:$0x1]
      %v1592 = vld [vmem:[#allocation2 + $0x78] sm:$0xe]
      %v1593 = vld [vmem:[#allocation2 + $0x7c] sm:$0xf]
      %v1594 = vld [vmem:[#allocation2 + $0x80] sm:$0x1]
      %v1595 = vld [vmem:[#allocation2 + $0x84] sm:$0xe]
      %v1596 = vld [vmem:[#allocation2 + $0x88] sm:$0xf]
      %v1597 = vld [vmem:[#allocation2 + $0x8c] sm:$0x1]
      %v1598 = vld [vmem:[#allocation2 + $0x90] sm:$0xe]
      %v1599 = vld [vmem:[#allocation2 + $0x94] sm:$0xf]
      %v1600 = vld [vmem:[#allocation2 + $0x98] sm:$0x1]
      %v1601 = vld [vmem:[#allocation2 + $0x9c] sm:$0xe]
      %v1602 = vld [vmem:[#allocation2 + $0xa0] sm:$0xf]
      %v1603 = vld [vmem:[#allocation2 + $0xa4] sm:$0x1]
      %v1604 = vld [vmem:[#allocation2 + $0xa8] sm:$0xe]
      %v1605 = vld [vmem:[#allocation2 + $0xac] sm:$0xf]
      %v1606 = vld [vmem:[#allocation2 + $0xb0] sm:$0x1]
      %v1607 = vld [vmem:[#allocation2 + $0xb4] sm:$0xe]
      %v1608 = vld [vmem:[#allocation2 + $0xb8] sm:$0xf]
      %v1609 = vld [vmem:[#allocation2 + $0xbc] sm:$0x1]
      %vm1658 = vcmask 1042432
      %vm1659 = vcmask 1046532
      %vm1660 = vmor %vm1658, %vm1659
      %v1661 = vrot.slane %v1562, 5
      %v1662 = vrot.slane %v1661, 4
      %v1663 = vrot.slane %v1563, 5
      %v1664 = vsel %vm1660, %v1662, %v1663
      %v1665 = vrot.slane %v1663, 4
      %v1666 = vrot.slane %v1564, 5
      %v1667 = vsel %vm1660, %v1665, %v1666
      %v1668 = vrot.slane %v1565, 5
      %v1669 = vrot.slane %v1668, 4
      %v1670 = vrot.slane %v1566, 5
      %v1671 = vsel %vm1660, %v1669, %v1670
      %v1672 = vrot.slane %v1670, 4
      %v1673 = vrot.slane %v1567, 5
      %v1674 = vsel %vm1660, %v1672, %v1673
      %v1675 = vrot.slane %v1568, 5
      %v1676 = vrot.slane %v1675, 4
      %v1677 = vrot.slane %v1569, 5
      %v1678 = vsel %vm1660, %v1676, %v1677
      %v1679 = vrot.slane %v1677, 4
      %v1680 = vrot.slane %v1570, 5
      %v1681 = vsel %vm1660, %v1679, %v1680
      %v1682 = vrot.slane %v1571, 5
      %v1683 = vrot.slane %v1682, 4
      %v1684 = vrot.slane %v1572, 5
      %v1685 = vsel %vm1660, %v1683, %v1684
      %v1686 = vrot.slane %v1684, 4
      %v1687 = vrot.slane %v1573, 5
      %v1688 = vsel %vm1660, %v1686, %v1687
      %v1689 = vrot.slane %v1574, 5
      %v1690 = vrot.slane %v1689, 4
      %v1691 = vrot.slane %v1575, 5
      %v1692 = vsel %vm1660, %v1690, %v1691
      %v1693 = vrot.slane %v1691, 4
      %v1694 = vrot.slane %v1576, 5
      %v1695 = vsel %vm1660, %v1693, %v1694
      %v1696 = vrot.slane %v1577, 5
      %v1697 = vrot.slane %v1696, 4
      %v1698 = vrot.slane %v1578, 5
      %v1699 = vsel %vm1660, %v1697, %v1698
      %v1700 = vrot.slane %v1698, 4
      %v1701 = vrot.slane %v1579, 5
      %v1702 = vsel %vm1660, %v1700, %v1701
      %v1703 = vrot.slane %v1580, 5
      %v1704 = vrot.slane %v1703, 4
      %v1705 = vrot.slane %v1581, 5
      %v1706 = vsel %vm1660, %v1704, %v1705
      %v1707 = vrot.slane %v1705, 4
      %v1708 = vrot.slane %v1582, 5
      %v1709 = vsel %vm1660, %v1707, %v1708
      %v1710 = vrot.slane %v1583, 5
      %v1711 = vrot.slane %v1710, 4
      %v1712 = vrot.slane %v1584, 5
      %v1713 = vsel %vm1660, %v1711, %v1712
      %v1714 = vrot.slane %v1712, 4
      %v1715 = vrot.slane %v1585, 5
      %v1716 = vsel %vm1660, %v1714, %v1715
      %v1717 = vrot.slane %v1586, 5
      %v1718 = vrot.slane %v1717, 4
      %v1719 = vrot.slane %v1587, 5
      %v1720 = vsel %vm1660, %v1718, %v1719
      %v1721 = vrot.slane %v1719, 4
      %v1722 = vrot.slane %v1588, 5
      %v1723 = vsel %vm1660, %v1721, %v1722
      %v1724 = vrot.slane %v1589, 5
      %v1725 = vrot.slane %v1724, 4
      %v1726 = vrot.slane %v1590, 5
      %v1727 = vsel %vm1660, %v1725, %v1726
      %v1728 = vrot.slane %v1726, 4
      %v1729 = vrot.slane %v1591, 5
      %v1730 = vsel %vm1660, %v1728, %v1729
      %v1731 = vrot.slane %v1592, 5
      %v1732 = vrot.slane %v1731, 4
      %v1733 = vrot.slane %v1593, 5
      %v1734 = vsel %vm1660, %v1732, %v1733
      %v1735 = vrot.slane %v1733, 4
      %v1736 = vrot.slane %v1594, 5
      %v1737 = vsel %vm1660, %v1735, %v1736
      %v1738 = vrot.slane %v1595, 5
      %v1739 = vrot.slane %v1738, 4
      %v1740 = vrot.slane %v1596, 5
      %v1741 = vsel %vm1660, %v1739, %v1740
      %v1742 = vrot.slane %v1740, 4
      %v1743 = vrot.slane %v1597, 5
      %v1744 = vsel %vm1660, %v1742, %v1743
      %v1745 = vrot.slane %v1598, 5
      %v1746 = vrot.slane %v1745, 4
      %v1747 = vrot.slane %v1599, 5
      %v1748 = vsel %vm1660, %v1746, %v1747
      %v1749 = vrot.slane %v1747, 4
      %v1750 = vrot.slane %v1600, 5
      %v1751 = vsel %vm1660, %v1749, %v1750
      %v1752 = vrot.slane %v1601, 5
      %v1753 = vrot.slane %v1752, 4
      %v1754 = vrot.slane %v1602, 5
      %v1755 = vsel %vm1660, %v1753, %v1754
      %v1756 = vrot.slane %v1754, 4
      %v1757 = vrot.slane %v1603, 5
      %v1758 = vsel %vm1660, %v1756, %v1757
      %v1759 = vrot.slane %v1604, 5
      %v1760 = vrot.slane %v1759, 4
      %v1761 = vrot.slane %v1605, 5
      %v1762 = vsel %vm1660, %v1760, %v1761
      %v1763 = vrot.slane %v1761, 4
      %v1764 = vrot.slane %v1606, 5
      %v1765 = vsel %vm1660, %v1763, %v1764
      %v1766 = vrot.slane %v1607, 5
      %v1767 = vrot.slane %v1766, 4
      %v1768 = vrot.slane %v1608, 5
      %v1769 = vsel %vm1660, %v1767, %v1768
      %v1770 = vrot.slane %v1768, 4
      %v1771 = vrot.slane %v1609, 5
      %v1772 = vsel %vm1660, %v1770, %v1771
      %1773 = vrot.lane.b32.xlu0 %v1664, 8
      %v1774 = vpop.permute.xlu0 %1773
      %1775 = vrot.lane.b32.xlu0 %v1667, 8
      %v1776 = vpop.permute.xlu0 %1775
      %1777 = vrot.lane.b32.xlu0 %v1671, 8
      %v1778 = vpop.permute.xlu0 %1777
      %1779 = vrot.lane.b32.xlu0 %v1674, 8
      %v1780 = vpop.permute.xlu0 %1779
      %1781 = vrot.lane.b32.xlu0 %v1678, 8
      %v1782 = vpop.permute.xlu0 %1781
      %1783 = vrot.lane.b32.xlu0 %v1681, 8
      %v1784 = vpop.permute.xlu0 %1783
      %1785 = vrot.lane.b32.xlu0 %v1685, 8
      %v1786 = vpop.permute.xlu0 %1785
      %1787 = vrot.lane.b32.xlu0 %v1688, 8
      %v1788 = vpop.permute.xlu0 %1787
      %1789 = vrot.lane.b32.xlu0 %v1692, 8
      %v1790 = vpop.permute.xlu0 %1789
      %1791 = vrot.lane.b32.xlu0 %v1695, 8
      %v1792 = vpop.permute.xlu0 %1791
      %1793 = vrot.lane.b32.xlu0 %v1699, 8
      %v1794 = vpop.permute.xlu0 %1793
      %1795 = vrot.lane.b32.xlu0 %v1702, 8
      %v1796 = vpop.permute.xlu0 %1795
      %1797 = vrot.lane.b32.xlu0 %v1706, 8
      %v1798 = vpop.permute.xlu0 %1797
      %1799 = vrot.lane.b32.xlu0 %v1709, 8
      %v1800 = vpop.permute.xlu0 %1799
      %1801 = vrot.lane.b32.xlu0 %v1713, 8
      %v1802 = vpop.permute.xlu0 %1801
      %1803 = vrot.lane.b32.xlu0 %v1716, 8
      %v1804 = vpop.permute.xlu0 %1803
      %1805 = vrot.lane.b32.xlu0 %v1720, 8
      %v1806 = vpop.permute.xlu0 %1805
      %1807 = vrot.lane.b32.xlu0 %v1723, 8
      %v1808 = vpop.permute.xlu0 %1807
      %1809 = vrot.lane.b32.xlu0 %v1727, 8
      %v1810 = vpop.permute.xlu0 %1809
      %1811 = vrot.lane.b32.xlu0 %v1730, 8
      %v1812 = vpop.permute.xlu0 %1811
      %1813 = vrot.lane.b32.xlu0 %v1734, 8
      %v1814 = vpop.permute.xlu0 %1813
      %1815 = vrot.lane.b32.xlu0 %v1737, 8
      %v1816 = vpop.permute.xlu0 %1815
      %1817 = vrot.lane.b32.xlu0 %v1741, 8
      %v1818 = vpop.permute.xlu0 %1817
      %1819 = vrot.lane.b32.xlu0 %v1744, 8
      %v1820 = vpop.permute.xlu0 %1819
      %1821 = vrot.lane.b32.xlu0 %v1748, 8
      %v1822 = vpop.permute.xlu0 %1821
      %1823 = vrot.lane.b32.xlu0 %v1751, 8
      %v1824 = vpop.permute.xlu0 %1823
      %1825 = vrot.lane.b32.xlu0 %v1755, 8
      %v1826 = vpop.permute.xlu0 %1825
      %1827 = vrot.lane.b32.xlu0 %v1758, 8
      %v1828 = vpop.permute.xlu0 %1827
      %1829 = vrot.lane.b32.xlu0 %v1762, 8
      %v1830 = vpop.permute.xlu0 %1829
      %1831 = vrot.lane.b32.xlu0 %v1765, 8
      %v1832 = vpop.permute.xlu0 %1831
      %1833 = vrot.lane.b32.xlu0 %v1769, 8
      %v1834 = vpop.permute.xlu0 %1833
      %1835 = vrot.lane.b32.xlu0 %v1772, 8
      %v1836 = vpop.permute.xlu0 %1835
      %vm1869 = vcmask 93248
      %1870 = vst.msk [vmem:[#allocation3] sm:$0xf] %vm1869, %v1774
      %1871 = vst.msk [vmem:[#allocation3 + $0x4] sm:$0xf] %vm1869, %v1776
      %1872 = vst.msk [vmem:[#allocation3 + $0x8] sm:$0xf] %vm1869, %v1778
      %1873 = vst.msk [vmem:[#allocation3 + $0xc] sm:$0xf] %vm1869, %v1780
      %1874 = vst.msk [vmem:[#allocation3 + $0x10] sm:$0xf] %vm1869, %v1782
      %1875 = vst.msk [vmem:[#allocation3 + $0x14] sm:$0xf] %vm1869, %v1784
      %1876 = vst.msk [vmem:[#allocation3 + $0x18] sm:$0xf] %vm1869, %v1786
      %1877 = vst.msk [vmem:[#allocation3 + $0x1c] sm:$0xf] %vm1869, %v1788
      %1878 = vst.msk [vmem:[#allocation3 + $0x20] sm:$0xf] %vm1869, %v1790
      %1879 = vst.msk [vmem:[#allocation3 + $0x24] sm:$0xf] %vm1869, %v1792
      %1880 = vst.msk [vmem:[#allocation3 + $0x28] sm:$0xf] %vm1869, %v1794
      %1881 = vst.msk [vmem:[#allocation3 + $0x2c] sm:$0xf] %vm1869, %v1796
      %1882 = vst.msk [vmem:[#allocation3 + $0x30] sm:$0xf] %vm1869, %v1798
      %1883 = vst.msk [vmem:[#allocation3 + $0x34] sm:$0xf] %vm1869, %v1800
      %1884 = vst.msk [vmem:[#allocation3 + $0x38] sm:$0xf] %vm1869, %v1802
      %1885 = vst.msk [vmem:[#allocation3 + $0x3c] sm:$0xf] %vm1869, %v1804
      %1886 = vst.msk [vmem:[#allocation3 + $0x40] sm:$0xf] %vm1869, %v1806
      %1887 = vst.msk [vmem:[#allocation3 + $0x44] sm:$0xf] %vm1869, %v1808
      %1888 = vst.msk [vmem:[#allocation3 + $0x48] sm:$0xf] %vm1869, %v1810
      %1889 = vst.msk [vmem:[#allocation3 + $0x4c] sm:$0xf] %vm1869, %v1812
      %1890 = vst.msk [vmem:[#allocation3 + $0x50] sm:$0xf] %vm1869, %v1814
      %1891 = vst.msk [vmem:[#allocation3 + $0x54] sm:$0xf] %vm1869, %v1816
      %1892 = vst.msk [vmem:[#allocation3 + $0x58] sm:$0xf] %vm1869, %v1818
      %1893 = vst.msk [vmem:[#allocation3 + $0x5c] sm:$0xf] %vm1869, %v1820
      %1894 = vst.msk [vmem:[#allocation3 + $0x60] sm:$0xf] %vm1869, %v1822
      %1895 = vst.msk [vmem:[#allocation3 + $0x64] sm:$0xf] %vm1869, %v1824
      %1896 = vst.msk [vmem:[#allocation3 + $0x68] sm:$0xf] %vm1869, %v1826
      %1897 = vst.msk [vmem:[#allocation3 + $0x6c] sm:$0xf] %vm1869, %v1828
      %1898 = vst.msk [vmem:[#allocation3 + $0x70] sm:$0xf] %vm1869, %v1830
      %1899 = vst.msk [vmem:[#allocation3 + $0x74] sm:$0xf] %vm1869, %v1832
      %1900 = vst.msk [vmem:[#allocation3 + $0x78] sm:$0xf] %vm1869, %v1834
      %1901 = vst.msk [vmem:[#allocation3 + $0x7c] sm:$0xf] %vm1869, %v1836
      %v1902 = vld [vmem:[%s816] sm:$0xf]
      %v1903 = vld [vmem:[%s816 + $0x4] sm:$0xf]
      %v1904 = vld [vmem:[%s816 + $0xc] sm:$0xf]
      %v1905 = vld [vmem:[%s816 + $0x10] sm:$0xf]
      %v1906 = vld [vmem:[%s816 + $0x18] sm:$0xf]
      %v1907 = vld [vmem:[%s816 + $0x1c] sm:$0xf]
      %v1908 = vld [vmem:[%s816 + $0x24] sm:$0xf]
      %v1909 = vld [vmem:[%s816 + $0x28] sm:$0xf]
      %v1910 = vld [vmem:[%s816 + $0x30] sm:$0xf]
      %v1911 = vld [vmem:[%s816 + $0x34] sm:$0xf]
      %v1912 = vld [vmem:[%s816 + $0x3c] sm:$0xf]
      %v1913 = vld [vmem:[%s816 + $0x40] sm:$0xf]
      %v1914 = vld [vmem:[%s816 + $0x48] sm:$0xf]
      %v1915 = vld [vmem:[%s816 + $0x4c] sm:$0xf]
      %v1916 = vld [vmem:[%s816 + $0x54] sm:$0xf]
      %v1917 = vld [vmem:[%s816 + $0x58] sm:$0xf]
      %v1918 = vld [vmem:[%s816 + $0x60] sm:$0xf]
      %v1919 = vld [vmem:[%s816 + $0x64] sm:$0xf]
      %v1920 = vld [vmem:[%s816 + $0x6c] sm:$0xf]
      %v1921 = vld [vmem:[%s816 + $0x70] sm:$0xf]
      %v1922 = vld [vmem:[%s816 + $0x78] sm:$0xf]
      %v1923 = vld [vmem:[%s816 + $0x7c] sm:$0xf]
      %v1924 = vld [vmem:[%s816 + $0x84] sm:$0xf]
      %v1925 = vld [vmem:[%s816 + $0x88] sm:$0xf]
      %v1926 = vld [vmem:[%s816 + $0x90] sm:$0xf]
      %v1927 = vld [vmem:[%s816 + $0x94] sm:$0xf]
      %v1928 = vld [vmem:[%s816 + $0x9c] sm:$0xf]
      %v1929 = vld [vmem:[%s816 + $0xa0] sm:$0xf]
      %v1930 = vld [vmem:[%s816 + $0xa8] sm:$0xf]
      %v1931 = vld [vmem:[%s816 + $0xac] sm:$0xf]
      %v1932 = vld [vmem:[%s816 + $0xb4] sm:$0xf]
      %v1933 = vld [vmem:[%s816 + $0xb8] sm:$0xf]
      %1966 = vrot.lane.b32.xlu0 %v1902, 12
      %v1967 = vpop.permute.xlu0 %1966
      %1968 = vrot.lane.b32.xlu0 %v1903, 12
      %v1969 = vpop.permute.xlu0 %1968
      %1970 = vrot.lane.b32.xlu0 %v1904, 12
      %v1971 = vpop.permute.xlu0 %1970
      %1972 = vrot.lane.b32.xlu0 %v1905, 12
      %v1973 = vpop.permute.xlu0 %1972
      %1974 = vrot.lane.b32.xlu0 %v1906, 12
      %v1975 = vpop.permute.xlu0 %1974
      %1976 = vrot.lane.b32.xlu0 %v1907, 12
      %v1977 = vpop.permute.xlu0 %1976
      %1978 = vrot.lane.b32.xlu0 %v1908, 12
      %v1979 = vpop.permute.xlu0 %1978
      %1980 = vrot.lane.b32.xlu0 %v1909, 12
      %v1981 = vpop.permute.xlu0 %1980
      %1982 = vrot.lane.b32.xlu0 %v1910, 12
      %v1983 = vpop.permute.xlu0 %1982
      %1984 = vrot.lane.b32.xlu0 %v1911, 12
      %v1985 = vpop.permute.xlu0 %1984
      %1986 = vrot.lane.b32.xlu0 %v1912, 12
      %v1987 = vpop.permute.xlu0 %1986
      %1988 = vrot.lane.b32.xlu0 %v1913, 12
      %v1989 = vpop.permute.xlu0 %1988
      %1990 = vrot.lane.b32.xlu0 %v1914, 12
      %v1991 = vpop.permute.xlu0 %1990
      %1992 = vrot.lane.b32.xlu0 %v1915, 12
      %v1993 = vpop.permute.xlu0 %1992
      %1994 = vrot.lane.b32.xlu0 %v1916, 12
      %v1995 = vpop.permute.xlu0 %1994
      %1996 = vrot.lane.b32.xlu0 %v1917, 12
      %v1997 = vpop.permute.xlu0 %1996
      %1998 = vrot.lane.b32.xlu0 %v1918, 12
      %v1999 = vpop.permute.xlu0 %1998
      %2000 = vrot.lane.b32.xlu0 %v1919, 12
      %v2001 = vpop.permute.xlu0 %2000
      %2002 = vrot.lane.b32.xlu0 %v1920, 12
      %v2003 = vpop.permute.xlu0 %2002
      %2004 = vrot.lane.b32.xlu0 %v1921, 12
      %v2005 = vpop.permute.xlu0 %2004
      %2006 = vrot.lane.b32.xlu0 %v1922, 12
      %v2007 = vpop.permute.xlu0 %2006
      %2008 = vrot.lane.b32.xlu0 %v1923, 12
      %v2009 = vpop.permute.xlu0 %2008
      %2010 = vrot.lane.b32.xlu0 %v1924, 12
      %v2011 = vpop.permute.xlu0 %2010
      %2012 = vrot.lane.b32.xlu0 %v1925, 12
      %v2013 = vpop.permute.xlu0 %2012
      %2014 = vrot.lane.b32.xlu0 %v1926, 12
      %v2015 = vpop.permute.xlu0 %2014
      %2016 = vrot.lane.b32.xlu0 %v1927, 12
      %v2017 = vpop.permute.xlu0 %2016
      %2018 = vrot.lane.b32.xlu0 %v1928, 12
      %v2019 = vpop.permute.xlu0 %2018
      %2020 = vrot.lane.b32.xlu0 %v1929, 12
      %v2021 = vpop.permute.xlu0 %2020
      %2022 = vrot.lane.b32.xlu0 %v1930, 12
      %v2023 = vpop.permute.xlu0 %2022
      %2024 = vrot.lane.b32.xlu0 %v1931, 12
      %v2025 = vpop.permute.xlu0 %2024
      %2026 = vrot.lane.b32.xlu0 %v1932, 12
      %v2027 = vpop.permute.xlu0 %2026
      %2028 = vrot.lane.b32.xlu0 %v1933, 12
      %v2029 = vpop.permute.xlu0 %2028
      %vm2062 = vcmask 126048
      %2063 = vst.msk [vmem:[#allocation3] sm:$0xf] %vm2062, %v1967
      %2064 = vst.msk [vmem:[#allocation3 + $0x4] sm:$0xf] %vm2062, %v1969
      %2065 = vst.msk [vmem:[#allocation3 + $0x8] sm:$0xf] %vm2062, %v1971
      %2066 = vst.msk [vmem:[#allocation3 + $0xc] sm:$0xf] %vm2062, %v1973
      %2067 = vst.msk [vmem:[#allocation3 + $0x10] sm:$0xf] %vm2062, %v1975
      %2068 = vst.msk [vmem:[#allocation3 + $0x14] sm:$0xf] %vm2062, %v1977
      %2069 = vst.msk [vmem:[#allocation3 + $0x18] sm:$0xf] %vm2062, %v1979
      %2070 = vst.msk [vmem:[#allocation3 + $0x1c] sm:$0xf] %vm2062, %v1981
      %2071 = vst.msk [vmem:[#allocation3 + $0x20] sm:$0xf] %vm2062, %v1983
      %2072 = vst.msk [vmem:[#allocation3 + $0x24] sm:$0xf] %vm2062, %v1985
      %2073 = vst.msk [vmem:[#allocation3 + $0x28] sm:$0xf] %vm2062, %v1987
      %2074 = vst.msk [vmem:[#allocation3 + $0x2c] sm:$0xf] %vm2062, %v1989
      %2075 = vst.msk [vmem:[#allocation3 + $0x30] sm:$0xf] %vm2062, %v1991
      %2076 = vst.msk [vmem:[#allocation3 + $0x34] sm:$0xf] %vm2062, %v1993
      %2077 = vst.msk [vmem:[#allocation3 + $0x38] sm:$0xf] %vm2062, %v1995
      %2078 = vst.msk [vmem:[#allocation3 + $0x3c] sm:$0xf] %vm2062, %v1997
      %2079 = vst.msk [vmem:[#allocation3 + $0x40] sm:$0xf] %vm2062, %v1999
      %2080 = vst.msk [vmem:[#allocation3 + $0x44] sm:$0xf] %vm2062, %v2001
      %2081 = vst.msk [vmem:[#allocation3 + $0x48] sm:$0xf] %vm2062, %v2003
      %2082 = vst.msk [vmem:[#allocation3 + $0x4c] sm:$0xf] %vm2062, %v2005
      %2083 = vst.msk [vmem:[#allocation3 + $0x50] sm:$0xf] %vm2062, %v2007
      %2084 = vst.msk [vmem:[#allocation3 + $0x54] sm:$0xf] %vm2062, %v2009
      %2085 = vst.msk [vmem:[#allocation3 + $0x58] sm:$0xf] %vm2062, %v2011
      %2086 = vst.msk [vmem:[#allocation3 + $0x5c] sm:$0xf] %vm2062, %v2013
      %2087 = vst.msk [vmem:[#allocation3 + $0x60] sm:$0xf] %vm2062, %v2015
      %2088 = vst.msk [vmem:[#allocation3 + $0x64] sm:$0xf] %vm2062, %v2017
      %2089 = vst.msk [vmem:[#allocation3 + $0x68] sm:$0xf] %vm2062, %v2019
      %2090 = vst.msk [vmem:[#allocation3 + $0x6c] sm:$0xf] %vm2062, %v2021
      %2091 = vst.msk [vmem:[#allocation3 + $0x70] sm:$0xf] %vm2062, %v2023
      %2092 = vst.msk [vmem:[#allocation3 + $0x74] sm:$0xf] %vm2062, %v2025
      %2093 = vst.msk [vmem:[#allocation3 + $0x78] sm:$0xf] %vm2062, %v2027
      %2094 = vst.msk [vmem:[#allocation3 + $0x7c] sm:$0xf] %vm2062, %v2029
      %v2095 = vld [vmem:[%s816] sm:$0xf]
      %v2096 = vld [vmem:[%s816 + $0x4] sm:$0xf]
      %v2097 = vld [vmem:[%s816 + $0x8] sm:$0x1]
      %v2098 = vld [vmem:[%s816 + $0xc] sm:$0xf]
      %v2099 = vld [vmem:[%s816 + $0x10] sm:$0xf]
      %v2100 = vld [vmem:[%s816 + $0x14] sm:$0x1]
      %v2101 = vld [vmem:[%s816 + $0x18] sm:$0xf]
      %v2102 = vld [vmem:[%s816 + $0x1c] sm:$0xf]
      %v2103 = vld [vmem:[%s816 + $0x20] sm:$0x1]
      %v2104 = vld [vmem:[%s816 + $0x24] sm:$0xf]
      %v2105 = vld [vmem:[%s816 + $0x28] sm:$0xf]
      %v2106 = vld [vmem:[%s816 + $0x2c] sm:$0x1]
      %v2107 = vld [vmem:[%s816 + $0x30] sm:$0xf]
      %v2108 = vld [vmem:[%s816 + $0x34] sm:$0xf]
      %v2109 = vld [vmem:[%s816 + $0x38] sm:$0x1]
      %v2110 = vld [vmem:[%s816 + $0x3c] sm:$0xf]
      %v2111 = vld [vmem:[%s816 + $0x40] sm:$0xf]
      %v2112 = vld [vmem:[%s816 + $0x44] sm:$0x1]
      %v2113 = vld [vmem:[%s816 + $0x48] sm:$0xf]
      %v2114 = vld [vmem:[%s816 + $0x4c] sm:$0xf]
      %v2115 = vld [vmem:[%s816 + $0x50] sm:$0x1]
      %v2116 = vld [vmem:[%s816 + $0x54] sm:$0xf]
      %v2117 = vld [vmem:[%s816 + $0x58] sm:$0xf]
      %v2118 = vld [vmem:[%s816 + $0x5c] sm:$0x1]
      %v2119 = vld [vmem:[%s816 + $0x60] sm:$0xf]
      %v2120 = vld [vmem:[%s816 + $0x64] sm:$0xf]
      %v2121 = vld [vmem:[%s816 + $0x68] sm:$0x1]
      %v2122 = vld [vmem:[%s816 + $0x6c] sm:$0xf]
      %v2123 = vld [vmem:[%s816 + $0x70] sm:$0xf]
      %v2124 = vld [vmem:[%s816 + $0x74] sm:$0x1]
      %v2125 = vld [vmem:[%s816 + $0x78] sm:$0xf]
      %v2126 = vld [vmem:[%s816 + $0x7c] sm:$0xf]
      %v2127 = vld [vmem:[%s816 + $0x80] sm:$0x1]
      %v2128 = vld [vmem:[%s816 + $0x84] sm:$0xf]
      %v2129 = vld [vmem:[%s816 + $0x88] sm:$0xf]
      %v2130 = vld [vmem:[%s816 + $0x8c] sm:$0x1]
      %v2131 = vld [vmem:[%s816 + $0x90] sm:$0xf]
      %v2132 = vld [vmem:[%s816 + $0x94] sm:$0xf]
      %v2133 = vld [vmem:[%s816 + $0x98] sm:$0x1]
      %v2134 = vld [vmem:[%s816 + $0x9c] sm:$0xf]
      %v2135 = vld [vmem:[%s816 + $0xa0] sm:$0xf]
      %v2136 = vld [vmem:[%s816 + $0xa4] sm:$0x1]
      %v2137 = vld [vmem:[%s816 + $0xa8] sm:$0xf]
      %v2138 = vld [vmem:[%s816 + $0xac] sm:$0xf]
      %v2139 = vld [vmem:[%s816 + $0xb0] sm:$0x1]
      %v2140 = vld [vmem:[%s816 + $0xb4] sm:$0xf]
      %v2141 = vld [vmem:[%s816 + $0xb8] sm:$0xf]
      %v2142 = vld [vmem:[%s816 + $0xbc] sm:$0x1]
      %v2144 = vshrl.u32 %v2095, 16
      %v2146 = vrot.slane %v2144, 4
      %v2147 = vshll.u32 %v2095, 16
      %v2149 = vrot.slane %v2147, 5
      %v2150 = vor.u32 %v2146, %v2149
      %v2151 = vrot.slane %v2150, 4
      %v2153 = vshll.u32 %v2096, 16
      %v2155 = vrot.slane %v2153, 5
      %v2156 = vsel %vm1048, %v2151, %v2155
      %v2157 = vshrl.u32 %v2096, 16
      %v2159 = vrot.slane %v2157, 4
      %v2160 = vor.u32 %v2159, %v2155
      %v2161 = vrot.slane %v2160, 4
      %v2163 = vshll.u32 %v2097, 16
      %v2165 = vrot.slane %v2163, 5
      %v2166 = vsel %vm1048, %v2161, %v2165
      %v2168 = vshrl.u32 %v2098, 16
      %v2170 = vrot.slane %v2168, 4
      %v2171 = vshll.u32 %v2098, 16
      %v2173 = vrot.slane %v2171, 5
      %v2174 = vor.u32 %v2170, %v2173
      %v2175 = vrot.slane %v2174, 4
      %v2177 = vshll.u32 %v2099, 16
      %v2179 = vrot.slane %v2177, 5
      %v2180 = vsel %vm1048, %v2175, %v2179
      %v2181 = vshrl.u32 %v2099, 16
      %v2183 = vrot.slane %v2181, 4
      %v2184 = vor.u32 %v2183, %v2179
      %v2185 = vrot.slane %v2184, 4
      %v2187 = vshll.u32 %v2100, 16
      %v2189 = vrot.slane %v2187, 5
      %v2190 = vsel %vm1048, %v2185, %v2189
      %v2192 = vshrl.u32 %v2101, 16
      %v2194 = vrot.slane %v2192, 4
      %v2195 = vshll.u32 %v2101, 16
      %v2197 = vrot.slane %v2195, 5
      %v2198 = vor.u32 %v2194, %v2197
      %v2199 = vrot.slane %v2198, 4
      %v2201 = vshll.u32 %v2102, 16
      %v2203 = vrot.slane %v2201, 5
      %v2204 = vsel %vm1048, %v2199, %v2203
      %v2205 = vshrl.u32 %v2102, 16
      %v2207 = vrot.slane %v2205, 4
      %v2208 = vor.u32 %v2207, %v2203
      %v2209 = vrot.slane %v2208, 4
      %v2211 = vshll.u32 %v2103, 16
      %v2213 = vrot.slane %v2211, 5
      %v2214 = vsel %vm1048, %v2209, %v2213
      %v2216 = vshrl.u32 %v2104, 16
      %v2218 = vrot.slane %v2216, 4
      %v2219 = vshll.u32 %v2104, 16
      %v2221 = vrot.slane %v2219, 5
      %v2222 = vor.u32 %v2218, %v2221
      %v2223 = vrot.slane %v2222, 4
      %v2225 = vshll.u32 %v2105, 16
      %v2227 = vrot.slane %v2225, 5
      %v2228 = vsel %vm1048, %v2223, %v2227
      %v2229 = vshrl.u32 %v2105, 16
      %v2231 = vrot.slane %v2229, 4
      %v2232 = vor.u32 %v2231, %v2227
      %v2233 = vrot.slane %v2232, 4
      %v2235 = vshll.u32 %v2106, 16
      %v2237 = vrot.slane %v2235, 5
      %v2238 = vsel %vm1048, %v2233, %v2237
      %v2240 = vshrl.u32 %v2107, 16
      %v2242 = vrot.slane %v2240, 4
      %v2243 = vshll.u32 %v2107, 16
      %v2245 = vrot.slane %v2243, 5
      %v2246 = vor.u32 %v2242, %v2245
      %v2247 = vrot.slane %v2246, 4
      %v2249 = vshll.u32 %v2108, 16
      %v2251 = vrot.slane %v2249, 5
      %v2252 = vsel %vm1048, %v2247, %v2251
      %v2253 = vshrl.u32 %v2108, 16
      %v2255 = vrot.slane %v2253, 4
      %v2256 = vor.u32 %v2255, %v2251
      %v2257 = vrot.slane %v2256, 4
      %v2259 = vshll.u32 %v2109, 16
      %v2261 = vrot.slane %v2259, 5
      %v2262 = vsel %vm1048, %v2257, %v2261
      %v2264 = vshrl.u32 %v2110, 16
      %v2266 = vrot.slane %v2264, 4
      %v2267 = vshll.u32 %v2110, 16
      %v2269 = vrot.slane %v2267, 5
      %v2270 = vor.u32 %v2266, %v2269
      %v2271 = vrot.slane %v2270, 4
      %v2273 = vshll.u32 %v2111, 16
      %v2275 = vrot.slane %v2273, 5
      %v2276 = vsel %vm1048, %v2271, %v2275
      %v2277 = vshrl.u32 %v2111, 16
      %v2279 = vrot.slane %v2277, 4
      %v2280 = vor.u32 %v2279, %v2275
      %v2281 = vrot.slane %v2280, 4
      %v2283 = vshll.u32 %v2112, 16
      %v2285 = vrot.slane %v2283, 5
      %v2286 = vsel %vm1048, %v2281, %v2285
      %v2288 = vshrl.u32 %v2113, 16
      %v2290 = vrot.slane %v2288, 4
      %v2291 = vshll.u32 %v2113, 16
      %v2293 = vrot.slane %v2291, 5
      %v2294 = vor.u32 %v2290, %v2293
      %v2295 = vrot.slane %v2294, 4
      %v2297 = vshll.u32 %v2114, 16
      %v2299 = vrot.slane %v2297, 5
      %v2300 = vsel %vm1048, %v2295, %v2299
      %v2301 = vshrl.u32 %v2114, 16
      %v2303 = vrot.slane %v2301, 4
      %v2304 = vor.u32 %v2303, %v2299
      %v2305 = vrot.slane %v2304, 4
      %v2307 = vshll.u32 %v2115, 16
      %v2309 = vrot.slane %v2307, 5
      %v2310 = vsel %vm1048, %v2305, %v2309
      %v2312 = vshrl.u32 %v2116, 16
      %v2314 = vrot.slane %v2312, 4
      %v2315 = vshll.u32 %v2116, 16
      %v2317 = vrot.slane %v2315, 5
      %v2318 = vor.u32 %v2314, %v2317
      %v2319 = vrot.slane %v2318, 4
      %v2321 = vshll.u32 %v2117, 16
      %v2323 = vrot.slane %v2321, 5
      %v2324 = vsel %vm1048, %v2319, %v2323
      %v2325 = vshrl.u32 %v2117, 16
      %v2327 = vrot.slane %v2325, 4
      %v2328 = vor.u32 %v2327, %v2323
      %v2329 = vrot.slane %v2328, 4
      %v2331 = vshll.u32 %v2118, 16
      %v2333 = vrot.slane %v2331, 5
      %v2334 = vsel %vm1048, %v2329, %v2333
      %v2336 = vshrl.u32 %v2119, 16
      %v2338 = vrot.slane %v2336, 4
      %v2339 = vshll.u32 %v2119, 16
      %v2341 = vrot.slane %v2339, 5
      %v2342 = vor.u32 %v2338, %v2341
      %v2343 = vrot.slane %v2342, 4
      %v2345 = vshll.u32 %v2120, 16
      %v2347 = vrot.slane %v2345, 5
      %v2348 = vsel %vm1048, %v2343, %v2347
      %v2349 = vshrl.u32 %v2120, 16
      %v2351 = vrot.slane %v2349, 4
      %v2352 = vor.u32 %v2351, %v2347
      %v2353 = vrot.slane %v2352, 4
      %v2355 = vshll.u32 %v2121, 16
      %v2357 = vrot.slane %v2355, 5
      %v2358 = vsel %vm1048, %v2353, %v2357
      %v2360 = vshrl.u32 %v2122, 16
      %v2362 = vrot.slane %v2360, 4
      %v2363 = vshll.u32 %v2122, 16
      %v2365 = vrot.slane %v2363, 5
      %v2366 = vor.u32 %v2362, %v2365
      %v2367 = vrot.slane %v2366, 4
      %v2369 = vshll.u32 %v2123, 16
      %v2371 = vrot.slane %v2369, 5
      %v2372 = vsel %vm1048, %v2367, %v2371
      %v2373 = vshrl.u32 %v2123, 16
      %v2375 = vrot.slane %v2373, 4
      %v2376 = vor.u32 %v2375, %v2371
      %v2377 = vrot.slane %v2376, 4
      %v2379 = vshll.u32 %v2124, 16
      %v2381 = vrot.slane %v2379, 5
      %v2382 = vsel %vm1048, %v2377, %v2381
      %v2384 = vshrl.u32 %v2125, 16
      %v2386 = vrot.slane %v2384, 4
      %v2387 = vshll.u32 %v2125, 16
      %v2389 = vrot.slane %v2387, 5
      %v2390 = vor.u32 %v2386, %v2389
      %v2391 = vrot.slane %v2390, 4
      %v2393 = vshll.u32 %v2126, 16
      %v2395 = vrot.slane %v2393, 5
      %v2396 = vsel %vm1048, %v2391, %v2395
      %v2397 = vshrl.u32 %v2126, 16
      %v2399 = vrot.slane %v2397, 4
      %v2400 = vor.u32 %v2399, %v2395
      %v2401 = vrot.slane %v2400, 4
      %v2403 = vshll.u32 %v2127, 16
      %v2405 = vrot.slane %v2403, 5
      %v2406 = vsel %vm1048, %v2401, %v2405
      %v2408 = vshrl.u32 %v2128, 16
      %v2410 = vrot.slane %v2408, 4
      %v2411 = vshll.u32 %v2128, 16
      %v2413 = vrot.slane %v2411, 5
      %v2414 = vor.u32 %v2410, %v2413
      %v2415 = vrot.slane %v2414, 4
      %v2417 = vshll.u32 %v2129, 16
      %v2419 = vrot.slane %v2417, 5
      %v2420 = vsel %vm1048, %v2415, %v2419
      %v2421 = vshrl.u32 %v2129, 16
      %v2423 = vrot.slane %v2421, 4
      %v2424 = vor.u32 %v2423, %v2419
      %v2425 = vrot.slane %v2424, 4
      %v2427 = vshll.u32 %v2130, 16
      %v2429 = vrot.slane %v2427, 5
      %v2430 = vsel %vm1048, %v2425, %v2429
      %v2432 = vshrl.u32 %v2131, 16
      %v2434 = vrot.slane %v2432, 4
      %v2435 = vshll.u32 %v2131, 16
      %v2437 = vrot.slane %v2435, 5
      %v2438 = vor.u32 %v2434, %v2437
      %v2439 = vrot.slane %v2438, 4
      %v2441 = vshll.u32 %v2132, 16
      %v2443 = vrot.slane %v2441, 5
      %v2444 = vsel %vm1048, %v2439, %v2443
      %v2445 = vshrl.u32 %v2132, 16
      %v2447 = vrot.slane %v2445, 4
      %v2448 = vor.u32 %v2447, %v2443
      %v2449 = vrot.slane %v2448, 4
      %v2451 = vshll.u32 %v2133, 16
      %v2453 = vrot.slane %v2451, 5
      %v2454 = vsel %vm1048, %v2449, %v2453
      %v2456 = vshrl.u32 %v2134, 16
      %v2458 = vrot.slane %v2456, 4
      %v2459 = vshll.u32 %v2134, 16
      %v2461 = vrot.slane %v2459, 5
      %v2462 = vor.u32 %v2458, %v2461
      %v2463 = vrot.slane %v2462, 4
      %v2465 = vshll.u32 %v2135, 16
      %v2467 = vrot.slane %v2465, 5
      %v2468 = vsel %vm1048, %v2463, %v2467
      %v2469 = vshrl.u32 %v2135, 16
      %v2471 = vrot.slane %v2469, 4
      %v2472 = vor.u32 %v2471, %v2467
      %v2473 = vrot.slane %v2472, 4
      %v2475 = vshll.u32 %v2136, 16
      %v2477 = vrot.slane %v2475, 5
      %v2478 = vsel %vm1048, %v2473, %v2477
      %v2480 = vshrl.u32 %v2137, 16
      %v2482 = vrot.slane %v2480, 4
      %v2483 = vshll.u32 %v2137, 16
      %v2485 = vrot.slane %v2483, 5
      %v2486 = vor.u32 %v2482, %v2485
      %v2487 = vrot.slane %v2486, 4
      %v2489 = vshll.u32 %v2138, 16
      %v2491 = vrot.slane %v2489, 5
      %v2492 = vsel %vm1048, %v2487, %v2491
      %v2493 = vshrl.u32 %v2138, 16
      %v2495 = vrot.slane %v2493, 4
      %v2496 = vor.u32 %v2495, %v2491
      %v2497 = vrot.slane %v2496, 4
      %v2499 = vshll.u32 %v2139, 16
      %v2501 = vrot.slane %v2499, 5
      %v2502 = vsel %vm1048, %v2497, %v2501
      %v2504 = vshrl.u32 %v2140, 16
      %v2506 = vrot.slane %v2504, 4
      %v2507 = vshll.u32 %v2140, 16
      %v2509 = vrot.slane %v2507, 5
      %v2510 = vor.u32 %v2506, %v2509
      %v2511 = vrot.slane %v2510, 4
      %v2513 = vshll.u32 %v2141, 16
      %v2515 = vrot.slane %v2513, 5
      %v2516 = vsel %vm1048, %v2511, %v2515
      %v2517 = vshrl.u32 %v2141, 16
      %v2519 = vrot.slane %v2517, 4
      %v2520 = vor.u32 %v2519, %v2515
      %v2521 = vrot.slane %v2520, 4
      %v2523 = vshll.u32 %v2142, 16
      %v2525 = vrot.slane %v2523, 5
      %v2526 = vsel %vm1048, %v2521, %v2525
      %2527 = vrot.lane.b32.xlu0 %v2156, 16
      %v2528 = vpop.permute.xlu0 %2527
      %2529 = vrot.lane.b32.xlu0 %v2166, 16
      %v2530 = vpop.permute.xlu0 %2529
      %2531 = vrot.lane.b32.xlu0 %v2180, 16
      %v2532 = vpop.permute.xlu0 %2531
      %2533 = vrot.lane.b32.xlu0 %v2190, 16
      %v2534 = vpop.permute.xlu0 %2533
      %2535 = vrot.lane.b32.xlu0 %v2204, 16
      %v2536 = vpop.permute.xlu0 %2535
      %2537 = vrot.lane.b32.xlu0 %v2214, 16
      %v2538 = vpop.permute.xlu0 %2537
      %2539 = vrot.lane.b32.xlu0 %v2228, 16
      %v2540 = vpop.permute.xlu0 %2539
      %2541 = vrot.lane.b32.xlu0 %v2238, 16
      %v2542 = vpop.permute.xlu0 %2541
      %2543 = vrot.lane.b32.xlu0 %v2252, 16
      %v2544 = vpop.permute.xlu0 %2543
      %2545 = vrot.lane.b32.xlu0 %v2262, 16
      %v2546 = vpop.permute.xlu0 %2545
      %2547 = vrot.lane.b32.xlu0 %v2276, 16
      %v2548 = vpop.permute.xlu0 %2547
      %2549 = vrot.lane.b32.xlu0 %v2286, 16
      %v2550 = vpop.permute.xlu0 %2549
      %2551 = vrot.lane.b32.xlu0 %v2300, 16
      %v2552 = vpop.permute.xlu0 %2551
      %2553 = vrot.lane.b32.xlu0 %v2310, 16
      %v2554 = vpop.permute.xlu0 %2553
      %2555 = vrot.lane.b32.xlu0 %v2324, 16
      %v2556 = vpop.permute.xlu0 %2555
      %2557 = vrot.lane.b32.xlu0 %v2334, 16
      %v2558 = vpop.permute.xlu0 %2557
      %2559 = vrot.lane.b32.xlu0 %v2348, 16
      %v2560 = vpop.permute.xlu0 %2559
      %2561 = vrot.lane.b32.xlu0 %v2358, 16
      %v2562 = vpop.permute.xlu0 %2561
      %2563 = vrot.lane.b32.xlu0 %v2372, 16
      %v2564 = vpop.permute.xlu0 %2563
      %2565 = vrot.lane.b32.xlu0 %v2382, 16
      %v2566 = vpop.permute.xlu0 %2565
      %2567 = vrot.lane.b32.xlu0 %v2396, 16
      %v2568 = vpop.permute.xlu0 %2567
      %2569 = vrot.lane.b32.xlu0 %v2406, 16
      %v2570 = vpop.permute.xlu0 %2569
      %2571 = vrot.lane.b32.xlu0 %v2420, 16
      %v2572 = vpop.permute.xlu0 %2571
      %2573 = vrot.lane.b32.xlu0 %v2430, 16
      %v2574 = vpop.permute.xlu0 %2573
      %2575 = vrot.lane.b32.xlu0 %v2444, 16
      %v2576 = vpop.permute.xlu0 %2575
      %2577 = vrot.lane.b32.xlu0 %v2454, 16
      %v2578 = vpop.permute.xlu0 %2577
      %2579 = vrot.lane.b32.xlu0 %v2468, 16
      %v2580 = vpop.permute.xlu0 %2579
      %2581 = vrot.lane.b32.xlu0 %v2478, 16
      %v2582 = vpop.permute.xlu0 %2581
      %2583 = vrot.lane.b32.xlu0 %v2492, 16
      %v2584 = vpop.permute.xlu0 %2583
      %2585 = vrot.lane.b32.xlu0 %v2502, 16
      %v2586 = vpop.permute.xlu0 %2585
      %2587 = vrot.lane.b32.xlu0 %v2516, 16
      %v2588 = vpop.permute.xlu0 %2587
      %2589 = vrot.lane.b32.xlu0 %v2526, 16
      %v2590 = vpop.permute.xlu0 %2589
      %vm2623 = vcmask 158848
      %2624 = vst.msk [vmem:[#allocation3] sm:$0xf] %vm2623, %v2528
      %2625 = vst.msk [vmem:[#allocation3 + $0x4] sm:$0xf] %vm2623, %v2530
      %2626 = vst.msk [vmem:[#allocation3 + $0x8] sm:$0xf] %vm2623, %v2532
      %2627 = vst.msk [vmem:[#allocation3 + $0xc] sm:$0xf] %vm2623, %v2534
      %2628 = vst.msk [vmem:[#allocation3 + $0x10] sm:$0xf] %vm2623, %v2536
      %2629 = vst.msk [vmem:[#allocation3 + $0x14] sm:$0xf] %vm2623, %v2538
      %2630 = vst.msk [vmem:[#allocation3 + $0x18] sm:$0xf] %vm2623, %v2540
      %2631 = vst.msk [vmem:[#allocation3 + $0x1c] sm:$0xf] %vm2623, %v2542
      %2632 = vst.msk [vmem:[#allocation3 + $0x20] sm:$0xf] %vm2623, %v2544
      %2633 = vst.msk [vmem:[#allocation3 + $0x24] sm:$0xf] %vm2623, %v2546
      %2634 = vst.msk [vmem:[#allocation3 + $0x28] sm:$0xf] %vm2623, %v2548
      %2635 = vst.msk [vmem:[#allocation3 + $0x2c] sm:$0xf] %vm2623, %v2550
      %2636 = vst.msk [vmem:[#allocation3 + $0x30] sm:$0xf] %vm2623, %v2552
      %2637 = vst.msk [vmem:[#allocation3 + $0x34] sm:$0xf] %vm2623, %v2554
      %2638 = vst.msk [vmem:[#allocation3 + $0x38] sm:$0xf] %vm2623, %v2556
      %2639 = vst.msk [vmem:[#allocation3 + $0x3c] sm:$0xf] %vm2623, %v2558
      %2640 = vst.msk [vmem:[#allocation3 + $0x40] sm:$0xf] %vm2623, %v2560
      %2641 = vst.msk [vmem:[#allocation3 + $0x44] sm:$0xf] %vm2623, %v2562
      %2642 = vst.msk [vmem:[#allocation3 + $0x48] sm:$0xf] %vm2623, %v2564
      %2643 = vst.msk [vmem:[#allocation3 + $0x4c] sm:$0xf] %vm2623, %v2566
      %2644 = vst.msk [vmem:[#allocation3 + $0x50] sm:$0xf] %vm2623, %v2568
      %2645 = vst.msk [vmem:[#allocation3 + $0x54] sm:$0xf] %vm2623, %v2570
      %2646 = vst.msk [vmem:[#allocation3 + $0x58] sm:$0xf] %vm2623, %v2572
      %2647 = vst.msk [vmem:[#allocation3 + $0x5c] sm:$0xf] %vm2623, %v2574
      %2648 = vst.msk [vmem:[#allocation3 + $0x60] sm:$0xf] %vm2623, %v2576
      %2649 = vst.msk [vmem:[#allocation3 + $0x64] sm:$0xf] %vm2623, %v2578
      %2650 = vst.msk [vmem:[#allocation3 + $0x68] sm:$0xf] %vm2623, %v2580
      %2651 = vst.msk [vmem:[#allocation3 + $0x6c] sm:$0xf] %vm2623, %v2582
      %2652 = vst.msk [vmem:[#allocation3 + $0x70] sm:$0xf] %vm2623, %v2584
      %2653 = vst.msk [vmem:[#allocation3 + $0x74] sm:$0xf] %vm2623, %v2586
      %2654 = vst.msk [vmem:[#allocation3 + $0x78] sm:$0xf] %vm2623, %v2588
      %2655 = vst.msk [vmem:[#allocation3 + $0x7c] sm:$0xf] %vm2623, %v2590
      %v2656 = vld [vmem:[%s816] sm:$0xe]
      %v2657 = vld [vmem:[%s816 + $0x4] sm:$0xf]
      %v2658 = vld [vmem:[%s816 + $0x8] sm:$0x1]
      %v2659 = vld [vmem:[%s816 + $0xc] sm:$0xe]
      %v2660 = vld [vmem:[%s816 + $0x10] sm:$0xf]
      %v2661 = vld [vmem:[%s816 + $0x14] sm:$0x1]
      %v2662 = vld [vmem:[%s816 + $0x18] sm:$0xe]
      %v2663 = vld [vmem:[%s816 + $0x1c] sm:$0xf]
      %v2664 = vld [vmem:[%s816 + $0x20] sm:$0x1]
      %v2665 = vld [vmem:[%s816 + $0x24] sm:$0xe]
      %v2666 = vld [vmem:[%s816 + $0x28] sm:$0xf]
      %v2667 = vld [vmem:[%s816 + $0x2c] sm:$0x1]
      %v2668 = vld [vmem:[%s816 + $0x30] sm:$0xe]
      %v2669 = vld [vmem:[%s816 + $0x34] sm:$0xf]
      %v2670 = vld [vmem:[%s816 + $0x38] sm:$0x1]
      %v2671 = vld [vmem:[%s816 + $0x3c] sm:$0xe]
      %v2672 = vld [vmem:[%s816 + $0x40] sm:$0xf]
      %v2673 = vld [vmem:[%s816 + $0x44] sm:$0x1]
      %v2674 = vld [vmem:[%s816 + $0x48] sm:$0xe]
      %v2675 = vld [vmem:[%s816 + $0x4c] sm:$0xf]
      %v2676 = vld [vmem:[%s816 + $0x50] sm:$0x1]
      %v2677 = vld [vmem:[%s816 + $0x54] sm:$0xe]
      %v2678 = vld [vmem:[%s816 + $0x58] sm:$0xf]
      %v2679 = vld [vmem:[%s816 + $0x5c] sm:$0x1]
      %v2680 = vld [vmem:[%s816 + $0x60] sm:$0xe]
      %v2681 = vld [vmem:[%s816 + $0x64] sm:$0xf]
      %v2682 = vld [vmem:[%s816 + $0x68] sm:$0x1]
      %v2683 = vld [vmem:[%s816 + $0x6c] sm:$0xe]
      %v2684 = vld [vmem:[%s816 + $0x70] sm:$0xf]
      %v2685 = vld [vmem:[%s816 + $0x74] sm:$0x1]
      %v2686 = vld [vmem:[%s816 + $0x78] sm:$0xe]
      %v2687 = vld [vmem:[%s816 + $0x7c] sm:$0xf]
      %v2688 = vld [vmem:[%s816 + $0x80] sm:$0x1]
      %v2689 = vld [vmem:[%s816 + $0x84] sm:$0xe]
      %v2690 = vld [vmem:[%s816 + $0x88] sm:$0xf]
      %v2691 = vld [vmem:[%s816 + $0x8c] sm:$0x1]
      %v2692 = vld [vmem:[%s816 + $0x90] sm:$0xe]
      %v2693 = vld [vmem:[%s816 + $0x94] sm:$0xf]
      %v2694 = vld [vmem:[%s816 + $0x98] sm:$0x1]
      %v2695 = vld [vmem:[%s816 + $0x9c] sm:$0xe]
      %v2696 = vld [vmem:[%s816 + $0xa0] sm:$0xf]
      %v2697 = vld [vmem:[%s816 + $0xa4] sm:$0x1]
      %v2698 = vld [vmem:[%s816 + $0xa8] sm:$0xe]
      %v2699 = vld [vmem:[%s816 + $0xac] sm:$0xf]
      %v2700 = vld [vmem:[%s816 + $0xb0] sm:$0x1]
      %v2701 = vld [vmem:[%s816 + $0xb4] sm:$0xe]
      %v2702 = vld [vmem:[%s816 + $0xb8] sm:$0xf]
      %v2703 = vld [vmem:[%s816 + $0xbc] sm:$0x1]
      %v2752 = vrot.slane %v2656, 5
      %v2753 = vrot.slane %v2752, 4
      %v2754 = vrot.slane %v2657, 5
      %v2755 = vsel %vm1660, %v2753, %v2754
      %v2756 = vrot.slane %v2754, 4
      %v2757 = vrot.slane %v2658, 5
      %v2758 = vsel %vm1660, %v2756, %v2757
      %v2759 = vrot.slane %v2659, 5
      %v2760 = vrot.slane %v2759, 4
      %v2761 = vrot.slane %v2660, 5
      %v2762 = vsel %vm1660, %v2760, %v2761
      %v2763 = vrot.slane %v2761, 4
      %v2764 = vrot.slane %v2661, 5
      %v2765 = vsel %vm1660, %v2763, %v2764
      %v2766 = vrot.slane %v2662, 5
      %v2767 = vrot.slane %v2766, 4
      %v2768 = vrot.slane %v2663, 5
      %v2769 = vsel %vm1660, %v2767, %v2768
      %v2770 = vrot.slane %v2768, 4
      %v2771 = vrot.slane %v2664, 5
      %v2772 = vsel %vm1660, %v2770, %v2771
      %v2773 = vrot.slane %v2665, 5
      %v2774 = vrot.slane %v2773, 4
      %v2775 = vrot.slane %v2666, 5
      %v2776 = vsel %vm1660, %v2774, %v2775
      %v2777 = vrot.slane %v2775, 4
      %v2778 = vrot.slane %v2667, 5
      %v2779 = vsel %vm1660, %v2777, %v2778
      %v2780 = vrot.slane %v2668, 5
      %v2781 = vrot.slane %v2780, 4
      %v2782 = vrot.slane %v2669, 5
      %v2783 = vsel %vm1660, %v2781, %v2782
      %v2784 = vrot.slane %v2782, 4
      %v2785 = vrot.slane %v2670, 5
      %v2786 = vsel %vm1660, %v2784, %v2785
      %v2787 = vrot.slane %v2671, 5
      %v2788 = vrot.slane %v2787, 4
      %v2789 = vrot.slane %v2672, 5
      %v2790 = vsel %vm1660, %v2788, %v2789
      %v2791 = vrot.slane %v2789, 4
      %v2792 = vrot.slane %v2673, 5
      %v2793 = vsel %vm1660, %v2791, %v2792
      %v2794 = vrot.slane %v2674, 5
      %v2795 = vrot.slane %v2794, 4
      %v2796 = vrot.slane %v2675, 5
      %v2797 = vsel %vm1660, %v2795, %v2796
      %v2798 = vrot.slane %v2796, 4
      %v2799 = vrot.slane %v2676, 5
      %v2800 = vsel %vm1660, %v2798, %v2799
      %v2801 = vrot.slane %v2677, 5
      %v2802 = vrot.slane %v2801, 4
      %v2803 = vrot.slane %v2678, 5
      %v2804 = vsel %vm1660, %v2802, %v2803
      %v2805 = vrot.slane %v2803, 4
      %v2806 = vrot.slane %v2679, 5
      %v2807 = vsel %vm1660, %v2805, %v2806
      %v2808 = vrot.slane %v2680, 5
      %v2809 = vrot.slane %v2808, 4
      %v2810 = vrot.slane %v2681, 5
      %v2811 = vsel %vm1660, %v2809, %v2810
      %v2812 = vrot.slane %v2810, 4
      %v2813 = vrot.slane %v2682, 5
      %v2814 = vsel %vm1660, %v2812, %v2813
      %v2815 = vrot.slane %v2683, 5
      %v2816 = vrot.slane %v2815, 4
      %v2817 = vrot.slane %v2684, 5
      %v2818 = vsel %vm1660, %v2816, %v2817
      %v2819 = vrot.slane %v2817, 4
      %v2820 = vrot.slane %v2685, 5
      %v2821 = vsel %vm1660, %v2819, %v2820
      %v2822 = vrot.slane %v2686, 5
      %v2823 = vrot.slane %v2822, 4
      %v2824 = vrot.slane %v2687, 5
      %v2825 = vsel %vm1660, %v2823, %v2824
      %v2826 = vrot.slane %v2824, 4
      %v2827 = vrot.slane %v2688, 5
      %v2828 = vsel %vm1660, %v2826, %v2827
      %v2829 = vrot.slane %v2689, 5
      %v2830 = vrot.slane %v2829, 4
      %v2831 = vrot.slane %v2690, 5
      %v2832 = vsel %vm1660, %v2830, %v2831
      %v2833 = vrot.slane %v2831, 4
      %v2834 = vrot.slane %v2691, 5
      %v2835 = vsel %vm1660, %v2833, %v2834
      %v2836 = vrot.slane %v2692, 5
      %v2837 = vrot.slane %v2836, 4
      %v2838 = vrot.slane %v2693, 5
      %v2839 = vsel %vm1660, %v2837, %v2838
      %v2840 = vrot.slane %v2838, 4
      %v2841 = vrot.slane %v2694, 5
      %v2842 = vsel %vm1660, %v2840, %v2841
      %v2843 = vrot.slane %v2695, 5
      %v2844 = vrot.slane %v2843, 4
      %v2845 = vrot.slane %v2696, 5
      %v2846 = vsel %vm1660, %v2844, %v2845
      %v2847 = vrot.slane %v2845, 4
      %v2848 = vrot.slane %v2697, 5
      %v2849 = vsel %vm1660, %v2847, %v2848
      %v2850 = vrot.slane %v2698, 5
      %v2851 = vrot.slane %v2850, 4
      %v2852 = vrot.slane %v2699, 5
      %v2853 = vsel %vm1660, %v2851, %v2852
      %v2854 = vrot.slane %v2852, 4
      %v2855 = vrot.slane %v2700, 5
      %v2856 = vsel %vm1660, %v2854, %v2855
      %v2857 = vrot.slane %v2701, 5
      %v2858 = vrot.slane %v2857, 4
      %v2859 = vrot.slane %v2702, 5
      %v2860 = vsel %vm1660, %v2858, %v2859
      %v2861 = vrot.slane %v2859, 4
      %v2862 = vrot.slane %v2703, 5
      %v2863 = vsel %vm1660, %v2861, %v2862
      %2864 = vrot.lane.b32.xlu0 %v2755, 20
      %v2865 = vpop.permute.xlu0 %2864
      %2866 = vrot.lane.b32.xlu0 %v2758, 20
      %v2867 = vpop.permute.xlu0 %2866
      %2868 = vrot.lane.b32.xlu0 %v2762, 20
      %v2869 = vpop.permute.xlu0 %2868
      %2870 = vrot.lane.b32.xlu0 %v2765, 20
      %v2871 = vpop.permute.xlu0 %2870
      %2872 = vrot.lane.b32.xlu0 %v2769, 20
      %v2873 = vpop.permute.xlu0 %2872
      %2874 = vrot.lane.b32.xlu0 %v2772, 20
      %v2875 = vpop.permute.xlu0 %2874
      %2876 = vrot.lane.b32.xlu0 %v2776, 20
      %v2877 = vpop.permute.xlu0 %2876
      %2878 = vrot.lane.b32.xlu0 %v2779, 20
      %v2879 = vpop.permute.xlu0 %2878
      %2880 = vrot.lane.b32.xlu0 %v2783, 20
      %v2881 = vpop.permute.xlu0 %2880
      %2882 = vrot.lane.b32.xlu0 %v2786, 20
      %v2883 = vpop.permute.xlu0 %2882
      %2884 = vrot.lane.b32.xlu0 %v2790, 20
      %v2885 = vpop.permute.xlu0 %2884
      %2886 = vrot.lane.b32.xlu0 %v2793, 20
      %v2887 = vpop.permute.xlu0 %2886
      %2888 = vrot.lane.b32.xlu0 %v2797, 20
      %v2889 = vpop.permute.xlu0 %2888
      %2890 = vrot.lane.b32.xlu0 %v2800, 20
      %v2891 = vpop.permute.xlu0 %2890
      %2892 = vrot.lane.b32.xlu0 %v2804, 20
      %v2893 = vpop.permute.xlu0 %2892
      %2894 = vrot.lane.b32.xlu0 %v2807, 20
      %v2895 = vpop.permute.xlu0 %2894
      %2896 = vrot.lane.b32.xlu0 %v2811, 20
      %v2897 = vpop.permute.xlu0 %2896
      %2898 = vrot.lane.b32.xlu0 %v2814, 20
      %v2899 = vpop.permute.xlu0 %2898
      %2900 = vrot.lane.b32.xlu0 %v2818, 20
      %v2901 = vpop.permute.xlu0 %2900
      %2902 = vrot.lane.b32.xlu0 %v2821, 20
      %v2903 = vpop.permute.xlu0 %2902
      %2904 = vrot.lane.b32.xlu0 %v2825, 20
      %v2905 = vpop.permute.xlu0 %2904
      %2906 = vrot.lane.b32.xlu0 %v2828, 20
      %v2907 = vpop.permute.xlu0 %2906
      %2908 = vrot.lane.b32.xlu0 %v2832, 20
      %v2909 = vpop.permute.xlu0 %2908
      %2910 = vrot.lane.b32.xlu0 %v2835, 20
      %v2911 = vpop.permute.xlu0 %2910
      %2912 = vrot.lane.b32.xlu0 %v2839, 20
      %v2913 = vpop.permute.xlu0 %2912
      %2914 = vrot.lane.b32.xlu0 %v2842, 20
      %v2915 = vpop.permute.xlu0 %2914
      %2916 = vrot.lane.b32.xlu0 %v2846, 20
      %v2917 = vpop.permute.xlu0 %2916
      %2918 = vrot.lane.b32.xlu0 %v2849, 20
      %v2919 = vpop.permute.xlu0 %2918
      %2920 = vrot.lane.b32.xlu0 %v2853, 20
      %v2921 = vpop.permute.xlu0 %2920
      %2922 = vrot.lane.b32.xlu0 %v2856, 20
      %v2923 = vpop.permute.xlu0 %2922
      %2924 = vrot.lane.b32.xlu0 %v2860, 20
      %v2925 = vpop.permute.xlu0 %2924
      %2926 = vrot.lane.b32.xlu0 %v2863, 20
      %v2927 = vpop.permute.xlu0 %2926
      %vm2960 = vcmask 191648
      %2961 = vst.msk [vmem:[#allocation3] sm:$0xf] %vm2960, %v2865
      %2962 = vst.msk [vmem:[#allocation3 + $0x4] sm:$0xf] %vm2960, %v2867
      %2963 = vst.msk [vmem:[#allocation3 + $0x8] sm:$0xf] %vm2960, %v2869
      %2964 = vst.msk [vmem:[#allocation3 + $0xc] sm:$0xf] %vm2960, %v2871
      %2965 = vst.msk [vmem:[#allocation3 + $0x10] sm:$0xf] %vm2960, %v2873
      %2966 = vst.msk [vmem:[#allocation3 + $0x14] sm:$0xf] %vm2960, %v2875
      %2967 = vst.msk [vmem:[#allocation3 + $0x18] sm:$0xf] %vm2960, %v2877
      %2968 = vst.msk [vmem:[#allocation3 + $0x1c] sm:$0xf] %vm2960, %v2879
      %2969 = vst.msk [vmem:[#allocation3 + $0x20] sm:$0xf] %vm2960, %v2881
      %2970 = vst.msk [vmem:[#allocation3 + $0x24] sm:$0xf] %vm2960, %v2883
      %2971 = vst.msk [vmem:[#allocation3 + $0x28] sm:$0xf] %vm2960, %v2885
      %2972 = vst.msk [vmem:[#allocation3 + $0x2c] sm:$0xf] %vm2960, %v2887
      %2973 = vst.msk [vmem:[#allocation3 + $0x30] sm:$0xf] %vm2960, %v2889
      %2974 = vst.msk [vmem:[#allocation3 + $0x34] sm:$0xf] %vm2960, %v2891
      %2975 = vst.msk [vmem:[#allocation3 + $0x38] sm:$0xf] %vm2960, %v2893
      %2976 = vst.msk [vmem:[#allocation3 + $0x3c] sm:$0xf] %vm2960, %v2895
      %2977 = vst.msk [vmem:[#allocation3 + $0x40] sm:$0xf] %vm2960, %v2897
      %2978 = vst.msk [vmem:[#allocation3 + $0x44] sm:$0xf] %vm2960, %v2899
      %2979 = vst.msk [vmem:[#allocation3 + $0x48] sm:$0xf] %vm2960, %v2901
      %2980 = vst.msk [vmem:[#allocation3 + $0x4c] sm:$0xf] %vm2960, %v2903
      %2981 = vst.msk [vmem:[#allocation3 + $0x50] sm:$0xf] %vm2960, %v2905
      %2982 = vst.msk [vmem:[#allocation3 + $0x54] sm:$0xf] %vm2960, %v2907
      %2983 = vst.msk [vmem:[#allocation3 + $0x58] sm:$0xf] %vm2960, %v2909
      %2984 = vst.msk [vmem:[#allocation3 + $0x5c] sm:$0xf] %vm2960, %v2911
      %2985 = vst.msk [vmem:[#allocation3 + $0x60] sm:$0xf] %vm2960, %v2913
      %2986 = vst.msk [vmem:[#allocation3 + $0x64] sm:$0xf] %vm2960, %v2915
      %2987 = vst.msk [vmem:[#allocation3 + $0x68] sm:$0xf] %vm2960, %v2917
      %2988 = vst.msk [vmem:[#allocation3 + $0x6c] sm:$0xf] %vm2960, %v2919
      %2989 = vst.msk [vmem:[#allocation3 + $0x70] sm:$0xf] %vm2960, %v2921
      %2990 = vst.msk [vmem:[#allocation3 + $0x74] sm:$0xf] %vm2960, %v2923
      %2991 = vst.msk [vmem:[#allocation3 + $0x78] sm:$0xf] %vm2960, %v2925
      %2992 = vst.msk [vmem:[#allocation3 + $0x7c] sm:$0xf] %vm2960, %v2927
      %s2993 = scalar_lea.vmem [#allocation2], 24
      %v2994 = vld [vmem:[%s2993] sm:$0xf]
      %v2995 = vld [vmem:[%s2993 + $0x4] sm:$0xf]
      %v2996 = vld [vmem:[%s2993 + $0xc] sm:$0xf]
      %v2997 = vld [vmem:[%s2993 + $0x10] sm:$0xf]
      %v2998 = vld [vmem:[%s2993 + $0x18] sm:$0xf]
      %v2999 = vld [vmem:[%s2993 + $0x1c] sm:$0xf]
      %v3000 = vld [vmem:[%s2993 + $0x24] sm:$0xf]
      %v3001 = vld [vmem:[%s2993 + $0x28] sm:$0xf]
      %v3002 = vld [vmem:[%s2993 + $0x30] sm:$0xf]
      %v3003 = vld [vmem:[%s2993 + $0x34] sm:$0xf]
      %v3004 = vld [vmem:[%s2993 + $0x3c] sm:$0xf]
      %v3005 = vld [vmem:[%s2993 + $0x40] sm:$0xf]
      %v3006 = vld [vmem:[%s2993 + $0x48] sm:$0xf]
      %v3007 = vld [vmem:[%s2993 + $0x4c] sm:$0xf]
      %v3008 = vld [vmem:[%s2993 + $0x54] sm:$0xf]
      %v3009 = vld [vmem:[%s2993 + $0x58] sm:$0xf]
      %v3010 = vld [vmem:[%s2993 + $0x60] sm:$0xf]
      %v3011 = vld [vmem:[%s2993 + $0x64] sm:$0xf]
      %v3012 = vld [vmem:[%s2993 + $0x6c] sm:$0xf]
      %v3013 = vld [vmem:[%s2993 + $0x70] sm:$0xf]
      %v3014 = vld [vmem:[%s2993 + $0x78] sm:$0xf]
      %v3015 = vld [vmem:[%s2993 + $0x7c] sm:$0xf]
      %v3016 = vld [vmem:[%s2993 + $0x84] sm:$0xf]
      %v3017 = vld [vmem:[%s2993 + $0x88] sm:$0xf]
      %v3018 = vld [vmem:[%s2993 + $0x90] sm:$0xf]
      %v3019 = vld [vmem:[%s2993 + $0x94] sm:$0xf]
      %v3020 = vld [vmem:[%s2993 + $0x9c] sm:$0xf]
      %v3021 = vld [vmem:[%s2993 + $0xa0] sm:$0xf]
      %v3022 = vld [vmem:[%s2993 + $0xa8] sm:$0xf]
      %v3023 = vld [vmem:[%s2993 + $0xac] sm:$0xf]
      %v3024 = vld [vmem:[%s2993 + $0xb4] sm:$0xf]
      %v3025 = vld [vmem:[%s2993 + $0xb8] sm:$0xf]
      %3058 = vrot.lane.b32.xlu0 %v2994, 24
      %v3059 = vpop.permute.xlu0 %3058
      %3060 = vrot.lane.b32.xlu0 %v2995, 24
      %v3061 = vpop.permute.xlu0 %3060
      %3062 = vrot.lane.b32.xlu0 %v2996, 24
      %v3063 = vpop.permute.xlu0 %3062
      %3064 = vrot.lane.b32.xlu0 %v2997, 24
      %v3065 = vpop.permute.xlu0 %3064
      %3066 = vrot.lane.b32.xlu0 %v2998, 24
      %v3067 = vpop.permute.xlu0 %3066
      %3068 = vrot.lane.b32.xlu0 %v2999, 24
      %v3069 = vpop.permute.xlu0 %3068
      %3070 = vrot.lane.b32.xlu0 %v3000, 24
      %v3071 = vpop.permute.xlu0 %3070
      %3072 = vrot.lane.b32.xlu0 %v3001, 24
      %v3073 = vpop.permute.xlu0 %3072
      %3074 = vrot.lane.b32.xlu0 %v3002, 24
      %v3075 = vpop.permute.xlu0 %3074
      %3076 = vrot.lane.b32.xlu0 %v3003, 24
      %v3077 = vpop.permute.xlu0 %3076
      %3078 = vrot.lane.b32.xlu0 %v3004, 24
      %v3079 = vpop.permute.xlu0 %3078
      %3080 = vrot.lane.b32.xlu0 %v3005, 24
      %v3081 = vpop.permute.xlu0 %3080
      %3082 = vrot.lane.b32.xlu0 %v3006, 24
      %v3083 = vpop.permute.xlu0 %3082
      %3084 = vrot.lane.b32.xlu0 %v3007, 24
      %v3085 = vpop.permute.xlu0 %3084
      %3086 = vrot.lane.b32.xlu0 %v3008, 24
      %v3087 = vpop.permute.xlu0 %3086
      %3088 = vrot.lane.b32.xlu0 %v3009, 24
      %v3089 = vpop.permute.xlu0 %3088
      %3090 = vrot.lane.b32.xlu0 %v3010, 24
      %v3091 = vpop.permute.xlu0 %3090
      %3092 = vrot.lane.b32.xlu0 %v3011, 24
      %v3093 = vpop.permute.xlu0 %3092
      %3094 = vrot.lane.b32.xlu0 %v3012, 24
      %v3095 = vpop.permute.xlu0 %3094
      %3096 = vrot.lane.b32.xlu0 %v3013, 24
      %v3097 = vpop.permute.xlu0 %3096
      %3098 = vrot.lane.b32.xlu0 %v3014, 24
      %v3099 = vpop.permute.xlu0 %3098
      %3100 = vrot.lane.b32.xlu0 %v3015, 24
      %v3101 = vpop.permute.xlu0 %3100
      %3102 = vrot.lane.b32.xlu0 %v3016, 24
      %v3103 = vpop.permute.xlu0 %3102
      %3104 = vrot.lane.b32.xlu0 %v3017, 24
      %v3105 = vpop.permute.xlu0 %3104
      %3106 = vrot.lane.b32.xlu0 %v3018, 24
      %v3107 = vpop.permute.xlu0 %3106
      %3108 = vrot.lane.b32.xlu0 %v3019, 24
      %v3109 = vpop.permute.xlu0 %3108
      %3110 = vrot.lane.b32.xlu0 %v3020, 24
      %v3111 = vpop.permute.xlu0 %3110
      %3112 = vrot.lane.b32.xlu0 %v3021, 24
      %v3113 = vpop.permute.xlu0 %3112
      %3114 = vrot.lane.b32.xlu0 %v3022, 24
      %v3115 = vpop.permute.xlu0 %3114
      %3116 = vrot.lane.b32.xlu0 %v3023, 24
      %v3117 = vpop.permute.xlu0 %3116
      %3118 = vrot.lane.b32.xlu0 %v3024, 24
      %v3119 = vpop.permute.xlu0 %3118
      %3120 = vrot.lane.b32.xlu0 %v3025, 24
      %v3121 = vpop.permute.xlu0 %3120
      %vm3154 = vcmask 224448
      %3155 = vst.msk [vmem:[#allocation3] sm:$0xf] %vm3154, %v3059
      %3156 = vst.msk [vmem:[#allocation3 + $0x4] sm:$0xf] %vm3154, %v3061
      %3157 = vst.msk [vmem:[#allocation3 + $0x8] sm:$0xf] %vm3154, %v3063
      %3158 = vst.msk [vmem:[#allocation3 + $0xc] sm:$0xf] %vm3154, %v3065
      %3159 = vst.msk [vmem:[#allocation3 + $0x10] sm:$0xf] %vm3154, %v3067
      %3160 = vst.msk [vmem:[#allocation3 + $0x14] sm:$0xf] %vm3154, %v3069
      %3161 = vst.msk [vmem:[#allocation3 + $0x18] sm:$0xf] %vm3154, %v3071
      %3162 = vst.msk [vmem:[#allocation3 + $0x1c] sm:$0xf] %vm3154, %v3073
      %3163 = vst.msk [vmem:[#allocation3 + $0x20] sm:$0xf] %vm3154, %v3075
      %3164 = vst.msk [vmem:[#allocation3 + $0x24] sm:$0xf] %vm3154, %v3077
      %3165 = vst.msk [vmem:[#allocation3 + $0x28] sm:$0xf] %vm3154, %v3079
      %3166 = vst.msk [vmem:[#allocation3 + $0x2c] sm:$0xf] %vm3154, %v3081
      %3167 = vst.msk [vmem:[#allocation3 + $0x30] sm:$0xf] %vm3154, %v3083
      %3168 = vst.msk [vmem:[#allocation3 + $0x34] sm:$0xf] %vm3154, %v3085
      %3169 = vst.msk [vmem:[#allocation3 + $0x38] sm:$0xf] %vm3154, %v3087
      %3170 = vst.msk [vmem:[#allocation3 + $0x3c] sm:$0xf] %vm3154, %v3089
      %3171 = vst.msk [vmem:[#allocation3 + $0x40] sm:$0xf] %vm3154, %v3091
      %3172 = vst.msk [vmem:[#allocation3 + $0x44] sm:$0xf] %vm3154, %v3093
      %3173 = vst.msk [vmem:[#allocation3 + $0x48] sm:$0xf] %vm3154, %v3095
      %3174 = vst.msk [vmem:[#allocation3 + $0x4c] sm:$0xf] %vm3154, %v3097
      %3175 = vst.msk [vmem:[#allocation3 + $0x50] sm:$0xf] %vm3154, %v3099
      %3176 = vst.msk [vmem:[#allocation3 + $0x54] sm:$0xf] %vm3154, %v3101
      %3177 = vst.msk [vmem:[#allocation3 + $0x58] sm:$0xf] %vm3154, %v3103
      %3178 = vst.msk [vmem:[#allocation3 + $0x5c] sm:$0xf] %vm3154, %v3105
      %3179 = vst.msk [vmem:[#allocation3 + $0x60] sm:$0xf] %vm3154, %v3107
      %3180 = vst.msk [vmem:[#allocation3 + $0x64] sm:$0xf] %vm3154, %v3109
      %3181 = vst.msk [vmem:[#allocation3 + $0x68] sm:$0xf] %vm3154, %v3111
      %3182 = vst.msk [vmem:[#allocation3 + $0x6c] sm:$0xf] %vm3154, %v3113
      %3183 = vst.msk [vmem:[#allocation3 + $0x70] sm:$0xf] %vm3154, %v3115
      %3184 = vst.msk [vmem:[#allocation3 + $0x74] sm:$0xf] %vm3154, %v3117
      %3185 = vst.msk [vmem:[#allocation3 + $0x78] sm:$0xf] %vm3154, %v3119
      %3186 = vst.msk [vmem:[#allocation3 + $0x7c] sm:$0xf] %vm3154, %v3121
      %v3187 = vld [vmem:[%s2993] sm:$0xf]
      %v3188 = vld [vmem:[%s2993 + $0x4] sm:$0xf]
      %v3189 = vld [vmem:[%s2993 + $0x8] sm:$0x1]
      %v3190 = vld [vmem:[%s2993 + $0xc] sm:$0xf]
      %v3191 = vld [vmem:[%s2993 + $0x10] sm:$0xf]
      %v3192 = vld [vmem:[%s2993 + $0x14] sm:$0x1]
      %v3193 = vld [vmem:[%s2993 + $0x18] sm:$0xf]
      %v3194 = vld [vmem:[%s2993 + $0x1c] sm:$0xf]
      %v3195 = vld [vmem:[%s2993 + $0x20] sm:$0x1]
      %v3196 = vld [vmem:[%s2993 + $0x24] sm:$0xf]
      %v3197 = vld [vmem:[%s2993 + $0x28] sm:$0xf]
      %v3198 = vld [vmem:[%s2993 + $0x2c] sm:$0x1]
      %v3199 = vld [vmem:[%s2993 + $0x30] sm:$0xf]
      %v3200 = vld [vmem:[%s2993 + $0x34] sm:$0xf]
      %v3201 = vld [vmem:[%s2993 + $0x38] sm:$0x1]
      %v3202 = vld [vmem:[%s2993 + $0x3c] sm:$0xf]
      %v3203 = vld [vmem:[%s2993 + $0x40] sm:$0xf]
      %v3204 = vld [vmem:[%s2993 + $0x44] sm:$0x1]
      %v3205 = vld [vmem:[%s2993 + $0x48] sm:$0xf]
      %v3206 = vld [vmem:[%s2993 + $0x4c] sm:$0xf]
      %v3207 = vld [vmem:[%s2993 + $0x50] sm:$0x1]
      %v3208 = vld [vmem:[%s2993 + $0x54] sm:$0xf]
      %v3209 = vld [vmem:[%s2993 + $0x58] sm:$0xf]
      %v3210 = vld [vmem:[%s2993 + $0x5c] sm:$0x1]
      %v3211 = vld [vmem:[%s2993 + $0x60] sm:$0xf]
      %v3212 = vld [vmem:[%s2993 + $0x64] sm:$0xf]
      %v3213 = vld [vmem:[%s2993 + $0x68] sm:$0x1]
      %v3214 = vld [vmem:[%s2993 + $0x6c] sm:$0xf]
      %v3215 = vld [vmem:[%s2993 + $0x70] sm:$0xf]
      %v3216 = vld [vmem:[%s2993 + $0x74] sm:$0x1]
      %v3217 = vld [vmem:[%s2993 + $0x78] sm:$0xf]
      %v3218 = vld [vmem:[%s2993 + $0x7c] sm:$0xf]
      %v3219 = vld [vmem:[%s2993 + $0x80] sm:$0x1]
      %v3220 = vld [vmem:[%s2993 + $0x84] sm:$0xf]
      %v3221 = vld [vmem:[%s2993 + $0x88] sm:$0xf]
      %v3222 = vld [vmem:[%s2993 + $0x8c] sm:$0x1]
      %v3223 = vld [vmem:[%s2993 + $0x90] sm:$0xf]
      %v3224 = vld [vmem:[%s2993 + $0x94] sm:$0xf]
      %v3225 = vld [vmem:[%s2993 + $0x98] sm:$0x1]
      %v3226 = vld [vmem:[%s2993 + $0x9c] sm:$0xf]
      %v3227 = vld [vmem:[%s2993 + $0xa0] sm:$0xf]
      %v3228 = vld [vmem:[%s2993 + $0xa4] sm:$0x1]
      %v3229 = vld [vmem:[%s2993 + $0xa8] sm:$0xf]
      %v3230 = vld [vmem:[%s2993 + $0xac] sm:$0xf]
      %v3231 = vld [vmem:[%s2993 + $0xb0] sm:$0x1]
      %v3232 = vld [vmem:[%s2993 + $0xb4] sm:$0xf]
      %v3233 = vld [vmem:[%s2993 + $0xb8] sm:$0xf]
      %v3234 = vld [vmem:[%s2993 + $0xbc] sm:$0x1]
      %v3236 = vshrl.u32 %v3187, 16
      %v3238 = vrot.slane %v3236, 4
      %v3239 = vshll.u32 %v3187, 16
      %v3241 = vrot.slane %v3239, 5
      %v3242 = vor.u32 %v3238, %v3241
      %v3243 = vrot.slane %v3242, 4
      %v3245 = vshll.u32 %v3188, 16
      %v3247 = vrot.slane %v3245, 5
      %v3248 = vsel %vm1048, %v3243, %v3247
      %v3249 = vshrl.u32 %v3188, 16
      %v3251 = vrot.slane %v3249, 4
      %v3252 = vor.u32 %v3251, %v3247
      %v3253 = vrot.slane %v3252, 4
      %v3255 = vshll.u32 %v3189, 16
      %v3257 = vrot.slane %v3255, 5
      %v3258 = vsel %vm1048, %v3253, %v3257
      %v3260 = vshrl.u32 %v3190, 16
      %v3262 = vrot.slane %v3260, 4
      %v3263 = vshll.u32 %v3190, 16
      %v3265 = vrot.slane %v3263, 5
      %v3266 = vor.u32 %v3262, %v3265
      %v3267 = vrot.slane %v3266, 4
      %v3269 = vshll.u32 %v3191, 16
      %v3271 = vrot.slane %v3269, 5
      %v3272 = vsel %vm1048, %v3267, %v3271
      %v3273 = vshrl.u32 %v3191, 16
      %v3275 = vrot.slane %v3273, 4
      %v3276 = vor.u32 %v3275, %v3271
      %v3277 = vrot.slane %v3276, 4
      %v3279 = vshll.u32 %v3192, 16
      %v3281 = vrot.slane %v3279, 5
      %v3282 = vsel %vm1048, %v3277, %v3281
      %v3284 = vshrl.u32 %v3193, 16
      %v3286 = vrot.slane %v3284, 4
      %v3287 = vshll.u32 %v3193, 16
      %v3289 = vrot.slane %v3287, 5
      %v3290 = vor.u32 %v3286, %v3289
      %v3291 = vrot.slane %v3290, 4
      %v3293 = vshll.u32 %v3194, 16
      %v3295 = vrot.slane %v3293, 5
      %v3296 = vsel %vm1048, %v3291, %v3295
      %v3297 = vshrl.u32 %v3194, 16
      %v3299 = vrot.slane %v3297, 4
      %v3300 = vor.u32 %v3299, %v3295
      %v3301 = vrot.slane %v3300, 4
      %v3303 = vshll.u32 %v3195, 16
      %v3305 = vrot.slane %v3303, 5
      %v3306 = vsel %vm1048, %v3301, %v3305
      %v3308 = vshrl.u32 %v3196, 16
      %v3310 = vrot.slane %v3308, 4
      %v3311 = vshll.u32 %v3196, 16
      %v3313 = vrot.slane %v3311, 5
      %v3314 = vor.u32 %v3310, %v3313
      %v3315 = vrot.slane %v3314, 4
      %v3317 = vshll.u32 %v3197, 16
      %v3319 = vrot.slane %v3317, 5
      %v3320 = vsel %vm1048, %v3315, %v3319
      %v3321 = vshrl.u32 %v3197, 16
      %v3323 = vrot.slane %v3321, 4
      %v3324 = vor.u32 %v3323, %v3319
      %v3325 = vrot.slane %v3324, 4
      %v3327 = vshll.u32 %v3198, 16
      %v3329 = vrot.slane %v3327, 5
      %v3330 = vsel %vm1048, %v3325, %v3329
      %v3332 = vshrl.u32 %v3199, 16
      %v3334 = vrot.slane %v3332, 4
      %v3335 = vshll.u32 %v3199, 16
      %v3337 = vrot.slane %v3335, 5
      %v3338 = vor.u32 %v3334, %v3337
      %v3339 = vrot.slane %v3338, 4
      %v3341 = vshll.u32 %v3200, 16
      %v3343 = vrot.slane %v3341, 5
      %v3344 = vsel %vm1048, %v3339, %v3343
      %v3345 = vshrl.u32 %v3200, 16
      %v3347 = vrot.slane %v3345, 4
      %v3348 = vor.u32 %v3347, %v3343
      %v3349 = vrot.slane %v3348, 4
      %v3351 = vshll.u32 %v3201, 16
      %v3353 = vrot.slane %v3351, 5
      %v3354 = vsel %vm1048, %v3349, %v3353
      %v3356 = vshrl.u32 %v3202, 16
      %v3358 = vrot.slane %v3356, 4
      %v3359 = vshll.u32 %v3202, 16
      %v3361 = vrot.slane %v3359, 5
      %v3362 = vor.u32 %v3358, %v3361
      %v3363 = vrot.slane %v3362, 4
      %v3365 = vshll.u32 %v3203, 16
      %v3367 = vrot.slane %v3365, 5
      %v3368 = vsel %vm1048, %v3363, %v3367
      %v3369 = vshrl.u32 %v3203, 16
      %v3371 = vrot.slane %v3369, 4
      %v3372 = vor.u32 %v3371, %v3367
      %v3373 = vrot.slane %v3372, 4
      %v3375 = vshll.u32 %v3204, 16
      %v3377 = vrot.slane %v3375, 5
      %v3378 = vsel %vm1048, %v3373, %v3377
      %v3380 = vshrl.u32 %v3205, 16
      %v3382 = vrot.slane %v3380, 4
      %v3383 = vshll.u32 %v3205, 16
      %v3385 = vrot.slane %v3383, 5
      %v3386 = vor.u32 %v3382, %v3385
      %v3387 = vrot.slane %v3386, 4
      %v3389 = vshll.u32 %v3206, 16
      %v3391 = vrot.slane %v3389, 5
      %v3392 = vsel %vm1048, %v3387, %v3391
      %v3393 = vshrl.u32 %v3206, 16
      %v3395 = vrot.slane %v3393, 4
      %v3396 = vor.u32 %v3395, %v3391
      %v3397 = vrot.slane %v3396, 4
      %v3399 = vshll.u32 %v3207, 16
      %v3401 = vrot.slane %v3399, 5
      %v3402 = vsel %vm1048, %v3397, %v3401
      %v3404 = vshrl.u32 %v3208, 16
      %v3406 = vrot.slane %v3404, 4
      %v3407 = vshll.u32 %v3208, 16
      %v3409 = vrot.slane %v3407, 5
      %v3410 = vor.u32 %v3406, %v3409
      %v3411 = vrot.slane %v3410, 4
      %v3413 = vshll.u32 %v3209, 16
      %v3415 = vrot.slane %v3413, 5
      %v3416 = vsel %vm1048, %v3411, %v3415
      %v3417 = vshrl.u32 %v3209, 16
      %v3419 = vrot.slane %v3417, 4
      %v3420 = vor.u32 %v3419, %v3415
      %v3421 = vrot.slane %v3420, 4
      %v3423 = vshll.u32 %v3210, 16
      %v3425 = vrot.slane %v3423, 5
      %v3426 = vsel %vm1048, %v3421, %v3425
      %v3428 = vshrl.u32 %v3211, 16
      %v3430 = vrot.slane %v3428, 4
      %v3431 = vshll.u32 %v3211, 16
      %v3433 = vrot.slane %v3431, 5
      %v3434 = vor.u32 %v3430, %v3433
      %v3435 = vrot.slane %v3434, 4
      %v3437 = vshll.u32 %v3212, 16
      %v3439 = vrot.slane %v3437, 5
      %v3440 = vsel %vm1048, %v3435, %v3439
      %v3441 = vshrl.u32 %v3212, 16
      %v3443 = vrot.slane %v3441, 4
      %v3444 = vor.u32 %v3443, %v3439
      %v3445 = vrot.slane %v3444, 4
      %v3447 = vshll.u32 %v3213, 16
      %v3449 = vrot.slane %v3447, 5
      %v3450 = vsel %vm1048, %v3445, %v3449
      %v3452 = vshrl.u32 %v3214, 16
      %v3454 = vrot.slane %v3452, 4
      %v3455 = vshll.u32 %v3214, 16
      %v3457 = vrot.slane %v3455, 5
      %v3458 = vor.u32 %v3454, %v3457
      %v3459 = vrot.slane %v3458, 4
      %v3461 = vshll.u32 %v3215, 16
      %v3463 = vrot.slane %v3461, 5
      %v3464 = vsel %vm1048, %v3459, %v3463
      %v3465 = vshrl.u32 %v3215, 16
      %v3467 = vrot.slane %v3465, 4
      %v3468 = vor.u32 %v3467, %v3463
      %v3469 = vrot.slane %v3468, 4
      %v3471 = vshll.u32 %v3216, 16
      %v3473 = vrot.slane %v3471, 5
      %v3474 = vsel %vm1048, %v3469, %v3473
      %v3476 = vshrl.u32 %v3217, 16
      %v3478 = vrot.slane %v3476, 4
      %v3479 = vshll.u32 %v3217, 16
      %v3481 = vrot.slane %v3479, 5
      %v3482 = vor.u32 %v3478, %v3481
      %v3483 = vrot.slane %v3482, 4
      %v3485 = vshll.u32 %v3218, 16
      %v3487 = vrot.slane %v3485, 5
      %v3488 = vsel %vm1048, %v3483, %v3487
      %v3489 = vshrl.u32 %v3218, 16
      %v3491 = vrot.slane %v3489, 4
      %v3492 = vor.u32 %v3491, %v3487
      %v3493 = vrot.slane %v3492, 4
      %v3495 = vshll.u32 %v3219, 16
      %v3497 = vrot.slane %v3495, 5
      %v3498 = vsel %vm1048, %v3493, %v3497
      %v3500 = vshrl.u32 %v3220, 16
      %v3502 = vrot.slane %v3500, 4
      %v3503 = vshll.u32 %v3220, 16
      %v3505 = vrot.slane %v3503, 5
      %v3506 = vor.u32 %v3502, %v3505
      %v3507 = vrot.slane %v3506, 4
      %v3509 = vshll.u32 %v3221, 16
      %v3511 = vrot.slane %v3509, 5
      %v3512 = vsel %vm1048, %v3507, %v3511
      %v3513 = vshrl.u32 %v3221, 16
      %v3515 = vrot.slane %v3513, 4
      %v3516 = vor.u32 %v3515, %v3511
      %v3517 = vrot.slane %v3516, 4
      %v3519 = vshll.u32 %v3222, 16
      %v3521 = vrot.slane %v3519, 5
      %v3522 = vsel %vm1048, %v3517, %v3521
      %v3524 = vshrl.u32 %v3223, 16
      %v3526 = vrot.slane %v3524, 4
      %v3527 = vshll.u32 %v3223, 16
      %v3529 = vrot.slane %v3527, 5
      %v3530 = vor.u32 %v3526, %v3529
      %v3531 = vrot.slane %v3530, 4
      %v3533 = vshll.u32 %v3224, 16
      %v3535 = vrot.slane %v3533, 5
      %v3536 = vsel %vm1048, %v3531, %v3535
      %v3537 = vshrl.u32 %v3224, 16
      %v3539 = vrot.slane %v3537, 4
      %v3540 = vor.u32 %v3539, %v3535
      %v3541 = vrot.slane %v3540, 4
      %v3543 = vshll.u32 %v3225, 16
      %v3545 = vrot.slane %v3543, 5
      %v3546 = vsel %vm1048, %v3541, %v3545
      %v3548 = vshrl.u32 %v3226, 16
      %v3550 = vrot.slane %v3548, 4
      %v3551 = vshll.u32 %v3226, 16
      %v3553 = vrot.slane %v3551, 5
      %v3554 = vor.u32 %v3550, %v3553
      %v3555 = vrot.slane %v3554, 4
      %v3557 = vshll.u32 %v3227, 16
      %v3559 = vrot.slane %v3557, 5
      %v3560 = vsel %vm1048, %v3555, %v3559
      %v3561 = vshrl.u32 %v3227, 16
      %v3563 = vrot.slane %v3561, 4
      %v3564 = vor.u32 %v3563, %v3559
      %v3565 = vrot.slane %v3564, 4
      %v3567 = vshll.u32 %v3228, 16
      %v3569 = vrot.slane %v3567, 5
      %v3570 = vsel %vm1048, %v3565, %v3569
      %v3572 = vshrl.u32 %v3229, 16
      %v3574 = vrot.slane %v3572, 4
      %v3575 = vshll.u32 %v3229, 16
      %v3577 = vrot.slane %v3575, 5
      %v3578 = vor.u32 %v3574, %v3577
      %v3579 = vrot.slane %v3578, 4
      %v3581 = vshll.u32 %v3230, 16
      %v3583 = vrot.slane %v3581, 5
      %v3584 = vsel %vm1048, %v3579, %v3583
      %v3585 = vshrl.u32 %v3230, 16
      %v3587 = vrot.slane %v3585, 4
      %v3588 = vor.u32 %v3587, %v3583
      %v3589 = vrot.slane %v3588, 4
      %v3591 = vshll.u32 %v3231, 16
      %v3593 = vrot.slane %v3591, 5
      %v3594 = vsel %vm1048, %v3589, %v3593
      %v3596 = vshrl.u32 %v3232, 16
      %v3598 = vrot.slane %v3596, 4
      %v3599 = vshll.u32 %v3232, 16
      %v3601 = vrot.slane %v3599, 5
      %v3602 = vor.u32 %v3598, %v3601
      %v3603 = vrot.slane %v3602, 4
      %v3605 = vshll.u32 %v3233, 16
      %v3607 = vrot.slane %v3605, 5
      %v3608 = vsel %vm1048, %v3603, %v3607
      %v3609 = vshrl.u32 %v3233, 16
      %v3611 = vrot.slane %v3609, 4
      %v3612 = vor.u32 %v3611, %v3607
      %v3613 = vrot.slane %v3612, 4
      %v3615 = vshll.u32 %v3234, 16
      %v3617 = vrot.slane %v3615, 5
      %v3618 = vsel %vm1048, %v3613, %v3617
      %3619 = vrot.lane.b32.xlu0 %v3248, 28
      %v3620 = vpop.permute.xlu0 %3619
      %3621 = vrot.lane.b32.xlu0 %v3258, 28
      %v3622 = vpop.permute.xlu0 %3621
      %3623 = vrot.lane.b32.xlu0 %v3272, 28
      %v3624 = vpop.permute.xlu0 %3623
      %3625 = vrot.lane.b32.xlu0 %v3282, 28
      %v3626 = vpop.permute.xlu0 %3625
      %3627 = vrot.lane.b32.xlu0 %v3296, 28
      %v3628 = vpop.permute.xlu0 %3627
      %3629 = vrot.lane.b32.xlu0 %v3306, 28
      %v3630 = vpop.permute.xlu0 %3629
      %3631 = vrot.lane.b32.xlu0 %v3320, 28
      %v3632 = vpop.permute.xlu0 %3631
      %3633 = vrot.lane.b32.xlu0 %v3330, 28
      %v3634 = vpop.permute.xlu0 %3633
      %3635 = vrot.lane.b32.xlu0 %v3344, 28
      %v3636 = vpop.permute.xlu0 %3635
      %3637 = vrot.lane.b32.xlu0 %v3354, 28
      %v3638 = vpop.permute.xlu0 %3637
      %3639 = vrot.lane.b32.xlu0 %v3368, 28
      %v3640 = vpop.permute.xlu0 %3639
      %3641 = vrot.lane.b32.xlu0 %v3378, 28
      %v3642 = vpop.permute.xlu0 %3641
      %3643 = vrot.lane.b32.xlu0 %v3392, 28
      %v3644 = vpop.permute.xlu0 %3643
      %3645 = vrot.lane.b32.xlu0 %v3402, 28
      %v3646 = vpop.permute.xlu0 %3645
      %3647 = vrot.lane.b32.xlu0 %v3416, 28
      %v3648 = vpop.permute.xlu0 %3647
      %3649 = vrot.lane.b32.xlu0 %v3426, 28
      %v3650 = vpop.permute.xlu0 %3649
      %3651 = vrot.lane.b32.xlu0 %v3440, 28
      %v3652 = vpop.permute.xlu0 %3651
      %3653 = vrot.lane.b32.xlu0 %v3450, 28
      %v3654 = vpop.permute.xlu0 %3653
      %3655 = vrot.lane.b32.xlu0 %v3464, 28
      %v3656 = vpop.permute.xlu0 %3655
      %3657 = vrot.lane.b32.xlu0 %v3474, 28
      %v3658 = vpop.permute.xlu0 %3657
      %3659 = vrot.lane.b32.xlu0 %v3488, 28
      %v3660 = vpop.permute.xlu0 %3659
      %3661 = vrot.lane.b32.xlu0 %v3498, 28
      %v3662 = vpop.permute.xlu0 %3661
      %3663 = vrot.lane.b32.xlu0 %v3512, 28
      %v3664 = vpop.permute.xlu0 %3663
      %3665 = vrot.lane.b32.xlu0 %v3522, 28
      %v3666 = vpop.permute.xlu0 %3665
      %3667 = vrot.lane.b32.xlu0 %v3536, 28
      %v3668 = vpop.permute.xlu0 %3667
      %3669 = vrot.lane.b32.xlu0 %v3546, 28
      %v3670 = vpop.permute.xlu0 %3669
      %3671 = vrot.lane.b32.xlu0 %v3560, 28
      %v3672 = vpop.permute.xlu0 %3671
      %3673 = vrot.lane.b32.xlu0 %v3570, 28
      %v3674 = vpop.permute.xlu0 %3673
      %3675 = vrot.lane.b32.xlu0 %v3584, 28
      %v3676 = vpop.permute.xlu0 %3675
      %3677 = vrot.lane.b32.xlu0 %v3594, 28
      %v3678 = vpop.permute.xlu0 %3677
      %3679 = vrot.lane.b32.xlu0 %v3608, 28
      %v3680 = vpop.permute.xlu0 %3679
      %3681 = vrot.lane.b32.xlu0 %v3618, 28
      %v3682 = vpop.permute.xlu0 %3681
      %vm3715 = vcmask 257248
      %3716 = vst.msk [vmem:[#allocation3] sm:$0xf] %vm3715, %v3620
      %3717 = vst.msk [vmem:[#allocation3 + $0x4] sm:$0xf] %vm3715, %v3622
      %3718 = vst.msk [vmem:[#allocation3 + $0x8] sm:$0xf] %vm3715, %v3624
      %3719 = vst.msk [vmem:[#allocation3 + $0xc] sm:$0xf] %vm3715, %v3626
      %3720 = vst.msk [vmem:[#allocation3 + $0x10] sm:$0xf] %vm3715, %v3628
      %3721 = vst.msk [vmem:[#allocation3 + $0x14] sm:$0xf] %vm3715, %v3630
      %3722 = vst.msk [vmem:[#allocation3 + $0x18] sm:$0xf] %vm3715, %v3632
      %3723 = vst.msk [vmem:[#allocation3 + $0x1c] sm:$0xf] %vm3715, %v3634
      %3724 = vst.msk [vmem:[#allocation3 + $0x20] sm:$0xf] %vm3715, %v3636
      %3725 = vst.msk [vmem:[#allocation3 + $0x24] sm:$0xf] %vm3715, %v3638
      %3726 = vst.msk [vmem:[#allocation3 + $0x28] sm:$0xf] %vm3715, %v3640
      %3727 = vst.msk [vmem:[#allocation3 + $0x2c] sm:$0xf] %vm3715, %v3642
      %3728 = vst.msk [vmem:[#allocation3 + $0x30] sm:$0xf] %vm3715, %v3644
      %3729 = vst.msk [vmem:[#allocation3 + $0x34] sm:$0xf] %vm3715, %v3646
      %3730 = vst.msk [vmem:[#allocation3 + $0x38] sm:$0xf] %vm3715, %v3648
      %3731 = vst.msk [vmem:[#allocation3 + $0x3c] sm:$0xf] %vm3715, %v3650
      %3732 = vst.msk [vmem:[#allocation3 + $0x40] sm:$0xf] %vm3715, %v3652
      %3733 = vst.msk [vmem:[#allocation3 + $0x44] sm:$0xf] %vm3715, %v3654
      %3734 = vst.msk [vmem:[#allocation3 + $0x48] sm:$0xf] %vm3715, %v3656
      %3735 = vst.msk [vmem:[#allocation3 + $0x4c] sm:$0xf] %vm3715, %v3658
      %3736 = vst.msk [vmem:[#allocation3 + $0x50] sm:$0xf] %vm3715, %v3660
      %3737 = vst.msk [vmem:[#allocation3 + $0x54] sm:$0xf] %vm3715, %v3662
      %3738 = vst.msk [vmem:[#allocation3 + $0x58] sm:$0xf] %vm3715, %v3664
      %3739 = vst.msk [vmem:[#allocation3 + $0x5c] sm:$0xf] %vm3715, %v3666
      %3740 = vst.msk [vmem:[#allocation3 + $0x60] sm:$0xf] %vm3715, %v3668
      %3741 = vst.msk [vmem:[#allocation3 + $0x64] sm:$0xf] %vm3715, %v3670
      %3742 = vst.msk [vmem:[#allocation3 + $0x68] sm:$0xf] %vm3715, %v3672
      %3743 = vst.msk [vmem:[#allocation3 + $0x6c] sm:$0xf] %vm3715, %v3674
      %3744 = vst.msk [vmem:[#allocation3 + $0x70] sm:$0xf] %vm3715, %v3676
      %3745 = vst.msk [vmem:[#allocation3 + $0x74] sm:$0xf] %vm3715, %v3678
      %3746 = vst.msk [vmem:[#allocation3 + $0x78] sm:$0xf] %vm3715, %v3680
      %3747 = vst.msk [vmem:[#allocation3 + $0x7c] sm:$0xf] %vm3715, %v3682
      %v3748 = vld [vmem:[%s2993] sm:$0xe]
      %v3749 = vld [vmem:[%s2993 + $0x4] sm:$0xf]
      %v3750 = vld [vmem:[%s2993 + $0x8] sm:$0x1]
      %v3751 = vld [vmem:[%s2993 + $0xc] sm:$0xe]
      %v3752 = vld [vmem:[%s2993 + $0x10] sm:$0xf]
      %v3753 = vld [vmem:[%s2993 + $0x14] sm:$0x1]
      %v3754 = vld [vmem:[%s2993 + $0x18] sm:$0xe]
      %v3755 = vld [vmem:[%s2993 + $0x1c] sm:$0xf]
      %v3756 = vld [vmem:[%s2993 + $0x20] sm:$0x1]
      %v3757 = vld [vmem:[%s2993 + $0x24] sm:$0xe]
      %v3758 = vld [vmem:[%s2993 + $0x28] sm:$0xf]
      %v3759 = vld [vmem:[%s2993 + $0x2c] sm:$0x1]
      %v3760 = vld [vmem:[%s2993 + $0x30] sm:$0xe]
      %v3761 = vld [vmem:[%s2993 + $0x34] sm:$0xf]
      %v3762 = vld [vmem:[%s2993 + $0x38] sm:$0x1]
      %v3763 = vld [vmem:[%s2993 + $0x3c] sm:$0xe]
      %v3764 = vld [vmem:[%s2993 + $0x40] sm:$0xf]
      %v3765 = vld [vmem:[%s2993 + $0x44] sm:$0x1]
      %v3766 = vld [vmem:[%s2993 + $0x48] sm:$0xe]
      %v3767 = vld [vmem:[%s2993 + $0x4c] sm:$0xf]
      %v3768 = vld [vmem:[%s2993 + $0x50] sm:$0x1]
      %v3769 = vld [vmem:[%s2993 + $0x54] sm:$0xe]
      %v3770 = vld [vmem:[%s2993 + $0x58] sm:$0xf]
      %v3771 = vld [vmem:[%s2993 + $0x5c] sm:$0x1]
      %v3772 = vld [vmem:[%s2993 + $0x60] sm:$0xe]
      %v3773 = vld [vmem:[%s2993 + $0x64] sm:$0xf]
      %v3774 = vld [vmem:[%s2993 + $0x68] sm:$0x1]
      %v3775 = vld [vmem:[%s2993 + $0x6c] sm:$0xe]
      %v3776 = vld [vmem:[%s2993 + $0x70] sm:$0xf]
      %v3777 = vld [vmem:[%s2993 + $0x74] sm:$0x1]
      %v3778 = vld [vmem:[%s2993 + $0x78] sm:$0xe]
      %v3779 = vld [vmem:[%s2993 + $0x7c] sm:$0xf]
      %v3780 = vld [vmem:[%s2993 + $0x80] sm:$0x1]
      %v3781 = vld [vmem:[%s2993 + $0x84] sm:$0xe]
      %v3782 = vld [vmem:[%s2993 + $0x88] sm:$0xf]
      %v3783 = vld [vmem:[%s2993 + $0x8c] sm:$0x1]
      %v3784 = vld [vmem:[%s2993 + $0x90] sm:$0xe]
      %v3785 = vld [vmem:[%s2993 + $0x94] sm:$0xf]
      %v3786 = vld [vmem:[%s2993 + $0x98] sm:$0x1]
      %v3787 = vld [vmem:[%s2993 + $0x9c] sm:$0xe]
      %v3788 = vld [vmem:[%s2993 + $0xa0] sm:$0xf]
      %v3789 = vld [vmem:[%s2993 + $0xa4] sm:$0x1]
      %v3790 = vld [vmem:[%s2993 + $0xa8] sm:$0xe]
      %v3791 = vld [vmem:[%s2993 + $0xac] sm:$0xf]
      %v3792 = vld [vmem:[%s2993 + $0xb0] sm:$0x1]
      %v3793 = vld [vmem:[%s2993 + $0xb4] sm:$0xe]
      %v3794 = vld [vmem:[%s2993 + $0xb8] sm:$0xf]
      %v3795 = vld [vmem:[%s2993 + $0xbc] sm:$0x1]
      %v3844 = vrot.slane %v3748, 5
      %v3845 = vrot.slane %v3844, 4
      %v3846 = vrot.slane %v3749, 5
      %v3847 = vsel %vm1660, %v3845, %v3846
      %v3848 = vrot.slane %v3846, 4
      %v3849 = vrot.slane %v3750, 5
      %v3850 = vsel %vm1660, %v3848, %v3849
      %v3851 = vrot.slane %v3751, 5
      %v3852 = vrot.slane %v3851, 4
      %v3853 = vrot.slane %v3752, 5
      %v3854 = vsel %vm1660, %v3852, %v3853
      %v3855 = vrot.slane %v3853, 4
      %v3856 = vrot.slane %v3753, 5
      %v3857 = vsel %vm1660, %v3855, %v3856
      %v3858 = vrot.slane %v3754, 5
      %v3859 = vrot.slane %v3858, 4
      %v3860 = vrot.slane %v3755, 5
      %v3861 = vsel %vm1660, %v3859, %v3860
      %v3862 = vrot.slane %v3860, 4
      %v3863 = vrot.slane %v3756, 5
      %v3864 = vsel %vm1660, %v3862, %v3863
      %v3865 = vrot.slane %v3757, 5
      %v3866 = vrot.slane %v3865, 4
      %v3867 = vrot.slane %v3758, 5
      %v3868 = vsel %vm1660, %v3866, %v3867
      %v3869 = vrot.slane %v3867, 4
      %v3870 = vrot.slane %v3759, 5
      %v3871 = vsel %vm1660, %v3869, %v3870
      %v3872 = vrot.slane %v3760, 5
      %v3873 = vrot.slane %v3872, 4
      %v3874 = vrot.slane %v3761, 5
      %v3875 = vsel %vm1660, %v3873, %v3874
      %v3876 = vrot.slane %v3874, 4
      %v3877 = vrot.slane %v3762, 5
      %v3878 = vsel %vm1660, %v3876, %v3877
      %v3879 = vrot.slane %v3763, 5
      %v3880 = vrot.slane %v3879, 4
      %v3881 = vrot.slane %v3764, 5
      %v3882 = vsel %vm1660, %v3880, %v3881
      %v3883 = vrot.slane %v3881, 4
      %v3884 = vrot.slane %v3765, 5
      %v3885 = vsel %vm1660, %v3883, %v3884
      %v3886 = vrot.slane %v3766, 5
      %v3887 = vrot.slane %v3886, 4
      %v3888 = vrot.slane %v3767, 5
      %v3889 = vsel %vm1660, %v3887, %v3888
      %v3890 = vrot.slane %v3888, 4
      %v3891 = vrot.slane %v3768, 5
      %v3892 = vsel %vm1660, %v3890, %v3891
      %v3893 = vrot.slane %v3769, 5
      %v3894 = vrot.slane %v3893, 4
      %v3895 = vrot.slane %v3770, 5
      %v3896 = vsel %vm1660, %v3894, %v3895
      %v3897 = vrot.slane %v3895, 4
      %v3898 = vrot.slane %v3771, 5
      %v3899 = vsel %vm1660, %v3897, %v3898
      %v3900 = vrot.slane %v3772, 5
      %v3901 = vrot.slane %v3900, 4
      %v3902 = vrot.slane %v3773, 5
      %v3903 = vsel %vm1660, %v3901, %v3902
      %v3904 = vrot.slane %v3902, 4
      %v3905 = vrot.slane %v3774, 5
      %v3906 = vsel %vm1660, %v3904, %v3905
      %v3907 = vrot.slane %v3775, 5
      %v3908 = vrot.slane %v3907, 4
      %v3909 = vrot.slane %v3776, 5
      %v3910 = vsel %vm1660, %v3908, %v3909
      %v3911 = vrot.slane %v3909, 4
      %v3912 = vrot.slane %v3777, 5
      %v3913 = vsel %vm1660, %v3911, %v3912
      %v3914 = vrot.slane %v3778, 5
      %v3915 = vrot.slane %v3914, 4
      %v3916 = vrot.slane %v3779, 5
      %v3917 = vsel %vm1660, %v3915, %v3916
      %v3918 = vrot.slane %v3916, 4
      %v3919 = vrot.slane %v3780, 5
      %v3920 = vsel %vm1660, %v3918, %v3919
      %v3921 = vrot.slane %v3781, 5
      %v3922 = vrot.slane %v3921, 4
      %v3923 = vrot.slane %v3782, 5
      %v3924 = vsel %vm1660, %v3922, %v3923
      %v3925 = vrot.slane %v3923, 4
      %v3926 = vrot.slane %v3783, 5
      %v3927 = vsel %vm1660, %v3925, %v3926
      %v3928 = vrot.slane %v3784, 5
      %v3929 = vrot.slane %v3928, 4
      %v3930 = vrot.slane %v3785, 5
      %v3931 = vsel %vm1660, %v3929, %v3930
      %v3932 = vrot.slane %v3930, 4
      %v3933 = vrot.slane %v3786, 5
      %v3934 = vsel %vm1660, %v3932, %v3933
      %v3935 = vrot.slane %v3787, 5
      %v3936 = vrot.slane %v3935, 4
      %v3937 = vrot.slane %v3788, 5
      %v3938 = vsel %vm1660, %v3936, %v3937
      %v3939 = vrot.slane %v3937, 4
      %v3940 = vrot.slane %v3789, 5
      %v3941 = vsel %vm1660, %v3939, %v3940
      %v3942 = vrot.slane %v3790, 5
      %v3943 = vrot.slane %v3942, 4
      %v3944 = vrot.slane %v3791, 5
      %v3945 = vsel %vm1660, %v3943, %v3944
      %v3946 = vrot.slane %v3944, 4
      %v3947 = vrot.slane %v3792, 5
      %v3948 = vsel %vm1660, %v3946, %v3947
      %v3949 = vrot.slane %v3793, 5
      %v3950 = vrot.slane %v3949, 4
      %v3951 = vrot.slane %v3794, 5
      %v3952 = vsel %vm1660, %v3950, %v3951
      %v3953 = vrot.slane %v3951, 4
      %v3954 = vrot.slane %v3795, 5
      %v3955 = vsel %vm1660, %v3953, %v3954
      %3956 = vrot.lane.b32.xlu0 %v3847, 32
      %v3957 = vpop.permute.xlu0 %3956
      %3958 = vrot.lane.b32.xlu0 %v3850, 32
      %v3959 = vpop.permute.xlu0 %3958
      %3960 = vrot.lane.b32.xlu0 %v3854, 32
      %v3961 = vpop.permute.xlu0 %3960
      %3962 = vrot.lane.b32.xlu0 %v3857, 32
      %v3963 = vpop.permute.xlu0 %3962
      %3964 = vrot.lane.b32.xlu0 %v3861, 32
      %v3965 = vpop.permute.xlu0 %3964
      %3966 = vrot.lane.b32.xlu0 %v3864, 32
      %v3967 = vpop.permute.xlu0 %3966
      %3968 = vrot.lane.b32.xlu0 %v3868, 32
      %v3969 = vpop.permute.xlu0 %3968
      %3970 = vrot.lane.b32.xlu0 %v3871, 32
      %v3971 = vpop.permute.xlu0 %3970
      %3972 = vrot.lane.b32.xlu0 %v3875, 32
      %v3973 = vpop.permute.xlu0 %3972
      %3974 = vrot.lane.b32.xlu0 %v3878, 32
      %v3975 = vpop.permute.xlu0 %3974
      %3976 = vrot.lane.b32.xlu0 %v3882, 32
      %v3977 = vpop.permute.xlu0 %3976
      %3978 = vrot.lane.b32.xlu0 %v3885, 32
      %v3979 = vpop.permute.xlu0 %3978
      %3980 = vrot.lane.b32.xlu0 %v3889, 32
      %v3981 = vpop.permute.xlu0 %3980
      %3982 = vrot.lane.b32.xlu0 %v3892, 32
      %v3983 = vpop.permute.xlu0 %3982
      %3984 = vrot.lane.b32.xlu0 %v3896, 32
      %v3985 = vpop.permute.xlu0 %3984
      %3986 = vrot.lane.b32.xlu0 %v3899, 32
      %v3987 = vpop.permute.xlu0 %3986
      %3988 = vrot.lane.b32.xlu0 %v3903, 32
      %v3989 = vpop.permute.xlu0 %3988
      %3990 = vrot.lane.b32.xlu0 %v3906, 32
      %v3991 = vpop.permute.xlu0 %3990
      %3992 = vrot.lane.b32.xlu0 %v3910, 32
      %v3993 = vpop.permute.xlu0 %3992
      %3994 = vrot.lane.b32.xlu0 %v3913, 32
      %v3995 = vpop.permute.xlu0 %3994
      %3996 = vrot.lane.b32.xlu0 %v3917, 32
      %v3997 = vpop.permute.xlu0 %3996
      %3998 = vrot.lane.b32.xlu0 %v3920, 32
      %v3999 = vpop.permute.xlu0 %3998
      %4000 = vrot.lane.b32.xlu0 %v3924, 32
      %v4001 = vpop.permute.xlu0 %4000
      %4002 = vrot.lane.b32.xlu0 %v3927, 32
      %v4003 = vpop.permute.xlu0 %4002
      %4004 = vrot.lane.b32.xlu0 %v3931, 32
      %v4005 = vpop.permute.xlu0 %4004
      %4006 = vrot.lane.b32.xlu0 %v3934, 32
      %v4007 = vpop.permute.xlu0 %4006
      %4008 = vrot.lane.b32.xlu0 %v3938, 32
      %v4009 = vpop.permute.xlu0 %4008
      %4010 = vrot.lane.b32.xlu0 %v3941, 32
      %v4011 = vpop.permute.xlu0 %4010
      %4012 = vrot.lane.b32.xlu0 %v3945, 32
      %v4013 = vpop.permute.xlu0 %4012
      %4014 = vrot.lane.b32.xlu0 %v3948, 32
      %v4015 = vpop.permute.xlu0 %4014
      %4016 = vrot.lane.b32.xlu0 %v3952, 32
      %v4017 = vpop.permute.xlu0 %4016
      %4018 = vrot.lane.b32.xlu0 %v3955, 32
      %v4019 = vpop.permute.xlu0 %4018
      %vm4052 = vcmask 290048
      %4053 = vst.msk [vmem:[#allocation3] sm:$0xf] %vm4052, %v3957
      %4054 = vst.msk [vmem:[#allocation3 + $0x4] sm:$0xf] %vm4052, %v3959
      %4055 = vst.msk [vmem:[#allocation3 + $0x8] sm:$0xf] %vm4052, %v3961
      %4056 = vst.msk [vmem:[#allocation3 + $0xc] sm:$0xf] %vm4052, %v3963
      %4057 = vst.msk [vmem:[#allocation3 + $0x10] sm:$0xf] %vm4052, %v3965
      %4058 = vst.msk [vmem:[#allocation3 + $0x14] sm:$0xf] %vm4052, %v3967
      %4059 = vst.msk [vmem:[#allocation3 + $0x18] sm:$0xf] %vm4052, %v3969
      %4060 = vst.msk [vmem:[#allocation3 + $0x1c] sm:$0xf] %vm4052, %v3971
      %4061 = vst.msk [vmem:[#allocation3 + $0x20] sm:$0xf] %vm4052, %v3973
      %4062 = vst.msk [vmem:[#allocation3 + $0x24] sm:$0xf] %vm4052, %v3975
      %4063 = vst.msk [vmem:[#allocation3 + $0x28] sm:$0xf] %vm4052, %v3977
      %4064 = vst.msk [vmem:[#allocation3 + $0x2c] sm:$0xf] %vm4052, %v3979
      %4065 = vst.msk [vmem:[#allocation3 + $0x30] sm:$0xf] %vm4052, %v3981
      %4066 = vst.msk [vmem:[#allocation3 + $0x34] sm:$0xf] %vm4052, %v3983
      %4067 = vst.msk [vmem:[#allocation3 + $0x38] sm:$0xf] %vm4052, %v3985
      %4068 = vst.msk [vmem:[#allocation3 + $0x3c] sm:$0xf] %vm4052, %v3987
      %4069 = vst.msk [vmem:[#allocation3 + $0x40] sm:$0xf] %vm4052, %v3989
      %4070 = vst.msk [vmem:[#allocation3 + $0x44] sm:$0xf] %vm4052, %v3991
      %4071 = vst.msk [vmem:[#allocation3 + $0x48] sm:$0xf] %vm4052, %v3993
      %4072 = vst.msk [vmem:[#allocation3 + $0x4c] sm:$0xf] %vm4052, %v3995
      %4073 = vst.msk [vmem:[#allocation3 + $0x50] sm:$0xf] %vm4052, %v3997
      %4074 = vst.msk [vmem:[#allocation3 + $0x54] sm:$0xf] %vm4052, %v3999
      %4075 = vst.msk [vmem:[#allocation3 + $0x58] sm:$0xf] %vm4052, %v4001
      %4076 = vst.msk [vmem:[#allocation3 + $0x5c] sm:$0xf] %vm4052, %v4003
      %4077 = vst.msk [vmem:[#allocation3 + $0x60] sm:$0xf] %vm4052, %v4005
      %4078 = vst.msk [vmem:[#allocation3 + $0x64] sm:$0xf] %vm4052, %v4007
      %4079 = vst.msk [vmem:[#allocation3 + $0x68] sm:$0xf] %vm4052, %v4009
      %4080 = vst.msk [vmem:[#allocation3 + $0x6c] sm:$0xf] %vm4052, %v4011
      %4081 = vst.msk [vmem:[#allocation3 + $0x70] sm:$0xf] %vm4052, %v4013
      %4082 = vst.msk [vmem:[#allocation3 + $0x74] sm:$0xf] %vm4052, %v4015
      %4083 = vst.msk [vmem:[#allocation3 + $0x78] sm:$0xf] %vm4052, %v4017
      %4084 = vst.msk [vmem:[#allocation3 + $0x7c] sm:$0xf] %vm4052, %v4019
      %v4085 = vld [vmem:[#allocation3] sm:$0xf]
      %v4086 = vld [vmem:[#allocation3 + $0x4] sm:$0xf]
      %v4087 = vld [vmem:[#allocation3 + $0x8] sm:$0xf]
      %v4088 = vld [vmem:[#allocation3 + $0xc] sm:$0xf]
      %v4089 = vld [vmem:[#allocation3 + $0x10] sm:$0xf]
      %v4090 = vld [vmem:[#allocation3 + $0x14] sm:$0xf]
      %v4091 = vld [vmem:[#allocation3 + $0x18] sm:$0xf]
      %v4092 = vld [vmem:[#allocation3 + $0x1c] sm:$0xf]
      %v4093 = vld [vmem:[#allocation3 + $0x20] sm:$0xf]
      %v4094 = vld [vmem:[#allocation3 + $0x24] sm:$0xf]
      %v4095 = vld [vmem:[#allocation3 + $0x28] sm:$0xf]
      %v4096 = vld [vmem:[#allocation3 + $0x2c] sm:$0xf]
      %v4097 = vld [vmem:[#allocation3 + $0x30] sm:$0xf]
      %v4098 = vld [vmem:[#allocation3 + $0x34] sm:$0xf]
      %v4099 = vld [vmem:[#allocation3 + $0x38] sm:$0xf]
      %v4100 = vld [vmem:[#allocation3 + $0x3c] sm:$0xf]
      %v4101 = vld [vmem:[#allocation3 + $0x40] sm:$0xf]
      %v4102 = vld [vmem:[#allocation3 + $0x44] sm:$0xf]
      %v4103 = vld [vmem:[#allocation3 + $0x48] sm:$0xf]
      %v4104 = vld [vmem:[#allocation3 + $0x4c] sm:$0xf]
      %v4105 = vld [vmem:[#allocation3 + $0x50] sm:$0xf]
      %v4106 = vld [vmem:[#allocation3 + $0x54] sm:$0xf]
      %v4107 = vld [vmem:[#allocation3 + $0x58] sm:$0xf]
      %v4108 = vld [vmem:[#allocation3 + $0x5c] sm:$0xf]
      %v4109 = vld [vmem:[#allocation3 + $0x60] sm:$0xf]
      %v4110 = vld [vmem:[#allocation3 + $0x64] sm:$0xf]
      %v4111 = vld [vmem:[#allocation3 + $0x68] sm:$0xf]
      %v4112 = vld [vmem:[#allocation3 + $0x6c] sm:$0xf]
      %v4113 = vld [vmem:[#allocation3 + $0x70] sm:$0xf]
      %v4114 = vld [vmem:[#allocation3 + $0x74] sm:$0xf]
      %v4115 = vld [vmem:[#allocation3 + $0x78] sm:$0xf]
      %v4116 = vld [vmem:[#allocation3 + $0x7c] sm:$0xf]
      %v4117 = vld [vmem:[%s3] sm:$0xf]
      %v4118 = vld [vmem:[%s3 + $0x4] sm:$0xf]
      %v4119 = vld [vmem:[%s3 + $0x8] sm:$0xf]
      %v4120 = vld [vmem:[%s3 + $0xc] sm:$0xf]
      %v4121 = vld [vmem:[%s3 + $0x10] sm:$0x3]
      %v4154 = vunpack.c.l.b16 %v4085
      %v4155 = vunpack.c.l.b16 %v4086
      %v4156 = vunpack.c.l.b16 %v4087
      %v4157 = vunpack.c.l.b16 %v4088
      %v4158 = vunpack.c.l.b16 %v4089
      %v4159 = vunpack.c.l.b16 %v4090
      %v4160 = vunpack.c.l.b16 %v4091
      %v4161 = vunpack.c.l.b16 %v4092
      %v4162 = vunpack.c.l.b16 %v4093
      %v4163 = vunpack.c.l.b16 %v4094
      %v4164 = vunpack.c.l.b16 %v4095
      %v4165 = vunpack.c.l.b16 %v4096
      %v4166 = vunpack.c.l.b16 %v4097
      %v4167 = vunpack.c.l.b16 %v4098
      %v4168 = vunpack.c.l.b16 %v4099
      %v4169 = vunpack.c.l.b16 %v4100
      %v4170 = vunpack.c.l.b16 %v4101
      %v4171 = vunpack.c.l.b16 %v4102
      %v4172 = vunpack.c.l.b16 %v4103
      %v4173 = vunpack.c.l.b16 %v4104
      %v4174 = vunpack.c.l.b16 %v4105
      %v4175 = vunpack.c.l.b16 %v4106
      %v4176 = vunpack.c.l.b16 %v4107
      %v4177 = vunpack.c.l.b16 %v4108
      %v4178 = vunpack.c.l.b16 %v4109
      %v4179 = vunpack.c.l.b16 %v4110
      %v4180 = vunpack.c.l.b16 %v4111
      %v4181 = vunpack.c.l.b16 %v4112
      %v4182 = vunpack.c.l.b16 %v4113
      %v4183 = vunpack.c.l.b16 %v4114
      %v4184 = vunpack.c.l.b16 %v4115
      %v4185 = vunpack.c.l.b16 %v4116
      %v4186 = vpack.c.b16 %v4155, %v4154
      %v4187 = vpack.c.b16 %v4157, %v4156
      %v4188 = vpack.c.b16 %v4159, %v4158
      %v4189 = vpack.c.b16 %v4161, %v4160
      %v4190 = vpack.c.b16 %v4163, %v4162
      %v4191 = vpack.c.b16 %v4165, %v4164
      %v4192 = vpack.c.b16 %v4167, %v4166
      %v4193 = vpack.c.b16 %v4169, %v4168
      %v4194 = vpack.c.b16 %v4171, %v4170
      %v4195 = vpack.c.b16 %v4173, %v4172
      %v4196 = vpack.c.b16 %v4175, %v4174
      %v4197 = vpack.c.b16 %v4177, %v4176
      %v4198 = vpack.c.b16 %v4179, %v4178
      %v4199 = vpack.c.b16 %v4181, %v4180
      %v4200 = vpack.c.b16 %v4183, %v4182
      %v4201 = vpack.c.b16 %v4185, %v4184
      %v4207 = vunpack.c.l.b16 %v4117
      %v4208 = vunpack.c.l.b16 %v4118
      %v4209 = vunpack.c.l.b16 %v4119
      %v4210 = vunpack.c.l.b16 %v4120
      %v4211 = vunpack.c.l.b16 %v4121
      %v4212 = vpack.c.b16 %v4208, %v4207
      %v4213 = vpack.c.b16 %v4210, %v4209
      %v4214 = vpack.c.b16 %v4211, %v4211
      %vm4217 = vcmask 293888
      %v4219 = vsel %vm4217, %v4186, 0
      %v4222 = vsel %vm4217, %v4187, 0
      %v4225 = vsel %vm4217, %v4188, 0
      %v4228 = vsel %vm4217, %v4189, 0
      %v4231 = vsel %vm4217, %v4190, 0
      %v4234 = vsel %vm4217, %v4191, 0
      %v4237 = vsel %vm4217, %v4192, 0
      %v4240 = vsel %vm4217, %v4193, 0
      %v4243 = vsel %vm4217, %v4194, 0
      %v4246 = vsel %vm4217, %v4195, 0
      %v4249 = vsel %vm4217, %v4196, 0
      %v4252 = vsel %vm4217, %v4197, 0
      %v4255 = vsel %vm4217, %v4198, 0
      %v4258 = vsel %vm4217, %v4199, 0
      %v4261 = vsel %vm4217, %v4200, 0
      %v4264 = vsel %vm4217, %v4201, 0
      %vm4266 = vcmask 1041408
      %v4268 = vsel %vm4266, %v4214, 0
      %4270 = vmatpush.bf16.msra.mxu0 0
      %4271 = vmatpush.bf16.msra.mxu0 0
      %4272 = vmatpush.bf16.msra.mxu0 0
      %4273 = vmatpush.bf16.msra.mxu0 0
      %4274 = vmatpush.bf16.msra.mxu0 0
      %4275 = vmatpush.bf16.msra.mxu0 %v4268
      %4276 = vmatpush.bf16.msra.mxu0 %v4213
      %4277 = vmatpush.bf16.msra.mxu0 %v4212
      %4278 = vmatmul.bf16.gmra.mxu0 %v4219
      %v4279 = vpop.f32.mrf.mxu0
      %v4280 = vadd.f32 0.0, %v4279
      %v4281 = vpop.f32.mrf.mxu0
      %v4282 = vadd.f32 0.0, %v4281
      %4283 = vmatmul.bf16.gmra.mxu0 %v4222
      %v4284 = vpop.f32.mrf.mxu0
      %v4285 = vadd.f32 0.0, %v4284
      %v4286 = vpop.f32.mrf.mxu0
      %v4287 = vadd.f32 0.0, %v4286
      %4288 = vmatmul.bf16.gmra.mxu0 %v4225
      %v4289 = vpop.f32.mrf.mxu0
      %v4290 = vadd.f32 0.0, %v4289
      %v4291 = vpop.f32.mrf.mxu0
      %v4292 = vadd.f32 0.0, %v4291
      %4293 = vmatmul.bf16.gmra.mxu0 %v4228
      %v4294 = vpop.f32.mrf.mxu0
      %v4295 = vadd.f32 0.0, %v4294
      %v4296 = vpop.f32.mrf.mxu0
      %v4297 = vadd.f32 0.0, %v4296
      %4298 = vmatmul.bf16.gmra.mxu0 %v4231
      %v4299 = vpop.f32.mrf.mxu0
      %v4300 = vadd.f32 0.0, %v4299
      %v4301 = vpop.f32.mrf.mxu0
      %v4302 = vadd.f32 0.0, %v4301
      %4303 = vmatmul.bf16.gmra.mxu0 %v4234
      %v4304 = vpop.f32.mrf.mxu0
      %v4305 = vadd.f32 0.0, %v4304
      %v4306 = vpop.f32.mrf.mxu0
      %v4307 = vadd.f32 0.0, %v4306
      %4308 = vmatmul.bf16.gmra.mxu0 %v4237
      %v4309 = vpop.f32.mrf.mxu0
      %v4310 = vadd.f32 0.0, %v4309
      %v4311 = vpop.f32.mrf.mxu0
      %v4312 = vadd.f32 0.0, %v4311
      %4313 = vmatmul.bf16.gmra.mxu0 %v4240
      %v4314 = vpop.f32.mrf.mxu0
      %v4315 = vadd.f32 0.0, %v4314
      %v4316 = vpop.f32.mrf.mxu0
      %v4317 = vadd.f32 0.0, %v4316
      %4318 = vmatmul.bf16.gmra.mxu0 %v4243
      %v4319 = vpop.f32.mrf.mxu0
      %v4320 = vadd.f32 0.0, %v4319
      %v4321 = vpop.f32.mrf.mxu0
      %v4322 = vadd.f32 0.0, %v4321
      %4323 = vmatmul.bf16.gmra.mxu0 %v4246
      %v4324 = vpop.f32.mrf.mxu0
      %v4325 = vadd.f32 0.0, %v4324
      %v4326 = vpop.f32.mrf.mxu0
      %v4327 = vadd.f32 0.0, %v4326
      %4328 = vmatmul.bf16.gmra.mxu0 %v4249
      %v4329 = vpop.f32.mrf.mxu0
      %v4330 = vadd.f32 0.0, %v4329
      %v4331 = vpop.f32.mrf.mxu0
      %v4332 = vadd.f32 0.0, %v4331
      %4333 = vmatmul.bf16.gmra.mxu0 %v4252
      %v4334 = vpop.f32.mrf.mxu0
      %v4335 = vadd.f32 0.0, %v4334
      %v4336 = vpop.f32.mrf.mxu0
      %v4337 = vadd.f32 0.0, %v4336
      %4338 = vmatmul.bf16.gmra.mxu0 %v4255
      %v4339 = vpop.f32.mrf.mxu0
      %v4340 = vadd.f32 0.0, %v4339
      %v4341 = vpop.f32.mrf.mxu0
      %v4342 = vadd.f32 0.0, %v4341
      %4343 = vmatmul.bf16.gmra.mxu0 %v4258
      %v4344 = vpop.f32.mrf.mxu0
      %v4345 = vadd.f32 0.0, %v4344
      %v4346 = vpop.f32.mrf.mxu0
      %v4347 = vadd.f32 0.0, %v4346
      %4348 = vmatmul.bf16.gmra.mxu0 %v4261
      %v4349 = vpop.f32.mrf.mxu0
      %v4350 = vadd.f32 0.0, %v4349
      %v4351 = vpop.f32.mrf.mxu0
      %v4352 = vadd.f32 0.0, %v4351
      %4353 = vmatmul.bf16.gmra.mxu0 %v4264
      %v4354 = vpop.f32.mrf.mxu0
      %v4355 = vadd.f32 0.0, %v4354
      %v4356 = vpop.f32.mrf.mxu0
      %v4357 = vadd.f32 0.0, %v4356
      %4358 = vdwg.mxu0
      %v4359 = vpack.c.bf16 %v4280, %v4280
      %v4360 = vpack.c.bf16 %v4282, %v4282
      %v4361 = vpack.c.bf16 %v4285, %v4285
      %v4362 = vpack.c.bf16 %v4287, %v4287
      %v4363 = vpack.c.bf16 %v4290, %v4290
      %v4364 = vpack.c.bf16 %v4292, %v4292
      %v4365 = vpack.c.bf16 %v4295, %v4295
      %v4366 = vpack.c.bf16 %v4297, %v4297
      %v4367 = vpack.c.bf16 %v4300, %v4300
      %v4368 = vpack.c.bf16 %v4302, %v4302
      %v4369 = vpack.c.bf16 %v4305, %v4305
      %v4370 = vpack.c.bf16 %v4307, %v4307
      %v4371 = vpack.c.bf16 %v4310, %v4310
      %v4372 = vpack.c.bf16 %v4312, %v4312
      %v4373 = vpack.c.bf16 %v4315, %v4315
      %v4374 = vpack.c.bf16 %v4317, %v4317
      %v4375 = vpack.c.bf16 %v4320, %v4320
      %v4376 = vpack.c.bf16 %v4322, %v4322
      %v4377 = vpack.c.bf16 %v4325, %v4325
      %v4378 = vpack.c.bf16 %v4327, %v4327
      %v4379 = vpack.c.bf16 %v4330, %v4330
      %v4380 = vpack.c.bf16 %v4332, %v4332
      %v4381 = vpack.c.bf16 %v4335, %v4335
      %v4382 = vpack.c.bf16 %v4337, %v4337
      %v4383 = vpack.c.bf16 %v4340, %v4340
      %v4384 = vpack.c.bf16 %v4342, %v4342
      %v4385 = vpack.c.bf16 %v4345, %v4345
      %v4386 = vpack.c.bf16 %v4347, %v4347
      %v4387 = vpack.c.bf16 %v4350, %v4350
      %v4388 = vpack.c.bf16 %v4352, %v4352
      %v4389 = vpack.c.bf16 %v4355, %v4355
      %v4390 = vpack.c.bf16 %v4357, %v4357
      %4391 = vst.msk [vmem:[%s231] sm:$0xf] %vm437, %v4359
      %4392 = vst.msk [vmem:[%s231 + $0x4] sm:$0xf] %vm437, %v4360
      %4393 = vst.msk [vmem:[%s231 + $0x8] sm:$0xf] %vm437, %v4361
      %4394 = vst.msk [vmem:[%s231 + $0xc] sm:$0xf] %vm437, %v4362
      %4395 = vst.msk [vmem:[%s231 + $0x10] sm:$0xf] %vm437, %v4363
      %4396 = vst.msk [vmem:[%s231 + $0x14] sm:$0xf] %vm437, %v4364
      %4397 = vst.msk [vmem:[%s231 + $0x18] sm:$0xf] %vm437, %v4365
      %4398 = vst.msk [vmem:[%s231 + $0x1c] sm:$0xf] %vm437, %v4366
      %4399 = vst.msk [vmem:[%s231 + $0x20] sm:$0xf] %vm437, %v4367
      %4400 = vst.msk [vmem:[%s231 + $0x24] sm:$0xf] %vm437, %v4368
      %4401 = vst.msk [vmem:[%s231 + $0x28] sm:$0xf] %vm437, %v4369
      %4402 = vst.msk [vmem:[%s231 + $0x2c] sm:$0xf] %vm437, %v4370
      %4403 = vst.msk [vmem:[%s231 + $0x30] sm:$0xf] %vm437, %v4371
      %4404 = vst.msk [vmem:[%s231 + $0x34] sm:$0xf] %vm437, %v4372
      %4405 = vst.msk [vmem:[%s231 + $0x38] sm:$0xf] %vm437, %v4373
      %4406 = vst.msk [vmem:[%s231 + $0x3c] sm:$0xf] %vm437, %v4374
      %4407 = vst.msk [vmem:[%s231 + $0x40] sm:$0xf] %vm437, %v4375
      %4408 = vst.msk [vmem:[%s231 + $0x44] sm:$0xf] %vm437, %v4376
      %4409 = vst.msk [vmem:[%s231 + $0x48] sm:$0xf] %vm437, %v4377
      %4410 = vst.msk [vmem:[%s231 + $0x4c] sm:$0xf] %vm437, %v4378
      %4411 = vst.msk [vmem:[%s231 + $0x50] sm:$0xf] %vm437, %v4379
      %4412 = vst.msk [vmem:[%s231 + $0x54] sm:$0xf] %vm437, %v4380
      %4413 = vst.msk [vmem:[%s231 + $0x58] sm:$0xf] %vm437, %v4381
      %4414 = vst.msk [vmem:[%s231 + $0x5c] sm:$0xf] %vm437, %v4382
      %4415 = vst.msk [vmem:[%s231 + $0x60] sm:$0xf] %vm437, %v4383
      %4416 = vst.msk [vmem:[%s231 + $0x64] sm:$0xf] %vm437, %v4384
      %4417 = vst.msk [vmem:[%s231 + $0x68] sm:$0xf] %vm437, %v4385
      %4418 = vst.msk [vmem:[%s231 + $0x6c] sm:$0xf] %vm437, %v4386
      %4419 = vst.msk [vmem:[%s231 + $0x70] sm:$0xf] %vm437, %v4387
      %4420 = vst.msk [vmem:[%s231 + $0x74] sm:$0xf] %vm437, %v4388
      %4421 = vst.msk [vmem:[%s231 + $0x78] sm:$0xf] %vm437, %v4389
      %4422 = vst.msk [vmem:[%s231 + $0x7c] sm:$0xf] %vm437, %v4390
      %v4423 = vunpack.c.l.bf16 %v4359
      %v4424 = vunpack.c.l.bf16 %v4360
      %v4425 = vunpack.c.l.bf16 %v4361
      %v4426 = vunpack.c.l.bf16 %v4362
      %v4427 = vunpack.c.l.bf16 %v4363
      %v4428 = vunpack.c.l.bf16 %v4364
      %v4429 = vunpack.c.l.bf16 %v4365
      %v4430 = vunpack.c.l.bf16 %v4366
      %v4431 = vunpack.c.l.bf16 %v4367
      %v4432 = vunpack.c.l.bf16 %v4368
      %v4433 = vunpack.c.l.bf16 %v4369
      %v4434 = vunpack.c.l.bf16 %v4370
      %v4435 = vunpack.c.l.bf16 %v4371
      %v4436 = vunpack.c.l.bf16 %v4372
      %v4437 = vunpack.c.l.bf16 %v4373
      %v4438 = vunpack.c.l.bf16 %v4374
      %v4439 = vunpack.c.l.bf16 %v4375
      %v4440 = vunpack.c.l.bf16 %v4376
      %v4441 = vunpack.c.l.bf16 %v4377
      %v4442 = vunpack.c.l.bf16 %v4378
      %v4443 = vunpack.c.l.bf16 %v4379
      %v4444 = vunpack.c.l.bf16 %v4380
      %v4445 = vunpack.c.l.bf16 %v4381
      %v4446 = vunpack.c.l.bf16 %v4382
      %v4447 = vunpack.c.l.bf16 %v4383
      %v4448 = vunpack.c.l.bf16 %v4384
      %v4449 = vunpack.c.l.bf16 %v4385
      %v4450 = vunpack.c.l.bf16 %v4386
      %v4451 = vunpack.c.l.bf16 %v4387
      %v4452 = vunpack.c.l.bf16 %v4388
      %v4453 = vunpack.c.l.bf16 %v4389
      %v4454 = vunpack.c.l.bf16 %v4390
      %vm4455 = vcmask 31744
      %v4456 = vsel %vm4455, %v4423, 0.0
      %v4457 = vsel %vm4455, %v4424, 0.0
      %v4458 = vadd.f32 %v4456, %v4457
      %v4459 = vsel %vm4455, %v4425, 0.0
      %v4460 = vadd.f32 %v4458, %v4459
      %v4461 = vsel %vm4455, %v4426, 0.0
      %v4462 = vadd.f32 %v4460, %v4461
      %v4463 = vsel %vm4455, %v4427, 0.0
      %v4464 = vadd.f32 %v4462, %v4463
      %v4465 = vsel %vm4455, %v4428, 0.0
      %v4466 = vadd.f32 %v4464, %v4465
      %v4467 = vsel %vm4455, %v4429, 0.0
      %v4468 = vadd.f32 %v4466, %v4467
      %v4469 = vsel %vm4455, %v4430, 0.0
      %v4470 = vadd.f32 %v4468, %v4469
      %v4471 = vsel %vm4455, %v4431, 0.0
      %v4472 = vadd.f32 %v4470, %v4471
      %v4473 = vsel %vm4455, %v4432, 0.0
      %v4474 = vadd.f32 %v4472, %v4473
      %v4475 = vsel %vm4455, %v4433, 0.0
      %v4476 = vadd.f32 %v4474, %v4475
      %v4477 = vsel %vm4455, %v4434, 0.0
      %v4478 = vadd.f32 %v4476, %v4477
      %v4479 = vsel %vm4455, %v4435, 0.0
      %v4480 = vadd.f32 %v4478, %v4479
      %v4481 = vsel %vm4455, %v4436, 0.0
      %v4482 = vadd.f32 %v4480, %v4481
      %v4483 = vsel %vm4455, %v4437, 0.0
      %v4484 = vadd.f32 %v4482, %v4483
      %v4485 = vsel %vm4455, %v4438, 0.0
      %v4486 = vadd.f32 %v4484, %v4485
      %v4487 = vsel %vm4455, %v4439, 0.0
      %v4488 = vadd.f32 %v4486, %v4487
      %v4489 = vsel %vm4455, %v4440, 0.0
      %v4490 = vadd.f32 %v4488, %v4489
      %v4491 = vsel %vm4455, %v4441, 0.0
      %v4492 = vadd.f32 %v4490, %v4491
      %v4493 = vsel %vm4455, %v4442, 0.0
      %v4494 = vadd.f32 %v4492, %v4493
      %v4495 = vsel %vm4455, %v4443, 0.0
      %v4496 = vadd.f32 %v4494, %v4495
      %v4497 = vsel %vm4455, %v4444, 0.0
      %v4498 = vadd.f32 %v4496, %v4497
      %v4499 = vsel %vm4455, %v4445, 0.0
      %v4500 = vadd.f32 %v4498, %v4499
      %v4501 = vsel %vm4455, %v4446, 0.0
      %v4502 = vadd.f32 %v4500, %v4501
      %v4503 = vsel %vm4455, %v4447, 0.0
      %v4504 = vadd.f32 %v4502, %v4503
      %v4505 = vsel %vm4455, %v4448, 0.0
      %v4506 = vadd.f32 %v4504, %v4505
      %v4507 = vsel %vm4455, %v4449, 0.0
      %v4508 = vadd.f32 %v4506, %v4507
      %v4509 = vsel %vm4455, %v4450, 0.0
      %v4510 = vadd.f32 %v4508, %v4509
      %v4511 = vsel %vm4455, %v4451, 0.0
      %v4512 = vadd.f32 %v4510, %v4511
      %v4513 = vsel %vm4455, %v4452, 0.0
      %v4514 = vadd.f32 %v4512, %v4513
      %v4515 = vsel %vm4455, %v4453, 0.0
      %v4516 = vadd.f32 %v4514, %v4515
      %v4517 = vsel %vm4455, %v4454, 0.0
      %v4518 = vadd.f32 %v4516, %v4517
      %v4519 = vrot.slane %v4518, 4
      %v4520 = vadd.f32 %v4518, %v4519
      %v4521 = vrot.slane %v4520, 2
      %v4522 = vadd.f32 %v4520, %v4521
      %v4523 = vrot.slane %v4522, 1
      %v4524 = vadd.f32 %v4522, %v4523
      %4525 = vst.msk [vmem:[%s235] sm:$0x1] %vm440, %v4524
      %v4526 = vmul.f32 %v4423, %v4423
      %v4527 = vmul.f32 %v4424, %v4424
      %v4528 = vmul.f32 %v4425, %v4425
      %v4529 = vmul.f32 %v4426, %v4426
      %v4530 = vmul.f32 %v4427, %v4427
      %v4531 = vmul.f32 %v4428, %v4428
      %v4532 = vmul.f32 %v4429, %v4429
      %v4533 = vmul.f32 %v4430, %v4430
      %v4534 = vmul.f32 %v4431, %v4431
      %v4535 = vmul.f32 %v4432, %v4432
      %v4536 = vmul.f32 %v4433, %v4433
      %v4537 = vmul.f32 %v4434, %v4434
      %v4538 = vmul.f32 %v4435, %v4435
      %v4539 = vmul.f32 %v4436, %v4436
      %v4540 = vmul.f32 %v4437, %v4437
      %v4541 = vmul.f32 %v4438, %v4438
      %v4542 = vmul.f32 %v4439, %v4439
      %v4543 = vmul.f32 %v4440, %v4440
      %v4544 = vmul.f32 %v4441, %v4441
      %v4545 = vmul.f32 %v4442, %v4442
      %v4546 = vmul.f32 %v4443, %v4443
      %v4547 = vmul.f32 %v4444, %v4444
      %v4548 = vmul.f32 %v4445, %v4445
      %v4549 = vmul.f32 %v4446, %v4446
      %v4550 = vmul.f32 %v4447, %v4447
      %v4551 = vmul.f32 %v4448, %v4448
      %v4552 = vmul.f32 %v4449, %v4449
      %v4553 = vmul.f32 %v4450, %v4450
      %v4554 = vmul.f32 %v4451, %v4451
      %v4555 = vmul.f32 %v4452, %v4452
      %v4556 = vmul.f32 %v4453, %v4453
      %v4557 = vmul.f32 %v4454, %v4454
      %v4558 = vsel %vm4455, %v4526, 0.0
      %v4559 = vsel %vm4455, %v4527, 0.0
      %v4560 = vadd.f32 %v4558, %v4559
      %v4561 = vsel %vm4455, %v4528, 0.0
      %v4562 = vadd.f32 %v4560, %v4561
      %v4563 = vsel %vm4455, %v4529, 0.0
      %v4564 = vadd.f32 %v4562, %v4563
      %v4565 = vsel %vm4455, %v4530, 0.0
      %v4566 = vadd.f32 %v4564, %v4565
      %v4567 = vsel %vm4455, %v4531, 0.0
      %v4568 = vadd.f32 %v4566, %v4567
      %v4569 = vsel %vm4455, %v4532, 0.0
      %v4570 = vadd.f32 %v4568, %v4569
      %v4571 = vsel %vm4455, %v4533, 0.0
      %v4572 = vadd.f32 %v4570, %v4571
      %v4573 = vsel %vm4455, %v4534, 0.0
      %v4574 = vadd.f32 %v4572, %v4573
      %v4575 = vsel %vm4455, %v4535, 0.0
      %v4576 = vadd.f32 %v4574, %v4575
      %v4577 = vsel %vm4455, %v4536, 0.0
      %v4578 = vadd.f32 %v4576, %v4577
      %v4579 = vsel %vm4455, %v4537, 0.0
      %v4580 = vadd.f32 %v4578, %v4579
      %v4581 = vsel %vm4455, %v4538, 0.0
      %v4582 = vadd.f32 %v4580, %v4581
      %v4583 = vsel %vm4455, %v4539, 0.0
      %v4584 = vadd.f32 %v4582, %v4583
      %v4585 = vsel %vm4455, %v4540, 0.0
      %v4586 = vadd.f32 %v4584, %v4585
      %v4587 = vsel %vm4455, %v4541, 0.0
      %v4588 = vadd.f32 %v4586, %v4587
      %v4589 = vsel %vm4455, %v4542, 0.0
      %v4590 = vadd.f32 %v4588, %v4589
      %v4591 = vsel %vm4455, %v4543, 0.0
      %v4592 = vadd.f32 %v4590, %v4591
      %v4593 = vsel %vm4455, %v4544, 0.0
      %v4594 = vadd.f32 %v4592, %v4593
      %v4595 = vsel %vm4455, %v4545, 0.0
      %v4596 = vadd.f32 %v4594, %v4595
      %v4597 = vsel %vm4455, %v4546, 0.0
      %v4598 = vadd.f32 %v4596, %v4597
      %v4599 = vsel %vm4455, %v4547, 0.0
      %v4600 = vadd.f32 %v4598, %v4599
      %v4601 = vsel %vm4455, %v4548, 0.0
      %v4602 = vadd.f32 %v4600, %v4601
      %v4603 = vsel %vm4455, %v4549, 0.0
      %v4604 = vadd.f32 %v4602, %v4603
      %v4605 = vsel %vm4455, %v4550, 0.0
      %v4606 = vadd.f32 %v4604, %v4605
      %v4607 = vsel %vm4455, %v4551, 0.0
      %v4608 = vadd.f32 %v4606, %v4607
      %v4609 = vsel %vm4455, %v4552, 0.0
      %v4610 = vadd.f32 %v4608, %v4609
      %v4611 = vsel %vm4455, %v4553, 0.0
      %v4612 = vadd.f32 %v4610, %v4611
      %v4613 = vsel %vm4455, %v4554, 0.0
      %v4614 = vadd.f32 %v4612, %v4613
      %v4615 = vsel %vm4455, %v4555, 0.0
      %v4616 = vadd.f32 %v4614, %v4615
      %v4617 = vsel %vm4455, %v4556, 0.0
      %v4618 = vadd.f32 %v4616, %v4617
      %v4619 = vsel %vm4455, %v4557, 0.0
      %v4620 = vadd.f32 %v4618, %v4619
      %v4621 = vrot.slane %v4620, 4
      %v4622 = vadd.f32 %v4620, %v4621
      %v4623 = vrot.slane %v4622, 2
      %v4624 = vadd.f32 %v4622, %v4623
      %v4625 = vrot.slane %v4624, 1
      %v4626 = vadd.f32 %v4624, %v4625
      %4627 = vst.msk [vmem:[%s235 + $0x1] sm:$0x1] %vm440, %v4626
      %p4628 = scmp.lt.s32.totalorder %s17, 1
      %s4629 = scalar_select %p4628, %s17, 1
      %s4630 = smul.addr %s4629, 32
      %s4631 = smul.addr %s4630, 4
      %s4632 = scalar_lea.vmem %s4, %s4631
      %p4633 = scmp.lt.s32.totalorder %s17, 1
      %s4634 = scalar_select %p4633, %s17, 1
      %s4635 = smul.addr %s4634, 2
      %s4636 = scalar_lea.vmem %s5, %s4635
      // Predicated region
      $region37: #{residual_block.4} parent=35 // pred_check
        %p4637 = pneg %p124
      $region38: #{residual_block.4} parent=35 // pred_check_branch
        %4639 = sbr.rel (%p4637) target = $region40
      $region39: #{residual_block.4} parent=35 // pred_region
        _
      $region40: #{residual_block.4} parent=35 // pred_fallthru
        _
      // Predicated region
      $region41: #{residual_block.4} parent=35 // pred_check
        %p4640 = pneg %p150
      $region42: #{residual_block.4} parent=35 // pred_check_branch
        %4642 = sbr.rel (%p4640) target = $region44
      $region43: #{residual_block.4} parent=35 // pred_region
        _
      $region44: #{residual_block.4} parent=35 // pred_fallthru
        _
    $region36: #{residual_block.4} parent=5 // pred_fallthru
      _
    %p4643 = scmp.le.s32.totalorder 2, %s12
    // Predicated region
    $region45: #{residual_block.4} parent=5 // pred_check
      %p4644 = pneg %p4643
    $region46: #{residual_block.4} parent=5 // pred_check_branch
      %4646 = sbr.rel (%p4644) target = $region48
    $region47: #{residual_block.4} parent=5 // pred_region
      %s4647 = ssub.s32 %s12, 2
      // Predicated region
      $region49: #{residual_block.4} parent=47 // pred_check
        %p4648 = pneg %p130
      $region50: #{residual_block.4} parent=47 // pred_check_branch
        %4650 = sbr.rel (%p4648) target = $region52
      $region51: #{residual_block.4} parent=47 // pred_region
        %p4651 = scmp.lt.s32.totalorder %s18, 1
        %s4652 = scalar_select %p4651, %s18, 1
        %s4653 = smul.addr %s4652, 32
        %s4654 = smul.addr %s4653, 4
        %s4655 = scalar_lea.vmem %s4, %s4654
      $region52: #{residual_block.4} parent=47 // pred_fallthru
        _
      // Predicated region
      $region53: #{residual_block.4} parent=47 // pred_check
        %p4656 = pneg %p156
      $region54: #{residual_block.4} parent=47 // pred_check_branch
        %4658 = sbr.rel (%p4656) target = $region56
      $region55: #{residual_block.4} parent=47 // pred_region
        %p4659 = scmp.lt.s32.totalorder %s18, 1
        %s4660 = scalar_select %p4659, %s18, 1
        %s4661 = smul.addr %s4660, 2
        %s4662 = scalar_lea.vmem %s5, %s4661
      $region56: #{residual_block.4} parent=47 // pred_fallthru
        _
    $region48: #{residual_block.4} parent=5 // pred_fallthru
      _
  $region6: #{residual_block.4} parent=0 // loop_footer
    %s16 = sadd.s32 1, %s12
  $region7: #{residual_block.4} parent=0 // loop_footer_branch
    %11 = sbr.rel target = $region3
  $region8: #{residual_block.4} parent=0 // loop_exit
    _

</llo_original>
